<compile_context>
chip_gen: v7x
topology: tpu7x:2x2x1
jax: 0.10.0
libtpu: 0.0.40
codegen_flags: <defaults>
</compile_context>

<pallas_src>
import jax
import jax.numpy as jnp
from jax import lax
from jax.experimental import pallas as pl
from jax.experimental.pallas import tpu as pltpu

EPS = 1e-5
LANE = 128


def _round_up(x, m):
    return (x + m - 1) // m * m


# --------------------------------------------------------------------------- #
# K1: per-image branch convolutions (im2col matmul) + fused BN statistics
# --------------------------------------------------------------------------- #
def _branch_conv_kernel(x_ref, w_ref, conv_ref, stat_ref):
    # x_ref:    (1, H+2P, W+2P, Cp) bf16  zero-padded input, one image
    # w_ref:    (M, 9*Cp, Cp)       bf16  dense block-diagonal im2col weights
    # conv_ref: (M, H, W, Cp)       f32   pre-BN conv outputs for this image
    # stat_ref: (M, 2, Cp)          f32   row 0 = sum, row 1 = sum of squares
    M, H, W, Cp = conv_ref.shape
    pad = (x_ref.shape[1] - H) // 2
    for m in range(M):                      # static unroll over branches
        dil = 1 + m                         # branch m: dilation = padding = 1+m
        taps = []
        for ky in range(3):
            for kx in range(3):
                y0 = pad + dil * (ky - 1)
                x0 = pad + dil * (kx - 1)
                taps.append(x_ref[0, y0:y0 + H, x0:x0 + W, :])
        patches = jnp.concatenate(taps, axis=-1)               # (H, W, 9*Cp)
        acc = jnp.einsum('hwk,ko->hwo', patches, w_ref[m],
                         preferred_element_type=jnp.float32)   # f32 accumulate
        conv_ref[m] = acc
        s = jnp.sum(jnp.sum(acc, axis=0), axis=0, keepdims=True)         # (1,Cp)
        sq = jnp.sum(jnp.sum(acc * acc, axis=0), axis=0, keepdims=True)  # (1,Cp)
        stat_ref[m, 0:1, :] = s
        stat_ref[m, 1:2, :] = sq


# --------------------------------------------------------------------------- #
# K2: global average pool of  sum_m relu(BN(conv_m))   (per image)
# --------------------------------------------------------------------------- #
def _gap_kernel(conv_ref, scale_ref, shift_ref, gap_ref):
    # conv_ref: (M, H, W, Cp) f32 ; scale/shift: (M, Cp) ; gap_ref: (1, 1, Cp)
    M, H, W, Cp = conv_ref.shape
    u = None
    for m in range(M):
        feat = jnp.maximum(
            conv_ref[m] * scale_ref[m:m + 1, :] + shift_ref[m:m + 1, :], 0.0)
        u = feat if u is None else u + feat
    gap_ref[0] = jnp.sum(jnp.sum(u, axis=0), axis=0, keepdims=True) * (
        1.0 / (H * W))


# --------------------------------------------------------------------------- #
# K3: attention head  (fc -> BN over batch -> ReLU -> fcs -> softmax over M)
# --------------------------------------------------------------------------- #
def _attention_kernel(gap_ref, wfc_ref, gfc_ref, bfc_ref, wfcs_ref, bfcs_ref,
                      attn_ref):
    # gap: (N, Cp) ; wfc: (d, Cp) ; gfc/bfc: (1, d)
    # wfcs: (M, Cp, d) ; bfcs: (M, 1, Cp) ; attn_ref: (N, M, Cp)
    M = wfcs_ref.shape[0]
    gap = gap_ref[...]
    # fc 1x1 conv (bias-free) as a lane-axis contraction, exact f32 on the VPU
    z0 = jnp.sum(gap[:, None, :] * wfc_ref[...][None, :, :], axis=-1)   # (N, d)
    mu = jnp.mean(z0, axis=0, keepdims=True)                 # batch stats (N)
    var = jnp.mean((z0 - mu) * (z0 - mu), axis=0, keepdims=True)
    z = jnp.maximum((z0 - mu) * jax.lax.rsqrt(var + EPS) * gfc_ref[...]
                    + bfc_ref[...], 0.0)                                # (N, d)
    logits = []
    for m in range(M):
        lm = jnp.sum(z[:, None, :] * wfcs_ref[m][None, :, :], axis=-1) \
            + bfcs_ref[m]                                               # (N, Cp)
        logits.append(lm)
    mx = logits[0]
    for m in range(1, M):
        mx = jnp.maximum(mx, logits[m])
    exps = [jnp.exp(l - mx) for l in logits]
    denom = exps[0]
    for m in range(1, M):
        denom = denom + exps[m]
    inv = 1.0 / denom
    for m in range(M):
        attn_ref[:, m:m + 1, :] = (exps[m] * inv)[:, None, :]


# --------------------------------------------------------------------------- #
# K4: feats_V = sum_m relu(BN(conv_m)) * attn_m   (per image)
# --------------------------------------------------------------------------- #
def _select_kernel(conv_ref, scale_ref, shift_ref, attn_ref, out_ref):
    # conv_ref: (M, H, W, Cp) ; scale/shift: (M, Cp) ; attn_ref: (1, M, Cp)
    # out_ref:  (1, H, W, Cp)
    M = conv_ref.shape[0]
    v = None
    for m in range(M):
        feat = jnp.maximum(
            conv_ref[m] * scale_ref[m:m + 1, :] + shift_ref[m:m + 1, :], 0.0)
        term = feat * attn_ref[0, m:m + 1, :]
        v = term if v is None else v + term
    out_ref[0] = v


# --------------------------------------------------------------------------- #
# Wrapper
# --------------------------------------------------------------------------- #
def _expand_grouped_weight(w, Cp):
    """(C, C/G, 3, 3) PyTorch grouped-conv weight -> exact dense HWIO
    block-diagonal weight, zero-padded to (3, 3, Cp, Cp)."""
    C, Cg, kh, kw = w.shape
    G = C // Cg
    Cgo = C // G
    dense = jnp.zeros((kh, kw, Cp, Cp), jnp.float32)
    blocks = w.reshape(G, Cgo, Cg, kh, kw)
    for g in range(G):
        blk = jnp.transpose(blocks[g], (2, 3, 1, 0))          # (kh, kw, Cg, Cgo)
        dense = dense.at[:, :, g * Cg:(g + 1) * Cg,
                         g * Cgo:(g + 1) * Cgo].set(blk)
    return dense.reshape(kh * kw * Cp, Cp)


def skconv_forward(x_nchw, params):
    """x_nchw: (N, C, H, W) f32 -> (N, C, H, W) f32."""
    N, C, H, W = x_nchw.shape
    conv_w = params['conv_w']                    # (M, C, C/G, 3, 3)
    M = conv_w.shape[0]
    d = params['fc_w'].shape[1]
    Cp = _round_up(C, LANE)                      # lane-dense channel padding
    P = M                                        # max padding = 1 + (M-1)

    # layout plumbing: NCHW -> NHWC, zero spatial halo + channel pad, bf16 input
    x = jnp.transpose(x_nchw, (0, 2, 3, 1)).astype(jnp.float32)
    x_pad = jnp.pad(x, ((0, 0), (P, P), (P, P), (0, Cp - C))).astype(jnp.bfloat16)

    w_stack = jnp.stack(
        [_expand_grouped_weight(conv_w[m], Cp) for m in range(M)],
        axis=0).astype(jnp.bfloat16)             # (M, 9*Cp, Cp)

    # ---- K1: branch convs + fused per-image BN statistics ------------------
    conv_out, stats = pl.pallas_call(
        _branch_conv_kernel,
        grid=(N,),
        in_specs=[
            pl.BlockSpec((1, H + 2 * P, W + 2 * P, Cp), lambda n: (n, 0, 0, 0)),
            pl.BlockSpec((M, 9 * Cp, Cp), lambda n: (0, 0, 0)),
        ],
        out_specs=(
            pl.BlockSpec((M, H, W, Cp), lambda n: (n, 0, 0, 0)),
            pl.BlockSpec((M, 2, Cp), lambda n: (n, 0, 0)),
        ),
        out_shape=(
            jax.ShapeDtypeStruct((N * M, H, W, Cp), jnp.float32),
            jax.ShapeDtypeStruct((N * M, 2, Cp), jnp.float32),
        ),
        compiler_params=pltpu.CompilerParams(
            dimension_semantics=("parallel",),
            vmem_limit_bytes=32 * 1024 * 1024),
    )(x_pad, w_stack)

    # BN batch statistics -> fused scale / shift (tiny (M, Cp) glue math)
    stats = stats.reshape(N, M, 2, Cp)
    cnt = float(N * H * W)
    mean = jnp.sum(stats[:, :, 0, :], axis=0) / cnt                  # (M, Cp)
    var = jnp.maximum(jnp.sum(stats[:, :, 1, :], axis=0) / cnt - mean * mean, 0.0)
    gamma = jnp.pad(params['bn_gamma'], ((0, 0), (0, Cp - C)))
    beta = jnp.pad(params['bn_beta'], ((0, 0), (0, Cp - C)))
    scale = gamma * jax.lax.rsqrt(var + EPS)                         # (M, Cp)
    shift = beta - mean * scale

    # ---- K2: global average pool of the fused branch activations -----------
    gap3 = pl.pallas_call(
        _gap_kernel,
        grid=(N,),
        in_specs=[
            pl.BlockSpec((M, H, W, Cp), lambda n: (n, 0, 0, 0)),
            pl.BlockSpec((M, Cp), lambda n: (0, 0)),
            pl.BlockSpec((M, Cp), lambda n: (0, 0)),
        ],
        out_specs=pl.BlockSpec((1, 1, Cp), lambda n: (n, 0, 0)),
        out_shape=jax.ShapeDtypeStruct((N, 1, Cp), jnp.float32),
        compiler_params=pltpu.CompilerParams(dimension_semantics=("parallel",)),
    )(conv_out, scale, shift)
    gap = gap3.reshape(N, Cp)

    # ---- K3: attention head (single tiny invocation, all-VMEM) -------------
    wfc_k = jnp.transpose(jnp.pad(params['fc_w'], ((0, Cp - C), (0, 0))))   # (d, Cp)
    gfc = params['fc_gamma'].reshape(1, d)
    bfc = params['fc_beta'].reshape(1, d)
    wfcs_k = jnp.transpose(jnp.pad(params['fcs_w'], ((0, 0), (0, 0), (0, Cp - C))),
                           (0, 2, 1))                                       # (M, Cp, d)
    bfcs_k = jnp.pad(params['fcs_b'], ((0, 0), (0, Cp - C))).reshape(M, 1, Cp)

    vmem = pl.BlockSpec(memory_space=pltpu.MemorySpace.VMEM)
    attn = pl.pallas_call(
        _attention_kernel,
        in_specs=[vmem] * 6,
        out_specs=vmem,
        out_shape=jax.ShapeDtypeStruct((N, M, Cp), jnp.float32),
    )(gap, wfc_k, gfc, bfc, wfcs_k, bfcs_k)

    # ---- K4: attention-weighted fusion of the branches ---------------------
    out_p = pl.pallas_call(
        _select_kernel,
        grid=(N,),
        in_specs=[
            pl.BlockSpec((M, H, W, Cp), lambda n: (n, 0, 0, 0)),
            pl.BlockSpec((M, Cp), lambda n: (0, 0)),
            pl.BlockSpec((M, Cp), lambda n: (0, 0)),
            pl.BlockSpec((1, M, Cp), lambda n: (n, 0, 0)),
        ],
        out_specs=pl.BlockSpec((1, H, W, Cp), lambda n: (n, 0, 0, 0)),
        out_shape=jax.ShapeDtypeStruct((N, H, W, Cp), jnp.float32),
        compiler_params=pltpu.CompilerParams(dimension_semantics=("parallel",)),
    )(conv_out, scale, shift, attn)

    return jnp.transpose(out_p[..., :C], (0, 3, 1, 2))


# --------------------------------------------------------------------------- #
# Plain-JAX reference (mirrors the kernel's bf16 MXU operands for the convs)
# --------------------------------------------------------------------------- #
def skconv_reference(x_nchw, params):
    x = jnp.transpose(x_nchw, (0, 2, 3, 1)).astype(jnp.float32)
    conv_w = params['conv_w']
    M, C, Cg, _, _ = conv_w.shape
    G = C // Cg

    def bn2d(y, g, b):
        mu = jnp.mean(y, axis=(0, 1, 2), keepdims=True)
        var = jnp.mean((y - mu) ** 2, axis=(0, 1, 2), keepdims=True)
        return ((y - mu) * jax.lax.rsqrt(var + EPS) * g.reshape(1, 1, 1, -1)
                + b.reshape(1, 1, 1, -1))

    feats = []
    for m in range(M):
        dil = 1 + m
        w_hwio = jnp.transpose(conv_w[m], (2, 3, 1, 0))        # (3, 3, Cg, C)
        y = lax.conv_general_dilated(
            x.astype(jnp.bfloat16), w_hwio.astype(jnp.bfloat16),
            window_strides=(1, 1),
            padding=[(dil, dil), (dil, dil)],
            rhs_dilation=(dil, dil),
            dimension_numbers=('NHWC', 'HWIO', 'NHWC'),
            feature_group_count=G,
            preferred_element_type=jnp.float32)
        feats.append(jnp.maximum(
            bn2d(y, params['bn_gamma'][m], params['bn_beta'][m]), 0.0))

    U = feats[0]
    for m in range(1, M):
        U = U + feats[m]
    S = jnp.mean(U, axis=(1, 2))                               # (N, C)
    z0 = jnp.einsum('nc,cd->nd', S, params['fc_w'],
                    precision=jax.lax.Precision.HIGHEST)       # (N, d)
    mu = jnp.mean(z0, axis=0, keepdims=True)
    var = jnp.mean((z0 - mu) ** 2, axis=0, keepdims=True)
    z = jnp.maximum((z0 - mu) * jax.lax.rsqrt(var + EPS)
                    * params['fc_gamma'][None, :] + params['fc_beta'][None, :],
                    0.0)
    logits = jnp.stack(
        [jnp.einsum('nd,dc->nc', z, params['fcs_w'][m],
                    precision=jax.lax.Precision.HIGHEST) + params['fcs_b'][m][None, :]
         for m in range(M)], axis=1)                           # (N, M, C)
    attn = jax.nn.softmax(logits, axis=1)
    V = feats[0] * attn[:, 0, :][:, None, None, :]
    for m in range(1, M):
        V = V + feats[m] * attn[:, m, :][:, None, None, :]
    return jnp.transpose(V, (0, 3, 1, 2))


def init_params(key, features, M=2, G=32, r=16, L=32):
    d = max(features // r, L)
    Cg = features // G
    keys = jax.random.split(key, 6)
    return {
        'conv_w': jax.random.normal(keys[0], (M, features, Cg, 3, 3),
                                    jnp.float32) * (2.0 / (9 * Cg)) ** 0.5,
        'bn_gamma': 1.0 + 0.1 * jax.random.normal(keys[1], (M, features), jnp.float32),
        'bn_beta': 0.1 * jax.random.normal(keys[2], (M, features), jnp.float32),
        'fc_w': jax.random.normal(keys[3], (features, d), jnp.float32)
                * (2.0 / features) ** 0.5,
        'fc_gamma': jnp.ones((d,), jnp.float32),
        'fc_beta': jnp.zeros((d,), jnp.float32),
        'fcs_w': jax.random.normal(keys[4], (M, d, features), jnp.float32)
                 * (2.0 / d) ** 0.5,
        'fcs_b': 0.1 * jax.random.normal(keys[5], (M, features), jnp.float32),
    }


if __name__ == "__main__":
    key = jax.random.PRNGKey(0)
    kx, kp = jax.random.split(key)

    # features must be divisible by the default G=32 groups; d = max(64//16, 32) = 32
    N, features, H, W = 2, 64, 16, 16
    x = jax.random.normal(kx, (N, features, H, W), jnp.float32)
    params = init_params(kp, features, M=2, G=32, r=16, L=32)

    out = jax.block_until_ready(skconv_forward(x, params))
    ref = jax.block_until_ready(skconv_reference(x, params))

    assert out.shape == (N, features, H, W), out.shape
    err = float(jnp.max(jnp.abs(out - ref)))
    assert jnp.allclose(out, ref, rtol=2e-3, atol=2e-3), err
    print("KERNEL_OK")
</pallas_src>

<mosaic_0001>
module attributes {stable_mosaic.version = 11 : i64} {
  func.func @_branch_conv_kernel(%arg0: i32, %arg1: memref<1x20x20x128xbf16, #tpu.memory_space<vmem>>, %arg2: memref<2x1152x128xbf16, #tpu.memory_space<vmem>>, %arg3: memref<2x16x16x128xf32, #tpu.memory_space<vmem>>, %arg4: memref<2x2x128xf32, #tpu.memory_space<vmem>>) attributes {dimension_semantics = [#tpu.dimension_semantics<parallel>], iteration_bounds = array<i64: 2>, scalar_prefetch = 0 : i64, scratch_operands = 0 : i64, tpu.core_type = #tpu.core_type<tc>, window_params = [{transform_indices = @transform_0, window_bounds = array<i64: 1, 20, 20, 128>}, {pipeline_mode = #tpu.pipeline_mode<synchronous>, transform_indices = @transform_1, window_bounds = array<i64: 2, 1152, 128>}, {transform_indices = @transform_2, window_bounds = array<i64: 2, 16, 16, 128>}, {transform_indices = @transform_3, window_bounds = array<i64: 2, 2, 128>}]} {
    %c0 = arith.constant 0 : index
    %c1 = arith.constant 1 : index
    %c1_0 = arith.constant 1 : index
    %c0_1 = arith.constant 0 : index
    %0 = vector.load %arg1[%c0, %c1, %c1_0, %c0_1] : memref<1x20x20x128xbf16, #tpu.memory_space<vmem>>, vector<1x16x16x128xbf16>
    %1 = vector.shape_cast %0 : vector<1x16x16x128xbf16> to vector<16x16x128xbf16>
    %c0_2 = arith.constant 0 : index
    %c1_3 = arith.constant 1 : index
    %c2 = arith.constant 2 : index
    %c0_4 = arith.constant 0 : index
    %2 = vector.load %arg1[%c0_2, %c1_3, %c2, %c0_4] : memref<1x20x20x128xbf16, #tpu.memory_space<vmem>>, vector<1x16x16x128xbf16>
    %3 = vector.shape_cast %2 : vector<1x16x16x128xbf16> to vector<16x16x128xbf16>
    %c0_5 = arith.constant 0 : index
    %c1_6 = arith.constant 1 : index
    %c3 = arith.constant 3 : index
    %c0_7 = arith.constant 0 : index
    %4 = vector.load %arg1[%c0_5, %c1_6, %c3, %c0_7] : memref<1x20x20x128xbf16, #tpu.memory_space<vmem>>, vector<1x16x16x128xbf16>
    %5 = vector.shape_cast %4 : vector<1x16x16x128xbf16> to vector<16x16x128xbf16>
    %c0_8 = arith.constant 0 : index
    %c2_9 = arith.constant 2 : index
    %c1_10 = arith.constant 1 : index
    %c0_11 = arith.constant 0 : index
    %6 = vector.load %arg1[%c0_8, %c2_9, %c1_10, %c0_11] : memref<1x20x20x128xbf16, #tpu.memory_space<vmem>>, vector<1x16x16x128xbf16>
    %7 = vector.shape_cast %6 : vector<1x16x16x128xbf16> to vector<16x16x128xbf16>
    %c0_12 = arith.constant 0 : index
    %c2_13 = arith.constant 2 : index
    %c2_14 = arith.constant 2 : index
    %c0_15 = arith.constant 0 : index
    %8 = vector.load %arg1[%c0_12, %c2_13, %c2_14, %c0_15] : memref<1x20x20x128xbf16, #tpu.memory_space<vmem>>, vector<1x16x16x128xbf16>
    %9 = vector.shape_cast %8 : vector<1x16x16x128xbf16> to vector<16x16x128xbf16>
    %c0_16 = arith.constant 0 : index
    %c2_17 = arith.constant 2 : index
    %c3_18 = arith.constant 3 : index
    %c0_19 = arith.constant 0 : index
    %10 = vector.load %arg1[%c0_16, %c2_17, %c3_18, %c0_19] : memref<1x20x20x128xbf16, #tpu.memory_space<vmem>>, vector<1x16x16x128xbf16>
    %11 = vector.shape_cast %10 : vector<1x16x16x128xbf16> to vector<16x16x128xbf16>
    %c0_20 = arith.constant 0 : index
    %c3_21 = arith.constant 3 : index
    %c1_22 = arith.constant 1 : index
    %c0_23 = arith.constant 0 : index
    %12 = vector.load %arg1[%c0_20, %c3_21, %c1_22, %c0_23] : memref<1x20x20x128xbf16, #tpu.memory_space<vmem>>, vector<1x16x16x128xbf16>
    %13 = vector.shape_cast %12 : vector<1x16x16x128xbf16> to vector<16x16x128xbf16>
    %c0_24 = arith.constant 0 : index
    %c3_25 = arith.constant 3 : index
    %c2_26 = arith.constant 2 : index
    %c0_27 = arith.constant 0 : index
    %14 = vector.load %arg1[%c0_24, %c3_25, %c2_26, %c0_27] : memref<1x20x20x128xbf16, #tpu.memory_space<vmem>>, vector<1x16x16x128xbf16>
    %15 = vector.shape_cast %14 : vector<1x16x16x128xbf16> to vector<16x16x128xbf16>
    %c0_28 = arith.constant 0 : index
    %c3_29 = arith.constant 3 : index
    %c3_30 = arith.constant 3 : index
    %c0_31 = arith.constant 0 : index
    %16 = vector.load %arg1[%c0_28, %c3_29, %c3_30, %c0_31] : memref<1x20x20x128xbf16, #tpu.memory_space<vmem>>, vector<1x16x16x128xbf16>
    %17 = vector.shape_cast %16 : vector<1x16x16x128xbf16> to vector<16x16x128xbf16>
    %18 = tpu.concatenate %1, %3, %5, %7, %9, %11, %13, %15, %17 in 2 : vector<16x16x128xbf16>, vector<16x16x128xbf16>, vector<16x16x128xbf16>, vector<16x16x128xbf16>, vector<16x16x128xbf16>, vector<16x16x128xbf16>, vector<16x16x128xbf16>, vector<16x16x128xbf16>, vector<16x16x128xbf16> -> vector<16x16x1152xbf16>
    %c0_32 = arith.constant 0 : index
    %c0_33 = arith.constant 0 : index
    %c0_34 = arith.constant 0 : index
    %19 = vector.load %arg2[%c0_32, %c0_33, %c0_34] : memref<2x1152x128xbf16, #tpu.memory_space<vmem>>, vector<1x1152x128xbf16>
    %20 = vector.shape_cast %19 : vector<1x1152x128xbf16> to vector<1152x128xbf16>
    "tpu.trace_start"() <{level = 10 : i32, message = "hwk,ko->hwo"}> : () -> ()
    %cst = arith.constant dense<0.000000e+00> : vector<16x16x128xf32>
    %21 = tpu.matmul %18, %20, %cst {dimension_numbers = #tpu.dot_dimension_numbers<[2], [0], [0, 1], [1], [0, 0, 0, 1, 1, 1], [], []>} : vector<16x16x1152xbf16>, vector<1152x128xbf16>, vector<16x16x128xf32> -> vector<16x16x128xf32>
    "tpu.trace_stop"() : () -> ()
    %c0_35 = arith.constant 0 : index
    %c0_36 = arith.constant 0 : index
    %c0_37 = arith.constant 0 : index
    %c0_38 = arith.constant 0 : index
    %22 = vector.load %arg3[%c0_35, %c0_36, %c0_37, %c0_38] : memref<2x16x16x128xf32, #tpu.memory_space<vmem>>, vector<1x16x16x128xf32>
    %23 = vector.shape_cast %22 : vector<1x16x16x128xf32> to vector<16x16x128xf32>
    %24 = vector.shape_cast %21 : vector<16x16x128xf32> to vector<1x16x16x128xf32>
    tpu.vector_store %arg3[%c0_35, %c0_36, %c0_37, %c0_38], %24 {strides = array<i32>} : memref<2x16x16x128xf32, #tpu.memory_space<vmem>>, vector<1x16x16x128xf32>,
    %cst_39 = arith.constant dense<0.000000e+00> : vector<16x128xf32>
    %25 = vector.multi_reduction <add>, %21, %cst_39 [0] : vector<16x16x128xf32> to vector<16x128xf32>
    %cst_40 = arith.constant dense<0.000000e+00> : vector<128xf32>
    %26 = vector.multi_reduction <add>, %25, %cst_40 [0] : vector<16x128xf32> to vector<128xf32>
    %27 = vector.shape_cast %26 : vector<128xf32> to vector<1x128xf32>
    %28 = arith.mulf %21, %21 : vector<16x16x128xf32>
    %cst_41 = arith.constant dense<0.000000e+00> : vector<16x128xf32>
    %29 = vector.multi_reduction <add>, %28, %cst_41 [0] : vector<16x16x128xf32> to vector<16x128xf32>
    %cst_42 = arith.constant dense<0.000000e+00> : vector<128xf32>
    %30 = vector.multi_reduction <add>, %29, %cst_42 [0] : vector<16x128xf32> to vector<128xf32>
    %31 = vector.shape_cast %30 : vector<128xf32> to vector<1x128xf32>
    %c0_43 = arith.constant 0 : index
    %c0_44 = arith.constant 0 : index
    %c0_45 = arith.constant 0 : index
    %32 = vector.load %arg4[%c0_43, %c0_44, %c0_45] : memref<2x2x128xf32, #tpu.memory_space<vmem>>, vector<1x1x128xf32>
    %33 = vector.shape_cast %32 : vector<1x1x128xf32> to vector<1x128xf32>
    %34 = vector.shape_cast %27 : vector<1x128xf32> to vector<1x1x128xf32>
    tpu.vector_store %arg4[%c0_43, %c0_44, %c0_45], %34 {strides = array<i32>} : memref<2x2x128xf32, #tpu.memory_space<vmem>>, vector<1x1x128xf32>,
    %c0_46 = arith.constant 0 : index
    %c1_47 = arith.constant 1 : index
    %c0_48 = arith.constant 0 : index
    %35 = vector.load %arg4[%c0_46, %c1_47, %c0_48] : memref<2x2x128xf32, #tpu.memory_space<vmem>>, vector<1x1x128xf32>
    %36 = vector.shape_cast %35 : vector<1x1x128xf32> to vector<1x128xf32>
    %37 = vector.shape_cast %31 : vector<1x128xf32> to vector<1x1x128xf32>
    tpu.vector_store %arg4[%c0_46, %c1_47, %c0_48], %37 {strides = array<i32>} : memref<2x2x128xf32, #tpu.memory_space<vmem>>, vector<1x1x128xf32>,
    %c0_49 = arith.constant 0 : index
    %c0_50 = arith.constant 0 : index
    %c0_51 = arith.constant 0 : index
    %c0_52 = arith.constant 0 : index
    %38 = vector.load %arg1[%c0_49, %c0_50, %c0_51, %c0_52] : memref<1x20x20x128xbf16, #tpu.memory_space<vmem>>, vector<1x16x16x128xbf16>
    %39 = vector.shape_cast %38 : vector<1x16x16x128xbf16> to vector<16x16x128xbf16>
    %c0_53 = arith.constant 0 : index
    %c0_54 = arith.constant 0 : index
    %c2_55 = arith.constant 2 : index
    %c0_56 = arith.constant 0 : index
    %40 = vector.load %arg1[%c0_53, %c0_54, %c2_55, %c0_56] : memref<1x20x20x128xbf16, #tpu.memory_space<vmem>>, vector<1x16x16x128xbf16>
    %41 = vector.shape_cast %40 : vector<1x16x16x128xbf16> to vector<16x16x128xbf16>
    %c0_57 = arith.constant 0 : index
    %c0_58 = arith.constant 0 : index
    %c4 = arith.constant 4 : index
    %c0_59 = arith.constant 0 : index
    %42 = vector.load %arg1[%c0_57, %c0_58, %c4, %c0_59] : memref<1x20x20x128xbf16, #tpu.memory_space<vmem>>, vector<1x16x16x128xbf16>
    %43 = vector.shape_cast %42 : vector<1x16x16x128xbf16> to vector<16x16x128xbf16>
    %c0_60 = arith.constant 0 : index
    %c2_61 = arith.constant 2 : index
    %c0_62 = arith.constant 0 : index
    %c0_63 = arith.constant 0 : index
    %44 = vector.load %arg1[%c0_60, %c2_61, %c0_62, %c0_63] : memref<1x20x20x128xbf16, #tpu.memory_space<vmem>>, vector<1x16x16x128xbf16>
    %45 = vector.shape_cast %44 : vector<1x16x16x128xbf16> to vector<16x16x128xbf16>
    %c0_64 = arith.constant 0 : index
    %c2_65 = arith.constant 2 : index
    %c2_66 = arith.constant 2 : index
    %c0_67 = arith.constant 0 : index
    %46 = vector.load %arg1[%c0_64, %c2_65, %c2_66, %c0_67] : memref<1x20x20x128xbf16, #tpu.memory_space<vmem>>, vector<1x16x16x128xbf16>
    %47 = vector.shape_cast %46 : vector<1x16x16x128xbf16> to vector<16x16x128xbf16>
    %c0_68 = arith.constant 0 : index
    %c2_69 = arith.constant 2 : index
    %c4_70 = arith.constant 4 : index
    %c0_71 = arith.constant 0 : index
    %48 = vector.load %arg1[%c0_68, %c2_69, %c4_70, %c0_71] : memref<1x20x20x128xbf16, #tpu.memory_space<vmem>>, vector<1x16x16x128xbf16>
    %49 = vector.shape_cast %48 : vector<1x16x16x128xbf16> to vector<16x16x128xbf16>
    %c0_72 = arith.constant 0 : index
    %c4_73 = arith.constant 4 : index
    %c0_74 = arith.constant 0 : index
    %c0_75 = arith.constant 0 : index
    %50 = vector.load %arg1[%c0_72, %c4_73, %c0_74, %c0_75] : memref<1x20x20x128xbf16, #tpu.memory_space<vmem>>, vector<1x16x16x128xbf16>
    %51 = vector.shape_cast %50 : vector<1x16x16x128xbf16> to vector<16x16x128xbf16>
    %c0_76 = arith.constant 0 : index
    %c4_77 = arith.constant 4 : index
    %c2_78 = arith.constant 2 : index
    %c0_79 = arith.constant 0 : index
    %52 = vector.load %arg1[%c0_76, %c4_77, %c2_78, %c0_79] : memref<1x20x20x128xbf16, #tpu.memory_space<vmem>>, vector<1x16x16x128xbf16>
    %53 = vector.shape_cast %52 : vector<1x16x16x128xbf16> to vector<16x16x128xbf16>
    %c0_80 = arith.constant 0 : index
    %c4_81 = arith.constant 4 : index
    %c4_82 = arith.constant 4 : index
    %c0_83 = arith.constant 0 : index
    %54 = vector.load %arg1[%c0_80, %c4_81, %c4_82, %c0_83] : memref<1x20x20x128xbf16, #tpu.memory_space<vmem>>, vector<1x16x16x128xbf16>
    %55 = vector.shape_cast %54 : vector<1x16x16x128xbf16> to vector<16x16x128xbf16>
    %56 = tpu.concatenate %39, %41, %43, %45, %47, %49, %51, %53, %55 in 2 : vector<16x16x128xbf16>, vector<16x16x128xbf16>, vector<16x16x128xbf16>, vector<16x16x128xbf16>, vector<16x16x128xbf16>, vector<16x16x128xbf16>, vector<16x16x128xbf16>, vector<16x16x128xbf16>, vector<16x16x128xbf16> -> vector<16x16x1152xbf16>
    %c1_84 = arith.constant 1 : index
    %c0_85 = arith.constant 0 : index
    %c0_86 = arith.constant 0 : index
    %57 = vector.load %arg2[%c1_84, %c0_85, %c0_86] : memref<2x1152x128xbf16, #tpu.memory_space<vmem>>, vector<1x1152x128xbf16>
    %58 = vector.shape_cast %57 : vector<1x1152x128xbf16> to vector<1152x128xbf16>
    "tpu.trace_start"() <{level = 10 : i32, message = "hwk,ko->hwo"}> : () -> ()
    %cst_87 = arith.constant dense<0.000000e+00> : vector<16x16x128xf32>
    %59 = tpu.matmul %56, %58, %cst_87 {dimension_numbers = #tpu.dot_dimension_numbers<[2], [0], [0, 1], [1], [0, 0, 0, 1, 1, 1], [], []>} : vector<16x16x1152xbf16>, vector<1152x128xbf16>, vector<16x16x128xf32> -> vector<16x16x128xf32>
    "tpu.trace_stop"() : () -> ()
    %c1_88 = arith.constant 1 : index
    %c0_89 = arith.constant 0 : index
    %c0_90 = arith.constant 0 : index
    %c0_91 = arith.constant 0 : index
    %60 = vector.load %arg3[%c1_88, %c0_89, %c0_90, %c0_91] : memref<2x16x16x128xf32, #tpu.memory_space<vmem>>, vector<1x16x16x128xf32>
    %61 = vector.shape_cast %60 : vector<1x16x16x128xf32> to vector<16x16x128xf32>
    %62 = vector.shape_cast %59 : vector<16x16x128xf32> to vector<1x16x16x128xf32>
    tpu.vector_store %arg3[%c1_88, %c0_89, %c0_90, %c0_91], %62 {strides = array<i32>} : memref<2x16x16x128xf32, #tpu.memory_space<vmem>>, vector<1x16x16x128xf32>,
    %cst_92 = arith.constant dense<0.000000e+00> : vector<16x128xf32>
    %63 = vector.multi_reduction <add>, %59, %cst_92 [0] : vector<16x16x128xf32> to vector<16x128xf32>
    %cst_93 = arith.constant dense<0.000000e+00> : vector<128xf32>
    %64 = vector.multi_reduction <add>, %63, %cst_93 [0] : vector<16x128xf32> to vector<128xf32>
    %65 = vector.shape_cast %64 : vector<128xf32> to vector<1x128xf32>
    %66 = arith.mulf %59, %59 : vector<16x16x128xf32>
    %cst_94 = arith.constant dense<0.000000e+00> : vector<16x128xf32>
    %67 = vector.multi_reduction <add>, %66, %cst_94 [0] : vector<16x16x128xf32> to vector<16x128xf32>
    %cst_95 = arith.constant dense<0.000000e+00> : vector<128xf32>
    %68 = vector.multi_reduction <add>, %67, %cst_95 [0] : vector<16x128xf32> to vector<128xf32>
    %69 = vector.shape_cast %68 : vector<128xf32> to vector<1x128xf32>
    %c1_96 = arith.constant 1 : index
    %c0_97 = arith.constant 0 : index
    %c0_98 = arith.constant 0 : index
    %70 = vector.load %arg4[%c1_96, %c0_97, %c0_98] : memref<2x2x128xf32, #tpu.memory_space<vmem>>, vector<1x1x128xf32>
    %71 = vector.shape_cast %70 : vector<1x1x128xf32> to vector<1x128xf32>
    %72 = vector.shape_cast %65 : vector<1x128xf32> to vector<1x1x128xf32>
    tpu.vector_store %arg4[%c1_96, %c0_97, %c0_98], %72 {strides = array<i32>} : memref<2x2x128xf32, #tpu.memory_space<vmem>>, vector<1x1x128xf32>,
    %c1_99 = arith.constant 1 : index
    %c1_100 = arith.constant 1 : index
    %c0_101 = arith.constant 0 : index
    %73 = vector.load %arg4[%c1_99, %c1_100, %c0_101] : memref<2x2x128xf32, #tpu.memory_space<vmem>>, vector<1x1x128xf32>
    %74 = vector.shape_cast %73 : vector<1x1x128xf32> to vector<1x128xf32>
    %75 = vector.shape_cast %69 : vector<1x128xf32> to vector<1x1x128xf32>
    tpu.vector_store %arg4[%c1_99, %c1_100, %c0_101], %75 {strides = array<i32>} : memref<2x2x128xf32, #tpu.memory_space<vmem>>, vector<1x1x128xf32>,
    return
  }
  func.func @transform_0(%arg0: i32) -> (i32, i32, i32, i32) {
    %c0_i32 = arith.constant 0 : i32
    %c0_i32_0 = arith.constant 0 : i32
    %c0_i32_1 = arith.constant 0 : i32
    %c0_i32_2 = arith.constant 0 : i32
    return %arg0, %c0_i32, %c0_i32_0, %c0_i32_1 : i32, i32, i32, i32
  }
  func.func @transform_1(%arg0: i32) -> (i32, i32, i32) {
    %c0_i32 = arith.constant 0 : i32
    %c0_i32_0 = arith.constant 0 : i32
    %c0_i32_1 = arith.constant 0 : i32
    %c0_i32_2 = arith.constant 0 : i32
    return %c0_i32, %c0_i32_0, %c0_i32_1 : i32, i32, i32
  }
  func.func @transform_2(%arg0: i32) -> (i32, i32, i32, i32) {
    %c0_i32 = arith.constant 0 : i32
    %c0_i32_0 = arith.constant 0 : i32
    %c0_i32_1 = arith.constant 0 : i32
    %c0_i32_2 = arith.constant 0 : i32
    return %arg0, %c0_i32, %c0_i32_0, %c0_i32_1 : i32, i32, i32, i32
  }
  func.func @transform_3(%arg0: i32) -> (i32, i32, i32) {
    %c0_i32 = arith.constant 0 : i32
    %c0_i32_0 = arith.constant 0 : i32
    %c0_i32_1 = arith.constant 0 : i32
    return %arg0, %c0_i32, %c0_i32_0 : i32, i32, i32
  }
}

</mosaic_0001>

<llo_original>
// kernel: tpu_custom_call.1
$region0: #{tpu_custom_call.1}
  #allocation0 [shape = 'u32[]', space=smem, size = 0x4, offset = 0x4, fixed_abs, tag = 'smem constant byte address 0x4 - core index']
  #allocation1 [shape = 'u32[144,128]{1,0:T(1,128)}', space=vmem, size = 0x12000, scoped, tag = 'internal scratch']
  %s0 = inlined_call_operand.vmem [shape: bf16[2,20,20,128], index: 0, kind: input, shape index: {}]
  %s1 = inlined_call_operand.hbm [shape: bf16[2,1152,128], index: 1, kind: input, shape index: {}]
  %s2 = inlined_call_operand.hbm [shape: f32[4,16,16,128], index: 2, kind: output, shape index: {0}]
  %s3 = inlined_call_operand.hbm [shape: f32[4,2,128], index: 3, kind: output, shape index: {1}]
  %4 = xla_tuple %s2, %s3
  %s5 = sld [smem:[#allocation0]]
  $region53: #{tpu_custom_call.1} parent=0
    _
  %s7 = ssub.s32 1, %s5
  %s8 = scalar_select 0, %s7, %s5
  $region1: #{tpu_custom_call.1} parent=0
    #allocation2 [shape = 'u8[589824]{0}', space=vmem, size = 0x90000, scoped, tag = 'input window, operand 1, single buffered']
    #allocation3 [shape = 's32[2]{0}', space=sflag, size = 0x8, scoped, tag = 'scoped memory for tpu_custom_call.1']
    #allocation4 [shape = 's32[2]{0}', space=sflag, size = 0x8, scoped, tag = 'scoped memory for tpu_custom_call.1']
    #allocation5 [shape = 'u8[524288]{0}', space=vmem, size = 0x80000, scoped, tag = 'output window, operand 0']
    #allocation6 [shape = 'u8[4096]{0}', space=vmem, size = 0x1000, scoped, tag = 'output window, operand 1']
    #allocation7 [shape = 's32[2]{0}', space=sflag, size = 0x8, scoped, tag = 'scoped memory for tpu_custom_call.1']
    %9 = vsyncpa [#allocation3], 0
    %10 = vsyncpa [#allocation4], 0
    %s11 = scalar_lea.sflag [#allocation4], 1
    %12 = vsyncpa %s11, 0
    %13 = vsyncpa [#allocation7], 0
    %s14 = scalar_lea.sflag [#allocation7], 1
    %15 = vsyncpa %s14, 0
    loop: start=0, step=1, limit=4
    $region2: #{tpu_custom_call.1} parent=1 // loop_pre_header
      _
    $region3: #{tpu_custom_call.1} parent=1 // loop_header
      %s17 = sphi 0, %s21
      %p18 = scmp.ge.s32.totalorder %s17, 4
      %s27 = sphi 0, %s29
      %s30 = sphi 0, %s27
      %s31 = sphi 0, %s30
      %s47 = sphi 0, %s31
      %s51 = sphi 0, %s51
      %s53 = sphi 0, %s51
      %s54 = sphi 0, %s53
      %s68 = sphi 0, %s54
      %s74 = sphi 0, %s76
      %s77 = sphi 0, %s74
      %s78 = sphi 0, %s77
      %s94 = sphi 0, %s78
      %s100 = sphi 0, %s102
      %s103 = sphi 0, %s100
      %s104 = sphi 0, %s103
      %s120 = sphi 0, %s104
    $region4: #{tpu_custom_call.1} parent=1 // loop_header_branch
      %20 = sbr.rel (%p18) target = $region8
    $region5: #{tpu_custom_call.1} parent=1 // loop_body
      %s22 = ssub.s32 %s17, 1
      %s23 = ssub.s32 %s17, 2
      %s24 = sadd.s32 %s17, 1
      %s25 = ssub.s32 %s17, %s24
      %p26 = scmp.eq.s32.totalorder %s25, 0
      %s28 = sadd.s32 %s27, 1
      %s29 = scalar_select %p26, %s27, %s28
      %p32 = pneg %p26
      %p33 = scmp.eq.s32.totalorder %s17, 1
      %p34 = por %p32, %p33
      %p35 = scmp.ne.s32.totalorder %s27, %s30
      %p36 = scmp.eq.s32.totalorder %s17, 0
      %p37 = por %p35, %p36
      %p38 = scmp.ne.s32.totalorder %s27, %s30
      %p39 = scmp.eq.s32.totalorder %s22, 1
      %p40 = por %p38, %p39
      %p41 = scmp.ne.s32.totalorder %s30, %s31
      %p42 = scmp.eq.s32.totalorder %s22, 0
      %p43 = por %p41, %p42
      %p44 = scmp.ne.s32.totalorder %s30, %s31
      %p45 = scmp.eq.s32.totalorder %s23, 1
      %p46 = por %p44, %p45
      %p48 = scmp.ne.s32.totalorder %s31, %s47
      %p49 = scmp.eq.s32.totalorder %s23, 0
      %p50 = por %p48, %p49
      %s52 = sadd.s32 %s51, 1
      %p55 = scmp.eq.s32.totalorder %s17, 1
      %p56 = scmp.ne.s32.totalorder %s51, %s53
      %p57 = scmp.eq.s32.totalorder %s17, 0
      %p58 = por %p56, %p57
      %p59 = scmp.ne.s32.totalorder %s51, %s53
      %p60 = scmp.eq.s32.totalorder %s22, 1
      %p61 = por %p59, %p60
      %p62 = scmp.ne.s32.totalorder %s53, %s54
      %p63 = scmp.eq.s32.totalorder %s22, 0
      %p64 = por %p62, %p63
      %p65 = scmp.ne.s32.totalorder %s53, %s54
      %p66 = scmp.eq.s32.totalorder %s23, 1
      %p67 = por %p65, %p66
      %p69 = scmp.ne.s32.totalorder %s54, %s68
      %p70 = scmp.eq.s32.totalorder %s23, 0
      %p71 = por %p69, %p70
      %s72 = ssub.s32 %s17, %s24
      %p73 = scmp.eq.s32.totalorder %s72, 0
      %s75 = sadd.s32 %s74, 1
      %s76 = scalar_select %p73, %s74, %s75
      %p79 = pneg %p73
      %p80 = scmp.eq.s32.totalorder %s17, 1
      %p81 = por %p79, %p80
      %p82 = scmp.ne.s32.totalorder %s74, %s77
      %p83 = scmp.eq.s32.totalorder %s17, 0
      %p84 = por %p82, %p83
      %p85 = scmp.ne.s32.totalorder %s74, %s77
      %p86 = scmp.eq.s32.totalorder %s22, 1
      %p87 = por %p85, %p86
      %p88 = scmp.ne.s32.totalorder %s77, %s78
      %p89 = scmp.eq.s32.totalorder %s22, 0
      %p90 = por %p88, %p89
      %p91 = scmp.ne.s32.totalorder %s77, %s78
      %p92 = scmp.eq.s32.totalorder %s23, 1
      %p93 = por %p91, %p92
      %p95 = scmp.ne.s32.totalorder %s78, %s94
      %p96 = scmp.eq.s32.totalorder %s23, 0
      %p97 = por %p95, %p96
      %s98 = ssub.s32 %s17, %s24
      %p99 = scmp.eq.s32.totalorder %s98, 0
      %s101 = sadd.s32 %s100, 1
      %s102 = scalar_select %p99, %s100, %s101
      %p105 = pneg %p99
      %p106 = scmp.eq.s32.totalorder %s17, 1
      %p107 = por %p105, %p106
      %p108 = scmp.ne.s32.totalorder %s100, %s103
      %p109 = scmp.eq.s32.totalorder %s17, 0
      %p110 = por %p108, %p109
      %p111 = scmp.ne.s32.totalorder %s100, %s103
      %p112 = scmp.eq.s32.totalorder %s22, 1
      %p113 = por %p111, %p112
      %p114 = scmp.ne.s32.totalorder %s103, %s104
      %p115 = scmp.eq.s32.totalorder %s22, 0
      %p116 = por %p114, %p115
      %p117 = scmp.ne.s32.totalorder %s103, %s104
      %p118 = scmp.eq.s32.totalorder %s23, 1
      %p119 = por %p117, %p118
      %p121 = scmp.ne.s32.totalorder %s104, %s120
      %p122 = scmp.eq.s32.totalorder %s23, 0
      %p123 = por %p121, %p122
      %p124 = scmp.le.s32.totalorder 1, %s17
      %p125 = scmp.lt.s32.totalorder %s17, 3
      %p126 = pnand %p124, %p125
      %p127 = pneg %p126
      // Predicated region
      $region9: #{tpu_custom_call.1} parent=5 // pred_check
        _
      $region10: #{tpu_custom_call.1} parent=5 // pred_check_branch
        %129 = sbr.rel (%p126) target = $region12
      $region11: #{tpu_custom_call.1} parent=5 // pred_region
        %s130 = ssub.s32 %s17, 1
        // Predicated region
        $region13: #{tpu_custom_call.1} parent=11 // pred_check
          %p131 = pneg %p64
        $region14: #{tpu_custom_call.1} parent=11 // pred_check_branch
          %133 = sbr.rel (%p131) target = $region16
        $region15: #{tpu_custom_call.1} parent=11 // pred_region
          %s135 = ssub.s32 18432, 18432
          %136 = vsyncadd [#allocation3], %s135
          %s137 = sshll.u32 [#allocation2], 4
          %s138 = int_to_ptr.vmem [resolvable:$true] %s137
          %143 = dma.hbm_to_vmem [thread:$0]  %s1, 18432, %s138, [#allocation3], 64, 64, 4
        $region16: #{tpu_custom_call.1} parent=11 // pred_fallthru
          _
      $region12: #{tpu_custom_call.1} parent=5 // pred_fallthru
        _
      %p144 = scmp.lt.s32.totalorder %s17, 2
      // Predicated region
      $region17: #{tpu_custom_call.1} parent=5 // pred_check
        %p145 = pneg %p144
      $region18: #{tpu_custom_call.1} parent=5 // pred_check_branch
        %147 = sbr.rel (%p145) target = $region20
      $region19: #{tpu_custom_call.1} parent=5 // pred_region
        // Predicated region
        $region21: #{tpu_custom_call.1} parent=19 // pred_check
          %p148 = pneg %p37
        $region22: #{tpu_custom_call.1} parent=19 // pred_check_branch
          %150 = sbr.rel (%p148) target = $region24
        $region23: #{tpu_custom_call.1} parent=19 // pred_region
          %p151 = scmp.lt.s32.totalorder %s17, 1
          %s152 = scalar_select %p151, %s17, 1
          %s153 = smul.addr %s152, 60
          %s154 = smul.addr %s153, 4
          %s155 = scalar_lea.vmem %s0, %s154
        $region24: #{tpu_custom_call.1} parent=19 // pred_fallthru
          _
      $region20: #{tpu_custom_call.1} parent=5 // pred_fallthru
        _
      %p156 = scmp.le.s32.totalorder 1, %s17
      %p157 = scmp.lt.s32.totalorder %s17, 3
      %p158 = pnand %p156, %p157
      %p159 = pneg %p158
      // Predicated region
      $region25: #{tpu_custom_call.1} parent=5 // pred_check
        _
      $region26: #{tpu_custom_call.1} parent=5 // pred_check_branch
        %161 = sbr.rel (%p158) target = $region28
      $region27: #{tpu_custom_call.1} parent=5 // pred_region
        %s162 = ssub.s32 %s17, 1
        // Predicated region
        $region29: #{tpu_custom_call.1} parent=27 // pred_check
          %p163 = pneg %p64
        $region30: #{tpu_custom_call.1} parent=27 // pred_check_branch
          %165 = sbr.rel (%p163) target = $region32
        $region31: #{tpu_custom_call.1} parent=27 // pred_region
          %166 = dma.done [#allocation3], 18432
        $region32: #{tpu_custom_call.1} parent=27 // pred_fallthru
          _
        %p167 = scmp.lt.s32.totalorder %s22, 1
        %s168 = scalar_select %p167, %s22, 1
        %s169 = smul.addr %s168, 60
        %s170 = smul.addr %s169, 4
        %s171 = scalar_lea.vmem %s0, %s170
        %p172 = pneg %p43
        %p173 = pneg %p40
        %p174 = pneg %p64
        %p175 = pneg %p61
        %p176 = pneg %p90
        %p177 = pneg %p87
        %s178 = sand.u32 %s77, 1
        %s179 = scalar_lea.sflag [#allocation4], %s178
        %s180 = sand.u32 %s77, 1
        %s181 = smul.addr %s180, 512
        %s182 = scalar_lea.vmem [#allocation5], %s181
        %p183 = pneg %p116
        %p184 = pneg %p113
        %s185 = sand.u32 %s103, 1
        %s186 = scalar_lea.sflag [#allocation7], %s185
        %s187 = sand.u32 %s103, 1
        %s188 = smul.addr %s187, 4
        %s189 = scalar_lea.vmem [#allocation6], %s188
        %p190 = scmp.lt.s32.totalorder %s22, 1
        %s191 = scalar_select %p190, %s22, 1
        %s192 = smul.addr %s191, 60
        %s193 = smul.addr %s192, 4
        %s194 = scalar_lea.vmem %s0, %s193
        %s195 = smul.u32 2, %s22
        %s196 = smul.u32 2, %s22
        %s198 = scalar_lea.vmem %s194, 12
        %v199 = vld [vmem:[%s198] sm:$0xf]
        %v200 = vld [vmem:[%s198 + $0x4] sm:$0xf]
        %v201 = vld [vmem:[%s198 + $0x8] sm:$0x1]
        %v202 = vld [vmem:[%s198 + $0xc] sm:$0xf]
        %v203 = vld [vmem:[%s198 + $0x10] sm:$0xf]
        %v204 = vld [vmem:[%s198 + $0x14] sm:$0x1]
        %v205 = vld [vmem:[%s198 + $0x18] sm:$0xf]
        %v206 = vld [vmem:[%s198 + $0x1c] sm:$0xf]
        %v207 = vld [vmem:[%s198 + $0x20] sm:$0x1]
        %v208 = vld [vmem:[%s198 + $0x24] sm:$0xf]
        %v209 = vld [vmem:[%s198 + $0x28] sm:$0xf]
        %v210 = vld [vmem:[%s198 + $0x2c] sm:$0x1]
        %v211 = vld [vmem:[%s198 + $0x30] sm:$0xf]
        %v212 = vld [vmem:[%s198 + $0x34] sm:$0xf]
        %v213 = vld [vmem:[%s198 + $0x38] sm:$0x1]
        %v214 = vld [vmem:[%s198 + $0x3c] sm:$0xf]
        %v215 = vld [vmem:[%s198 + $0x40] sm:$0xf]
        %v216 = vld [vmem:[%s198 + $0x44] sm:$0x1]
        %v217 = vld [vmem:[%s198 + $0x48] sm:$0xf]
        %v218 = vld [vmem:[%s198 + $0x4c] sm:$0xf]
        %v219 = vld [vmem:[%s198 + $0x50] sm:$0x1]
        %v220 = vld [vmem:[%s198 + $0x54] sm:$0xf]
        %v221 = vld [vmem:[%s198 + $0x58] sm:$0xf]
        %v222 = vld [vmem:[%s198 + $0x5c] sm:$0x1]
        %v223 = vld [vmem:[%s198 + $0x60] sm:$0xf]
        %v224 = vld [vmem:[%s198 + $0x64] sm:$0xf]
        %v225 = vld [vmem:[%s198 + $0x68] sm:$0x1]
        %v226 = vld [vmem:[%s198 + $0x6c] sm:$0xf]
        %v227 = vld [vmem:[%s198 + $0x70] sm:$0xf]
        %v228 = vld [vmem:[%s198 + $0x74] sm:$0x1]
        %v229 = vld [vmem:[%s198 + $0x78] sm:$0xf]
        %v230 = vld [vmem:[%s198 + $0x7c] sm:$0xf]
        %v231 = vld [vmem:[%s198 + $0x80] sm:$0x1]
        %v232 = vld [vmem:[%s198 + $0x84] sm:$0xf]
        %v233 = vld [vmem:[%s198 + $0x88] sm:$0xf]
        %v234 = vld [vmem:[%s198 + $0x8c] sm:$0x1]
        %v235 = vld [vmem:[%s198 + $0x90] sm:$0xf]
        %v236 = vld [vmem:[%s198 + $0x94] sm:$0xf]
        %v237 = vld [vmem:[%s198 + $0x98] sm:$0x1]
        %v238 = vld [vmem:[%s198 + $0x9c] sm:$0xf]
        %v239 = vld [vmem:[%s198 + $0xa0] sm:$0xf]
        %v240 = vld [vmem:[%s198 + $0xa4] sm:$0x1]
        %v241 = vld [vmem:[%s198 + $0xa8] sm:$0xf]
        %v242 = vld [vmem:[%s198 + $0xac] sm:$0xf]
        %v243 = vld [vmem:[%s198 + $0xb0] sm:$0x1]
        %v244 = vld [vmem:[%s198 + $0xb4] sm:$0xf]
        %v245 = vld [vmem:[%s198 + $0xb8] sm:$0xf]
        %v246 = vld [vmem:[%s198 + $0xbc] sm:$0x1]
        %v247 = vld [vmem:[%s198] sm:$0xe]
        %v248 = vld [vmem:[%s198 + $0xc] sm:$0xe]
        %v249 = vld [vmem:[%s198 + $0x18] sm:$0xe]
        %v250 = vld [vmem:[%s198 + $0x24] sm:$0xe]
        %v251 = vld [vmem:[%s198 + $0x30] sm:$0xe]
        %v252 = vld [vmem:[%s198 + $0x3c] sm:$0xe]
        %v253 = vld [vmem:[%s198 + $0x48] sm:$0xe]
        %v254 = vld [vmem:[%s198 + $0x54] sm:$0xe]
        %v255 = vld [vmem:[%s198 + $0x60] sm:$0xe]
        %v256 = vld [vmem:[%s198 + $0x6c] sm:$0xe]
        %v257 = vld [vmem:[%s198 + $0x78] sm:$0xe]
        %v258 = vld [vmem:[%s198 + $0x84] sm:$0xe]
        %v259 = vld [vmem:[%s198 + $0x90] sm:$0xe]
        %v260 = vld [vmem:[%s198 + $0x9c] sm:$0xe]
        %v261 = vld [vmem:[%s198 + $0xa8] sm:$0xe]
        %v262 = vld [vmem:[%s198 + $0xb4] sm:$0xe]
        %v263 = vld [vmem:[%s198 + $0x8] sm:$0x3]
        %v264 = vld [vmem:[%s198 + $0x14] sm:$0x3]
        %v265 = vld [vmem:[%s198 + $0x20] sm:$0x3]
        %v266 = vld [vmem:[%s198 + $0x2c] sm:$0x3]
        %v267 = vld [vmem:[%s198 + $0x38] sm:$0x3]
        %v268 = vld [vmem:[%s198 + $0x44] sm:$0x3]
        %v269 = vld [vmem:[%s198 + $0x50] sm:$0x3]
        %v270 = vld [vmem:[%s198 + $0x5c] sm:$0x3]
        %v271 = vld [vmem:[%s198 + $0x68] sm:$0x3]
        %v272 = vld [vmem:[%s198 + $0x74] sm:$0x3]
        %v273 = vld [vmem:[%s198 + $0x80] sm:$0x3]
        %v274 = vld [vmem:[%s198 + $0x8c] sm:$0x3]
        %v275 = vld [vmem:[%s198 + $0x98] sm:$0x3]
        %v276 = vld [vmem:[%s198 + $0xa4] sm:$0x3]
        %v277 = vld [vmem:[%s198 + $0xb0] sm:$0x3]
        %v278 = vld [vmem:[%s198 + $0xbc] sm:$0x3]
        %s279 = scalar_lea.vmem %s194, 24
        %v280 = vld [vmem:[%s279] sm:$0xf]
        %v281 = vld [vmem:[%s279 + $0x4] sm:$0xf]
        %v282 = vld [vmem:[%s279 + $0x8] sm:$0x1]
        %v283 = vld [vmem:[%s279 + $0xc] sm:$0xf]
        %v284 = vld [vmem:[%s279 + $0x10] sm:$0xf]
        %v285 = vld [vmem:[%s279 + $0x14] sm:$0x1]
        %v286 = vld [vmem:[%s279 + $0x18] sm:$0xf]
        %v287 = vld [vmem:[%s279 + $0x1c] sm:$0xf]
        %v288 = vld [vmem:[%s279 + $0x20] sm:$0x1]
        %v289 = vld [vmem:[%s279 + $0x24] sm:$0xf]
        %v290 = vld [vmem:[%s279 + $0x28] sm:$0xf]
        %v291 = vld [vmem:[%s279 + $0x2c] sm:$0x1]
        %v292 = vld [vmem:[%s279 + $0x30] sm:$0xf]
        %v293 = vld [vmem:[%s279 + $0x34] sm:$0xf]
        %v294 = vld [vmem:[%s279 + $0x38] sm:$0x1]
        %v295 = vld [vmem:[%s279 + $0x3c] sm:$0xf]
        %v296 = vld [vmem:[%s279 + $0x40] sm:$0xf]
        %v297 = vld [vmem:[%s279 + $0x44] sm:$0x1]
        %v298 = vld [vmem:[%s279 + $0x48] sm:$0xf]
        %v299 = vld [vmem:[%s279 + $0x4c] sm:$0xf]
        %v300 = vld [vmem:[%s279 + $0x50] sm:$0x1]
        %v301 = vld [vmem:[%s279 + $0x54] sm:$0xf]
        %v302 = vld [vmem:[%s279 + $0x58] sm:$0xf]
        %v303 = vld [vmem:[%s279 + $0x5c] sm:$0x1]
        %v304 = vld [vmem:[%s279 + $0x60] sm:$0xf]
        %v305 = vld [vmem:[%s279 + $0x64] sm:$0xf]
        %v306 = vld [vmem:[%s279 + $0x68] sm:$0x1]
        %v307 = vld [vmem:[%s279 + $0x6c] sm:$0xf]
        %v308 = vld [vmem:[%s279 + $0x70] sm:$0xf]
        %v309 = vld [vmem:[%s279 + $0x74] sm:$0x1]
        %v310 = vld [vmem:[%s279 + $0x78] sm:$0xf]
        %v311 = vld [vmem:[%s279 + $0x7c] sm:$0xf]
        %v312 = vld [vmem:[%s279 + $0x80] sm:$0x1]
        %v313 = vld [vmem:[%s279 + $0x84] sm:$0xf]
        %v314 = vld [vmem:[%s279 + $0x88] sm:$0xf]
        %v315 = vld [vmem:[%s279 + $0x8c] sm:$0x1]
        %v316 = vld [vmem:[%s279 + $0x90] sm:$0xf]
        %v317 = vld [vmem:[%s279 + $0x94] sm:$0xf]
        %v318 = vld [vmem:[%s279 + $0x98] sm:$0x1]
        %v319 = vld [vmem:[%s279 + $0x9c] sm:$0xf]
        %v320 = vld [vmem:[%s279 + $0xa0] sm:$0xf]
        %v321 = vld [vmem:[%s279 + $0xa4] sm:$0x1]
        %v322 = vld [vmem:[%s279 + $0xa8] sm:$0xf]
        %v323 = vld [vmem:[%s279 + $0xac] sm:$0xf]
        %v324 = vld [vmem:[%s279 + $0xb0] sm:$0x1]
        %v325 = vld [vmem:[%s279 + $0xb4] sm:$0xf]
        %v326 = vld [vmem:[%s279 + $0xb8] sm:$0xf]
        %v327 = vld [vmem:[%s279 + $0xbc] sm:$0x1]
        %v328 = vld [vmem:[%s279] sm:$0xe]
        %v329 = vld [vmem:[%s279 + $0xc] sm:$0xe]
        %v330 = vld [vmem:[%s279 + $0x18] sm:$0xe]
        %v331 = vld [vmem:[%s279 + $0x24] sm:$0xe]
        %v332 = vld [vmem:[%s279 + $0x30] sm:$0xe]
        %v333 = vld [vmem:[%s279 + $0x3c] sm:$0xe]
        %v334 = vld [vmem:[%s279 + $0x48] sm:$0xe]
        %v335 = vld [vmem:[%s279 + $0x54] sm:$0xe]
        %v336 = vld [vmem:[%s279 + $0x60] sm:$0xe]
        %v337 = vld [vmem:[%s279 + $0x6c] sm:$0xe]
        %v338 = vld [vmem:[%s279 + $0x78] sm:$0xe]
        %v339 = vld [vmem:[%s279 + $0x84] sm:$0xe]
        %v340 = vld [vmem:[%s279 + $0x90] sm:$0xe]
        %v341 = vld [vmem:[%s279 + $0x9c] sm:$0xe]
        %v342 = vld [vmem:[%s279 + $0xa8] sm:$0xe]
        %v343 = vld [vmem:[%s279 + $0xb4] sm:$0xe]
        %v344 = vld [vmem:[%s279 + $0x8] sm:$0x3]
        %v345 = vld [vmem:[%s279 + $0x14] sm:$0x3]
        %v346 = vld [vmem:[%s279 + $0x20] sm:$0x3]
        %v347 = vld [vmem:[%s279 + $0x2c] sm:$0x3]
        %v348 = vld [vmem:[%s279 + $0x38] sm:$0x3]
        %v349 = vld [vmem:[%s279 + $0x44] sm:$0x3]
        %v350 = vld [vmem:[%s279 + $0x50] sm:$0x3]
        %v351 = vld [vmem:[%s279 + $0x5c] sm:$0x3]
        %v352 = vld [vmem:[%s279 + $0x68] sm:$0x3]
        %v353 = vld [vmem:[%s279 + $0x74] sm:$0x3]
        %v354 = vld [vmem:[%s279 + $0x80] sm:$0x3]
        %v355 = vld [vmem:[%s279 + $0x8c] sm:$0x3]
        %v356 = vld [vmem:[%s279 + $0x98] sm:$0x3]
        %v357 = vld [vmem:[%s279 + $0xa4] sm:$0x3]
        %v358 = vld [vmem:[%s279 + $0xb0] sm:$0x3]
        %v359 = vld [vmem:[%s279 + $0xbc] sm:$0x3]
        %s360 = scalar_lea.vmem %s194, 36
        %v361 = vld [vmem:[%s360] sm:$0xf]
        %v362 = vld [vmem:[%s360 + $0x4] sm:$0xf]
        %v363 = vld [vmem:[%s360 + $0x8] sm:$0x1]
        %v364 = vld [vmem:[%s360 + $0xc] sm:$0xf]
        %v365 = vld [vmem:[%s360 + $0x10] sm:$0xf]
        %v366 = vld [vmem:[%s360 + $0x14] sm:$0x1]
        %v367 = vld [vmem:[%s360 + $0x18] sm:$0xf]
        %v368 = vld [vmem:[%s360 + $0x1c] sm:$0xf]
        %v369 = vld [vmem:[%s360 + $0x20] sm:$0x1]
        %v370 = vld [vmem:[%s360 + $0x24] sm:$0xf]
        %v371 = vld [vmem:[%s360 + $0x28] sm:$0xf]
        %v372 = vld [vmem:[%s360 + $0x2c] sm:$0x1]
        %v373 = vld [vmem:[%s360 + $0x30] sm:$0xf]
        %v374 = vld [vmem:[%s360 + $0x34] sm:$0xf]
        %v375 = vld [vmem:[%s360 + $0x38] sm:$0x1]
        %v376 = vld [vmem:[%s360 + $0x3c] sm:$0xf]
        %v377 = vld [vmem:[%s360 + $0x40] sm:$0xf]
        %v378 = vld [vmem:[%s360 + $0x44] sm:$0x1]
        %v379 = vld [vmem:[%s360 + $0x48] sm:$0xf]
        %v380 = vld [vmem:[%s360 + $0x4c] sm:$0xf]
        %v381 = vld [vmem:[%s360 + $0x50] sm:$0x1]
        %v382 = vld [vmem:[%s360 + $0x54] sm:$0xf]
        %v383 = vld [vmem:[%s360 + $0x58] sm:$0xf]
        %v384 = vld [vmem:[%s360 + $0x5c] sm:$0x1]
        %v385 = vld [vmem:[%s360 + $0x60] sm:$0xf]
        %v386 = vld [vmem:[%s360 + $0x64] sm:$0xf]
        %v387 = vld [vmem:[%s360 + $0x68] sm:$0x1]
        %v388 = vld [vmem:[%s360 + $0x6c] sm:$0xf]
        %v389 = vld [vmem:[%s360 + $0x70] sm:$0xf]
        %v390 = vld [vmem:[%s360 + $0x74] sm:$0x1]
        %v391 = vld [vmem:[%s360 + $0x78] sm:$0xf]
        %v392 = vld [vmem:[%s360 + $0x7c] sm:$0xf]
        %v393 = vld [vmem:[%s360 + $0x80] sm:$0x1]
        %v394 = vld [vmem:[%s360 + $0x84] sm:$0xf]
        %v395 = vld [vmem:[%s360 + $0x88] sm:$0xf]
        %v396 = vld [vmem:[%s360 + $0x8c] sm:$0x1]
        %v397 = vld [vmem:[%s360 + $0x90] sm:$0xf]
        %v398 = vld [vmem:[%s360 + $0x94] sm:$0xf]
        %v399 = vld [vmem:[%s360 + $0x98] sm:$0x1]
        %v400 = vld [vmem:[%s360 + $0x9c] sm:$0xf]
        %v401 = vld [vmem:[%s360 + $0xa0] sm:$0xf]
        %v402 = vld [vmem:[%s360 + $0xa4] sm:$0x1]
        %v403 = vld [vmem:[%s360 + $0xa8] sm:$0xf]
        %v404 = vld [vmem:[%s360 + $0xac] sm:$0xf]
        %v405 = vld [vmem:[%s360 + $0xb0] sm:$0x1]
        %v406 = vld [vmem:[%s360 + $0xb4] sm:$0xf]
        %v407 = vld [vmem:[%s360 + $0xb8] sm:$0xf]
        %v408 = vld [vmem:[%s360 + $0xbc] sm:$0x1]
        %v409 = vld [vmem:[%s360] sm:$0xe]
        %v410 = vld [vmem:[%s360 + $0xc] sm:$0xe]
        %v411 = vld [vmem:[%s360 + $0x18] sm:$0xe]
        %v412 = vld [vmem:[%s360 + $0x24] sm:$0xe]
        %v413 = vld [vmem:[%s360 + $0x30] sm:$0xe]
        %v414 = vld [vmem:[%s360 + $0x3c] sm:$0xe]
        %v415 = vld [vmem:[%s360 + $0x48] sm:$0xe]
        %v416 = vld [vmem:[%s360 + $0x54] sm:$0xe]
        %v417 = vld [vmem:[%s360 + $0x60] sm:$0xe]
        %v418 = vld [vmem:[%s360 + $0x6c] sm:$0xe]
        %v419 = vld [vmem:[%s360 + $0x78] sm:$0xe]
        %v420 = vld [vmem:[%s360 + $0x84] sm:$0xe]
        %v421 = vld [vmem:[%s360 + $0x90] sm:$0xe]
        %v422 = vld [vmem:[%s360 + $0x9c] sm:$0xe]
        %v423 = vld [vmem:[%s360 + $0xa8] sm:$0xe]
        %v424 = vld [vmem:[%s360 + $0xb4] sm:$0xe]
        %v425 = vld [vmem:[%s360 + $0x8] sm:$0x3]
        %v426 = vld [vmem:[%s360 + $0x14] sm:$0x3]
        %v427 = vld [vmem:[%s360 + $0x20] sm:$0x3]
        %v428 = vld [vmem:[%s360 + $0x2c] sm:$0x3]
        %v429 = vld [vmem:[%s360 + $0x38] sm:$0x3]
        %v430 = vld [vmem:[%s360 + $0x44] sm:$0x3]
        %v431 = vld [vmem:[%s360 + $0x50] sm:$0x3]
        %v432 = vld [vmem:[%s360 + $0x5c] sm:$0x3]
        %v433 = vld [vmem:[%s360 + $0x68] sm:$0x3]
        %v434 = vld [vmem:[%s360 + $0x74] sm:$0x3]
        %v435 = vld [vmem:[%s360 + $0x80] sm:$0x3]
        %v436 = vld [vmem:[%s360 + $0x8c] sm:$0x3]
        %v437 = vld [vmem:[%s360 + $0x98] sm:$0x3]
        %v438 = vld [vmem:[%s360 + $0xa4] sm:$0x3]
        %v439 = vld [vmem:[%s360 + $0xb0] sm:$0x3]
        %v440 = vld [vmem:[%s360 + $0xbc] sm:$0x3]
        %v489 = vunpack.c.l.b16 %v199
        %v490 = vunpack.c.l.b16 %v200
        %v491 = vunpack.c.l.b16 %v201
        %v492 = vunpack.c.l.b16 %v202
        %v493 = vunpack.c.l.b16 %v203
        %v494 = vunpack.c.l.b16 %v204
        %v495 = vunpack.c.l.b16 %v205
        %v496 = vunpack.c.l.b16 %v206
        %v497 = vunpack.c.l.b16 %v207
        %v498 = vunpack.c.l.b16 %v208
        %v499 = vunpack.c.l.b16 %v209
        %v500 = vunpack.c.l.b16 %v210
        %v501 = vunpack.c.l.b16 %v211
        %v502 = vunpack.c.l.b16 %v212
        %v503 = vunpack.c.l.b16 %v213
        %v504 = vunpack.c.l.b16 %v214
        %v505 = vunpack.c.l.b16 %v215
        %v506 = vunpack.c.l.b16 %v216
        %v507 = vunpack.c.l.b16 %v217
        %v508 = vunpack.c.l.b16 %v218
        %v509 = vunpack.c.l.b16 %v219
        %v510 = vunpack.c.l.b16 %v220
        %v511 = vunpack.c.l.b16 %v221
        %v512 = vunpack.c.l.b16 %v222
        %v513 = vunpack.c.l.b16 %v223
        %v514 = vunpack.c.l.b16 %v224
        %v515 = vunpack.c.l.b16 %v225
        %v516 = vunpack.c.l.b16 %v226
        %v517 = vunpack.c.l.b16 %v227
        %v518 = vunpack.c.l.b16 %v228
        %v519 = vunpack.c.l.b16 %v229
        %v520 = vunpack.c.l.b16 %v230
        %v521 = vunpack.c.l.b16 %v231
        %v522 = vunpack.c.l.b16 %v232
        %v523 = vunpack.c.l.b16 %v233
        %v524 = vunpack.c.l.b16 %v234
        %v525 = vunpack.c.l.b16 %v235
        %v526 = vunpack.c.l.b16 %v236
        %v527 = vunpack.c.l.b16 %v237
        %v528 = vunpack.c.l.b16 %v238
        %v529 = vunpack.c.l.b16 %v239
        %v530 = vunpack.c.l.b16 %v240
        %v531 = vunpack.c.l.b16 %v241
        %v532 = vunpack.c.l.b16 %v242
        %v533 = vunpack.c.l.b16 %v243
        %v534 = vunpack.c.l.b16 %v244
        %v535 = vunpack.c.l.b16 %v245
        %v536 = vunpack.c.l.b16 %v246
        %v537 = vpack.c.b16 %v490, %v489
        %v538 = vpack.c.b16 %v491, %v491
        %v539 = vpack.c.b16 %v493, %v492
        %v540 = vpack.c.b16 %v494, %v494
        %v541 = vpack.c.b16 %v496, %v495
        %v542 = vpack.c.b16 %v497, %v497
        %v543 = vpack.c.b16 %v499, %v498
        %v544 = vpack.c.b16 %v500, %v500
        %v545 = vpack.c.b16 %v502, %v501
        %v546 = vpack.c.b16 %v503, %v503
        %v547 = vpack.c.b16 %v505, %v504
        %v548 = vpack.c.b16 %v506, %v506
        %v549 = vpack.c.b16 %v508, %v507
        %v550 = vpack.c.b16 %v509, %v509
        %v551 = vpack.c.b16 %v511, %v510
        %v552 = vpack.c.b16 %v512, %v512
        %v553 = vpack.c.b16 %v514, %v513
        %v554 = vpack.c.b16 %v515, %v515
        %v555 = vpack.c.b16 %v517, %v516
        %v556 = vpack.c.b16 %v518, %v518
        %v557 = vpack.c.b16 %v520, %v519
        %v558 = vpack.c.b16 %v521, %v521
        %v559 = vpack.c.b16 %v523, %v522
        %v560 = vpack.c.b16 %v524, %v524
        %v561 = vpack.c.b16 %v526, %v525
        %v562 = vpack.c.b16 %v527, %v527
        %v563 = vpack.c.b16 %v529, %v528
        %v564 = vpack.c.b16 %v530, %v530
        %v565 = vpack.c.b16 %v532, %v531
        %v566 = vpack.c.b16 %v533, %v533
        %v567 = vpack.c.b16 %v535, %v534
        %v568 = vpack.c.b16 %v536, %v536
        %v585 = vunpack.c.l.b16 %v247
        %v586 = vunpack.c.l.b16 %v248
        %v587 = vunpack.c.l.b16 %v249
        %v588 = vunpack.c.l.b16 %v250
        %v589 = vunpack.c.l.b16 %v251
        %v590 = vunpack.c.l.b16 %v252
        %v591 = vunpack.c.l.b16 %v253
        %v592 = vunpack.c.l.b16 %v254
        %v593 = vunpack.c.l.b16 %v255
        %v594 = vunpack.c.l.b16 %v256
        %v595 = vunpack.c.l.b16 %v257
        %v596 = vunpack.c.l.b16 %v258
        %v597 = vunpack.c.l.b16 %v259
        %v598 = vunpack.c.l.b16 %v260
        %v599 = vunpack.c.l.b16 %v261
        %v600 = vunpack.c.l.b16 %v262
        %v601 = vpack.c.b16 %v490, %v585
        %v602 = vpack.c.b16 %v493, %v586
        %v603 = vpack.c.b16 %v496, %v587
        %v604 = vpack.c.b16 %v499, %v588
        %v605 = vpack.c.b16 %v502, %v589
        %v606 = vpack.c.b16 %v505, %v590
        %v607 = vpack.c.b16 %v508, %v591
        %v608 = vpack.c.b16 %v511, %v592
        %v609 = vpack.c.b16 %v514, %v593
        %v610 = vpack.c.b16 %v517, %v594
        %v611 = vpack.c.b16 %v520, %v595
        %v612 = vpack.c.b16 %v523, %v596
        %v613 = vpack.c.b16 %v526, %v597
        %v614 = vpack.c.b16 %v529, %v598
        %v615 = vpack.c.b16 %v532, %v599
        %v616 = vpack.c.b16 %v535, %v600
        %vm617 = vsmask.f32 7424
        %v619 = vshrl.u32 %v601, 16
        %v621 = vshll.u32 %v601, 16
        %v623 = vrot.slane %v621, 1
        %v624 = vor.u32 %v619, %v623
        %v626 = vshll.u32 %v538, 16
        %v628 = vrot.slane %v626, 1
        %v629 = vsel %vm617, %v624, %v628
        %v630 = vshrl.u32 %v538, 16
        %v633 = vshrl.u32 %v602, 16
        %v635 = vshll.u32 %v602, 16
        %v637 = vrot.slane %v635, 1
        %v638 = vor.u32 %v633, %v637
        %v640 = vshll.u32 %v540, 16
        %v642 = vrot.slane %v640, 1
        %v643 = vsel %vm617, %v638, %v642
        %v644 = vshrl.u32 %v540, 16
        %v647 = vshrl.u32 %v603, 16
        %v649 = vshll.u32 %v603, 16
        %v651 = vrot.slane %v649, 1
        %v652 = vor.u32 %v647, %v651
        %v654 = vshll.u32 %v542, 16
        %v656 = vrot.slane %v654, 1
        %v657 = vsel %vm617, %v652, %v656
        %v658 = vshrl.u32 %v542, 16
        %v661 = vshrl.u32 %v604, 16
        %v663 = vshll.u32 %v604, 16
        %v665 = vrot.slane %v663, 1
        %v666 = vor.u32 %v661, %v665
        %v668 = vshll.u32 %v544, 16
        %v670 = vrot.slane %v668, 1
        %v671 = vsel %vm617, %v666, %v670
        %v672 = vshrl.u32 %v544, 16
        %v675 = vshrl.u32 %v605, 16
        %v677 = vshll.u32 %v605, 16
        %v679 = vrot.slane %v677, 1
        %v680 = vor.u32 %v675, %v679
        %v682 = vshll.u32 %v546, 16
        %v684 = vrot.slane %v682, 1
        %v685 = vsel %vm617, %v680, %v684
        %v686 = vshrl.u32 %v546, 16
        %v689 = vshrl.u32 %v606, 16
        %v691 = vshll.u32 %v606, 16
        %v693 = vrot.slane %v691, 1
        %v694 = vor.u32 %v689, %v693
        %v696 = vshll.u32 %v548, 16
        %v698 = vrot.slane %v696, 1
        %v699 = vsel %vm617, %v694, %v698
        %v700 = vshrl.u32 %v548, 16
        %v703 = vshrl.u32 %v607, 16
        %v705 = vshll.u32 %v607, 16
        %v707 = vrot.slane %v705, 1
        %v708 = vor.u32 %v703, %v707
        %v710 = vshll.u32 %v550, 16
        %v712 = vrot.slane %v710, 1
        %v713 = vsel %vm617, %v708, %v712
        %v714 = vshrl.u32 %v550, 16
        %v717 = vshrl.u32 %v608, 16
        %v719 = vshll.u32 %v608, 16
        %v721 = vrot.slane %v719, 1
        %v722 = vor.u32 %v717, %v721
        %v724 = vshll.u32 %v552, 16
        %v726 = vrot.slane %v724, 1
        %v727 = vsel %vm617, %v722, %v726
        %v728 = vshrl.u32 %v552, 16
        %v731 = vshrl.u32 %v609, 16
        %v733 = vshll.u32 %v609, 16
        %v735 = vrot.slane %v733, 1
        %v736 = vor.u32 %v731, %v735
        %v738 = vshll.u32 %v554, 16
        %v740 = vrot.slane %v738, 1
        %v741 = vsel %vm617, %v736, %v740
        %v742 = vshrl.u32 %v554, 16
        %v745 = vshrl.u32 %v610, 16
        %v747 = vshll.u32 %v610, 16
        %v749 = vrot.slane %v747, 1
        %v750 = vor.u32 %v745, %v749
        %v752 = vshll.u32 %v556, 16
        %v754 = vrot.slane %v752, 1
        %v755 = vsel %vm617, %v750, %v754
        %v756 = vshrl.u32 %v556, 16
        %v759 = vshrl.u32 %v611, 16
        %v761 = vshll.u32 %v611, 16
        %v763 = vrot.slane %v761, 1
        %v764 = vor.u32 %v759, %v763
        %v766 = vshll.u32 %v558, 16
        %v768 = vrot.slane %v766, 1
        %v769 = vsel %vm617, %v764, %v768
        %v770 = vshrl.u32 %v558, 16
        %v773 = vshrl.u32 %v612, 16
        %v775 = vshll.u32 %v612, 16
        %v777 = vrot.slane %v775, 1
        %v778 = vor.u32 %v773, %v777
        %v780 = vshll.u32 %v560, 16
        %v782 = vrot.slane %v780, 1
        %v783 = vsel %vm617, %v778, %v782
        %v784 = vshrl.u32 %v560, 16
        %v787 = vshrl.u32 %v613, 16
        %v789 = vshll.u32 %v613, 16
        %v791 = vrot.slane %v789, 1
        %v792 = vor.u32 %v787, %v791
        %v794 = vshll.u32 %v562, 16
        %v796 = vrot.slane %v794, 1
        %v797 = vsel %vm617, %v792, %v796
        %v798 = vshrl.u32 %v562, 16
        %v801 = vshrl.u32 %v614, 16
        %v803 = vshll.u32 %v614, 16
        %v805 = vrot.slane %v803, 1
        %v806 = vor.u32 %v801, %v805
        %v808 = vshll.u32 %v564, 16
        %v810 = vrot.slane %v808, 1
        %v811 = vsel %vm617, %v806, %v810
        %v812 = vshrl.u32 %v564, 16
        %v815 = vshrl.u32 %v615, 16
        %v817 = vshll.u32 %v615, 16
        %v819 = vrot.slane %v817, 1
        %v820 = vor.u32 %v815, %v819
        %v822 = vshll.u32 %v566, 16
        %v824 = vrot.slane %v822, 1
        %v825 = vsel %vm617, %v820, %v824
        %v826 = vshrl.u32 %v566, 16
        %v829 = vshrl.u32 %v616, 16
        %v831 = vshll.u32 %v616, 16
        %v833 = vrot.slane %v831, 1
        %v834 = vor.u32 %v829, %v833
        %v836 = vshll.u32 %v568, 16
        %v838 = vrot.slane %v836, 1
        %v839 = vsel %vm617, %v834, %v838
        %v840 = vshrl.u32 %v568, 16
        %v858 = vunpack.c.l.b16 %v263
        %v859 = vunpack.c.l.b16 %v264
        %v860 = vunpack.c.l.b16 %v265
        %v861 = vunpack.c.l.b16 %v266
        %v862 = vunpack.c.l.b16 %v267
        %v863 = vunpack.c.l.b16 %v268
        %v864 = vunpack.c.l.b16 %v269
        %v865 = vunpack.c.l.b16 %v270
        %v866 = vunpack.c.l.b16 %v271
        %v867 = vunpack.c.l.b16 %v272
        %v868 = vunpack.c.l.b16 %v273
        %v869 = vunpack.c.l.b16 %v274
        %v870 = vunpack.c.l.b16 %v275
        %v871 = vunpack.c.l.b16 %v276
        %v872 = vunpack.c.l.b16 %v277
        %v873 = vunpack.c.l.b16 %v278
        %v874 = vpack.c.b16 %v858, %v858
        %v875 = vpack.c.b16 %v859, %v859
        %v876 = vpack.c.b16 %v860, %v860
        %v877 = vpack.c.b16 %v861, %v861
        %v878 = vpack.c.b16 %v862, %v862
        %v879 = vpack.c.b16 %v863, %v863
        %v880 = vpack.c.b16 %v864, %v864
        %v881 = vpack.c.b16 %v865, %v865
        %v882 = vpack.c.b16 %v866, %v866
        %v883 = vpack.c.b16 %v867, %v867
        %v884 = vpack.c.b16 %v868, %v868
        %v885 = vpack.c.b16 %v869, %v869
        %v886 = vpack.c.b16 %v870, %v870
        %v887 = vpack.c.b16 %v871, %v871
        %v888 = vpack.c.b16 %v872, %v872
        %v889 = vpack.c.b16 %v873, %v873
        %vm890 = vcmask 1046528
        %v891 = vrot.slane %v601, 1
        %v892 = vrot.slane %v874, 1
        %v893 = vsel %vm890, %v891, %v892
        %v894 = vrot.slane %v602, 1
        %v895 = vrot.slane %v875, 1
        %v896 = vsel %vm890, %v894, %v895
        %v897 = vrot.slane %v603, 1
        %v898 = vrot.slane %v876, 1
        %v899 = vsel %vm890, %v897, %v898
        %v900 = vrot.slane %v604, 1
        %v901 = vrot.slane %v877, 1
        %v902 = vsel %vm890, %v900, %v901
        %v903 = vrot.slane %v605, 1
        %v904 = vrot.slane %v878, 1
        %v905 = vsel %vm890, %v903, %v904
        %v906 = vrot.slane %v606, 1
        %v907 = vrot.slane %v879, 1
        %v908 = vsel %vm890, %v906, %v907
        %v909 = vrot.slane %v607, 1
        %v910 = vrot.slane %v880, 1
        %v911 = vsel %vm890, %v909, %v910
        %v912 = vrot.slane %v608, 1
        %v913 = vrot.slane %v881, 1
        %v914 = vsel %vm890, %v912, %v913
        %v915 = vrot.slane %v609, 1
        %v916 = vrot.slane %v882, 1
        %v917 = vsel %vm890, %v915, %v916
        %v918 = vrot.slane %v610, 1
        %v919 = vrot.slane %v883, 1
        %v920 = vsel %vm890, %v918, %v919
        %v921 = vrot.slane %v611, 1
        %v922 = vrot.slane %v884, 1
        %v923 = vsel %vm890, %v921, %v922
        %v924 = vrot.slane %v612, 1
        %v925 = vrot.slane %v885, 1
        %v926 = vsel %vm890, %v924, %v925
        %v927 = vrot.slane %v613, 1
        %v928 = vrot.slane %v886, 1
        %v929 = vsel %vm890, %v927, %v928
        %v930 = vrot.slane %v614, 1
        %v931 = vrot.slane %v887, 1
        %v932 = vsel %vm890, %v930, %v931
        %v933 = vrot.slane %v615, 1
        %v934 = vrot.slane %v888, 1
        %v935 = vsel %vm890, %v933, %v934
        %v936 = vrot.slane %v616, 1
        %v937 = vrot.slane %v889, 1
        %v938 = vsel %vm890, %v936, %v937
        %v987 = vunpack.c.l.b16 %v280
        %v988 = vunpack.c.l.b16 %v281
        %v989 = vunpack.c.l.b16 %v282
        %v990 = vunpack.c.l.b16 %v283
        %v991 = vunpack.c.l.b16 %v284
        %v992 = vunpack.c.l.b16 %v285
        %v993 = vunpack.c.l.b16 %v286
        %v994 = vunpack.c.l.b16 %v287
        %v995 = vunpack.c.l.b16 %v288
        %v996 = vunpack.c.l.b16 %v289
        %v997 = vunpack.c.l.b16 %v290
        %v998 = vunpack.c.l.b16 %v291
        %v999 = vunpack.c.l.b16 %v292
        %v1000 = vunpack.c.l.b16 %v293
        %v1001 = vunpack.c.l.b16 %v294
        %v1002 = vunpack.c.l.b16 %v295
        %v1003 = vunpack.c.l.b16 %v296
        %v1004 = vunpack.c.l.b16 %v297
        %v1005 = vunpack.c.l.b16 %v298
        %v1006 = vunpack.c.l.b16 %v299
        %v1007 = vunpack.c.l.b16 %v300
        %v1008 = vunpack.c.l.b16 %v301
        %v1009 = vunpack.c.l.b16 %v302
        %v1010 = vunpack.c.l.b16 %v303
        %v1011 = vunpack.c.l.b16 %v304
        %v1012 = vunpack.c.l.b16 %v305
        %v1013 = vunpack.c.l.b16 %v306
        %v1014 = vunpack.c.l.b16 %v307
        %v1015 = vunpack.c.l.b16 %v308
        %v1016 = vunpack.c.l.b16 %v309
        %v1017 = vunpack.c.l.b16 %v310
        %v1018 = vunpack.c.l.b16 %v311
        %v1019 = vunpack.c.l.b16 %v312
        %v1020 = vunpack.c.l.b16 %v313
        %v1021 = vunpack.c.l.b16 %v314
        %v1022 = vunpack.c.l.b16 %v315
        %v1023 = vunpack.c.l.b16 %v316
        %v1024 = vunpack.c.l.b16 %v317
        %v1025 = vunpack.c.l.b16 %v318
        %v1026 = vunpack.c.l.b16 %v319
        %v1027 = vunpack.c.l.b16 %v320
        %v1028 = vunpack.c.l.b16 %v321
        %v1029 = vunpack.c.l.b16 %v322
        %v1030 = vunpack.c.l.b16 %v323
        %v1031 = vunpack.c.l.b16 %v324
        %v1032 = vunpack.c.l.b16 %v325
        %v1033 = vunpack.c.l.b16 %v326
        %v1034 = vunpack.c.l.b16 %v327
        %v1035 = vpack.c.b16 %v988, %v987
        %v1036 = vpack.c.b16 %v989, %v989
        %v1037 = vpack.c.b16 %v991, %v990
        %v1038 = vpack.c.b16 %v992, %v992
        %v1039 = vpack.c.b16 %v994, %v993
        %v1040 = vpack.c.b16 %v995, %v995
        %v1041 = vpack.c.b16 %v997, %v996
        %v1042 = vpack.c.b16 %v998, %v998
        %v1043 = vpack.c.b16 %v1000, %v999
        %v1044 = vpack.c.b16 %v1001, %v1001
        %v1045 = vpack.c.b16 %v1003, %v1002
        %v1046 = vpack.c.b16 %v1004, %v1004
        %v1047 = vpack.c.b16 %v1006, %v1005
        %v1048 = vpack.c.b16 %v1007, %v1007
        %v1049 = vpack.c.b16 %v1009, %v1008
        %v1050 = vpack.c.b16 %v1010, %v1010
        %v1051 = vpack.c.b16 %v1012, %v1011
        %v1052 = vpack.c.b16 %v1013, %v1013
        %v1053 = vpack.c.b16 %v1015, %v1014
        %v1054 = vpack.c.b16 %v1016, %v1016
        %v1055 = vpack.c.b16 %v1018, %v1017
        %v1056 = vpack.c.b16 %v1019, %v1019
        %v1057 = vpack.c.b16 %v1021, %v1020
        %v1058 = vpack.c.b16 %v1022, %v1022
        %v1059 = vpack.c.b16 %v1024, %v1023
        %v1060 = vpack.c.b16 %v1025, %v1025
        %v1061 = vpack.c.b16 %v1027, %v1026
        %v1062 = vpack.c.b16 %v1028, %v1028
        %v1063 = vpack.c.b16 %v1030, %v1029
        %v1064 = vpack.c.b16 %v1031, %v1031
        %v1065 = vpack.c.b16 %v1033, %v1032
        %v1066 = vpack.c.b16 %v1034, %v1034
        %v1083 = vunpack.c.l.b16 %v328
        %v1084 = vunpack.c.l.b16 %v329
        %v1085 = vunpack.c.l.b16 %v330
        %v1086 = vunpack.c.l.b16 %v331
        %v1087 = vunpack.c.l.b16 %v332
        %v1088 = vunpack.c.l.b16 %v333
        %v1089 = vunpack.c.l.b16 %v334
        %v1090 = vunpack.c.l.b16 %v335
        %v1091 = vunpack.c.l.b16 %v336
        %v1092 = vunpack.c.l.b16 %v337
        %v1093 = vunpack.c.l.b16 %v338
        %v1094 = vunpack.c.l.b16 %v339
        %v1095 = vunpack.c.l.b16 %v340
        %v1096 = vunpack.c.l.b16 %v341
        %v1097 = vunpack.c.l.b16 %v342
        %v1098 = vunpack.c.l.b16 %v343
        %v1099 = vpack.c.b16 %v988, %v1083
        %v1100 = vpack.c.b16 %v991, %v1084
        %v1101 = vpack.c.b16 %v994, %v1085
        %v1102 = vpack.c.b16 %v997, %v1086
        %v1103 = vpack.c.b16 %v1000, %v1087
        %v1104 = vpack.c.b16 %v1003, %v1088
        %v1105 = vpack.c.b16 %v1006, %v1089
        %v1106 = vpack.c.b16 %v1009, %v1090
        %v1107 = vpack.c.b16 %v1012, %v1091
        %v1108 = vpack.c.b16 %v1015, %v1092
        %v1109 = vpack.c.b16 %v1018, %v1093
        %v1110 = vpack.c.b16 %v1021, %v1094
        %v1111 = vpack.c.b16 %v1024, %v1095
        %v1112 = vpack.c.b16 %v1027, %v1096
        %v1113 = vpack.c.b16 %v1030, %v1097
        %v1114 = vpack.c.b16 %v1033, %v1098
        %v1116 = vshrl.u32 %v1099, 16
        %v1118 = vshll.u32 %v1099, 16
        %v1120 = vrot.slane %v1118, 1
        %v1121 = vor.u32 %v1116, %v1120
        %v1123 = vshll.u32 %v1036, 16
        %v1125 = vrot.slane %v1123, 1
        %v1126 = vsel %vm617, %v1121, %v1125
        %v1127 = vshrl.u32 %v1036, 16
        %v1130 = vshrl.u32 %v1100, 16
        %v1132 = vshll.u32 %v1100, 16
        %v1134 = vrot.slane %v1132, 1
        %v1135 = vor.u32 %v1130, %v1134
        %v1137 = vshll.u32 %v1038, 16
        %v1139 = vrot.slane %v1137, 1
        %v1140 = vsel %vm617, %v1135, %v1139
        %v1141 = vshrl.u32 %v1038, 16
        %v1144 = vshrl.u32 %v1101, 16
        %v1146 = vshll.u32 %v1101, 16
        %v1148 = vrot.slane %v1146, 1
        %v1149 = vor.u32 %v1144, %v1148
        %v1151 = vshll.u32 %v1040, 16
        %v1153 = vrot.slane %v1151, 1
        %v1154 = vsel %vm617, %v1149, %v1153
        %v1155 = vshrl.u32 %v1040, 16
        %v1158 = vshrl.u32 %v1102, 16
        %v1160 = vshll.u32 %v1102, 16
        %v1162 = vrot.slane %v1160, 1
        %v1163 = vor.u32 %v1158, %v1162
        %v1165 = vshll.u32 %v1042, 16
        %v1167 = vrot.slane %v1165, 1
        %v1168 = vsel %vm617, %v1163, %v1167
        %v1169 = vshrl.u32 %v1042, 16
        %v1172 = vshrl.u32 %v1103, 16
        %v1174 = vshll.u32 %v1103, 16
        %v1176 = vrot.slane %v1174, 1
        %v1177 = vor.u32 %v1172, %v1176
        %v1179 = vshll.u32 %v1044, 16
        %v1181 = vrot.slane %v1179, 1
        %v1182 = vsel %vm617, %v1177, %v1181
        %v1183 = vshrl.u32 %v1044, 16
        %v1186 = vshrl.u32 %v1104, 16
        %v1188 = vshll.u32 %v1104, 16
        %v1190 = vrot.slane %v1188, 1
        %v1191 = vor.u32 %v1186, %v1190
        %v1193 = vshll.u32 %v1046, 16
        %v1195 = vrot.slane %v1193, 1
        %v1196 = vsel %vm617, %v1191, %v1195
        %v1197 = vshrl.u32 %v1046, 16
        %v1200 = vshrl.u32 %v1105, 16
        %v1202 = vshll.u32 %v1105, 16
        %v1204 = vrot.slane %v1202, 1
        %v1205 = vor.u32 %v1200, %v1204
        %v1207 = vshll.u32 %v1048, 16
        %v1209 = vrot.slane %v1207, 1
        %v1210 = vsel %vm617, %v1205, %v1209
        %v1211 = vshrl.u32 %v1048, 16
        %v1214 = vshrl.u32 %v1106, 16
        %v1216 = vshll.u32 %v1106, 16
        %v1218 = vrot.slane %v1216, 1
        %v1219 = vor.u32 %v1214, %v1218
        %v1221 = vshll.u32 %v1050, 16
        %v1223 = vrot.slane %v1221, 1
        %v1224 = vsel %vm617, %v1219, %v1223
        %v1225 = vshrl.u32 %v1050, 16
        %v1228 = vshrl.u32 %v1107, 16
        %v1230 = vshll.u32 %v1107, 16
        %v1232 = vrot.slane %v1230, 1
        %v1233 = vor.u32 %v1228, %v1232
        %v1235 = vshll.u32 %v1052, 16
        %v1237 = vrot.slane %v1235, 1
        %v1238 = vsel %vm617, %v1233, %v1237
        %v1239 = vshrl.u32 %v1052, 16
        %v1242 = vshrl.u32 %v1108, 16
        %v1244 = vshll.u32 %v1108, 16
        %v1246 = vrot.slane %v1244, 1
        %v1247 = vor.u32 %v1242, %v1246
        %v1249 = vshll.u32 %v1054, 16
        %v1251 = vrot.slane %v1249, 1
        %v1252 = vsel %vm617, %v1247, %v1251
        %v1253 = vshrl.u32 %v1054, 16
        %v1256 = vshrl.u32 %v1109, 16
        %v1258 = vshll.u32 %v1109, 16
        %v1260 = vrot.slane %v1258, 1
        %v1261 = vor.u32 %v1256, %v1260
        %v1263 = vshll.u32 %v1056, 16
        %v1265 = vrot.slane %v1263, 1
        %v1266 = vsel %vm617, %v1261, %v1265
        %v1267 = vshrl.u32 %v1056, 16
        %v1270 = vshrl.u32 %v1110, 16
        %v1272 = vshll.u32 %v1110, 16
        %v1274 = vrot.slane %v1272, 1
        %v1275 = vor.u32 %v1270, %v1274
        %v1277 = vshll.u32 %v1058, 16
        %v1279 = vrot.slane %v1277, 1
        %v1280 = vsel %vm617, %v1275, %v1279
        %v1281 = vshrl.u32 %v1058, 16
        %v1284 = vshrl.u32 %v1111, 16
        %v1286 = vshll.u32 %v1111, 16
        %v1288 = vrot.slane %v1286, 1
        %v1289 = vor.u32 %v1284, %v1288
        %v1291 = vshll.u32 %v1060, 16
        %v1293 = vrot.slane %v1291, 1
        %v1294 = vsel %vm617, %v1289, %v1293
        %v1295 = vshrl.u32 %v1060, 16
        %v1298 = vshrl.u32 %v1112, 16
        %v1300 = vshll.u32 %v1112, 16
        %v1302 = vrot.slane %v1300, 1
        %v1303 = vor.u32 %v1298, %v1302
        %v1305 = vshll.u32 %v1062, 16
        %v1307 = vrot.slane %v1305, 1
        %v1308 = vsel %vm617, %v1303, %v1307
        %v1309 = vshrl.u32 %v1062, 16
        %v1312 = vshrl.u32 %v1113, 16
        %v1314 = vshll.u32 %v1113, 16
        %v1316 = vrot.slane %v1314, 1
        %v1317 = vor.u32 %v1312, %v1316
        %v1319 = vshll.u32 %v1064, 16
        %v1321 = vrot.slane %v1319, 1
        %v1322 = vsel %vm617, %v1317, %v1321
        %v1323 = vshrl.u32 %v1064, 16
        %v1326 = vshrl.u32 %v1114, 16
        %v1328 = vshll.u32 %v1114, 16
        %v1330 = vrot.slane %v1328, 1
        %v1331 = vor.u32 %v1326, %v1330
        %v1333 = vshll.u32 %v1066, 16
        %v1335 = vrot.slane %v1333, 1
        %v1336 = vsel %vm617, %v1331, %v1335
        %v1337 = vshrl.u32 %v1066, 16
        %v1355 = vunpack.c.l.b16 %v344
        %v1356 = vunpack.c.l.b16 %v345
        %v1357 = vunpack.c.l.b16 %v346
        %v1358 = vunpack.c.l.b16 %v347
        %v1359 = vunpack.c.l.b16 %v348
        %v1360 = vunpack.c.l.b16 %v349
        %v1361 = vunpack.c.l.b16 %v350
        %v1362 = vunpack.c.l.b16 %v351
        %v1363 = vunpack.c.l.b16 %v352
        %v1364 = vunpack.c.l.b16 %v353
        %v1365 = vunpack.c.l.b16 %v354
        %v1366 = vunpack.c.l.b16 %v355
        %v1367 = vunpack.c.l.b16 %v356
        %v1368 = vunpack.c.l.b16 %v357
        %v1369 = vunpack.c.l.b16 %v358
        %v1370 = vunpack.c.l.b16 %v359
        %v1371 = vpack.c.b16 %v1355, %v1355
        %v1372 = vpack.c.b16 %v1356, %v1356
        %v1373 = vpack.c.b16 %v1357, %v1357
        %v1374 = vpack.c.b16 %v1358, %v1358
        %v1375 = vpack.c.b16 %v1359, %v1359
        %v1376 = vpack.c.b16 %v1360, %v1360
        %v1377 = vpack.c.b16 %v1361, %v1361
        %v1378 = vpack.c.b16 %v1362, %v1362
        %v1379 = vpack.c.b16 %v1363, %v1363
        %v1380 = vpack.c.b16 %v1364, %v1364
        %v1381 = vpack.c.b16 %v1365, %v1365
        %v1382 = vpack.c.b16 %v1366, %v1366
        %v1383 = vpack.c.b16 %v1367, %v1367
        %v1384 = vpack.c.b16 %v1368, %v1368
        %v1385 = vpack.c.b16 %v1369, %v1369
        %v1386 = vpack.c.b16 %v1370, %v1370
        %v1387 = vrot.slane %v1099, 1
        %v1388 = vrot.slane %v1371, 1
        %v1389 = vsel %vm890, %v1387, %v1388
        %v1390 = vrot.slane %v1100, 1
        %v1391 = vrot.slane %v1372, 1
        %v1392 = vsel %vm890, %v1390, %v1391
        %v1393 = vrot.slane %v1101, 1
        %v1394 = vrot.slane %v1373, 1
        %v1395 = vsel %vm890, %v1393, %v1394
        %v1396 = vrot.slane %v1102, 1
        %v1397 = vrot.slane %v1374, 1
        %v1398 = vsel %vm890, %v1396, %v1397
        %v1399 = vrot.slane %v1103, 1
        %v1400 = vrot.slane %v1375, 1
        %v1401 = vsel %vm890, %v1399, %v1400
        %v1402 = vrot.slane %v1104, 1
        %v1403 = vrot.slane %v1376, 1
        %v1404 = vsel %vm890, %v1402, %v1403
        %v1405 = vrot.slane %v1105, 1
        %v1406 = vrot.slane %v1377, 1
        %v1407 = vsel %vm890, %v1405, %v1406
        %v1408 = vrot.slane %v1106, 1
        %v1409 = vrot.slane %v1378, 1
        %v1410 = vsel %vm890, %v1408, %v1409
        %v1411 = vrot.slane %v1107, 1
        %v1412 = vrot.slane %v1379, 1
        %v1413 = vsel %vm890, %v1411, %v1412
        %v1414 = vrot.slane %v1108, 1
        %v1415 = vrot.slane %v1380, 1
        %v1416 = vsel %vm890, %v1414, %v1415
        %v1417 = vrot.slane %v1109, 1
        %v1418 = vrot.slane %v1381, 1
        %v1419 = vsel %vm890, %v1417, %v1418
        %v1420 = vrot.slane %v1110, 1
        %v1421 = vrot.slane %v1382, 1
        %v1422 = vsel %vm890, %v1420, %v1421
        %v1423 = vrot.slane %v1111, 1
        %v1424 = vrot.slane %v1383, 1
        %v1425 = vsel %vm890, %v1423, %v1424
        %v1426 = vrot.slane %v1112, 1
        %v1427 = vrot.slane %v1384, 1
        %v1428 = vsel %vm890, %v1426, %v1427
        %v1429 = vrot.slane %v1113, 1
        %v1430 = vrot.slane %v1385, 1
        %v1431 = vsel %vm890, %v1429, %v1430
        %v1432 = vrot.slane %v1114, 1
        %v1433 = vrot.slane %v1386, 1
        %v1434 = vsel %vm890, %v1432, %v1433
        %v1483 = vunpack.c.l.b16 %v361
        %v1484 = vunpack.c.l.b16 %v362
        %v1485 = vunpack.c.l.b16 %v363
        %v1486 = vunpack.c.l.b16 %v364
        %v1487 = vunpack.c.l.b16 %v365
        %v1488 = vunpack.c.l.b16 %v366
        %v1489 = vunpack.c.l.b16 %v367
        %v1490 = vunpack.c.l.b16 %v368
        %v1491 = vunpack.c.l.b16 %v369
        %v1492 = vunpack.c.l.b16 %v370
        %v1493 = vunpack.c.l.b16 %v371
        %v1494 = vunpack.c.l.b16 %v372
        %v1495 = vunpack.c.l.b16 %v373
        %v1496 = vunpack.c.l.b16 %v374
        %v1497 = vunpack.c.l.b16 %v375
        %v1498 = vunpack.c.l.b16 %v376
        %v1499 = vunpack.c.l.b16 %v377
        %v1500 = vunpack.c.l.b16 %v378
        %v1501 = vunpack.c.l.b16 %v379
        %v1502 = vunpack.c.l.b16 %v380
        %v1503 = vunpack.c.l.b16 %v381
        %v1504 = vunpack.c.l.b16 %v382
        %v1505 = vunpack.c.l.b16 %v383
        %v1506 = vunpack.c.l.b16 %v384
        %v1507 = vunpack.c.l.b16 %v385
        %v1508 = vunpack.c.l.b16 %v386
        %v1509 = vunpack.c.l.b16 %v387
        %v1510 = vunpack.c.l.b16 %v388
        %v1511 = vunpack.c.l.b16 %v389
        %v1512 = vunpack.c.l.b16 %v390
        %v1513 = vunpack.c.l.b16 %v391
        %v1514 = vunpack.c.l.b16 %v392
        %v1515 = vunpack.c.l.b16 %v393
        %v1516 = vunpack.c.l.b16 %v394
        %v1517 = vunpack.c.l.b16 %v395
        %v1518 = vunpack.c.l.b16 %v396
        %v1519 = vunpack.c.l.b16 %v397
        %v1520 = vunpack.c.l.b16 %v398
        %v1521 = vunpack.c.l.b16 %v399
        %v1522 = vunpack.c.l.b16 %v400
        %v1523 = vunpack.c.l.b16 %v401
        %v1524 = vunpack.c.l.b16 %v402
        %v1525 = vunpack.c.l.b16 %v403
        %v1526 = vunpack.c.l.b16 %v404
        %v1527 = vunpack.c.l.b16 %v405
        %v1528 = vunpack.c.l.b16 %v406
        %v1529 = vunpack.c.l.b16 %v407
        %v1530 = vunpack.c.l.b16 %v408
        %v1531 = vpack.c.b16 %v1484, %v1483
        %v1532 = vpack.c.b16 %v1485, %v1485
        %v1533 = vpack.c.b16 %v1487, %v1486
        %v1534 = vpack.c.b16 %v1488, %v1488
        %v1535 = vpack.c.b16 %v1490, %v1489
        %v1536 = vpack.c.b16 %v1491, %v1491
        %v1537 = vpack.c.b16 %v1493, %v1492
        %v1538 = vpack.c.b16 %v1494, %v1494
        %v1539 = vpack.c.b16 %v1496, %v1495
        %v1540 = vpack.c.b16 %v1497, %v1497
        %v1541 = vpack.c.b16 %v1499, %v1498
        %v1542 = vpack.c.b16 %v1500, %v1500
        %v1543 = vpack.c.b16 %v1502, %v1501
        %v1544 = vpack.c.b16 %v1503, %v1503
        %v1545 = vpack.c.b16 %v1505, %v1504
        %v1546 = vpack.c.b16 %v1506, %v1506
        %v1547 = vpack.c.b16 %v1508, %v1507
        %v1548 = vpack.c.b16 %v1509, %v1509
        %v1549 = vpack.c.b16 %v1511, %v1510
        %v1550 = vpack.c.b16 %v1512, %v1512
        %v1551 = vpack.c.b16 %v1514, %v1513
        %v1552 = vpack.c.b16 %v1515, %v1515
        %v1553 = vpack.c.b16 %v1517, %v1516
        %v1554 = vpack.c.b16 %v1518, %v1518
        %v1555 = vpack.c.b16 %v1520, %v1519
        %v1556 = vpack.c.b16 %v1521, %v1521
        %v1557 = vpack.c.b16 %v1523, %v1522
        %v1558 = vpack.c.b16 %v1524, %v1524
        %v1559 = vpack.c.b16 %v1526, %v1525
        %v1560 = vpack.c.b16 %v1527, %v1527
        %v1561 = vpack.c.b16 %v1529, %v1528
        %v1562 = vpack.c.b16 %v1530, %v1530
        %v1579 = vunpack.c.l.b16 %v409
        %v1580 = vunpack.c.l.b16 %v410
        %v1581 = vunpack.c.l.b16 %v411
        %v1582 = vunpack.c.l.b16 %v412
        %v1583 = vunpack.c.l.b16 %v413
        %v1584 = vunpack.c.l.b16 %v414
        %v1585 = vunpack.c.l.b16 %v415
        %v1586 = vunpack.c.l.b16 %v416
        %v1587 = vunpack.c.l.b16 %v417
        %v1588 = vunpack.c.l.b16 %v418
        %v1589 = vunpack.c.l.b16 %v419
        %v1590 = vunpack.c.l.b16 %v420
        %v1591 = vunpack.c.l.b16 %v421
        %v1592 = vunpack.c.l.b16 %v422
        %v1593 = vunpack.c.l.b16 %v423
        %v1594 = vunpack.c.l.b16 %v424
        %v1595 = vpack.c.b16 %v1484, %v1579
        %v1596 = vpack.c.b16 %v1487, %v1580
        %v1597 = vpack.c.b16 %v1490, %v1581
        %v1598 = vpack.c.b16 %v1493, %v1582
        %v1599 = vpack.c.b16 %v1496, %v1583
        %v1600 = vpack.c.b16 %v1499, %v1584
        %v1601 = vpack.c.b16 %v1502, %v1585
        %v1602 = vpack.c.b16 %v1505, %v1586
        %v1603 = vpack.c.b16 %v1508, %v1587
        %v1604 = vpack.c.b16 %v1511, %v1588
        %v1605 = vpack.c.b16 %v1514, %v1589
        %v1606 = vpack.c.b16 %v1517, %v1590
        %v1607 = vpack.c.b16 %v1520, %v1591
        %v1608 = vpack.c.b16 %v1523, %v1592
        %v1609 = vpack.c.b16 %v1526, %v1593
        %v1610 = vpack.c.b16 %v1529, %v1594
        %v1612 = vshrl.u32 %v1595, 16
        %v1614 = vshll.u32 %v1595, 16
        %v1616 = vrot.slane %v1614, 1
        %v1617 = vor.u32 %v1612, %v1616
        %v1619 = vshll.u32 %v1532, 16
        %v1621 = vrot.slane %v1619, 1
        %v1622 = vsel %vm617, %v1617, %v1621
        %v1623 = vshrl.u32 %v1532, 16
        %v1626 = vshrl.u32 %v1596, 16
        %v1628 = vshll.u32 %v1596, 16
        %v1630 = vrot.slane %v1628, 1
        %v1631 = vor.u32 %v1626, %v1630
        %v1633 = vshll.u32 %v1534, 16
        %v1635 = vrot.slane %v1633, 1
        %v1636 = vsel %vm617, %v1631, %v1635
        %v1637 = vshrl.u32 %v1534, 16
        %v1640 = vshrl.u32 %v1597, 16
        %v1642 = vshll.u32 %v1597, 16
        %v1644 = vrot.slane %v1642, 1
        %v1645 = vor.u32 %v1640, %v1644
        %v1647 = vshll.u32 %v1536, 16
        %v1649 = vrot.slane %v1647, 1
        %v1650 = vsel %vm617, %v1645, %v1649
        %v1651 = vshrl.u32 %v1536, 16
        %v1654 = vshrl.u32 %v1598, 16
        %v1656 = vshll.u32 %v1598, 16
        %v1658 = vrot.slane %v1656, 1
        %v1659 = vor.u32 %v1654, %v1658
        %v1661 = vshll.u32 %v1538, 16
        %v1663 = vrot.slane %v1661, 1
        %v1664 = vsel %vm617, %v1659, %v1663
        %v1665 = vshrl.u32 %v1538, 16
        %v1668 = vshrl.u32 %v1599, 16
        %v1670 = vshll.u32 %v1599, 16
        %v1672 = vrot.slane %v1670, 1
        %v1673 = vor.u32 %v1668, %v1672
        %v1675 = vshll.u32 %v1540, 16
        %v1677 = vrot.slane %v1675, 1
        %v1678 = vsel %vm617, %v1673, %v1677
        %v1679 = vshrl.u32 %v1540, 16
        %v1682 = vshrl.u32 %v1600, 16
        %v1684 = vshll.u32 %v1600, 16
        %v1686 = vrot.slane %v1684, 1
        %v1687 = vor.u32 %v1682, %v1686
        %v1689 = vshll.u32 %v1542, 16
        %v1691 = vrot.slane %v1689, 1
        %v1692 = vsel %vm617, %v1687, %v1691
        %v1693 = vshrl.u32 %v1542, 16
        %v1696 = vshrl.u32 %v1601, 16
        %v1698 = vshll.u32 %v1601, 16
        %v1700 = vrot.slane %v1698, 1
        %v1701 = vor.u32 %v1696, %v1700
        %v1703 = vshll.u32 %v1544, 16
        %v1705 = vrot.slane %v1703, 1
        %v1706 = vsel %vm617, %v1701, %v1705
        %v1707 = vshrl.u32 %v1544, 16
        %v1710 = vshrl.u32 %v1602, 16
        %v1712 = vshll.u32 %v1602, 16
        %v1714 = vrot.slane %v1712, 1
        %v1715 = vor.u32 %v1710, %v1714
        %v1717 = vshll.u32 %v1546, 16
        %v1719 = vrot.slane %v1717, 1
        %v1720 = vsel %vm617, %v1715, %v1719
        %v1721 = vshrl.u32 %v1546, 16
        %v1724 = vshrl.u32 %v1603, 16
        %v1726 = vshll.u32 %v1603, 16
        %v1728 = vrot.slane %v1726, 1
        %v1729 = vor.u32 %v1724, %v1728
        %v1731 = vshll.u32 %v1548, 16
        %v1733 = vrot.slane %v1731, 1
        %v1734 = vsel %vm617, %v1729, %v1733
        %v1735 = vshrl.u32 %v1548, 16
        %v1738 = vshrl.u32 %v1604, 16
        %v1740 = vshll.u32 %v1604, 16
        %v1742 = vrot.slane %v1740, 1
        %v1743 = vor.u32 %v1738, %v1742
        %v1745 = vshll.u32 %v1550, 16
        %v1747 = vrot.slane %v1745, 1
        %v1748 = vsel %vm617, %v1743, %v1747
        %v1749 = vshrl.u32 %v1550, 16
        %v1752 = vshrl.u32 %v1605, 16
        %v1754 = vshll.u32 %v1605, 16
        %v1756 = vrot.slane %v1754, 1
        %v1757 = vor.u32 %v1752, %v1756
        %v1759 = vshll.u32 %v1552, 16
        %v1761 = vrot.slane %v1759, 1
        %v1762 = vsel %vm617, %v1757, %v1761
        %v1763 = vshrl.u32 %v1552, 16
        %v1766 = vshrl.u32 %v1606, 16
        %v1768 = vshll.u32 %v1606, 16
        %v1770 = vrot.slane %v1768, 1
        %v1771 = vor.u32 %v1766, %v1770
        %v1773 = vshll.u32 %v1554, 16
        %v1775 = vrot.slane %v1773, 1
        %v1776 = vsel %vm617, %v1771, %v1775
        %v1777 = vshrl.u32 %v1554, 16
        %v1780 = vshrl.u32 %v1607, 16
        %v1782 = vshll.u32 %v1607, 16
        %v1784 = vrot.slane %v1782, 1
        %v1785 = vor.u32 %v1780, %v1784
        %v1787 = vshll.u32 %v1556, 16
        %v1789 = vrot.slane %v1787, 1
        %v1790 = vsel %vm617, %v1785, %v1789
        %v1791 = vshrl.u32 %v1556, 16
        %v1794 = vshrl.u32 %v1608, 16
        %v1796 = vshll.u32 %v1608, 16
        %v1798 = vrot.slane %v1796, 1
        %v1799 = vor.u32 %v1794, %v1798
        %v1801 = vshll.u32 %v1558, 16
        %v1803 = vrot.slane %v1801, 1
        %v1804 = vsel %vm617, %v1799, %v1803
        %v1805 = vshrl.u32 %v1558, 16
        %v1808 = vshrl.u32 %v1609, 16
        %v1810 = vshll.u32 %v1609, 16
        %v1812 = vrot.slane %v1810, 1
        %v1813 = vor.u32 %v1808, %v1812
        %v1815 = vshll.u32 %v1560, 16
        %v1817 = vrot.slane %v1815, 1
        %v1818 = vsel %vm617, %v1813, %v1817
        %v1819 = vshrl.u32 %v1560, 16
        %v1822 = vshrl.u32 %v1610, 16
        %v1824 = vshll.u32 %v1610, 16
        %v1826 = vrot.slane %v1824, 1
        %v1827 = vor.u32 %v1822, %v1826
        %v1829 = vshll.u32 %v1562, 16
        %v1831 = vrot.slane %v1829, 1
        %v1832 = vsel %vm617, %v1827, %v1831
        %v1833 = vshrl.u32 %v1562, 16
        %v1851 = vunpack.c.l.b16 %v425
        %v1852 = vunpack.c.l.b16 %v426
        %v1853 = vunpack.c.l.b16 %v427
        %v1854 = vunpack.c.l.b16 %v428
        %v1855 = vunpack.c.l.b16 %v429
        %v1856 = vunpack.c.l.b16 %v430
        %v1857 = vunpack.c.l.b16 %v431
        %v1858 = vunpack.c.l.b16 %v432
        %v1859 = vunpack.c.l.b16 %v433
        %v1860 = vunpack.c.l.b16 %v434
        %v1861 = vunpack.c.l.b16 %v435
        %v1862 = vunpack.c.l.b16 %v436
        %v1863 = vunpack.c.l.b16 %v437
        %v1864 = vunpack.c.l.b16 %v438
        %v1865 = vunpack.c.l.b16 %v439
        %v1866 = vunpack.c.l.b16 %v440
        %v1867 = vpack.c.b16 %v1851, %v1851
        %v1868 = vpack.c.b16 %v1852, %v1852
        %v1869 = vpack.c.b16 %v1853, %v1853
        %v1870 = vpack.c.b16 %v1854, %v1854
        %v1871 = vpack.c.b16 %v1855, %v1855
        %v1872 = vpack.c.b16 %v1856, %v1856
        %v1873 = vpack.c.b16 %v1857, %v1857
        %v1874 = vpack.c.b16 %v1858, %v1858
        %v1875 = vpack.c.b16 %v1859, %v1859
        %v1876 = vpack.c.b16 %v1860, %v1860
        %v1877 = vpack.c.b16 %v1861, %v1861
        %v1878 = vpack.c.b16 %v1862, %v1862
        %v1879 = vpack.c.b16 %v1863, %v1863
        %v1880 = vpack.c.b16 %v1864, %v1864
        %v1881 = vpack.c.b16 %v1865, %v1865
        %v1882 = vpack.c.b16 %v1866, %v1866
        %v1883 = vrot.slane %v1595, 1
        %v1884 = vrot.slane %v1867, 1
        %v1885 = vsel %vm890, %v1883, %v1884
        %v1886 = vrot.slane %v1596, 1
        %v1887 = vrot.slane %v1868, 1
        %v1888 = vsel %vm890, %v1886, %v1887
        %v1889 = vrot.slane %v1597, 1
        %v1890 = vrot.slane %v1869, 1
        %v1891 = vsel %vm890, %v1889, %v1890
        %v1892 = vrot.slane %v1598, 1
        %v1893 = vrot.slane %v1870, 1
        %v1894 = vsel %vm890, %v1892, %v1893
        %v1895 = vrot.slane %v1599, 1
        %v1896 = vrot.slane %v1871, 1
        %v1897 = vsel %vm890, %v1895, %v1896
        %v1898 = vrot.slane %v1600, 1
        %v1899 = vrot.slane %v1872, 1
        %v1900 = vsel %vm890, %v1898, %v1899
        %v1901 = vrot.slane %v1601, 1
        %v1902 = vrot.slane %v1873, 1
        %v1903 = vsel %vm890, %v1901, %v1902
        %v1904 = vrot.slane %v1602, 1
        %v1905 = vrot.slane %v1874, 1
        %v1906 = vsel %vm890, %v1904, %v1905
        %v1907 = vrot.slane %v1603, 1
        %v1908 = vrot.slane %v1875, 1
        %v1909 = vsel %vm890, %v1907, %v1908
        %v1910 = vrot.slane %v1604, 1
        %v1911 = vrot.slane %v1876, 1
        %v1912 = vsel %vm890, %v1910, %v1911
        %v1913 = vrot.slane %v1605, 1
        %v1914 = vrot.slane %v1877, 1
        %v1915 = vsel %vm890, %v1913, %v1914
        %v1916 = vrot.slane %v1606, 1
        %v1917 = vrot.slane %v1878, 1
        %v1918 = vsel %vm890, %v1916, %v1917
        %v1919 = vrot.slane %v1607, 1
        %v1920 = vrot.slane %v1879, 1
        %v1921 = vsel %vm890, %v1919, %v1920
        %v1922 = vrot.slane %v1608, 1
        %v1923 = vrot.slane %v1880, 1
        %v1924 = vsel %vm890, %v1922, %v1923
        %v1925 = vrot.slane %v1609, 1
        %v1926 = vrot.slane %v1881, 1
        %v1927 = vsel %vm890, %v1925, %v1926
        %v1928 = vrot.slane %v1610, 1
        %v1929 = vrot.slane %v1882, 1
        %v1930 = vsel %vm890, %v1928, %v1929
        %v1931 = vld [vmem:[#allocation2] sm:$0xf]
        %v1932 = vld [vmem:[#allocation2 + $0x4] sm:$0xf]
        %v1933 = vld [vmem:[#allocation2 + $0x8] sm:$0xf]
        %v1934 = vld [vmem:[#allocation2 + $0xc] sm:$0xf]
        %v1935 = vld [vmem:[#allocation2 + $0x10] sm:$0xf]
        %v1936 = vld [vmem:[#allocation2 + $0x14] sm:$0xf]
        %v1937 = vld [vmem:[#allocation2 + $0x18] sm:$0xf]
        %v1938 = vld [vmem:[#allocation2 + $0x1c] sm:$0xf]
        %v1939 = vld [vmem:[#allocation2 + $0x20] sm:$0xf]
        %v1940 = vld [vmem:[#allocation2 + $0x24] sm:$0xf]
        %v1941 = vld [vmem:[#allocation2 + $0x28] sm:$0xf]
        %v1942 = vld [vmem:[#allocation2 + $0x2c] sm:$0xf]
        %v1943 = vld [vmem:[#allocation2 + $0x30] sm:$0xf]
        %v1944 = vld [vmem:[#allocation2 + $0x34] sm:$0xf]
        %v1945 = vld [vmem:[#allocation2 + $0x38] sm:$0xf]
        %v1946 = vld [vmem:[#allocation2 + $0x3c] sm:$0xf]
        %v1947 = vld [vmem:[#allocation2 + $0x40] sm:$0xf]
        %v1948 = vld [vmem:[#allocation2 + $0x44] sm:$0xf]
        %v1949 = vld [vmem:[#allocation2 + $0x48] sm:$0xf]
        %v1950 = vld [vmem:[#allocation2 + $0x4c] sm:$0xf]
        %v1951 = vld [vmem:[#allocation2 + $0x50] sm:$0xf]
        %v1952 = vld [vmem:[#allocation2 + $0x54] sm:$0xf]
        %v1953 = vld [vmem:[#allocation2 + $0x58] sm:$0xf]
        %v1954 = vld [vmem:[#allocation2 + $0x5c] sm:$0xf]
        %v1955 = vld [vmem:[#allocation2 + $0x60] sm:$0xf]
        %v1956 = vld [vmem:[#allocation2 + $0x64] sm:$0xf]
        %v1957 = vld [vmem:[#allocation2 + $0x68] sm:$0xf]
        %v1958 = vld [vmem:[#allocation2 + $0x6c] sm:$0xf]
        %v1959 = vld [vmem:[#allocation2 + $0x70] sm:$0xf]
        %v1960 = vld [vmem:[#allocation2 + $0x74] sm:$0xf]
        %v1961 = vld [vmem:[#allocation2 + $0x78] sm:$0xf]
        %v1962 = vld [vmem:[#allocation2 + $0x7c] sm:$0xf]
        %v1963 = vld [vmem:[#allocation2 + $0x80] sm:$0xf]
        %v1964 = vld [vmem:[#allocation2 + $0x84] sm:$0xf]
        %v1965 = vld [vmem:[#allocation2 + $0x88] sm:$0xf]
        %v1966 = vld [vmem:[#allocation2 + $0x8c] sm:$0xf]
        %v1967 = vld [vmem:[#allocation2 + $0x90] sm:$0xf]
        %v1968 = vld [vmem:[#allocation2 + $0x94] sm:$0xf]
        %v1969 = vld [vmem:[#allocation2 + $0x98] sm:$0xf]
        %v1970 = vld [vmem:[#allocation2 + $0x9c] sm:$0xf]
        %v1971 = vld [vmem:[#allocation2 + $0xa0] sm:$0xf]
        %v1972 = vld [vmem:[#allocation2 + $0xa4] sm:$0xf]
        %v1973 = vld [vmem:[#allocation2 + $0xa8] sm:$0xf]
        %v1974 = vld [vmem:[#allocation2 + $0xac] sm:$0xf]
        %v1975 = vld [vmem:[#allocation2 + $0xb0] sm:$0xf]
        %v1976 = vld [vmem:[#allocation2 + $0xb4] sm:$0xf]
        %v1977 = vld [vmem:[#allocation2 + $0xb8] sm:$0xf]
        %v1978 = vld [vmem:[#allocation2 + $0xbc] sm:$0xf]
        %v1979 = vld [vmem:[#allocation2 + $0xc0] sm:$0xf]
        %v1980 = vld [vmem:[#allocation2 + $0xc4] sm:$0xf]
        %v1981 = vld [vmem:[#allocation2 + $0xc8] sm:$0xf]
        %v1982 = vld [vmem:[#allocation2 + $0xcc] sm:$0xf]
        %v1983 = vld [vmem:[#allocation2 + $0xd0] sm:$0xf]
        %v1984 = vld [vmem:[#allocation2 + $0xd4] sm:$0xf]
        %v1985 = vld [vmem:[#allocation2 + $0xd8] sm:$0xf]
        %v1986 = vld [vmem:[#allocation2 + $0xdc] sm:$0xf]
        %v1987 = vld [vmem:[#allocation2 + $0xe0] sm:$0xf]
        %v1988 = vld [vmem:[#allocation2 + $0xe4] sm:$0xf]
        %v1989 = vld [vmem:[#allocation2 + $0xe8] sm:$0xf]
        %v1990 = vld [vmem:[#allocation2 + $0xec] sm:$0xf]
        %v1991 = vld [vmem:[#allocation2 + $0xf0] sm:$0xf]
        %v1992 = vld [vmem:[#allocation2 + $0xf4] sm:$0xf]
        %v1993 = vld [vmem:[#allocation2 + $0xf8] sm:$0xf]
        %v1994 = vld [vmem:[#allocation2 + $0xfc] sm:$0xf]
        %v1995 = vld [vmem:[#allocation2 + $0x100] sm:$0xf]
        %v1996 = vld [vmem:[#allocation2 + $0x104] sm:$0xf]
        %v1997 = vld [vmem:[#allocation2 + $0x108] sm:$0xf]
        %v1998 = vld [vmem:[#allocation2 + $0x10c] sm:$0xf]
        %v1999 = vld [vmem:[#allocation2 + $0x110] sm:$0xf]
        %v2000 = vld [vmem:[#allocation2 + $0x114] sm:$0xf]
        %v2001 = vld [vmem:[#allocation2 + $0x118] sm:$0xf]
        %v2002 = vld [vmem:[#allocation2 + $0x11c] sm:$0xf]
        %v2003 = vld [vmem:[#allocation2 + $0x120] sm:$0xf]
        %v2004 = vld [vmem:[#allocation2 + $0x124] sm:$0xf]
        %v2005 = vld [vmem:[#allocation2 + $0x128] sm:$0xf]
        %v2006 = vld [vmem:[#allocation2 + $0x12c] sm:$0xf]
        %v2007 = vld [vmem:[#allocation2 + $0x130] sm:$0xf]
        %v2008 = vld [vmem:[#allocation2 + $0x134] sm:$0xf]
        %v2009 = vld [vmem:[#allocation2 + $0x138] sm:$0xf]
        %v2010 = vld [vmem:[#allocation2 + $0x13c] sm:$0xf]
        %v2011 = vld [vmem:[#allocation2 + $0x140] sm:$0xf]
        %v2012 = vld [vmem:[#allocation2 + $0x144] sm:$0xf]
        %v2013 = vld [vmem:[#allocation2 + $0x148] sm:$0xf]
        %v2014 = vld [vmem:[#allocation2 + $0x14c] sm:$0xf]
        %v2015 = vld [vmem:[#allocation2 + $0x150] sm:$0xf]
        %v2016 = vld [vmem:[#allocation2 + $0x154] sm:$0xf]
        %v2017 = vld [vmem:[#allocation2 + $0x158] sm:$0xf]
        %v2018 = vld [vmem:[#allocation2 + $0x15c] sm:$0xf]
        %v2019 = vld [vmem:[#allocation2 + $0x160] sm:$0xf]
        %v2020 = vld [vmem:[#allocation2 + $0x164] sm:$0xf]
        %v2021 = vld [vmem:[#allocation2 + $0x168] sm:$0xf]
        %v2022 = vld [vmem:[#allocation2 + $0x16c] sm:$0xf]
        %v2023 = vld [vmem:[#allocation2 + $0x170] sm:$0xf]
        %v2024 = vld [vmem:[#allocation2 + $0x174] sm:$0xf]
        %v2025 = vld [vmem:[#allocation2 + $0x178] sm:$0xf]
        %v2026 = vld [vmem:[#allocation2 + $0x17c] sm:$0xf]
        %v2027 = vld [vmem:[#allocation2 + $0x180] sm:$0xf]
        %v2028 = vld [vmem:[#allocation2 + $0x184] sm:$0xf]
        %v2029 = vld [vmem:[#allocation2 + $0x188] sm:$0xf]
        %v2030 = vld [vmem:[#allocation2 + $0x18c] sm:$0xf]
        %v2031 = vld [vmem:[#allocation2 + $0x190] sm:$0xf]
        %v2032 = vld [vmem:[#allocation2 + $0x194] sm:$0xf]
        %v2033 = vld [vmem:[#allocation2 + $0x198] sm:$0xf]
        %v2034 = vld [vmem:[#allocation2 + $0x19c] sm:$0xf]
        %v2035 = vld [vmem:[#allocation2 + $0x1a0] sm:$0xf]
        %v2036 = vld [vmem:[#allocation2 + $0x1a4] sm:$0xf]
        %v2037 = vld [vmem:[#allocation2 + $0x1a8] sm:$0xf]
        %v2038 = vld [vmem:[#allocation2 + $0x1ac] sm:$0xf]
        %v2039 = vld [vmem:[#allocation2 + $0x1b0] sm:$0xf]
        %v2040 = vld [vmem:[#allocation2 + $0x1b4] sm:$0xf]
        %v2041 = vld [vmem:[#allocation2 + $0x1b8] sm:$0xf]
        %v2042 = vld [vmem:[#allocation2 + $0x1bc] sm:$0xf]
        %v2043 = vld [vmem:[#allocation2 + $0x1c0] sm:$0xf]
        %v2044 = vld [vmem:[#allocation2 + $0x1c4] sm:$0xf]
        %v2045 = vld [vmem:[#allocation2 + $0x1c8] sm:$0xf]
        %v2046 = vld [vmem:[#allocation2 + $0x1cc] sm:$0xf]
        %v2047 = vld [vmem:[#allocation2 + $0x1d0] sm:$0xf]
        %v2048 = vld [vmem:[#allocation2 + $0x1d4] sm:$0xf]
        %v2049 = vld [vmem:[#allocation2 + $0x1d8] sm:$0xf]
        %v2050 = vld [vmem:[#allocation2 + $0x1dc] sm:$0xf]
        %v2051 = vld [vmem:[#allocation2 + $0x1e0] sm:$0xf]
        %v2052 = vld [vmem:[#allocation2 + $0x1e4] sm:$0xf]
        %v2053 = vld [vmem:[#allocation2 + $0x1e8] sm:$0xf]
        %v2054 = vld [vmem:[#allocation2 + $0x1ec] sm:$0xf]
        %v2055 = vld [vmem:[#allocation2 + $0x1f0] sm:$0xf]
        %v2056 = vld [vmem:[#allocation2 + $0x1f4] sm:$0xf]
        %v2057 = vld [vmem:[#allocation2 + $0x1f8] sm:$0xf]
        %v2058 = vld [vmem:[#allocation2 + $0x1fc] sm:$0xf]
        %v2059 = vld [vmem:[#allocation2 + $0x200] sm:$0xf]
        %v2060 = vld [vmem:[#allocation2 + $0x204] sm:$0xf]
        %v2061 = vld [vmem:[#allocation2 + $0x208] sm:$0xf]
        %v2062 = vld [vmem:[#allocation2 + $0x20c] sm:$0xf]
        %v2063 = vld [vmem:[#allocation2 + $0x210] sm:$0xf]
        %v2064 = vld [vmem:[#allocation2 + $0x214] sm:$0xf]
        %v2065 = vld [vmem:[#allocation2 + $0x218] sm:$0xf]
        %v2066 = vld [vmem:[#allocation2 + $0x21c] sm:$0xf]
        %v2067 = vld [vmem:[#allocation2 + $0x220] sm:$0xf]
        %v2068 = vld [vmem:[#allocation2 + $0x224] sm:$0xf]
        %v2069 = vld [vmem:[#allocation2 + $0x228] sm:$0xf]
        %v2070 = vld [vmem:[#allocation2 + $0x22c] sm:$0xf]
        %v2071 = vld [vmem:[#allocation2 + $0x230] sm:$0xf]
        %v2072 = vld [vmem:[#allocation2 + $0x234] sm:$0xf]
        %v2073 = vld [vmem:[#allocation2 + $0x238] sm:$0xf]
        %v2074 = vld [vmem:[#allocation2 + $0x23c] sm:$0xf]
        %v2076 = vshrl.u32 %v537, 16
        %v2078 = vshll.u32 %v537, 16
        %v2080 = vrot.slane %v2078, 1
        %v2081 = vor.u32 %v2076, %v2080
        %v2082 = vsel %vm617, %v2081, %v628
        %v2084 = vshrl.u32 %v629, 16
        %v2086 = vshll.u32 %v629, 16
        %v2088 = vrot.slane %v2086, 1
        %v2089 = vor.u32 %v2084, %v2088
        %v2091 = vshll.u32 %v630, 16
        %v2093 = vrot.slane %v2091, 1
        %v2094 = vsel %vm617, %v2089, %v2093
        %v2096 = vshrl.u32 %v893, 16
        %v2098 = vshll.u32 %v893, 16
        %v2100 = vrot.slane %v2098, 1
        %v2101 = vor.u32 %v2096, %v2100
        %v2103 = vshll.u32 %v892, 16
        %v2105 = vrot.slane %v2103, 1
        %v2106 = vsel %vm617, %v2101, %v2105
        %v2108 = vshrl.u32 %v1035, 16
        %v2110 = vshll.u32 %v1035, 16
        %v2112 = vrot.slane %v2110, 1
        %v2113 = vor.u32 %v2108, %v2112
        %v2114 = vsel %vm617, %v2113, %v1125
        %v2116 = vshrl.u32 %v1126, 16
        %v2118 = vshll.u32 %v1126, 16
        %v2120 = vrot.slane %v2118, 1
        %v2121 = vor.u32 %v2116, %v2120
        %v2123 = vshll.u32 %v1127, 16
        %v2125 = vrot.slane %v2123, 1
        %v2126 = vsel %vm617, %v2121, %v2125
        %v2128 = vshrl.u32 %v1389, 16
        %v2130 = vshll.u32 %v1389, 16
        %v2132 = vrot.slane %v2130, 1
        %v2133 = vor.u32 %v2128, %v2132
        %v2135 = vshll.u32 %v1388, 16
        %v2137 = vrot.slane %v2135, 1
        %v2138 = vsel %vm617, %v2133, %v2137
        %v2140 = vshrl.u32 %v1531, 16
        %v2142 = vshll.u32 %v1531, 16
        %v2144 = vrot.slane %v2142, 1
        %v2145 = vor.u32 %v2140, %v2144
        %v2146 = vsel %vm617, %v2145, %v1621
        %v2148 = vshrl.u32 %v1622, 16
        %v2150 = vshll.u32 %v1622, 16
        %v2152 = vrot.slane %v2150, 1
        %v2153 = vor.u32 %v2148, %v2152
        %v2155 = vshll.u32 %v1623, 16
        %v2157 = vrot.slane %v2155, 1
        %v2158 = vsel %vm617, %v2153, %v2157
        %v2160 = vshrl.u32 %v1885, 16
        %v2162 = vshll.u32 %v1885, 16
        %v2164 = vrot.slane %v2162, 1
        %v2165 = vor.u32 %v2160, %v2164
        %v2167 = vshll.u32 %v1884, 16
        %v2169 = vrot.slane %v2167, 1
        %v2170 = vsel %vm617, %v2165, %v2169
        %v2172 = vshrl.u32 %v539, 16
        %v2174 = vshll.u32 %v539, 16
        %v2176 = vrot.slane %v2174, 1
        %v2177 = vor.u32 %v2172, %v2176
        %v2178 = vsel %vm617, %v2177, %v642
        %v2180 = vshrl.u32 %v643, 16
        %v2182 = vshll.u32 %v643, 16
        %v2184 = vrot.slane %v2182, 1
        %v2185 = vor.u32 %v2180, %v2184
        %v2187 = vshll.u32 %v644, 16
        %v2189 = vrot.slane %v2187, 1
        %v2190 = vsel %vm617, %v2185, %v2189
        %v2192 = vshrl.u32 %v896, 16
        %v2194 = vshll.u32 %v896, 16
        %v2196 = vrot.slane %v2194, 1
        %v2197 = vor.u32 %v2192, %v2196
        %v2199 = vshll.u32 %v895, 16
        %v2201 = vrot.slane %v2199, 1
        %v2202 = vsel %vm617, %v2197, %v2201
        %v2204 = vshrl.u32 %v1037, 16
        %v2206 = vshll.u32 %v1037, 16
        %v2208 = vrot.slane %v2206, 1
        %v2209 = vor.u32 %v2204, %v2208
        %v2210 = vsel %vm617, %v2209, %v1139
        %v2212 = vshrl.u32 %v1140, 16
        %v2214 = vshll.u32 %v1140, 16
        %v2216 = vrot.slane %v2214, 1
        %v2217 = vor.u32 %v2212, %v2216
        %v2219 = vshll.u32 %v1141, 16
        %v2221 = vrot.slane %v2219, 1
        %v2222 = vsel %vm617, %v2217, %v2221
        %v2224 = vshrl.u32 %v1392, 16
        %v2226 = vshll.u32 %v1392, 16
        %v2228 = vrot.slane %v2226, 1
        %v2229 = vor.u32 %v2224, %v2228
        %v2231 = vshll.u32 %v1391, 16
        %v2233 = vrot.slane %v2231, 1
        %v2234 = vsel %vm617, %v2229, %v2233
        %v2236 = vshrl.u32 %v1533, 16
        %v2238 = vshll.u32 %v1533, 16
        %v2240 = vrot.slane %v2238, 1
        %v2241 = vor.u32 %v2236, %v2240
        %v2242 = vsel %vm617, %v2241, %v1635
        %v2244 = vshrl.u32 %v1636, 16
        %v2246 = vshll.u32 %v1636, 16
        %v2248 = vrot.slane %v2246, 1
        %v2249 = vor.u32 %v2244, %v2248
        %v2251 = vshll.u32 %v1637, 16
        %v2253 = vrot.slane %v2251, 1
        %v2254 = vsel %vm617, %v2249, %v2253
        %v2256 = vshrl.u32 %v1888, 16
        %v2258 = vshll.u32 %v1888, 16
        %v2260 = vrot.slane %v2258, 1
        %v2261 = vor.u32 %v2256, %v2260
        %v2263 = vshll.u32 %v1887, 16
        %v2265 = vrot.slane %v2263, 1
        %v2266 = vsel %vm617, %v2261, %v2265
        %v2268 = vshrl.u32 %v541, 16
        %v2270 = vshll.u32 %v541, 16
        %v2272 = vrot.slane %v2270, 1
        %v2273 = vor.u32 %v2268, %v2272
        %v2274 = vsel %vm617, %v2273, %v656
        %v2276 = vshrl.u32 %v657, 16
        %v2278 = vshll.u32 %v657, 16
        %v2280 = vrot.slane %v2278, 1
        %v2281 = vor.u32 %v2276, %v2280
        %v2283 = vshll.u32 %v658, 16
        %v2285 = vrot.slane %v2283, 1
        %v2286 = vsel %vm617, %v2281, %v2285
        %v2288 = vshrl.u32 %v899, 16
        %v2290 = vshll.u32 %v899, 16
        %v2292 = vrot.slane %v2290, 1
        %v2293 = vor.u32 %v2288, %v2292
        %v2295 = vshll.u32 %v898, 16
        %v2297 = vrot.slane %v2295, 1
        %v2298 = vsel %vm617, %v2293, %v2297
        %v2300 = vshrl.u32 %v1039, 16
        %v2302 = vshll.u32 %v1039, 16
        %v2304 = vrot.slane %v2302, 1
        %v2305 = vor.u32 %v2300, %v2304
        %v2306 = vsel %vm617, %v2305, %v1153
        %v2308 = vshrl.u32 %v1154, 16
        %v2310 = vshll.u32 %v1154, 16
        %v2312 = vrot.slane %v2310, 1
        %v2313 = vor.u32 %v2308, %v2312
        %v2315 = vshll.u32 %v1155, 16
        %v2317 = vrot.slane %v2315, 1
        %v2318 = vsel %vm617, %v2313, %v2317
        %v2320 = vshrl.u32 %v1395, 16
        %v2322 = vshll.u32 %v1395, 16
        %v2324 = vrot.slane %v2322, 1
        %v2325 = vor.u32 %v2320, %v2324
        %v2327 = vshll.u32 %v1394, 16
        %v2329 = vrot.slane %v2327, 1
        %v2330 = vsel %vm617, %v2325, %v2329
        %v2332 = vshrl.u32 %v1535, 16
        %v2334 = vshll.u32 %v1535, 16
        %v2336 = vrot.slane %v2334, 1
        %v2337 = vor.u32 %v2332, %v2336
        %v2338 = vsel %vm617, %v2337, %v1649
        %v2340 = vshrl.u32 %v1650, 16
        %v2342 = vshll.u32 %v1650, 16
        %v2344 = vrot.slane %v2342, 1
        %v2345 = vor.u32 %v2340, %v2344
        %v2347 = vshll.u32 %v1651, 16
        %v2349 = vrot.slane %v2347, 1
        %v2350 = vsel %vm617, %v2345, %v2349
        %v2352 = vshrl.u32 %v1891, 16
        %v2354 = vshll.u32 %v1891, 16
        %v2356 = vrot.slane %v2354, 1
        %v2357 = vor.u32 %v2352, %v2356
        %v2359 = vshll.u32 %v1890, 16
        %v2361 = vrot.slane %v2359, 1
        %v2362 = vsel %vm617, %v2357, %v2361
        %v2364 = vshrl.u32 %v543, 16
        %v2366 = vshll.u32 %v543, 16
        %v2368 = vrot.slane %v2366, 1
        %v2369 = vor.u32 %v2364, %v2368
        %v2370 = vsel %vm617, %v2369, %v670
        %v2372 = vshrl.u32 %v671, 16
        %v2374 = vshll.u32 %v671, 16
        %v2376 = vrot.slane %v2374, 1
        %v2377 = vor.u32 %v2372, %v2376
        %v2379 = vshll.u32 %v672, 16
        %v2381 = vrot.slane %v2379, 1
        %v2382 = vsel %vm617, %v2377, %v2381
        %v2384 = vshrl.u32 %v902, 16
        %v2386 = vshll.u32 %v902, 16
        %v2388 = vrot.slane %v2386, 1
        %v2389 = vor.u32 %v2384, %v2388
        %v2391 = vshll.u32 %v901, 16
        %v2393 = vrot.slane %v2391, 1
        %v2394 = vsel %vm617, %v2389, %v2393
        %v2396 = vshrl.u32 %v1041, 16
        %v2398 = vshll.u32 %v1041, 16
        %v2400 = vrot.slane %v2398, 1
        %v2401 = vor.u32 %v2396, %v2400
        %v2402 = vsel %vm617, %v2401, %v1167
        %v2404 = vshrl.u32 %v1168, 16
        %v2406 = vshll.u32 %v1168, 16
        %v2408 = vrot.slane %v2406, 1
        %v2409 = vor.u32 %v2404, %v2408
        %v2411 = vshll.u32 %v1169, 16
        %v2413 = vrot.slane %v2411, 1
        %v2414 = vsel %vm617, %v2409, %v2413
        %v2416 = vshrl.u32 %v1398, 16
        %v2418 = vshll.u32 %v1398, 16
        %v2420 = vrot.slane %v2418, 1
        %v2421 = vor.u32 %v2416, %v2420
        %v2423 = vshll.u32 %v1397, 16
        %v2425 = vrot.slane %v2423, 1
        %v2426 = vsel %vm617, %v2421, %v2425
        %v2428 = vshrl.u32 %v1537, 16
        %v2430 = vshll.u32 %v1537, 16
        %v2432 = vrot.slane %v2430, 1
        %v2433 = vor.u32 %v2428, %v2432
        %v2434 = vsel %vm617, %v2433, %v1663
        %v2436 = vshrl.u32 %v1664, 16
        %v2438 = vshll.u32 %v1664, 16
        %v2440 = vrot.slane %v2438, 1
        %v2441 = vor.u32 %v2436, %v2440
        %v2443 = vshll.u32 %v1665, 16
        %v2445 = vrot.slane %v2443, 1
        %v2446 = vsel %vm617, %v2441, %v2445
        %v2448 = vshrl.u32 %v1894, 16
        %v2450 = vshll.u32 %v1894, 16
        %v2452 = vrot.slane %v2450, 1
        %v2453 = vor.u32 %v2448, %v2452
        %v2455 = vshll.u32 %v1893, 16
        %v2457 = vrot.slane %v2455, 1
        %v2458 = vsel %vm617, %v2453, %v2457
        %v2460 = vshrl.u32 %v545, 16
        %v2462 = vshll.u32 %v545, 16
        %v2464 = vrot.slane %v2462, 1
        %v2465 = vor.u32 %v2460, %v2464
        %v2466 = vsel %vm617, %v2465, %v684
        %v2468 = vshrl.u32 %v685, 16
        %v2470 = vshll.u32 %v685, 16
        %v2472 = vrot.slane %v2470, 1
        %v2473 = vor.u32 %v2468, %v2472
        %v2475 = vshll.u32 %v686, 16
        %v2477 = vrot.slane %v2475, 1
        %v2478 = vsel %vm617, %v2473, %v2477
        %v2480 = vshrl.u32 %v905, 16
        %v2482 = vshll.u32 %v905, 16
        %v2484 = vrot.slane %v2482, 1
        %v2485 = vor.u32 %v2480, %v2484
        %v2487 = vshll.u32 %v904, 16
        %v2489 = vrot.slane %v2487, 1
        %v2490 = vsel %vm617, %v2485, %v2489
        %v2492 = vshrl.u32 %v1043, 16
        %v2494 = vshll.u32 %v1043, 16
        %v2496 = vrot.slane %v2494, 1
        %v2497 = vor.u32 %v2492, %v2496
        %v2498 = vsel %vm617, %v2497, %v1181
        %v2500 = vshrl.u32 %v1182, 16
        %v2502 = vshll.u32 %v1182, 16
        %v2504 = vrot.slane %v2502, 1
        %v2505 = vor.u32 %v2500, %v2504
        %v2507 = vshll.u32 %v1183, 16
        %v2509 = vrot.slane %v2507, 1
        %v2510 = vsel %vm617, %v2505, %v2509
        %v2512 = vshrl.u32 %v1401, 16
        %v2514 = vshll.u32 %v1401, 16
        %v2516 = vrot.slane %v2514, 1
        %v2517 = vor.u32 %v2512, %v2516
        %v2519 = vshll.u32 %v1400, 16
        %v2521 = vrot.slane %v2519, 1
        %v2522 = vsel %vm617, %v2517, %v2521
        %v2524 = vshrl.u32 %v1539, 16
        %v2526 = vshll.u32 %v1539, 16
        %v2528 = vrot.slane %v2526, 1
        %v2529 = vor.u32 %v2524, %v2528
        %v2530 = vsel %vm617, %v2529, %v1677
        %v2532 = vshrl.u32 %v1678, 16
        %v2534 = vshll.u32 %v1678, 16
        %v2536 = vrot.slane %v2534, 1
        %v2537 = vor.u32 %v2532, %v2536
        %v2539 = vshll.u32 %v1679, 16
        %v2541 = vrot.slane %v2539, 1
        %v2542 = vsel %vm617, %v2537, %v2541
        %v2544 = vshrl.u32 %v1897, 16
        %v2546 = vshll.u32 %v1897, 16
        %v2548 = vrot.slane %v2546, 1
        %v2549 = vor.u32 %v2544, %v2548
        %v2551 = vshll.u32 %v1896, 16
        %v2553 = vrot.slane %v2551, 1
        %v2554 = vsel %vm617, %v2549, %v2553
        %v2556 = vshrl.u32 %v547, 16
        %v2558 = vshll.u32 %v547, 16
        %v2560 = vrot.slane %v2558, 1
        %v2561 = vor.u32 %v2556, %v2560
        %v2562 = vsel %vm617, %v2561, %v698
        %v2564 = vshrl.u32 %v699, 16
        %v2566 = vshll.u32 %v699, 16
        %v2568 = vrot.slane %v2566, 1
        %v2569 = vor.u32 %v2564, %v2568
        %v2571 = vshll.u32 %v700, 16
        %v2573 = vrot.slane %v2571, 1
        %v2574 = vsel %vm617, %v2569, %v2573
        %v2576 = vshrl.u32 %v908, 16
        %v2578 = vshll.u32 %v908, 16
        %v2580 = vrot.slane %v2578, 1
        %v2581 = vor.u32 %v2576, %v2580
        %v2583 = vshll.u32 %v907, 16
        %v2585 = vrot.slane %v2583, 1
        %v2586 = vsel %vm617, %v2581, %v2585
        %v2588 = vshrl.u32 %v1045, 16
        %v2590 = vshll.u32 %v1045, 16
        %v2592 = vrot.slane %v2590, 1
        %v2593 = vor.u32 %v2588, %v2592
        %v2594 = vsel %vm617, %v2593, %v1195
        %v2596 = vshrl.u32 %v1196, 16
        %v2598 = vshll.u32 %v1196, 16
        %v2600 = vrot.slane %v2598, 1
        %v2601 = vor.u32 %v2596, %v2600
        %v2603 = vshll.u32 %v1197, 16
        %v2605 = vrot.slane %v2603, 1
        %v2606 = vsel %vm617, %v2601, %v2605
        %v2608 = vshrl.u32 %v1404, 16
        %v2610 = vshll.u32 %v1404, 16
        %v2612 = vrot.slane %v2610, 1
        %v2613 = vor.u32 %v2608, %v2612
        %v2615 = vshll.u32 %v1403, 16
        %v2617 = vrot.slane %v2615, 1
        %v2618 = vsel %vm617, %v2613, %v2617
        %v2620 = vshrl.u32 %v1541, 16
        %v2622 = vshll.u32 %v1541, 16
        %v2624 = vrot.slane %v2622, 1
        %v2625 = vor.u32 %v2620, %v2624
        %v2626 = vsel %vm617, %v2625, %v1691
        %v2628 = vshrl.u32 %v1692, 16
        %v2630 = vshll.u32 %v1692, 16
        %v2632 = vrot.slane %v2630, 1
        %v2633 = vor.u32 %v2628, %v2632
        %v2635 = vshll.u32 %v1693, 16
        %v2637 = vrot.slane %v2635, 1
        %v2638 = vsel %vm617, %v2633, %v2637
        %v2640 = vshrl.u32 %v1900, 16
        %v2642 = vshll.u32 %v1900, 16
        %v2644 = vrot.slane %v2642, 1
        %v2645 = vor.u32 %v2640, %v2644
        %v2647 = vshll.u32 %v1899, 16
        %v2649 = vrot.slane %v2647, 1
        %v2650 = vsel %vm617, %v2645, %v2649
        %v2652 = vshrl.u32 %v549, 16
        %v2654 = vshll.u32 %v549, 16
        %v2656 = vrot.slane %v2654, 1
        %v2657 = vor.u32 %v2652, %v2656
        %v2658 = vsel %vm617, %v2657, %v712
        %v2660 = vshrl.u32 %v713, 16
        %v2662 = vshll.u32 %v713, 16
        %v2664 = vrot.slane %v2662, 1
        %v2665 = vor.u32 %v2660, %v2664
        %v2667 = vshll.u32 %v714, 16
        %v2669 = vrot.slane %v2667, 1
        %v2670 = vsel %vm617, %v2665, %v2669
        %v2672 = vshrl.u32 %v911, 16
        %v2674 = vshll.u32 %v911, 16
        %v2676 = vrot.slane %v2674, 1
        %v2677 = vor.u32 %v2672, %v2676
        %v2679 = vshll.u32 %v910, 16
        %v2681 = vrot.slane %v2679, 1
        %v2682 = vsel %vm617, %v2677, %v2681
        %v2684 = vshrl.u32 %v1047, 16
        %v2686 = vshll.u32 %v1047, 16
        %v2688 = vrot.slane %v2686, 1
        %v2689 = vor.u32 %v2684, %v2688
        %v2690 = vsel %vm617, %v2689, %v1209
        %v2692 = vshrl.u32 %v1210, 16
        %v2694 = vshll.u32 %v1210, 16
        %v2696 = vrot.slane %v2694, 1
        %v2697 = vor.u32 %v2692, %v2696
        %v2699 = vshll.u32 %v1211, 16
        %v2701 = vrot.slane %v2699, 1
        %v2702 = vsel %vm617, %v2697, %v2701
        %v2704 = vshrl.u32 %v1407, 16
        %v2706 = vshll.u32 %v1407, 16
        %v2708 = vrot.slane %v2706, 1
        %v2709 = vor.u32 %v2704, %v2708
        %v2711 = vshll.u32 %v1406, 16
        %v2713 = vrot.slane %v2711, 1
        %v2714 = vsel %vm617, %v2709, %v2713
        %v2716 = vshrl.u32 %v1543, 16
        %v2718 = vshll.u32 %v1543, 16
        %v2720 = vrot.slane %v2718, 1
        %v2721 = vor.u32 %v2716, %v2720
        %v2722 = vsel %vm617, %v2721, %v1705
        %v2724 = vshrl.u32 %v1706, 16
        %v2726 = vshll.u32 %v1706, 16
        %v2728 = vrot.slane %v2726, 1
        %v2729 = vor.u32 %v2724, %v2728
        %v2731 = vshll.u32 %v1707, 16
        %v2733 = vrot.slane %v2731, 1
        %v2734 = vsel %vm617, %v2729, %v2733
        %v2736 = vshrl.u32 %v1903, 16
        %v2738 = vshll.u32 %v1903, 16
        %v2740 = vrot.slane %v2738, 1
        %v2741 = vor.u32 %v2736, %v2740
        %v2743 = vshll.u32 %v1902, 16
        %v2745 = vrot.slane %v2743, 1
        %v2746 = vsel %vm617, %v2741, %v2745
        %v2748 = vshrl.u32 %v551, 16
        %v2750 = vshll.u32 %v551, 16
        %v2752 = vrot.slane %v2750, 1
        %v2753 = vor.u32 %v2748, %v2752
        %v2754 = vsel %vm617, %v2753, %v726
        %v2756 = vshrl.u32 %v727, 16
        %v2758 = vshll.u32 %v727, 16
        %v2760 = vrot.slane %v2758, 1
        %v2761 = vor.u32 %v2756, %v2760
        %v2763 = vshll.u32 %v728, 16
        %v2765 = vrot.slane %v2763, 1
        %v2766 = vsel %vm617, %v2761, %v2765
        %v2768 = vshrl.u32 %v914, 16
        %v2770 = vshll.u32 %v914, 16
        %v2772 = vrot.slane %v2770, 1
        %v2773 = vor.u32 %v2768, %v2772
        %v2775 = vshll.u32 %v913, 16
        %v2777 = vrot.slane %v2775, 1
        %v2778 = vsel %vm617, %v2773, %v2777
        %v2780 = vshrl.u32 %v1049, 16
        %v2782 = vshll.u32 %v1049, 16
        %v2784 = vrot.slane %v2782, 1
        %v2785 = vor.u32 %v2780, %v2784
        %v2786 = vsel %vm617, %v2785, %v1223
        %v2788 = vshrl.u32 %v1224, 16
        %v2790 = vshll.u32 %v1224, 16
        %v2792 = vrot.slane %v2790, 1
        %v2793 = vor.u32 %v2788, %v2792
        %v2795 = vshll.u32 %v1225, 16
        %v2797 = vrot.slane %v2795, 1
        %v2798 = vsel %vm617, %v2793, %v2797
        %v2800 = vshrl.u32 %v1410, 16
        %v2802 = vshll.u32 %v1410, 16
        %v2804 = vrot.slane %v2802, 1
        %v2805 = vor.u32 %v2800, %v2804
        %v2807 = vshll.u32 %v1409, 16
        %v2809 = vrot.slane %v2807, 1
        %v2810 = vsel %vm617, %v2805, %v2809
        %v2812 = vshrl.u32 %v1545, 16
        %v2814 = vshll.u32 %v1545, 16
        %v2816 = vrot.slane %v2814, 1
        %v2817 = vor.u32 %v2812, %v2816
        %v2818 = vsel %vm617, %v2817, %v1719
        %v2820 = vshrl.u32 %v1720, 16
        %v2822 = vshll.u32 %v1720, 16
        %v2824 = vrot.slane %v2822, 1
        %v2825 = vor.u32 %v2820, %v2824
        %v2827 = vshll.u32 %v1721, 16
        %v2829 = vrot.slane %v2827, 1
        %v2830 = vsel %vm617, %v2825, %v2829
        %v2832 = vshrl.u32 %v1906, 16
        %v2834 = vshll.u32 %v1906, 16
        %v2836 = vrot.slane %v2834, 1
        %v2837 = vor.u32 %v2832, %v2836
        %v2839 = vshll.u32 %v1905, 16
        %v2841 = vrot.slane %v2839, 1
        %v2842 = vsel %vm617, %v2837, %v2841
        %v2844 = vshrl.u32 %v553, 16
        %v2846 = vshll.u32 %v553, 16
        %v2848 = vrot.slane %v2846, 1
        %v2849 = vor.u32 %v2844, %v2848
        %v2850 = vsel %vm617, %v2849, %v740
        %v2852 = vshrl.u32 %v741, 16
        %v2854 = vshll.u32 %v741, 16
        %v2856 = vrot.slane %v2854, 1
        %v2857 = vor.u32 %v2852, %v2856
        %v2859 = vshll.u32 %v742, 16
        %v2861 = vrot.slane %v2859, 1
        %v2862 = vsel %vm617, %v2857, %v2861
        %v2864 = vshrl.u32 %v917, 16
        %v2866 = vshll.u32 %v917, 16
        %v2868 = vrot.slane %v2866, 1
        %v2869 = vor.u32 %v2864, %v2868
        %v2871 = vshll.u32 %v916, 16
        %v2873 = vrot.slane %v2871, 1
        %v2874 = vsel %vm617, %v2869, %v2873
        %v2876 = vshrl.u32 %v1051, 16
        %v2878 = vshll.u32 %v1051, 16
        %v2880 = vrot.slane %v2878, 1
        %v2881 = vor.u32 %v2876, %v2880
        %v2882 = vsel %vm617, %v2881, %v1237
        %v2884 = vshrl.u32 %v1238, 16
        %v2886 = vshll.u32 %v1238, 16
        %v2888 = vrot.slane %v2886, 1
        %v2889 = vor.u32 %v2884, %v2888
        %v2891 = vshll.u32 %v1239, 16
        %v2893 = vrot.slane %v2891, 1
        %v2894 = vsel %vm617, %v2889, %v2893
        %v2896 = vshrl.u32 %v1413, 16
        %v2898 = vshll.u32 %v1413, 16
        %v2900 = vrot.slane %v2898, 1
        %v2901 = vor.u32 %v2896, %v2900
        %v2903 = vshll.u32 %v1412, 16
        %v2905 = vrot.slane %v2903, 1
        %v2906 = vsel %vm617, %v2901, %v2905
        %v2908 = vshrl.u32 %v1547, 16
        %v2910 = vshll.u32 %v1547, 16
        %v2912 = vrot.slane %v2910, 1
        %v2913 = vor.u32 %v2908, %v2912
        %v2914 = vsel %vm617, %v2913, %v1733
        %v2916 = vshrl.u32 %v1734, 16
        %v2918 = vshll.u32 %v1734, 16
        %v2920 = vrot.slane %v2918, 1
        %v2921 = vor.u32 %v2916, %v2920
        %v2923 = vshll.u32 %v1735, 16
        %v2925 = vrot.slane %v2923, 1
        %v2926 = vsel %vm617, %v2921, %v2925
        %v2928 = vshrl.u32 %v1909, 16
        %v2930 = vshll.u32 %v1909, 16
        %v2932 = vrot.slane %v2930, 1
        %v2933 = vor.u32 %v2928, %v2932
        %v2935 = vshll.u32 %v1908, 16
        %v2937 = vrot.slane %v2935, 1
        %v2938 = vsel %vm617, %v2933, %v2937
        %v2940 = vshrl.u32 %v555, 16
        %v2942 = vshll.u32 %v555, 16
        %v2944 = vrot.slane %v2942, 1
        %v2945 = vor.u32 %v2940, %v2944
        %v2946 = vsel %vm617, %v2945, %v754
        %v2948 = vshrl.u32 %v755, 16
        %v2950 = vshll.u32 %v755, 16
        %v2952 = vrot.slane %v2950, 1
        %v2953 = vor.u32 %v2948, %v2952
        %v2955 = vshll.u32 %v756, 16
        %v2957 = vrot.slane %v2955, 1
        %v2958 = vsel %vm617, %v2953, %v2957
        %v2960 = vshrl.u32 %v920, 16
        %v2962 = vshll.u32 %v920, 16
        %v2964 = vrot.slane %v2962, 1
        %v2965 = vor.u32 %v2960, %v2964
        %v2967 = vshll.u32 %v919, 16
        %v2969 = vrot.slane %v2967, 1
        %v2970 = vsel %vm617, %v2965, %v2969
        %v2972 = vshrl.u32 %v1053, 16
        %v2974 = vshll.u32 %v1053, 16
        %v2976 = vrot.slane %v2974, 1
        %v2977 = vor.u32 %v2972, %v2976
        %v2978 = vsel %vm617, %v2977, %v1251
        %v2980 = vshrl.u32 %v1252, 16
        %v2982 = vshll.u32 %v1252, 16
        %v2984 = vrot.slane %v2982, 1
        %v2985 = vor.u32 %v2980, %v2984
        %v2987 = vshll.u32 %v1253, 16
        %v2989 = vrot.slane %v2987, 1
        %v2990 = vsel %vm617, %v2985, %v2989
        %v2992 = vshrl.u32 %v1416, 16
        %v2994 = vshll.u32 %v1416, 16
        %v2996 = vrot.slane %v2994, 1
        %v2997 = vor.u32 %v2992, %v2996
        %v2999 = vshll.u32 %v1415, 16
        %v3001 = vrot.slane %v2999, 1
        %v3002 = vsel %vm617, %v2997, %v3001
        %v3004 = vshrl.u32 %v1549, 16
        %v3006 = vshll.u32 %v1549, 16
        %v3008 = vrot.slane %v3006, 1
        %v3009 = vor.u32 %v3004, %v3008
        %v3010 = vsel %vm617, %v3009, %v1747
        %v3012 = vshrl.u32 %v1748, 16
        %v3014 = vshll.u32 %v1748, 16
        %v3016 = vrot.slane %v3014, 1
        %v3017 = vor.u32 %v3012, %v3016
        %v3019 = vshll.u32 %v1749, 16
        %v3021 = vrot.slane %v3019, 1
        %v3022 = vsel %vm617, %v3017, %v3021
        %v3024 = vshrl.u32 %v1912, 16
        %v3026 = vshll.u32 %v1912, 16
        %v3028 = vrot.slane %v3026, 1
        %v3029 = vor.u32 %v3024, %v3028
        %v3031 = vshll.u32 %v1911, 16
        %v3033 = vrot.slane %v3031, 1
        %v3034 = vsel %vm617, %v3029, %v3033
        %v3036 = vshrl.u32 %v557, 16
        %v3038 = vshll.u32 %v557, 16
        %v3040 = vrot.slane %v3038, 1
        %v3041 = vor.u32 %v3036, %v3040
        %v3042 = vsel %vm617, %v3041, %v768
        %v3044 = vshrl.u32 %v769, 16
        %v3046 = vshll.u32 %v769, 16
        %v3048 = vrot.slane %v3046, 1
        %v3049 = vor.u32 %v3044, %v3048
        %v3051 = vshll.u32 %v770, 16
        %v3053 = vrot.slane %v3051, 1
        %v3054 = vsel %vm617, %v3049, %v3053
        %v3056 = vshrl.u32 %v923, 16
        %v3058 = vshll.u32 %v923, 16
        %v3060 = vrot.slane %v3058, 1
        %v3061 = vor.u32 %v3056, %v3060
        %v3063 = vshll.u32 %v922, 16
        %v3065 = vrot.slane %v3063, 1
        %v3066 = vsel %vm617, %v3061, %v3065
        %v3068 = vshrl.u32 %v1055, 16
        %v3070 = vshll.u32 %v1055, 16
        %v3072 = vrot.slane %v3070, 1
        %v3073 = vor.u32 %v3068, %v3072
        %v3074 = vsel %vm617, %v3073, %v1265
        %v3076 = vshrl.u32 %v1266, 16
        %v3078 = vshll.u32 %v1266, 16
        %v3080 = vrot.slane %v3078, 1
        %v3081 = vor.u32 %v3076, %v3080
        %v3083 = vshll.u32 %v1267, 16
        %v3085 = vrot.slane %v3083, 1
        %v3086 = vsel %vm617, %v3081, %v3085
        %v3088 = vshrl.u32 %v1419, 16
        %v3090 = vshll.u32 %v1419, 16
        %v3092 = vrot.slane %v3090, 1
        %v3093 = vor.u32 %v3088, %v3092
        %v3095 = vshll.u32 %v1418, 16
        %v3097 = vrot.slane %v3095, 1
        %v3098 = vsel %vm617, %v3093, %v3097
        %v3100 = vshrl.u32 %v1551, 16
        %v3102 = vshll.u32 %v1551, 16
        %v3104 = vrot.slane %v3102, 1
        %v3105 = vor.u32 %v3100, %v3104
        %v3106 = vsel %vm617, %v3105, %v1761
        %v3108 = vshrl.u32 %v1762, 16
        %v3110 = vshll.u32 %v1762, 16
        %v3112 = vrot.slane %v3110, 1
        %v3113 = vor.u32 %v3108, %v3112
        %v3115 = vshll.u32 %v1763, 16
        %v3117 = vrot.slane %v3115, 1
        %v3118 = vsel %vm617, %v3113, %v3117
        %v3120 = vshrl.u32 %v1915, 16
        %v3122 = vshll.u32 %v1915, 16
        %v3124 = vrot.slane %v3122, 1
        %v3125 = vor.u32 %v3120, %v3124
        %v3127 = vshll.u32 %v1914, 16
        %v3129 = vrot.slane %v3127, 1
        %v3130 = vsel %vm617, %v3125, %v3129
        %v3132 = vshrl.u32 %v559, 16
        %v3134 = vshll.u32 %v559, 16
        %v3136 = vrot.slane %v3134, 1
        %v3137 = vor.u32 %v3132, %v3136
        %v3138 = vsel %vm617, %v3137, %v782
        %v3140 = vshrl.u32 %v783, 16
        %v3142 = vshll.u32 %v783, 16
        %v3144 = vrot.slane %v3142, 1
        %v3145 = vor.u32 %v3140, %v3144
        %v3147 = vshll.u32 %v784, 16
        %v3149 = vrot.slane %v3147, 1
        %v3150 = vsel %vm617, %v3145, %v3149
        %v3152 = vshrl.u32 %v926, 16
        %v3154 = vshll.u32 %v926, 16
        %v3156 = vrot.slane %v3154, 1
        %v3157 = vor.u32 %v3152, %v3156
        %v3159 = vshll.u32 %v925, 16
        %v3161 = vrot.slane %v3159, 1
        %v3162 = vsel %vm617, %v3157, %v3161
        %v3164 = vshrl.u32 %v1057, 16
        %v3166 = vshll.u32 %v1057, 16
        %v3168 = vrot.slane %v3166, 1
        %v3169 = vor.u32 %v3164, %v3168
        %v3170 = vsel %vm617, %v3169, %v1279
        %v3172 = vshrl.u32 %v1280, 16
        %v3174 = vshll.u32 %v1280, 16
        %v3176 = vrot.slane %v3174, 1
        %v3177 = vor.u32 %v3172, %v3176
        %v3179 = vshll.u32 %v1281, 16
        %v3181 = vrot.slane %v3179, 1
        %v3182 = vsel %vm617, %v3177, %v3181
        %v3184 = vshrl.u32 %v1422, 16
        %v3186 = vshll.u32 %v1422, 16
        %v3188 = vrot.slane %v3186, 1
        %v3189 = vor.u32 %v3184, %v3188
        %v3191 = vshll.u32 %v1421, 16
        %v3193 = vrot.slane %v3191, 1
        %v3194 = vsel %vm617, %v3189, %v3193
        %v3196 = vshrl.u32 %v1553, 16
        %v3198 = vshll.u32 %v1553, 16
        %v3200 = vrot.slane %v3198, 1
        %v3201 = vor.u32 %v3196, %v3200
        %v3202 = vsel %vm617, %v3201, %v1775
        %v3204 = vshrl.u32 %v1776, 16
        %v3206 = vshll.u32 %v1776, 16
        %v3208 = vrot.slane %v3206, 1
        %v3209 = vor.u32 %v3204, %v3208
        %v3211 = vshll.u32 %v1777, 16
        %v3213 = vrot.slane %v3211, 1
        %v3214 = vsel %vm617, %v3209, %v3213
        %v3216 = vshrl.u32 %v1918, 16
        %v3218 = vshll.u32 %v1918, 16
        %v3220 = vrot.slane %v3218, 1
        %v3221 = vor.u32 %v3216, %v3220
        %v3223 = vshll.u32 %v1917, 16
        %v3225 = vrot.slane %v3223, 1
        %v3226 = vsel %vm617, %v3221, %v3225
        %v3228 = vshrl.u32 %v561, 16
        %v3230 = vshll.u32 %v561, 16
        %v3232 = vrot.slane %v3230, 1
        %v3233 = vor.u32 %v3228, %v3232
        %v3234 = vsel %vm617, %v3233, %v796
        %v3236 = vshrl.u32 %v797, 16
        %v3238 = vshll.u32 %v797, 16
        %v3240 = vrot.slane %v3238, 1
        %v3241 = vor.u32 %v3236, %v3240
        %v3243 = vshll.u32 %v798, 16
        %v3245 = vrot.slane %v3243, 1
        %v3246 = vsel %vm617, %v3241, %v3245
        %v3248 = vshrl.u32 %v929, 16
        %v3250 = vshll.u32 %v929, 16
        %v3252 = vrot.slane %v3250, 1
        %v3253 = vor.u32 %v3248, %v3252
        %v3255 = vshll.u32 %v928, 16
        %v3257 = vrot.slane %v3255, 1
        %v3258 = vsel %vm617, %v3253, %v3257
        %v3260 = vshrl.u32 %v1059, 16
        %v3262 = vshll.u32 %v1059, 16
        %v3264 = vrot.slane %v3262, 1
        %v3265 = vor.u32 %v3260, %v3264
        %v3266 = vsel %vm617, %v3265, %v1293
        %v3268 = vshrl.u32 %v1294, 16
        %v3270 = vshll.u32 %v1294, 16
        %v3272 = vrot.slane %v3270, 1
        %v3273 = vor.u32 %v3268, %v3272
        %v3275 = vshll.u32 %v1295, 16
        %v3277 = vrot.slane %v3275, 1
        %v3278 = vsel %vm617, %v3273, %v3277
        %v3280 = vshrl.u32 %v1425, 16
        %v3282 = vshll.u32 %v1425, 16
        %v3284 = vrot.slane %v3282, 1
        %v3285 = vor.u32 %v3280, %v3284
        %v3287 = vshll.u32 %v1424, 16
        %v3289 = vrot.slane %v3287, 1
        %v3290 = vsel %vm617, %v3285, %v3289
        %v3292 = vshrl.u32 %v1555, 16
        %v3294 = vshll.u32 %v1555, 16
        %v3296 = vrot.slane %v3294, 1
        %v3297 = vor.u32 %v3292, %v3296
        %v3298 = vsel %vm617, %v3297, %v1789
        %v3300 = vshrl.u32 %v1790, 16
        %v3302 = vshll.u32 %v1790, 16
        %v3304 = vrot.slane %v3302, 1
        %v3305 = vor.u32 %v3300, %v3304
        %v3307 = vshll.u32 %v1791, 16
        %v3309 = vrot.slane %v3307, 1
        %v3310 = vsel %vm617, %v3305, %v3309
        %v3312 = vshrl.u32 %v1921, 16
        %v3314 = vshll.u32 %v1921, 16
        %v3316 = vrot.slane %v3314, 1
        %v3317 = vor.u32 %v3312, %v3316
        %v3319 = vshll.u32 %v1920, 16
        %v3321 = vrot.slane %v3319, 1
        %v3322 = vsel %vm617, %v3317, %v3321
        %v3324 = vshrl.u32 %v563, 16
        %v3326 = vshll.u32 %v563, 16
        %v3328 = vrot.slane %v3326, 1
        %v3329 = vor.u32 %v3324, %v3328
        %v3330 = vsel %vm617, %v3329, %v810
        %v3332 = vshrl.u32 %v811, 16
        %v3334 = vshll.u32 %v811, 16
        %v3336 = vrot.slane %v3334, 1
        %v3337 = vor.u32 %v3332, %v3336
        %v3339 = vshll.u32 %v812, 16
        %v3341 = vrot.slane %v3339, 1
        %v3342 = vsel %vm617, %v3337, %v3341
        %v3344 = vshrl.u32 %v932, 16
        %v3346 = vshll.u32 %v932, 16
        %v3348 = vrot.slane %v3346, 1
        %v3349 = vor.u32 %v3344, %v3348
        %v3351 = vshll.u32 %v931, 16
        %v3353 = vrot.slane %v3351, 1
        %v3354 = vsel %vm617, %v3349, %v3353
        %v3356 = vshrl.u32 %v1061, 16
        %v3358 = vshll.u32 %v1061, 16
        %v3360 = vrot.slane %v3358, 1
        %v3361 = vor.u32 %v3356, %v3360
        %v3362 = vsel %vm617, %v3361, %v1307
        %v3364 = vshrl.u32 %v1308, 16
        %v3366 = vshll.u32 %v1308, 16
        %v3368 = vrot.slane %v3366, 1
        %v3369 = vor.u32 %v3364, %v3368
        %v3371 = vshll.u32 %v1309, 16
        %v3373 = vrot.slane %v3371, 1
        %v3374 = vsel %vm617, %v3369, %v3373
        %v3376 = vshrl.u32 %v1428, 16
        %v3378 = vshll.u32 %v1428, 16
        %v3380 = vrot.slane %v3378, 1
        %v3381 = vor.u32 %v3376, %v3380
        %v3383 = vshll.u32 %v1427, 16
        %v3385 = vrot.slane %v3383, 1
        %v3386 = vsel %vm617, %v3381, %v3385
        %v3388 = vshrl.u32 %v1557, 16
        %v3390 = vshll.u32 %v1557, 16
        %v3392 = vrot.slane %v3390, 1
        %v3393 = vor.u32 %v3388, %v3392
        %v3394 = vsel %vm617, %v3393, %v1803
        %v3396 = vshrl.u32 %v1804, 16
        %v3398 = vshll.u32 %v1804, 16
        %v3400 = vrot.slane %v3398, 1
        %v3401 = vor.u32 %v3396, %v3400
        %v3403 = vshll.u32 %v1805, 16
        %v3405 = vrot.slane %v3403, 1
        %v3406 = vsel %vm617, %v3401, %v3405
        %v3408 = vshrl.u32 %v1924, 16
        %v3410 = vshll.u32 %v1924, 16
        %v3412 = vrot.slane %v3410, 1
        %v3413 = vor.u32 %v3408, %v3412
        %v3415 = vshll.u32 %v1923, 16
        %v3417 = vrot.slane %v3415, 1
        %v3418 = vsel %vm617, %v3413, %v3417
        %v3420 = vshrl.u32 %v565, 16
        %v3422 = vshll.u32 %v565, 16
        %v3424 = vrot.slane %v3422, 1
        %v3425 = vor.u32 %v3420, %v3424
        %v3426 = vsel %vm617, %v3425, %v824
        %v3428 = vshrl.u32 %v825, 16
        %v3430 = vshll.u32 %v825, 16
        %v3432 = vrot.slane %v3430, 1
        %v3433 = vor.u32 %v3428, %v3432
        %v3435 = vshll.u32 %v826, 16
        %v3437 = vrot.slane %v3435, 1
        %v3438 = vsel %vm617, %v3433, %v3437
        %v3440 = vshrl.u32 %v935, 16
        %v3442 = vshll.u32 %v935, 16
        %v3444 = vrot.slane %v3442, 1
        %v3445 = vor.u32 %v3440, %v3444
        %v3447 = vshll.u32 %v934, 16
        %v3449 = vrot.slane %v3447, 1
        %v3450 = vsel %vm617, %v3445, %v3449
        %v3452 = vshrl.u32 %v1063, 16
        %v3454 = vshll.u32 %v1063, 16
        %v3456 = vrot.slane %v3454, 1
        %v3457 = vor.u32 %v3452, %v3456
        %v3458 = vsel %vm617, %v3457, %v1321
        %v3460 = vshrl.u32 %v1322, 16
        %v3462 = vshll.u32 %v1322, 16
        %v3464 = vrot.slane %v3462, 1
        %v3465 = vor.u32 %v3460, %v3464
        %v3467 = vshll.u32 %v1323, 16
        %v3469 = vrot.slane %v3467, 1
        %v3470 = vsel %vm617, %v3465, %v3469
        %v3472 = vshrl.u32 %v1431, 16
        %v3474 = vshll.u32 %v1431, 16
        %v3476 = vrot.slane %v3474, 1
        %v3477 = vor.u32 %v3472, %v3476
        %v3479 = vshll.u32 %v1430, 16
        %v3481 = vrot.slane %v3479, 1
        %v3482 = vsel %vm617, %v3477, %v3481
        %v3484 = vshrl.u32 %v1559, 16
        %v3486 = vshll.u32 %v1559, 16
        %v3488 = vrot.slane %v3486, 1
        %v3489 = vor.u32 %v3484, %v3488
        %v3490 = vsel %vm617, %v3489, %v1817
        %v3492 = vshrl.u32 %v1818, 16
        %v3494 = vshll.u32 %v1818, 16
        %v3496 = vrot.slane %v3494, 1
        %v3497 = vor.u32 %v3492, %v3496
        %v3499 = vshll.u32 %v1819, 16
        %v3501 = vrot.slane %v3499, 1
        %v3502 = vsel %vm617, %v3497, %v3501
        %v3504 = vshrl.u32 %v1927, 16
        %v3506 = vshll.u32 %v1927, 16
        %v3508 = vrot.slane %v3506, 1
        %v3509 = vor.u32 %v3504, %v3508
        %v3511 = vshll.u32 %v1926, 16
        %v3513 = vrot.slane %v3511, 1
        %v3514 = vsel %vm617, %v3509, %v3513
        %v3516 = vshrl.u32 %v567, 16
        %v3518 = vshll.u32 %v567, 16
        %v3520 = vrot.slane %v3518, 1
        %v3521 = vor.u32 %v3516, %v3520
        %v3522 = vsel %vm617, %v3521, %v838
        %v3524 = vshrl.u32 %v839, 16
        %v3526 = vshll.u32 %v839, 16
        %v3528 = vrot.slane %v3526, 1
        %v3529 = vor.u32 %v3524, %v3528
        %v3531 = vshll.u32 %v840, 16
        %v3533 = vrot.slane %v3531, 1
        %v3534 = vsel %vm617, %v3529, %v3533
        %v3536 = vshrl.u32 %v938, 16
        %v3538 = vshll.u32 %v938, 16
        %v3540 = vrot.slane %v3538, 1
        %v3541 = vor.u32 %v3536, %v3540
        %v3543 = vshll.u32 %v937, 16
        %v3545 = vrot.slane %v3543, 1
        %v3546 = vsel %vm617, %v3541, %v3545
        %v3548 = vshrl.u32 %v1065, 16
        %v3550 = vshll.u32 %v1065, 16
        %v3552 = vrot.slane %v3550, 1
        %v3553 = vor.u32 %v3548, %v3552
        %v3554 = vsel %vm617, %v3553, %v1335
        %v3556 = vshrl.u32 %v1336, 16
        %v3558 = vshll.u32 %v1336, 16
        %v3560 = vrot.slane %v3558, 1
        %v3561 = vor.u32 %v3556, %v3560
        %v3563 = vshll.u32 %v1337, 16
        %v3565 = vrot.slane %v3563, 1
        %v3566 = vsel %vm617, %v3561, %v3565
        %v3568 = vshrl.u32 %v1434, 16
        %v3570 = vshll.u32 %v1434, 16
        %v3572 = vrot.slane %v3570, 1
        %v3573 = vor.u32 %v3568, %v3572
        %v3575 = vshll.u32 %v1433, 16
        %v3577 = vrot.slane %v3575, 1
        %v3578 = vsel %vm617, %v3573, %v3577
        %v3580 = vshrl.u32 %v1561, 16
        %v3582 = vshll.u32 %v1561, 16
        %v3584 = vrot.slane %v3582, 1
        %v3585 = vor.u32 %v3580, %v3584
        %v3586 = vsel %vm617, %v3585, %v1831
        %v3588 = vshrl.u32 %v1832, 16
        %v3590 = vshll.u32 %v1832, 16
        %v3592 = vrot.slane %v3590, 1
        %v3593 = vor.u32 %v3588, %v3592
        %v3595 = vshll.u32 %v1833, 16
        %v3597 = vrot.slane %v3595, 1
        %v3598 = vsel %vm617, %v3593, %v3597
        %v3600 = vshrl.u32 %v1930, 16
        %v3602 = vshll.u32 %v1930, 16
        %v3604 = vrot.slane %v3602, 1
        %v3605 = vor.u32 %v3600, %v3604
        %v3607 = vshll.u32 %v1929, 16
        %v3609 = vrot.slane %v3607, 1
        %v3610 = vsel %vm617, %v3605, %v3609
        %v3899 = vunpack.c.l.b16 %v1931
        %v3900 = vunpack.c.l.b16 %v1932
        %v3901 = vunpack.c.l.b16 %v1933
        %v3902 = vunpack.c.l.b16 %v1934
        %v3903 = vunpack.c.l.b16 %v1935
        %v3904 = vunpack.c.l.b16 %v1936
        %v3905 = vunpack.c.l.b16 %v1937
        %v3906 = vunpack.c.l.b16 %v1938
        %v3907 = vunpack.c.l.b16 %v1939
        %v3908 = vunpack.c.l.b16 %v1940
        %v3909 = vunpack.c.l.b16 %v1941
        %v3910 = vunpack.c.l.b16 %v1942
        %v3911 = vunpack.c.l.b16 %v1943
        %v3912 = vunpack.c.l.b16 %v1944
        %v3913 = vunpack.c.l.b16 %v1945
        %v3914 = vunpack.c.l.b16 %v1946
        %v3915 = vunpack.c.l.b16 %v1947
        %v3916 = vunpack.c.l.b16 %v1948
        %v3917 = vunpack.c.l.b16 %v1949
        %v3918 = vunpack.c.l.b16 %v1950
        %v3919 = vunpack.c.l.b16 %v1951
        %v3920 = vunpack.c.l.b16 %v1952
        %v3921 = vunpack.c.l.b16 %v1953
        %v3922 = vunpack.c.l.b16 %v1954
        %v3923 = vunpack.c.l.b16 %v1955
        %v3924 = vunpack.c.l.b16 %v1956
        %v3925 = vunpack.c.l.b16 %v1957
        %v3926 = vunpack.c.l.b16 %v1958
        %v3927 = vunpack.c.l.b16 %v1959
        %v3928 = vunpack.c.l.b16 %v1960
        %v3929 = vunpack.c.l.b16 %v1961
        %v3930 = vunpack.c.l.b16 %v1962
        %v3931 = vunpack.c.l.b16 %v1963
        %v3932 = vunpack.c.l.b16 %v1964
        %v3933 = vunpack.c.l.b16 %v1965
        %v3934 = vunpack.c.l.b16 %v1966
        %v3935 = vunpack.c.l.b16 %v1967
        %v3936 = vunpack.c.l.b16 %v1968
        %v3937 = vunpack.c.l.b16 %v1969
        %v3938 = vunpack.c.l.b16 %v1970
        %v3939 = vunpack.c.l.b16 %v1971
        %v3940 = vunpack.c.l.b16 %v1972
        %v3941 = vunpack.c.l.b16 %v1973
        %v3942 = vunpack.c.l.b16 %v1974
        %v3943 = vunpack.c.l.b16 %v1975
        %v3944 = vunpack.c.l.b16 %v1976
        %v3945 = vunpack.c.l.b16 %v1977
        %v3946 = vunpack.c.l.b16 %v1978
        %v3947 = vunpack.c.l.b16 %v1979
        %v3948 = vunpack.c.l.b16 %v1980
        %v3949 = vunpack.c.l.b16 %v1981
        %v3950 = vunpack.c.l.b16 %v1982
        %v3951 = vunpack.c.l.b16 %v1983
        %v3952 = vunpack.c.l.b16 %v1984
        %v3953 = vunpack.c.l.b16 %v1985
        %v3954 = vunpack.c.l.b16 %v1986
        %v3955 = vunpack.c.l.b16 %v1987
        %v3956 = vunpack.c.l.b16 %v1988
        %v3957 = vunpack.c.l.b16 %v1989
        %v3958 = vunpack.c.l.b16 %v1990
        %v3959 = vunpack.c.l.b16 %v1991
        %v3960 = vunpack.c.l.b16 %v1992
        %v3961 = vunpack.c.l.b16 %v1993
        %v3962 = vunpack.c.l.b16 %v1994
        %v3963 = vunpack.c.l.b16 %v1995
        %v3964 = vunpack.c.l.b16 %v1996
        %v3965 = vunpack.c.l.b16 %v1997
        %v3966 = vunpack.c.l.b16 %v1998
        %v3967 = vunpack.c.l.b16 %v1999
        %v3968 = vunpack.c.l.b16 %v2000
        %v3969 = vunpack.c.l.b16 %v2001
        %v3970 = vunpack.c.l.b16 %v2002
        %v3971 = vunpack.c.l.b16 %v2003
        %v3972 = vunpack.c.l.b16 %v2004
        %v3973 = vunpack.c.l.b16 %v2005
        %v3974 = vunpack.c.l.b16 %v2006
        %v3975 = vunpack.c.l.b16 %v2007
        %v3976 = vunpack.c.l.b16 %v2008
        %v3977 = vunpack.c.l.b16 %v2009
        %v3978 = vunpack.c.l.b16 %v2010
        %v3979 = vunpack.c.l.b16 %v2011
        %v3980 = vunpack.c.l.b16 %v2012
        %v3981 = vunpack.c.l.b16 %v2013
        %v3982 = vunpack.c.l.b16 %v2014
        %v3983 = vunpack.c.l.b16 %v2015
        %v3984 = vunpack.c.l.b16 %v2016
        %v3985 = vunpack.c.l.b16 %v2017
        %v3986 = vunpack.c.l.b16 %v2018
        %v3987 = vunpack.c.l.b16 %v2019
        %v3988 = vunpack.c.l.b16 %v2020
        %v3989 = vunpack.c.l.b16 %v2021
        %v3990 = vunpack.c.l.b16 %v2022
        %v3991 = vunpack.c.l.b16 %v2023
        %v3992 = vunpack.c.l.b16 %v2024
        %v3993 = vunpack.c.l.b16 %v2025
        %v3994 = vunpack.c.l.b16 %v2026
        %v3995 = vunpack.c.l.b16 %v2027
        %v3996 = vunpack.c.l.b16 %v2028
        %v3997 = vunpack.c.l.b16 %v2029
        %v3998 = vunpack.c.l.b16 %v2030
        %v3999 = vunpack.c.l.b16 %v2031
        %v4000 = vunpack.c.l.b16 %v2032
        %v4001 = vunpack.c.l.b16 %v2033
        %v4002 = vunpack.c.l.b16 %v2034
        %v4003 = vunpack.c.l.b16 %v2035
        %v4004 = vunpack.c.l.b16 %v2036
        %v4005 = vunpack.c.l.b16 %v2037
        %v4006 = vunpack.c.l.b16 %v2038
        %v4007 = vunpack.c.l.b16 %v2039
        %v4008 = vunpack.c.l.b16 %v2040
        %v4009 = vunpack.c.l.b16 %v2041
        %v4010 = vunpack.c.l.b16 %v2042
        %v4011 = vunpack.c.l.b16 %v2043
        %v4012 = vunpack.c.l.b16 %v2044
        %v4013 = vunpack.c.l.b16 %v2045
        %v4014 = vunpack.c.l.b16 %v2046
        %v4015 = vunpack.c.l.b16 %v2047
        %v4016 = vunpack.c.l.b16 %v2048
        %v4017 = vunpack.c.l.b16 %v2049
        %v4018 = vunpack.c.l.b16 %v2050
        %v4019 = vunpack.c.l.b16 %v2051
        %v4020 = vunpack.c.l.b16 %v2052
        %v4021 = vunpack.c.l.b16 %v2053
        %v4022 = vunpack.c.l.b16 %v2054
        %v4023 = vunpack.c.l.b16 %v2055
        %v4024 = vunpack.c.l.b16 %v2056
        %v4025 = vunpack.c.l.b16 %v2057
        %v4026 = vunpack.c.l.b16 %v2058
        %v4027 = vunpack.c.l.b16 %v2059
        %v4028 = vunpack.c.l.b16 %v2060
        %v4029 = vunpack.c.l.b16 %v2061
        %v4030 = vunpack.c.l.b16 %v2062
        %v4031 = vunpack.c.l.b16 %v2063
        %v4032 = vunpack.c.l.b16 %v2064
        %v4033 = vunpack.c.l.b16 %v2065
        %v4034 = vunpack.c.l.b16 %v2066
        %v4035 = vunpack.c.l.b16 %v2067
        %v4036 = vunpack.c.l.b16 %v2068
        %v4037 = vunpack.c.l.b16 %v2069
        %v4038 = vunpack.c.l.b16 %v2070
        %v4039 = vunpack.c.l.b16 %v2071
        %v4040 = vunpack.c.l.b16 %v2072
        %v4041 = vunpack.c.l.b16 %v2073
        %v4042 = vunpack.c.l.b16 %v2074
        %v4043 = vpack.c.b16 %v3900, %v3899
        %v4044 = vpack.c.b16 %v3902, %v3901
        %v4045 = vpack.c.b16 %v3904, %v3903
        %v4046 = vpack.c.b16 %v3906, %v3905
        %v4047 = vpack.c.b16 %v3908, %v3907
        %v4048 = vpack.c.b16 %v3910, %v3909
        %v4049 = vpack.c.b16 %v3912, %v3911
        %v4050 = vpack.c.b16 %v3914, %v3913
        %v4051 = vpack.c.b16 %v3916, %v3915
        %v4052 = vpack.c.b16 %v3918, %v3917
        %v4053 = vpack.c.b16 %v3920, %v3919
        %v4054 = vpack.c.b16 %v3922, %v3921
        %v4055 = vpack.c.b16 %v3924, %v3923
        %v4056 = vpack.c.b16 %v3926, %v3925
        %v4057 = vpack.c.b16 %v3928, %v3927
        %v4058 = vpack.c.b16 %v3930, %v3929
        %v4059 = vpack.c.b16 %v3932, %v3931
        %v4060 = vpack.c.b16 %v3934, %v3933
        %v4061 = vpack.c.b16 %v3936, %v3935
        %v4062 = vpack.c.b16 %v3938, %v3937
        %v4063 = vpack.c.b16 %v3940, %v3939
        %v4064 = vpack.c.b16 %v3942, %v3941
        %v4065 = vpack.c.b16 %v3944, %v3943
        %v4066 = vpack.c.b16 %v3946, %v3945
        %v4067 = vpack.c.b16 %v3948, %v3947
        %v4068 = vpack.c.b16 %v3950, %v3949
        %v4069 = vpack.c.b16 %v3952, %v3951
        %v4070 = vpack.c.b16 %v3954, %v3953
        %v4071 = vpack.c.b16 %v3956, %v3955
        %v4072 = vpack.c.b16 %v3958, %v3957
        %v4073 = vpack.c.b16 %v3960, %v3959
        %v4074 = vpack.c.b16 %v3962, %v3961
        %v4075 = vpack.c.b16 %v3964, %v3963
        %v4076 = vpack.c.b16 %v3966, %v3965
        %v4077 = vpack.c.b16 %v3968, %v3967
        %v4078 = vpack.c.b16 %v3970, %v3969
        %v4079 = vpack.c.b16 %v3972, %v3971
        %v4080 = vpack.c.b16 %v3974, %v3973
        %v4081 = vpack.c.b16 %v3976, %v3975
        %v4082 = vpack.c.b16 %v3978, %v3977
        %v4083 = vpack.c.b16 %v3980, %v3979
        %v4084 = vpack.c.b16 %v3982, %v3981
        %v4085 = vpack.c.b16 %v3984, %v3983
        %v4086 = vpack.c.b16 %v3986, %v3985
        %v4087 = vpack.c.b16 %v3988, %v3987
        %v4088 = vpack.c.b16 %v3990, %v3989
        %v4089 = vpack.c.b16 %v3992, %v3991
        %v4090 = vpack.c.b16 %v3994, %v3993
        %v4091 = vpack.c.b16 %v3996, %v3995
        %v4092 = vpack.c.b16 %v3998, %v3997
        %v4093 = vpack.c.b16 %v4000, %v3999
        %v4094 = vpack.c.b16 %v4002, %v4001
        %v4095 = vpack.c.b16 %v4004, %v4003
        %v4096 = vpack.c.b16 %v4006, %v4005
        %v4097 = vpack.c.b16 %v4008, %v4007
        %v4098 = vpack.c.b16 %v4010, %v4009
        %v4099 = vpack.c.b16 %v4012, %v4011
        %v4100 = vpack.c.b16 %v4014, %v4013
        %v4101 = vpack.c.b16 %v4016, %v4015
        %v4102 = vpack.c.b16 %v4018, %v4017
        %v4103 = vpack.c.b16 %v4020, %v4019
        %v4104 = vpack.c.b16 %v4022, %v4021
        %v4105 = vpack.c.b16 %v4024, %v4023
        %v4106 = vpack.c.b16 %v4026, %v4025
        %v4107 = vpack.c.b16 %v4028, %v4027
        %v4108 = vpack.c.b16 %v4030, %v4029
        %v4109 = vpack.c.b16 %v4032, %v4031
        %v4110 = vpack.c.b16 %v4034, %v4033
        %v4111 = vpack.c.b16 %v4036, %v4035
        %v4112 = vpack.c.b16 %v4038, %v4037
        %v4113 = vpack.c.b16 %v4040, %v4039
        %v4114 = vpack.c.b16 %v4042, %v4041
        %4187 = vmatprep.subr.bf16.mxu0 0
        %4188 = vmatpush1.bf16.msra.mxu0 %v4043
        %4189 = vmatprep.subr.bf16.mxu0 0
        %4190 = vmatpush1.bf16.msra.mxu0 %v4044
        %4191 = vmatprep.subr.bf16.mxu0 0
        %4192 = vmatpush1.bf16.msra.mxu0 %v4045
        %4193 = vmatprep.subr.bf16.mxu0 0
        %4194 = vmatpush1.bf16.msra.mxu0 %v4046
        %4195 = vmatprep.subr.bf16.mxu0 0
        %4196 = vmatpush1.bf16.msra.mxu0 %v4047
        %4197 = vmatprep.subr.bf16.mxu0 0
        %4198 = vmatpush1.bf16.msra.mxu0 %v4048
        %4199 = vmatprep.subr.bf16.mxu0 0
        %4200 = vmatpush1.bf16.msra.mxu0 %v4049
        %4201 = vmatprep.subr.bf16.mxu0 0
        %4202 = vmatpush1.bf16.msra.mxu0 %v4050
        %4203 = vmatprep.subr.bf16.mxu0 0
        %4204 = vmatpush1.bf16.msra.mxu0 %v4051
        %4205 = vmatprep.subr.bf16.mxu0 0
        %4206 = vmatpush1.bf16.msra.mxu0 %v4052
        %4207 = vmatprep.subr.bf16.mxu0 0
        %4208 = vmatpush1.bf16.msra.mxu0 %v4053
        %4209 = vmatprep.subr.bf16.mxu0 0
        %4210 = vmatpush1.bf16.msra.mxu0 %v4054
        %4211 = vmatprep.subr.bf16.mxu0 0
        %4212 = vmatpush1.bf16.msra.mxu0 %v4055
        %4213 = vmatprep.subr.bf16.mxu0 0
        %4214 = vmatpush1.bf16.msra.mxu0 %v4056
        %4215 = vmatprep.subr.bf16.mxu0 0
        %4216 = vmatpush1.bf16.msra.mxu0 %v4057
        %4217 = vmatprep.subr.bf16.mxu0 0
        %4218 = vmatpush1.bf16.msra.mxu0 %v4058
        %4219 = vmatprep.mubr.bf16.mxu0 %v2094
        %4220 = vmatmul.mubr.bf16.gmra.mrb[0].mxu0 %v2082
        %v4221 = vpop.f32.mrb[0].mxu0
        %v4222 = vadd.f32 0.0, %v4221
        %v4223 = vpop.f32.mrb[0].mxu0
        %v4224 = vpop.f32.mrb[0].mxu0
        %v4225 = vadd.f32 0.0, %v4224
        %v4226 = vpop.f32.mrb[0].mxu0
        %4227 = vmatprep.mubr.bf16.mxu0 %v2190
        %4228 = vmatmul.mubr.bf16.gmra.mrb[0].mxu0 %v2178
        %v4229 = vpop.f32.mrb[0].mxu0
        %v4230 = vadd.f32 0.0, %v4229
        %v4231 = vpop.f32.mrb[0].mxu0
        %v4232 = vpop.f32.mrb[0].mxu0
        %v4233 = vadd.f32 0.0, %v4232
        %v4234 = vpop.f32.mrb[0].mxu0
        %4235 = vmatprep.mubr.bf16.mxu0 %v2286
        %4236 = vmatmul.mubr.bf16.gmra.mrb[0].mxu0 %v2274
        %v4237 = vpop.f32.mrb[0].mxu0
        %v4238 = vadd.f32 0.0, %v4237
        %v4239 = vpop.f32.mrb[0].mxu0
        %v4240 = vpop.f32.mrb[0].mxu0
        %v4241 = vadd.f32 0.0, %v4240
        %v4242 = vpop.f32.mrb[0].mxu0
        %4243 = vmatprep.mubr.bf16.mxu0 %v2382
        %4244 = vmatmul.mubr.bf16.gmra.mrb[0].mxu0 %v2370
        %v4245 = vpop.f32.mrb[0].mxu0
        %v4246 = vadd.f32 0.0, %v4245
        %v4247 = vpop.f32.mrb[0].mxu0
        %v4248 = vpop.f32.mrb[0].mxu0
        %v4249 = vadd.f32 0.0, %v4248
        %v4250 = vpop.f32.mrb[0].mxu0
        %4251 = vmatprep.mubr.bf16.mxu0 %v2478
        %4252 = vmatmul.mubr.bf16.gmra.mrb[0].mxu0 %v2466
        %v4253 = vpop.f32.mrb[0].mxu0
        %v4254 = vadd.f32 0.0, %v4253
        %v4255 = vpop.f32.mrb[0].mxu0
        %v4256 = vpop.f32.mrb[0].mxu0
        %v4257 = vadd.f32 0.0, %v4256
        %v4258 = vpop.f32.mrb[0].mxu0
        %4259 = vmatprep.mubr.bf16.mxu0 %v2574
        %4260 = vmatmul.mubr.bf16.gmra.mrb[0].mxu0 %v2562
        %v4261 = vpop.f32.mrb[0].mxu0
        %v4262 = vadd.f32 0.0, %v4261
        %v4263 = vpop.f32.mrb[0].mxu0
        %v4264 = vpop.f32.mrb[0].mxu0
        %v4265 = vadd.f32 0.0, %v4264
        %v4266 = vpop.f32.mrb[0].mxu0
        %4267 = vmatprep.mubr.bf16.mxu0 %v2670
        %4268 = vmatmul.mubr.bf16.gmra.mrb[0].mxu0 %v2658
        %v4269 = vpop.f32.mrb[0].mxu0
        %v4270 = vadd.f32 0.0, %v4269
        %v4271 = vpop.f32.mrb[0].mxu0
        %v4272 = vpop.f32.mrb[0].mxu0
        %v4273 = vadd.f32 0.0, %v4272
        %v4274 = vpop.f32.mrb[0].mxu0
        %4275 = vmatprep.mubr.bf16.mxu0 %v2766
        %4276 = vmatmul.mubr.bf16.gmra.mrb[0].mxu0 %v2754
        %v4277 = vpop.f32.mrb[0].mxu0
        %v4278 = vadd.f32 0.0, %v4277
        %v4279 = vpop.f32.mrb[0].mxu0
        %v4280 = vpop.f32.mrb[0].mxu0
        %v4281 = vadd.f32 0.0, %v4280
        %v4282 = vpop.f32.mrb[0].mxu0
        %4283 = vmatprep.mubr.bf16.mxu0 %v2862
        %4284 = vmatmul.mubr.bf16.gmra.mrb[0].mxu0 %v2850
        %v4285 = vpop.f32.mrb[0].mxu0
        %v4286 = vadd.f32 0.0, %v4285
        %v4287 = vpop.f32.mrb[0].mxu0
        %v4288 = vpop.f32.mrb[0].mxu0
        %v4289 = vadd.f32 0.0, %v4288
        %v4290 = vpop.f32.mrb[0].mxu0
        %4291 = vmatprep.mubr.bf16.mxu0 %v2958
        %4292 = vmatmul.mubr.bf16.gmra.mrb[0].mxu0 %v2946
        %v4293 = vpop.f32.mrb[0].mxu0
        %v4294 = vadd.f32 0.0, %v4293
        %v4295 = vpop.f32.mrb[0].mxu0
        %v4296 = vpop.f32.mrb[0].mxu0
        %v4297 = vadd.f32 0.0, %v4296
        %v4298 = vpop.f32.mrb[0].mxu0
        %4299 = vmatprep.mubr.bf16.mxu0 %v3054
        %4300 = vmatmul.mubr.bf16.gmra.mrb[0].mxu0 %v3042
        %v4301 = vpop.f32.mrb[0].mxu0
        %v4302 = vadd.f32 0.0, %v4301
        %v4303 = vpop.f32.mrb[0].mxu0
        %v4304 = vpop.f32.mrb[0].mxu0
        %v4305 = vadd.f32 0.0, %v4304
        %v4306 = vpop.f32.mrb[0].mxu0
        %4307 = vmatprep.mubr.bf16.mxu0 %v3150
        %4308 = vmatmul.mubr.bf16.gmra.mrb[0].mxu0 %v3138
        %v4309 = vpop.f32.mrb[0].mxu0
        %v4310 = vadd.f32 0.0, %v4309
        %v4311 = vpop.f32.mrb[0].mxu0
        %v4312 = vpop.f32.mrb[0].mxu0
        %v4313 = vadd.f32 0.0, %v4312
        %v4314 = vpop.f32.mrb[0].mxu0
        %4315 = vmatprep.mubr.bf16.mxu0 %v3246
        %4316 = vmatmul.mubr.bf16.gmra.mrb[0].mxu0 %v3234
        %v4317 = vpop.f32.mrb[0].mxu0
        %v4318 = vadd.f32 0.0, %v4317
        %v4319 = vpop.f32.mrb[0].mxu0
        %v4320 = vpop.f32.mrb[0].mxu0
        %v4321 = vadd.f32 0.0, %v4320
        %v4322 = vpop.f32.mrb[0].mxu0
        %4323 = vmatprep.mubr.bf16.mxu0 %v3342
        %4324 = vmatmul.mubr.bf16.gmra.mrb[0].mxu0 %v3330
        %v4325 = vpop.f32.mrb[0].mxu0
        %v4326 = vadd.f32 0.0, %v4325
        %v4327 = vpop.f32.mrb[0].mxu0
        %v4328 = vpop.f32.mrb[0].mxu0
        %v4329 = vadd.f32 0.0, %v4328
        %v4330 = vpop.f32.mrb[0].mxu0
        %4331 = vmatprep.mubr.bf16.mxu0 %v3438
        %4332 = vmatmul.mubr.bf16.gmra.mrb[0].mxu0 %v3426
        %v4333 = vpop.f32.mrb[0].mxu0
        %v4334 = vadd.f32 0.0, %v4333
        %v4335 = vpop.f32.mrb[0].mxu0
        %v4336 = vpop.f32.mrb[0].mxu0
        %v4337 = vadd.f32 0.0, %v4336
        %v4338 = vpop.f32.mrb[0].mxu0
        %4339 = vmatprep.mubr.bf16.mxu0 %v3534
        %4340 = vmatmul.mubr.bf16.gmra.mrb[0].mxu0 %v3522
        %v4341 = vpop.f32.mrb[0].mxu0
        %v4342 = vadd.f32 0.0, %v4341
        %v4343 = vpop.f32.mrb[0].mxu0
        %v4344 = vpop.f32.mrb[0].mxu0
        %v4345 = vadd.f32 0.0, %v4344
        %v4346 = vpop.f32.mrb[0].mxu0
        %4347 = vdwg.mxu0
        %4348 = vmatprep.subr.bf16.mxu0 0
        %4349 = vmatpush1.bf16.msra.mxu0 %v4059
        %4350 = vmatprep.subr.bf16.mxu0 0
        %4351 = vmatpush1.bf16.msra.mxu0 %v4060
        %4352 = vmatprep.subr.bf16.mxu0 0
        %4353 = vmatpush1.bf16.msra.mxu0 %v4061
        %4354 = vmatprep.subr.bf16.mxu0 0
        %4355 = vmatpush1.bf16.msra.mxu0 %v4062
        %4356 = vmatprep.subr.bf16.mxu0 0
        %4357 = vmatpush1.bf16.msra.mxu0 %v4063
        %4358 = vmatprep.subr.bf16.mxu0 0
        %4359 = vmatpush1.bf16.msra.mxu0 %v4064
        %4360 = vmatprep.subr.bf16.mxu0 0
        %4361 = vmatpush1.bf16.msra.mxu0 %v4065
        %4362 = vmatprep.subr.bf16.mxu0 0
        %4363 = vmatpush1.bf16.msra.mxu0 %v4066
        %4364 = vmatprep.subr.bf16.mxu0 0
        %4365 = vmatpush1.bf16.msra.mxu0 %v4067
        %4366 = vmatprep.subr.bf16.mxu0 0
        %4367 = vmatpush1.bf16.msra.mxu0 %v4068
        %4368 = vmatprep.subr.bf16.mxu0 0
        %4369 = vmatpush1.bf16.msra.mxu0 %v4069
        %4370 = vmatprep.subr.bf16.mxu0 0
        %4371 = vmatpush1.bf16.msra.mxu0 %v4070
        %4372 = vmatprep.subr.bf16.mxu0 0
        %4373 = vmatpush1.bf16.msra.mxu0 %v4071
        %4374 = vmatprep.subr.bf16.mxu0 0
        %4375 = vmatpush1.bf16.msra.mxu0 %v4072
        %4376 = vmatprep.subr.bf16.mxu0 0
        %4377 = vmatpush1.bf16.msra.mxu0 %v4073
        %4378 = vmatprep.subr.bf16.mxu0 0
        %4379 = vmatpush1.bf16.msra.mxu0 %v4074
        %4380 = vmatprep.mubr.bf16.mxu0 %v2114
        %4381 = vmatmul.mubr.bf16.gmra.mrb[0].mxu0 %v2106
        %v4382 = vpop.f32.mrb[0].mxu0
        %v4383 = vadd.f32 %v4222, %v4382
        %v4384 = vpop.f32.mrb[0].mxu0
        %v4385 = vpop.f32.mrb[0].mxu0
        %v4386 = vadd.f32 %v4225, %v4385
        %v4387 = vpop.f32.mrb[0].mxu0
        %4388 = vmatprep.mubr.bf16.mxu0 %v2210
        %4389 = vmatmul.mubr.bf16.gmra.mrb[0].mxu0 %v2202
        %v4390 = vpop.f32.mrb[0].mxu0
        %v4391 = vadd.f32 %v4230, %v4390
        %v4392 = vpop.f32.mrb[0].mxu0
        %v4393 = vpop.f32.mrb[0].mxu0
        %v4394 = vadd.f32 %v4233, %v4393
        %v4395 = vpop.f32.mrb[0].mxu0
        %4396 = vmatprep.mubr.bf16.mxu0 %v2306
        %4397 = vmatmul.mubr.bf16.gmra.mrb[0].mxu0 %v2298
        %v4398 = vpop.f32.mrb[0].mxu0
        %v4399 = vadd.f32 %v4238, %v4398
        %v4400 = vpop.f32.mrb[0].mxu0
        %v4401 = vpop.f32.mrb[0].mxu0
        %v4402 = vadd.f32 %v4241, %v4401
        %v4403 = vpop.f32.mrb[0].mxu0
        %4404 = vmatprep.mubr.bf16.mxu0 %v2402
        %4405 = vmatmul.mubr.bf16.gmra.mrb[0].mxu0 %v2394
        %v4406 = vpop.f32.mrb[0].mxu0
        %v4407 = vadd.f32 %v4246, %v4406
        %v4408 = vpop.f32.mrb[0].mxu0
        %v4409 = vpop.f32.mrb[0].mxu0
        %v4410 = vadd.f32 %v4249, %v4409
        %v4411 = vpop.f32.mrb[0].mxu0
        %4412 = vmatprep.mubr.bf16.mxu0 %v2498
        %4413 = vmatmul.mubr.bf16.gmra.mrb[0].mxu0 %v2490
        %v4414 = vpop.f32.mrb[0].mxu0
        %v4415 = vadd.f32 %v4254, %v4414
        %v4416 = vpop.f32.mrb[0].mxu0
        %v4417 = vpop.f32.mrb[0].mxu0
        %v4418 = vadd.f32 %v4257, %v4417
        %v4419 = vpop.f32.mrb[0].mxu0
        %4420 = vmatprep.mubr.bf16.mxu0 %v2594
        %4421 = vmatmul.mubr.bf16.gmra.mrb[0].mxu0 %v2586
        %v4422 = vpop.f32.mrb[0].mxu0
        %v4423 = vadd.f32 %v4262, %v4422
        %v4424 = vpop.f32.mrb[0].mxu0
        %v4425 = vpop.f32.mrb[0].mxu0
        %v4426 = vadd.f32 %v4265, %v4425
        %v4427 = vpop.f32.mrb[0].mxu0
        %4428 = vmatprep.mubr.bf16.mxu0 %v2690
        %4429 = vmatmul.mubr.bf16.gmra.mrb[0].mxu0 %v2682
        %v4430 = vpop.f32.mrb[0].mxu0
        %v4431 = vadd.f32 %v4270, %v4430
        %v4432 = vpop.f32.mrb[0].mxu0
        %v4433 = vpop.f32.mrb[0].mxu0
        %v4434 = vadd.f32 %v4273, %v4433
        %v4435 = vpop.f32.mrb[0].mxu0
        %4436 = vmatprep.mubr.bf16.mxu0 %v2786
        %4437 = vmatmul.mubr.bf16.gmra.mrb[0].mxu0 %v2778
        %v4438 = vpop.f32.mrb[0].mxu0
        %v4439 = vadd.f32 %v4278, %v4438
        %v4440 = vpop.f32.mrb[0].mxu0
        %v4441 = vpop.f32.mrb[0].mxu0
        %v4442 = vadd.f32 %v4281, %v4441
        %v4443 = vpop.f32.mrb[0].mxu0
        %4444 = vmatprep.mubr.bf16.mxu0 %v2882
        %4445 = vmatmul.mubr.bf16.gmra.mrb[0].mxu0 %v2874
        %v4446 = vpop.f32.mrb[0].mxu0
        %v4447 = vadd.f32 %v4286, %v4446
        %v4448 = vpop.f32.mrb[0].mxu0
        %v4449 = vpop.f32.mrb[0].mxu0
        %v4450 = vadd.f32 %v4289, %v4449
        %v4451 = vpop.f32.mrb[0].mxu0
        %4452 = vmatprep.mubr.bf16.mxu0 %v2978
        %4453 = vmatmul.mubr.bf16.gmra.mrb[0].mxu0 %v2970
        %v4454 = vpop.f32.mrb[0].mxu0
        %v4455 = vadd.f32 %v4294, %v4454
        %v4456 = vpop.f32.mrb[0].mxu0
        %v4457 = vpop.f32.mrb[0].mxu0
        %v4458 = vadd.f32 %v4297, %v4457
        %v4459 = vpop.f32.mrb[0].mxu0
        %4460 = vmatprep.mubr.bf16.mxu0 %v3074
        %4461 = vmatmul.mubr.bf16.gmra.mrb[0].mxu0 %v3066
        %v4462 = vpop.f32.mrb[0].mxu0
        %v4463 = vadd.f32 %v4302, %v4462
        %v4464 = vpop.f32.mrb[0].mxu0
        %v4465 = vpop.f32.mrb[0].mxu0
        %v4466 = vadd.f32 %v4305, %v4465
        %v4467 = vpop.f32.mrb[0].mxu0
        %4468 = vmatprep.mubr.bf16.mxu0 %v3170
        %4469 = vmatmul.mubr.bf16.gmra.mrb[0].mxu0 %v3162
        %v4470 = vpop.f32.mrb[0].mxu0
        %v4471 = vadd.f32 %v4310, %v4470
        %v4472 = vpop.f32.mrb[0].mxu0
        %v4473 = vpop.f32.mrb[0].mxu0
        %v4474 = vadd.f32 %v4313, %v4473
        %v4475 = vpop.f32.mrb[0].mxu0
        %4476 = vmatprep.mubr.bf16.mxu0 %v3266
        %4477 = vmatmul.mubr.bf16.gmra.mrb[0].mxu0 %v3258
        %v4478 = vpop.f32.mrb[0].mxu0
        %v4479 = vadd.f32 %v4318, %v4478
        %v4480 = vpop.f32.mrb[0].mxu0
        %v4481 = vpop.f32.mrb[0].mxu0
        %v4482 = vadd.f32 %v4321, %v4481
        %v4483 = vpop.f32.mrb[0].mxu0
        %4484 = vmatprep.mubr.bf16.mxu0 %v3362
        %4485 = vmatmul.mubr.bf16.gmra.mrb[0].mxu0 %v3354
        %v4486 = vpop.f32.mrb[0].mxu0
        %v4487 = vadd.f32 %v4326, %v4486
        %v4488 = vpop.f32.mrb[0].mxu0
        %v4489 = vpop.f32.mrb[0].mxu0
        %v4490 = vadd.f32 %v4329, %v4489
        %v4491 = vpop.f32.mrb[0].mxu0
        %4492 = vmatprep.mubr.bf16.mxu0 %v3458
        %4493 = vmatmul.mubr.bf16.gmra.mrb[0].mxu0 %v3450
        %v4494 = vpop.f32.mrb[0].mxu0
        %v4495 = vadd.f32 %v4334, %v4494
        %v4496 = vpop.f32.mrb[0].mxu0
        %v4497 = vpop.f32.mrb[0].mxu0
        %v4498 = vadd.f32 %v4337, %v4497
        %v4499 = vpop.f32.mrb[0].mxu0
        %4500 = vmatprep.mubr.bf16.mxu0 %v3554
        %4501 = vmatmul.mubr.bf16.gmra.mrb[0].mxu0 %v3546
        %v4502 = vpop.f32.mrb[0].mxu0
        %v4503 = vadd.f32 %v4342, %v4502
        %v4504 = vpop.f32.mrb[0].mxu0
        %v4505 = vpop.f32.mrb[0].mxu0
        %v4506 = vadd.f32 %v4345, %v4505
        %v4507 = vpop.f32.mrb[0].mxu0
        %4508 = vdwg.mxu0
        %4509 = vmatprep.subr.bf16.mxu0 0
        %4510 = vmatpush1.bf16.msra.mxu0 %v4075
        %4511 = vmatprep.subr.bf16.mxu0 0
        %4512 = vmatpush1.bf16.msra.mxu0 %v4076
        %4513 = vmatprep.subr.bf16.mxu0 0
        %4514 = vmatpush1.bf16.msra.mxu0 %v4077
        %4515 = vmatprep.subr.bf16.mxu0 0
        %4516 = vmatpush1.bf16.msra.mxu0 %v4078
        %4517 = vmatprep.subr.bf16.mxu0 0
        %4518 = vmatpush1.bf16.msra.mxu0 %v4079
        %4519 = vmatprep.subr.bf16.mxu0 0
        %4520 = vmatpush1.bf16.msra.mxu0 %v4080
        %4521 = vmatprep.subr.bf16.mxu0 0
        %4522 = vmatpush1.bf16.msra.mxu0 %v4081
        %4523 = vmatprep.subr.bf16.mxu0 0
        %4524 = vmatpush1.bf16.msra.mxu0 %v4082
        %4525 = vmatprep.subr.bf16.mxu0 0
        %4526 = vmatpush1.bf16.msra.mxu0 %v4083
        %4527 = vmatprep.subr.bf16.mxu0 0
        %4528 = vmatpush1.bf16.msra.mxu0 %v4084
        %4529 = vmatprep.subr.bf16.mxu0 0
        %4530 = vmatpush1.bf16.msra.mxu0 %v4085
        %4531 = vmatprep.subr.bf16.mxu0 0
        %4532 = vmatpush1.bf16.msra.mxu0 %v4086
        %4533 = vmatprep.subr.bf16.mxu0 0
        %4534 = vmatpush1.bf16.msra.mxu0 %v4087
        %4535 = vmatprep.subr.bf16.mxu0 0
        %4536 = vmatpush1.bf16.msra.mxu0 %v4088
        %4537 = vmatprep.subr.bf16.mxu0 0
        %4538 = vmatpush1.bf16.msra.mxu0 %v4089
        %4539 = vmatprep.subr.bf16.mxu0 0
        %4540 = vmatpush1.bf16.msra.mxu0 %v4090
        %4541 = vmatprep.mubr.bf16.mxu0 %v2138
        %4542 = vmatmul.mubr.bf16.gmra.mrb[0].mxu0 %v2126
        %v4543 = vpop.f32.mrb[0].mxu0
        %v4544 = vadd.f32 %v4383, %v4543
        %v4545 = vpop.f32.mrb[0].mxu0
        %v4546 = vpop.f32.mrb[0].mxu0
        %v4547 = vadd.f32 %v4386, %v4546
        %v4548 = vpop.f32.mrb[0].mxu0
        %4549 = vmatprep.mubr.bf16.mxu0 %v2234
        %4550 = vmatmul.mubr.bf16.gmra.mrb[0].mxu0 %v2222
        %v4551 = vpop.f32.mrb[0].mxu0
        %v4552 = vadd.f32 %v4391, %v4551
        %v4553 = vpop.f32.mrb[0].mxu0
        %v4554 = vpop.f32.mrb[0].mxu0
        %v4555 = vadd.f32 %v4394, %v4554
        %v4556 = vpop.f32.mrb[0].mxu0
        %4557 = vmatprep.mubr.bf16.mxu0 %v2330
        %4558 = vmatmul.mubr.bf16.gmra.mrb[0].mxu0 %v2318
        %v4559 = vpop.f32.mrb[0].mxu0
        %v4560 = vadd.f32 %v4399, %v4559
        %v4561 = vpop.f32.mrb[0].mxu0
        %v4562 = vpop.f32.mrb[0].mxu0
        %v4563 = vadd.f32 %v4402, %v4562
        %v4564 = vpop.f32.mrb[0].mxu0
        %4565 = vmatprep.mubr.bf16.mxu0 %v2426
        %4566 = vmatmul.mubr.bf16.gmra.mrb[0].mxu0 %v2414
        %v4567 = vpop.f32.mrb[0].mxu0
        %v4568 = vadd.f32 %v4407, %v4567
        %v4569 = vpop.f32.mrb[0].mxu0
        %v4570 = vpop.f32.mrb[0].mxu0
        %v4571 = vadd.f32 %v4410, %v4570
        %v4572 = vpop.f32.mrb[0].mxu0
        %4573 = vmatprep.mubr.bf16.mxu0 %v2522
        %4574 = vmatmul.mubr.bf16.gmra.mrb[0].mxu0 %v2510
        %v4575 = vpop.f32.mrb[0].mxu0
        %v4576 = vadd.f32 %v4415, %v4575
        %v4577 = vpop.f32.mrb[0].mxu0
        %v4578 = vpop.f32.mrb[0].mxu0
        %v4579 = vadd.f32 %v4418, %v4578
        %v4580 = vpop.f32.mrb[0].mxu0
        %4581 = vmatprep.mubr.bf16.mxu0 %v2618
        %4582 = vmatmul.mubr.bf16.gmra.mrb[0].mxu0 %v2606
        %v4583 = vpop.f32.mrb[0].mxu0
        %v4584 = vadd.f32 %v4423, %v4583
        %v4585 = vpop.f32.mrb[0].mxu0
        %v4586 = vpop.f32.mrb[0].mxu0
        %v4587 = vadd.f32 %v4426, %v4586
        %v4588 = vpop.f32.mrb[0].mxu0
        %4589 = vmatprep.mubr.bf16.mxu0 %v2714
        %4590 = vmatmul.mubr.bf16.gmra.mrb[0].mxu0 %v2702
        %v4591 = vpop.f32.mrb[0].mxu0
        %v4592 = vadd.f32 %v4431, %v4591
        %v4593 = vpop.f32.mrb[0].mxu0
        %v4594 = vpop.f32.mrb[0].mxu0
        %v4595 = vadd.f32 %v4434, %v4594
        %v4596 = vpop.f32.mrb[0].mxu0
        %4597 = vmatprep.mubr.bf16.mxu0 %v2810
        %4598 = vmatmul.mubr.bf16.gmra.mrb[0].mxu0 %v2798
        %v4599 = vpop.f32.mrb[0].mxu0
        %v4600 = vadd.f32 %v4439, %v4599
        %v4601 = vpop.f32.mrb[0].mxu0
        %v4602 = vpop.f32.mrb[0].mxu0
        %v4603 = vadd.f32 %v4442, %v4602
        %v4604 = vpop.f32.mrb[0].mxu0
        %4605 = vmatprep.mubr.bf16.mxu0 %v2906
        %4606 = vmatmul.mubr.bf16.gmra.mrb[0].mxu0 %v2894
        %v4607 = vpop.f32.mrb[0].mxu0
        %v4608 = vadd.f32 %v4447, %v4607
        %v4609 = vpop.f32.mrb[0].mxu0
        %v4610 = vpop.f32.mrb[0].mxu0
        %v4611 = vadd.f32 %v4450, %v4610
        %v4612 = vpop.f32.mrb[0].mxu0
        %4613 = vmatprep.mubr.bf16.mxu0 %v3002
        %4614 = vmatmul.mubr.bf16.gmra.mrb[0].mxu0 %v2990
        %v4615 = vpop.f32.mrb[0].mxu0
        %v4616 = vadd.f32 %v4455, %v4615
        %v4617 = vpop.f32.mrb[0].mxu0
        %v4618 = vpop.f32.mrb[0].mxu0
        %v4619 = vadd.f32 %v4458, %v4618
        %v4620 = vpop.f32.mrb[0].mxu0
        %4621 = vmatprep.mubr.bf16.mxu0 %v3098
        %4622 = vmatmul.mubr.bf16.gmra.mrb[0].mxu0 %v3086
        %v4623 = vpop.f32.mrb[0].mxu0
        %v4624 = vadd.f32 %v4463, %v4623
        %v4625 = vpop.f32.mrb[0].mxu0
        %v4626 = vpop.f32.mrb[0].mxu0
        %v4627 = vadd.f32 %v4466, %v4626
        %v4628 = vpop.f32.mrb[0].mxu0
        %4629 = vmatprep.mubr.bf16.mxu0 %v3194
        %4630 = vmatmul.mubr.bf16.gmra.mrb[0].mxu0 %v3182
        %v4631 = vpop.f32.mrb[0].mxu0
        %v4632 = vadd.f32 %v4471, %v4631
        %v4633 = vpop.f32.mrb[0].mxu0
        %v4634 = vpop.f32.mrb[0].mxu0
        %v4635 = vadd.f32 %v4474, %v4634
        %v4636 = vpop.f32.mrb[0].mxu0
        %4637 = vmatprep.mubr.bf16.mxu0 %v3290
        %4638 = vmatmul.mubr.bf16.gmra.mrb[0].mxu0 %v3278
        %v4639 = vpop.f32.mrb[0].mxu0
        %v4640 = vadd.f32 %v4479, %v4639
        %v4641 = vpop.f32.mrb[0].mxu0
        %v4642 = vpop.f32.mrb[0].mxu0
        %v4643 = vadd.f32 %v4482, %v4642
        %v4644 = vpop.f32.mrb[0].mxu0
        %4645 = vmatprep.mubr.bf16.mxu0 %v3386
        %4646 = vmatmul.mubr.bf16.gmra.mrb[0].mxu0 %v3374
        %v4647 = vpop.f32.mrb[0].mxu0
        %v4648 = vadd.f32 %v4487, %v4647
        %v4649 = vpop.f32.mrb[0].mxu0
        %v4650 = vpop.f32.mrb[0].mxu0
        %v4651 = vadd.f32 %v4490, %v4650
        %v4652 = vpop.f32.mrb[0].mxu0
        %4653 = vmatprep.mubr.bf16.mxu0 %v3482
        %4654 = vmatmul.mubr.bf16.gmra.mrb[0].mxu0 %v3470
        %v4655 = vpop.f32.mrb[0].mxu0
        %v4656 = vadd.f32 %v4495, %v4655
        %v4657 = vpop.f32.mrb[0].mxu0
        %v4658 = vpop.f32.mrb[0].mxu0
        %v4659 = vadd.f32 %v4498, %v4658
        %v4660 = vpop.f32.mrb[0].mxu0
        %4661 = vmatprep.mubr.bf16.mxu0 %v3578
        %4662 = vmatmul.mubr.bf16.gmra.mrb[0].mxu0 %v3566
        %v4663 = vpop.f32.mrb[0].mxu0
        %v4664 = vadd.f32 %v4503, %v4663
        %v4665 = vpop.f32.mrb[0].mxu0
        %v4666 = vpop.f32.mrb[0].mxu0
        %v4667 = vadd.f32 %v4506, %v4666
        %v4668 = vpop.f32.mrb[0].mxu0
        %4669 = vdwg.mxu0
        %4670 = vmatprep.subr.bf16.mxu0 0
        %4671 = vmatpush1.bf16.msra.mxu0 %v4091
        %4672 = vmatprep.subr.bf16.mxu0 0
        %4673 = vmatpush1.bf16.msra.mxu0 %v4092
        %4674 = vmatprep.subr.bf16.mxu0 0
        %4675 = vmatpush1.bf16.msra.mxu0 %v4093
        %4676 = vmatprep.subr.bf16.mxu0 0
        %4677 = vmatpush1.bf16.msra.mxu0 %v4094
        %4678 = vmatprep.subr.bf16.mxu0 0
        %4679 = vmatpush1.bf16.msra.mxu0 %v4095
        %4680 = vmatprep.subr.bf16.mxu0 0
        %4681 = vmatpush1.bf16.msra.mxu0 %v4096
        %4682 = vmatprep.subr.bf16.mxu0 0
        %4683 = vmatpush1.bf16.msra.mxu0 %v4097
        %4684 = vmatprep.subr.bf16.mxu0 0
        %4685 = vmatpush1.bf16.msra.mxu0 %v4098
        %4686 = vmatprep.subr.bf16.mxu0 0
        %4687 = vmatpush1.bf16.msra.mxu0 %v4099
        %4688 = vmatprep.subr.bf16.mxu0 0
        %4689 = vmatpush1.bf16.msra.mxu0 %v4100
        %4690 = vmatprep.subr.bf16.mxu0 0
        %4691 = vmatpush1.bf16.msra.mxu0 %v4101
        %4692 = vmatprep.subr.bf16.mxu0 0
        %4693 = vmatpush1.bf16.msra.mxu0 %v4102
        %4694 = vmatprep.subr.bf16.mxu0 0
        %4695 = vmatpush1.bf16.msra.mxu0 %v4103
        %4696 = vmatprep.subr.bf16.mxu0 0
        %4697 = vmatpush1.bf16.msra.mxu0 %v4104
        %4698 = vmatprep.subr.bf16.mxu0 0
        %4699 = vmatpush1.bf16.msra.mxu0 %v4105
        %4700 = vmatprep.subr.bf16.mxu0 0
        %4701 = vmatpush1.bf16.msra.mxu0 %v4106
        %4702 = vmatprep.mubr.bf16.mxu0 %v2158
        %4703 = vmatmul.mubr.bf16.gmra.mrb[0].mxu0 %v2146
        %v4704 = vpop.f32.mrb[0].mxu0
        %v4705 = vadd.f32 %v4544, %v4704
        %v4706 = vpop.f32.mrb[0].mxu0
        %v4707 = vpop.f32.mrb[0].mxu0
        %v4708 = vadd.f32 %v4547, %v4707
        %v4709 = vpop.f32.mrb[0].mxu0
        %4710 = vmatprep.mubr.bf16.mxu0 %v2254
        %4711 = vmatmul.mubr.bf16.gmra.mrb[0].mxu0 %v2242
        %v4712 = vpop.f32.mrb[0].mxu0
        %v4713 = vadd.f32 %v4552, %v4712
        %v4714 = vpop.f32.mrb[0].mxu0
        %v4715 = vpop.f32.mrb[0].mxu0
        %v4716 = vadd.f32 %v4555, %v4715
        %v4717 = vpop.f32.mrb[0].mxu0
        %4718 = vmatprep.mubr.bf16.mxu0 %v2350
        %4719 = vmatmul.mubr.bf16.gmra.mrb[0].mxu0 %v2338
        %v4720 = vpop.f32.mrb[0].mxu0
        %v4721 = vadd.f32 %v4560, %v4720
        %v4722 = vpop.f32.mrb[0].mxu0
        %v4723 = vpop.f32.mrb[0].mxu0
        %v4724 = vadd.f32 %v4563, %v4723
        %v4725 = vpop.f32.mrb[0].mxu0
        %4726 = vmatprep.mubr.bf16.mxu0 %v2446
        %4727 = vmatmul.mubr.bf16.gmra.mrb[0].mxu0 %v2434
        %v4728 = vpop.f32.mrb[0].mxu0
        %v4729 = vadd.f32 %v4568, %v4728
        %v4730 = vpop.f32.mrb[0].mxu0
        %v4731 = vpop.f32.mrb[0].mxu0
        %v4732 = vadd.f32 %v4571, %v4731
        %v4733 = vpop.f32.mrb[0].mxu0
        %4734 = vmatprep.mubr.bf16.mxu0 %v2542
        %4735 = vmatmul.mubr.bf16.gmra.mrb[0].mxu0 %v2530
        %v4736 = vpop.f32.mrb[0].mxu0
        %v4737 = vadd.f32 %v4576, %v4736
        %v4738 = vpop.f32.mrb[0].mxu0
        %v4739 = vpop.f32.mrb[0].mxu0
        %v4740 = vadd.f32 %v4579, %v4739
        %v4741 = vpop.f32.mrb[0].mxu0
        %4742 = vmatprep.mubr.bf16.mxu0 %v2638
        %4743 = vmatmul.mubr.bf16.gmra.mrb[0].mxu0 %v2626
        %v4744 = vpop.f32.mrb[0].mxu0
        %v4745 = vadd.f32 %v4584, %v4744
        %v4746 = vpop.f32.mrb[0].mxu0
        %v4747 = vpop.f32.mrb[0].mxu0
        %v4748 = vadd.f32 %v4587, %v4747
        %v4749 = vpop.f32.mrb[0].mxu0
        %4750 = vmatprep.mubr.bf16.mxu0 %v2734
        %4751 = vmatmul.mubr.bf16.gmra.mrb[0].mxu0 %v2722
        %v4752 = vpop.f32.mrb[0].mxu0
        %v4753 = vadd.f32 %v4592, %v4752
        %v4754 = vpop.f32.mrb[0].mxu0
        %v4755 = vpop.f32.mrb[0].mxu0
        %v4756 = vadd.f32 %v4595, %v4755
        %v4757 = vpop.f32.mrb[0].mxu0
        %4758 = vmatprep.mubr.bf16.mxu0 %v2830
        %4759 = vmatmul.mubr.bf16.gmra.mrb[0].mxu0 %v2818
        %v4760 = vpop.f32.mrb[0].mxu0
        %v4761 = vadd.f32 %v4600, %v4760
        %v4762 = vpop.f32.mrb[0].mxu0
        %v4763 = vpop.f32.mrb[0].mxu0
        %v4764 = vadd.f32 %v4603, %v4763
        %v4765 = vpop.f32.mrb[0].mxu0
        %4766 = vmatprep.mubr.bf16.mxu0 %v2926
        %4767 = vmatmul.mubr.bf16.gmra.mrb[0].mxu0 %v2914
        %v4768 = vpop.f32.mrb[0].mxu0
        %v4769 = vadd.f32 %v4608, %v4768
        %v4770 = vpop.f32.mrb[0].mxu0
        %v4771 = vpop.f32.mrb[0].mxu0
        %v4772 = vadd.f32 %v4611, %v4771
        %v4773 = vpop.f32.mrb[0].mxu0
        %4774 = vmatprep.mubr.bf16.mxu0 %v3022
        %4775 = vmatmul.mubr.bf16.gmra.mrb[0].mxu0 %v3010
        %v4776 = vpop.f32.mrb[0].mxu0
        %v4777 = vadd.f32 %v4616, %v4776
        %v4778 = vpop.f32.mrb[0].mxu0
        %v4779 = vpop.f32.mrb[0].mxu0
        %v4780 = vadd.f32 %v4619, %v4779
        %v4781 = vpop.f32.mrb[0].mxu0
        %4782 = vmatprep.mubr.bf16.mxu0 %v3118
        %4783 = vmatmul.mubr.bf16.gmra.mrb[0].mxu0 %v3106
        %v4784 = vpop.f32.mrb[0].mxu0
        %v4785 = vadd.f32 %v4624, %v4784
        %v4786 = vpop.f32.mrb[0].mxu0
        %v4787 = vpop.f32.mrb[0].mxu0
        %v4788 = vadd.f32 %v4627, %v4787
        %v4789 = vpop.f32.mrb[0].mxu0
        %4790 = vmatprep.mubr.bf16.mxu0 %v3214
        %4791 = vmatmul.mubr.bf16.gmra.mrb[0].mxu0 %v3202
        %v4792 = vpop.f32.mrb[0].mxu0
        %v4793 = vadd.f32 %v4632, %v4792
        %v4794 = vpop.f32.mrb[0].mxu0
        %v4795 = vpop.f32.mrb[0].mxu0
        %v4796 = vadd.f32 %v4635, %v4795
        %v4797 = vpop.f32.mrb[0].mxu0
        %4798 = vmatprep.mubr.bf16.mxu0 %v3310
        %4799 = vmatmul.mubr.bf16.gmra.mrb[0].mxu0 %v3298
        %v4800 = vpop.f32.mrb[0].mxu0
        %v4801 = vadd.f32 %v4640, %v4800
        %v4802 = vpop.f32.mrb[0].mxu0
        %v4803 = vpop.f32.mrb[0].mxu0
        %v4804 = vadd.f32 %v4643, %v4803
        %v4805 = vpop.f32.mrb[0].mxu0
        %4806 = vmatprep.mubr.bf16.mxu0 %v3406
        %4807 = vmatmul.mubr.bf16.gmra.mrb[0].mxu0 %v3394
        %v4808 = vpop.f32.mrb[0].mxu0
        %v4809 = vadd.f32 %v4648, %v4808
        %v4810 = vpop.f32.mrb[0].mxu0
        %v4811 = vpop.f32.mrb[0].mxu0
        %v4812 = vadd.f32 %v4651, %v4811
        %v4813 = vpop.f32.mrb[0].mxu0
        %4814 = vmatprep.mubr.bf16.mxu0 %v3502
        %4815 = vmatmul.mubr.bf16.gmra.mrb[0].mxu0 %v3490
        %v4816 = vpop.f32.mrb[0].mxu0
        %v4817 = vadd.f32 %v4656, %v4816
        %v4818 = vpop.f32.mrb[0].mxu0
        %v4819 = vpop.f32.mrb[0].mxu0
        %v4820 = vadd.f32 %v4659, %v4819
        %v4821 = vpop.f32.mrb[0].mxu0
        %4822 = vmatprep.mubr.bf16.mxu0 %v3598
        %4823 = vmatmul.mubr.bf16.gmra.mrb[0].mxu0 %v3586
        %v4824 = vpop.f32.mrb[0].mxu0
        %v4825 = vadd.f32 %v4664, %v4824
        %v4826 = vpop.f32.mrb[0].mxu0
        %v4827 = vpop.f32.mrb[0].mxu0
        %v4828 = vadd.f32 %v4667, %v4827
        %v4829 = vpop.f32.mrb[0].mxu0
        %4830 = vdwg.mxu0
        %4831 = vmatprep.subr.bf16.mxu0 0
        %4832 = vmatpush1.bf16.msra.mxu0 %v4107
        %4833 = vmatprep.subr.bf16.mxu0 0
        %4834 = vmatpush1.bf16.msra.mxu0 %v4108
        %4835 = vmatprep.subr.bf16.mxu0 0
        %4836 = vmatpush1.bf16.msra.mxu0 %v4109
        %4837 = vmatprep.subr.bf16.mxu0 0
        %4838 = vmatpush1.bf16.msra.mxu0 %v4110
        %4839 = vmatprep.subr.bf16.mxu0 0
        %4840 = vmatpush1.bf16.msra.mxu0 %v4111
        %4841 = vmatprep.subr.bf16.mxu0 0
        %4842 = vmatpush1.bf16.msra.mxu0 %v4112
        %4843 = vmatprep.subr.bf16.mxu0 0
        %4844 = vmatpush1.bf16.msra.mxu0 %v4113
        %4845 = vmatprep.subr.bf16.mxu0 0
        %4846 = vmatpush1.bf16.msra.mxu0 %v4114
        %4847 = vmatprep.subr.bf16.mxu0 0
        %4848 = vmatpush1.bf16.msra.mxu0 0
        %4849 = vmatprep.subr.bf16.mxu0 0
        %4850 = vmatpush1.bf16.msra.mxu0 0
        %4851 = vmatprep.subr.bf16.mxu0 0
        %4852 = vmatpush1.bf16.msra.mxu0 0
        %4853 = vmatprep.subr.bf16.mxu0 0
        %4854 = vmatpush1.bf16.msra.mxu0 0
        %4855 = vmatprep.subr.bf16.mxu0 0
        %4856 = vmatpush1.bf16.msra.mxu0 0
        %4857 = vmatprep.subr.bf16.mxu0 0
        %4858 = vmatpush1.bf16.msra.mxu0 0
        %4859 = vmatprep.subr.bf16.mxu0 0
        %4860 = vmatpush1.bf16.msra.mxu0 0
        %4861 = vmatprep.subr.bf16.mxu0 0
        %4862 = vmatpush1.bf16.msra.mxu0 0
        %4863 = vmatprep.mubr.bf16.mxu0 0
        %4864 = vmatmul.mubr.bf16.gmra.mrb[0].mxu0 %v2170
        %v4865 = vpop.f32.mrb[0].mxu0
        %v4866 = vadd.f32 %v4705, %v4865
        %v4867 = vpop.f32.mrb[0].mxu0
        %v4868 = vpop.f32.mrb[0].mxu0
        %v4869 = vadd.f32 %v4708, %v4868
        %v4870 = vpop.f32.mrb[0].mxu0
        %4871 = vmatprep.mubr.bf16.mxu0 0
        %4872 = vmatmul.mubr.bf16.gmra.mrb[0].mxu0 %v2266
        %v4873 = vpop.f32.mrb[0].mxu0
        %v4874 = vadd.f32 %v4713, %v4873
        %v4875 = vpop.f32.mrb[0].mxu0
        %v4876 = vpop.f32.mrb[0].mxu0
        %v4877 = vadd.f32 %v4716, %v4876
        %v4878 = vpop.f32.mrb[0].mxu0
        %4879 = vmatprep.mubr.bf16.mxu0 0
        %4880 = vmatmul.mubr.bf16.gmra.mrb[0].mxu0 %v2362
        %v4881 = vpop.f32.mrb[0].mxu0
        %v4882 = vadd.f32 %v4721, %v4881
        %v4883 = vpop.f32.mrb[0].mxu0
        %v4884 = vpop.f32.mrb[0].mxu0
        %v4885 = vadd.f32 %v4724, %v4884
        %v4886 = vpop.f32.mrb[0].mxu0
        %4887 = vmatprep.mubr.bf16.mxu0 0
        %4888 = vmatmul.mubr.bf16.gmra.mrb[0].mxu0 %v2458
        %v4889 = vpop.f32.mrb[0].mxu0
        %v4890 = vadd.f32 %v4729, %v4889
        %v4891 = vpop.f32.mrb[0].mxu0
        %v4892 = vpop.f32.mrb[0].mxu0
        %v4893 = vadd.f32 %v4732, %v4892
        %v4894 = vpop.f32.mrb[0].mxu0
        %4895 = vmatprep.mubr.bf16.mxu0 0
        %4896 = vmatmul.mubr.bf16.gmra.mrb[0].mxu0 %v2554
        %v4897 = vpop.f32.mrb[0].mxu0
        %v4898 = vadd.f32 %v4737, %v4897
        %v4899 = vpop.f32.mrb[0].mxu0
        %v4900 = vpop.f32.mrb[0].mxu0
        %v4901 = vadd.f32 %v4740, %v4900
        %v4902 = vpop.f32.mrb[0].mxu0
        %4903 = vmatprep.mubr.bf16.mxu0 0
        %4904 = vmatmul.mubr.bf16.gmra.mrb[0].mxu0 %v2650
        %v4905 = vpop.f32.mrb[0].mxu0
        %v4906 = vadd.f32 %v4745, %v4905
        %v4907 = vpop.f32.mrb[0].mxu0
        %v4908 = vpop.f32.mrb[0].mxu0
        %v4909 = vadd.f32 %v4748, %v4908
        %v4910 = vpop.f32.mrb[0].mxu0
        %4911 = vmatprep.mubr.bf16.mxu0 0
        %4912 = vmatmul.mubr.bf16.gmra.mrb[0].mxu0 %v2746
        %v4913 = vpop.f32.mrb[0].mxu0
        %v4914 = vadd.f32 %v4753, %v4913
        %v4915 = vpop.f32.mrb[0].mxu0
        %v4916 = vpop.f32.mrb[0].mxu0
        %v4917 = vadd.f32 %v4756, %v4916
        %v4918 = vpop.f32.mrb[0].mxu0
        %4919 = vmatprep.mubr.bf16.mxu0 0
        %4920 = vmatmul.mubr.bf16.gmra.mrb[0].mxu0 %v2842
        %v4921 = vpop.f32.mrb[0].mxu0
        %v4922 = vadd.f32 %v4761, %v4921
        %v4923 = vpop.f32.mrb[0].mxu0
        %v4924 = vpop.f32.mrb[0].mxu0
        %v4925 = vadd.f32 %v4764, %v4924
        %v4926 = vpop.f32.mrb[0].mxu0
        %4927 = vmatprep.mubr.bf16.mxu0 0
        %4928 = vmatmul.mubr.bf16.gmra.mrb[0].mxu0 %v2938
        %v4929 = vpop.f32.mrb[0].mxu0
        %v4930 = vadd.f32 %v4769, %v4929
        %v4931 = vpop.f32.mrb[0].mxu0
        %v4932 = vpop.f32.mrb[0].mxu0
        %v4933 = vadd.f32 %v4772, %v4932
        %v4934 = vpop.f32.mrb[0].mxu0
        %4935 = vmatprep.mubr.bf16.mxu0 0
        %4936 = vmatmul.mubr.bf16.gmra.mrb[0].mxu0 %v3034
        %v4937 = vpop.f32.mrb[0].mxu0
        %v4938 = vadd.f32 %v4777, %v4937
        %v4939 = vpop.f32.mrb[0].mxu0
        %v4940 = vpop.f32.mrb[0].mxu0
        %v4941 = vadd.f32 %v4780, %v4940
        %v4942 = vpop.f32.mrb[0].mxu0
        %4943 = vmatprep.mubr.bf16.mxu0 0
        %4944 = vmatmul.mubr.bf16.gmra.mrb[0].mxu0 %v3130
        %v4945 = vpop.f32.mrb[0].mxu0
        %v4946 = vadd.f32 %v4785, %v4945
        %v4947 = vpop.f32.mrb[0].mxu0
        %v4948 = vpop.f32.mrb[0].mxu0
        %v4949 = vadd.f32 %v4788, %v4948
        %v4950 = vpop.f32.mrb[0].mxu0
        %4951 = vmatprep.mubr.bf16.mxu0 0
        %4952 = vmatmul.mubr.bf16.gmra.mrb[0].mxu0 %v3226
        %v4953 = vpop.f32.mrb[0].mxu0
        %v4954 = vadd.f32 %v4793, %v4953
        %v4955 = vpop.f32.mrb[0].mxu0
        %v4956 = vpop.f32.mrb[0].mxu0
        %v4957 = vadd.f32 %v4796, %v4956
        %v4958 = vpop.f32.mrb[0].mxu0
        %4959 = vmatprep.mubr.bf16.mxu0 0
        %4960 = vmatmul.mubr.bf16.gmra.mrb[0].mxu0 %v3322
        %v4961 = vpop.f32.mrb[0].mxu0
        %v4962 = vadd.f32 %v4801, %v4961
        %v4963 = vpop.f32.mrb[0].mxu0
        %v4964 = vpop.f32.mrb[0].mxu0
        %v4965 = vadd.f32 %v4804, %v4964
        %v4966 = vpop.f32.mrb[0].mxu0
        %4967 = vmatprep.mubr.bf16.mxu0 0
        %4968 = vmatmul.mubr.bf16.gmra.mrb[0].mxu0 %v3418
        %v4969 = vpop.f32.mrb[0].mxu0
        %v4970 = vadd.f32 %v4809, %v4969
        %v4971 = vpop.f32.mrb[0].mxu0
        %v4972 = vpop.f32.mrb[0].mxu0
        %v4973 = vadd.f32 %v4812, %v4972
        %v4974 = vpop.f32.mrb[0].mxu0
        %4975 = vmatprep.mubr.bf16.mxu0 0
        %4976 = vmatmul.mubr.bf16.gmra.mrb[0].mxu0 %v3514
        %v4977 = vpop.f32.mrb[0].mxu0
        %v4978 = vadd.f32 %v4817, %v4977
        %v4979 = vpop.f32.mrb[0].mxu0
        %v4980 = vpop.f32.mrb[0].mxu0
        %v4981 = vadd.f32 %v4820, %v4980
        %v4982 = vpop.f32.mrb[0].mxu0
        %4983 = vmatprep.mubr.bf16.mxu0 0
        %4984 = vmatmul.mubr.bf16.gmra.mrb[0].mxu0 %v3610
        %v4985 = vpop.f32.mrb[0].mxu0
        %v4986 = vadd.f32 %v4825, %v4985
        %v4987 = vpop.f32.mrb[0].mxu0
        %v4988 = vpop.f32.mrb[0].mxu0
        %v4989 = vadd.f32 %v4828, %v4988
        %v4990 = vpop.f32.mrb[0].mxu0
        %4991 = vdwg.mxu0
        %4992 = vst [vmem:[%s182] sm:$0xff] %v4866
        %4993 = vst [vmem:[%s182 + $0x8] sm:$0xff] %v4869
        %4994 = vst [vmem:[%s182 + $0x10] sm:$0xff] %v4874
        %4995 = vst [vmem:[%s182 + $0x18] sm:$0xff] %v4877
        %4996 = vst [vmem:[%s182 + $0x20] sm:$0xff] %v4882
        %4997 = vst [vmem:[%s182 + $0x28] sm:$0xff] %v4885
        %4998 = vst [vmem:[%s182 + $0x30] sm:$0xff] %v4890
        %4999 = vst [vmem:[%s182 + $0x38] sm:$0xff] %v4893
        %5000 = vst [vmem:[%s182 + $0x40] sm:$0xff] %v4898
        %5001 = vst [vmem:[%s182 + $0x48] sm:$0xff] %v4901
        %5002 = vst [vmem:[%s182 + $0x50] sm:$0xff] %v4906
        %5003 = vst [vmem:[%s182 + $0x58] sm:$0xff] %v4909
        %5004 = vst [vmem:[%s182 + $0x60] sm:$0xff] %v4914
        %5005 = vst [vmem:[%s182 + $0x68] sm:$0xff] %v4917
        %5006 = vst [vmem:[%s182 + $0x70] sm:$0xff] %v4922
        %5007 = vst [vmem:[%s182 + $0x78] sm:$0xff] %v4925
        %5008 = vst [vmem:[%s182 + $0x80] sm:$0xff] %v4930
        %5009 = vst [vmem:[%s182 + $0x88] sm:$0xff] %v4933
        %5010 = vst [vmem:[%s182 + $0x90] sm:$0xff] %v4938
        %5011 = vst [vmem:[%s182 + $0x98] sm:$0xff] %v4941
        %5012 = vst [vmem:[%s182 + $0xa0] sm:$0xff] %v4946
        %5013 = vst [vmem:[%s182 + $0xa8] sm:$0xff] %v4949
        %5014 = vst [vmem:[%s182 + $0xb0] sm:$0xff] %v4954
        %5015 = vst [vmem:[%s182 + $0xb8] sm:$0xff] %v4957
        %5016 = vst [vmem:[%s182 + $0xc0] sm:$0xff] %v4962
        %5017 = vst [vmem:[%s182 + $0xc8] sm:$0xff] %v4965
        %5018 = vst [vmem:[%s182 + $0xd0] sm:$0xff] %v4970
        %5019 = vst [vmem:[%s182 + $0xd8] sm:$0xff] %v4973
        %5020 = vst [vmem:[%s182 + $0xe0] sm:$0xff] %v4978
        %5021 = vst [vmem:[%s182 + $0xe8] sm:$0xff] %v4981
        %5022 = vst [vmem:[%s182 + $0xf0] sm:$0xff] %v4986
        %5023 = vst [vmem:[%s182 + $0xf8] sm:$0xff] %v4989
        %v5024 = vadd.f32 %v4866, %v4874
        %v5025 = vadd.f32 %v5024, %v4882
        %v5026 = vadd.f32 %v5025, %v4890
        %v5027 = vadd.f32 %v5026, %v4898
        %v5028 = vadd.f32 %v5027, %v4906
        %v5029 = vadd.f32 %v5028, %v4914
        %v5030 = vadd.f32 %v5029, %v4922
        %v5031 = vadd.f32 %v5030, %v4930
        %v5032 = vadd.f32 %v5031, %v4938
        %v5033 = vadd.f32 %v5032, %v4946
        %v5034 = vadd.f32 %v5033, %v4954
        %v5035 = vadd.f32 %v5034, %v4962
        %v5036 = vadd.f32 %v5035, %v4970
        %v5037 = vadd.f32 %v5036, %v4978
        %v5038 = vadd.f32 %v5037, %v4986
        %v5039 = vadd.f32 %v4869, %v4877
        %v5040 = vadd.f32 %v5039, %v4885
        %v5041 = vadd.f32 %v5040, %v4893
        %v5042 = vadd.f32 %v5041, %v4901
        %v5043 = vadd.f32 %v5042, %v4909
        %v5044 = vadd.f32 %v5043, %v4917
        %v5045 = vadd.f32 %v5044, %v4925
        %v5046 = vadd.f32 %v5045, %v4933
        %v5047 = vadd.f32 %v5046, %v4941
        %v5048 = vadd.f32 %v5047, %v4949
        %v5049 = vadd.f32 %v5048, %v4957
        %v5050 = vadd.f32 %v5049, %v4965
        %v5051 = vadd.f32 %v5050, %v4973
        %v5052 = vadd.f32 %v5051, %v4981
        %v5053 = vadd.f32 %v5052, %v4989
        %v5054 = vadd.f32 %v5038, %v5053
        %v5055 = vrot.slane %v5054, 4
        %v5056 = vadd.f32 %v5054, %v5055
        %v5057 = vrot.slane %v5056, 2
        %v5058 = vadd.f32 %v5056, %v5057
        %v5059 = vrot.slane %v5058, 1
        %v5060 = vadd.f32 %v5058, %v5059
        %v5061 = vmul.f32 %v4866, %v4866
        %v5062 = vmul.f32 %v4869, %v4869
        %v5063 = vmul.f32 %v4874, %v4874
        %v5064 = vmul.f32 %v4877, %v4877
        %v5065 = vmul.f32 %v4882, %v4882
        %v5066 = vmul.f32 %v4885, %v4885
        %v5067 = vmul.f32 %v4890, %v4890
        %v5068 = vmul.f32 %v4893, %v4893
        %v5069 = vmul.f32 %v4898, %v4898
        %v5070 = vmul.f32 %v4901, %v4901
        %v5071 = vmul.f32 %v4906, %v4906
        %v5072 = vmul.f32 %v4909, %v4909
        %v5073 = vmul.f32 %v4914, %v4914
        %v5074 = vmul.f32 %v4917, %v4917
        %v5075 = vmul.f32 %v4922, %v4922
        %v5076 = vmul.f32 %v4925, %v4925
        %v5077 = vmul.f32 %v4930, %v4930
        %v5078 = vmul.f32 %v4933, %v4933
        %v5079 = vmul.f32 %v4938, %v4938
        %v5080 = vmul.f32 %v4941, %v4941
        %v5081 = vmul.f32 %v4946, %v4946
        %v5082 = vmul.f32 %v4949, %v4949
        %v5083 = vmul.f32 %v4954, %v4954
        %v5084 = vmul.f32 %v4957, %v4957
        %v5085 = vmul.f32 %v4962, %v4962
        %v5086 = vmul.f32 %v4965, %v4965
        %v5087 = vmul.f32 %v4970, %v4970
        %v5088 = vmul.f32 %v4973, %v4973
        %v5089 = vmul.f32 %v4978, %v4978
        %v5090 = vmul.f32 %v4981, %v4981
        %v5091 = vmul.f32 %v4986, %v4986
        %v5092 = vmul.f32 %v4989, %v4989
        %v5093 = vadd.f32 %v5061, %v5063
        %v5094 = vadd.f32 %v5093, %v5065
        %v5095 = vadd.f32 %v5094, %v5067
        %v5096 = vadd.f32 %v5095, %v5069
        %v5097 = vadd.f32 %v5096, %v5071
        %v5098 = vadd.f32 %v5097, %v5073
        %v5099 = vadd.f32 %v5098, %v5075
        %v5100 = vadd.f32 %v5099, %v5077
        %v5101 = vadd.f32 %v5100, %v5079
        %v5102 = vadd.f32 %v5101, %v5081
        %v5103 = vadd.f32 %v5102, %v5083
        %v5104 = vadd.f32 %v5103, %v5085
        %v5105 = vadd.f32 %v5104, %v5087
        %v5106 = vadd.f32 %v5105, %v5089
        %v5107 = vadd.f32 %v5106, %v5091
        %v5108 = vadd.f32 %v5062, %v5064
        %v5109 = vadd.f32 %v5108, %v5066
        %v5110 = vadd.f32 %v5109, %v5068
        %v5111 = vadd.f32 %v5110, %v5070
        %v5112 = vadd.f32 %v5111, %v5072
        %v5113 = vadd.f32 %v5112, %v5074
        %v5114 = vadd.f32 %v5113, %v5076
        %v5115 = vadd.f32 %v5114, %v5078
        %v5116 = vadd.f32 %v5115, %v5080
        %v5117 = vadd.f32 %v5116, %v5082
        %v5118 = vadd.f32 %v5117, %v5084
        %v5119 = vadd.f32 %v5118, %v5086
        %v5120 = vadd.f32 %v5119, %v5088
        %v5121 = vadd.f32 %v5120, %v5090
        %v5122 = vadd.f32 %v5121, %v5092
        %v5123 = vadd.f32 %v5107, %v5122
        %v5124 = vrot.slane %v5123, 4
        %v5125 = vadd.f32 %v5123, %v5124
        %v5126 = vrot.slane %v5125, 2
        %v5127 = vadd.f32 %v5125, %v5126
        %v5128 = vrot.slane %v5127, 1
        %v5129 = vadd.f32 %v5127, %v5128
        %5130 = vst [vmem:[%s189] sm:$0x1] %v5060
        %5131 = vst [vmem:[%s189 + $0x1] sm:$0x1] %v5129
        %v5132 = vld [vmem:[%s194] sm:$0xf]
        %v5133 = vld [vmem:[%s194 + $0x4] sm:$0xf]
        %v5134 = vld [vmem:[%s194 + $0xc] sm:$0xf]
        %v5135 = vld [vmem:[%s194 + $0x10] sm:$0xf]
        %v5136 = vld [vmem:[%s194 + $0x18] sm:$0xf]
        %v5137 = vld [vmem:[%s194 + $0x1c] sm:$0xf]
        %v5138 = vld [vmem:[%s194 + $0x24] sm:$0xf]
        %v5139 = vld [vmem:[%s194 + $0x28] sm:$0xf]
        %v5140 = vld [vmem:[%s194 + $0x30] sm:$0xf]
        %v5141 = vld [vmem:[%s194 + $0x34] sm:$0xf]
        %v5142 = vld [vmem:[%s194 + $0x3c] sm:$0xf]
        %v5143 = vld [vmem:[%s194 + $0x40] sm:$0xf]
        %v5144 = vld [vmem:[%s194 + $0x48] sm:$0xf]
        %v5145 = vld [vmem:[%s194 + $0x4c] sm:$0xf]
        %v5146 = vld [vmem:[%s194 + $0x54] sm:$0xf]
        %v5147 = vld [vmem:[%s194 + $0x58] sm:$0xf]
        %v5148 = vld [vmem:[%s194 + $0x60] sm:$0xf]
        %v5149 = vld [vmem:[%s194 + $0x64] sm:$0xf]
        %v5150 = vld [vmem:[%s194 + $0x6c] sm:$0xf]
        %v5151 = vld [vmem:[%s194 + $0x70] sm:$0xf]
        %v5152 = vld [vmem:[%s194 + $0x78] sm:$0xf]
        %v5153 = vld [vmem:[%s194 + $0x7c] sm:$0xf]
        %v5154 = vld [vmem:[%s194 + $0x84] sm:$0xf]
        %v5155 = vld [vmem:[%s194 + $0x88] sm:$0xf]
        %v5156 = vld [vmem:[%s194 + $0x90] sm:$0xf]
        %v5157 = vld [vmem:[%s194 + $0x94] sm:$0xf]
        %v5158 = vld [vmem:[%s194 + $0x9c] sm:$0xf]
        %v5159 = vld [vmem:[%s194 + $0xa0] sm:$0xf]
        %v5160 = vld [vmem:[%s194 + $0xa8] sm:$0xf]
        %v5161 = vld [vmem:[%s194 + $0xac] sm:$0xf]
        %v5162 = vld [vmem:[%s194 + $0xb4] sm:$0xf]
        %v5163 = vld [vmem:[%s194 + $0xb8] sm:$0xf]
        %v5164 = vld [vmem:[%s194] sm:$0xe]
        %v5165 = vld [vmem:[%s194 + $0x8] sm:$0x1]
        %v5166 = vld [vmem:[%s194 + $0xc] sm:$0xe]
        %v5167 = vld [vmem:[%s194 + $0x14] sm:$0x1]
        %v5168 = vld [vmem:[%s194 + $0x18] sm:$0xe]
        %v5169 = vld [vmem:[%s194 + $0x20] sm:$0x1]
        %v5170 = vld [vmem:[%s194 + $0x24] sm:$0xe]
        %v5171 = vld [vmem:[%s194 + $0x2c] sm:$0x1]
        %v5172 = vld [vmem:[%s194 + $0x30] sm:$0xe]
        %v5173 = vld [vmem:[%s194 + $0x38] sm:$0x1]
        %v5174 = vld [vmem:[%s194 + $0x3c] sm:$0xe]
        %v5175 = vld [vmem:[%s194 + $0x44] sm:$0x1]
        %v5176 = vld [vmem:[%s194 + $0x48] sm:$0xe]
        %v5177 = vld [vmem:[%s194 + $0x50] sm:$0x1]
        %v5178 = vld [vmem:[%s194 + $0x54] sm:$0xe]
        %v5179 = vld [vmem:[%s194 + $0x5c] sm:$0x1]
        %v5180 = vld [vmem:[%s194 + $0x60] sm:$0xe]
        %v5181 = vld [vmem:[%s194 + $0x68] sm:$0x1]
        %v5182 = vld [vmem:[%s194 + $0x6c] sm:$0xe]
        %v5183 = vld [vmem:[%s194 + $0x74] sm:$0x1]
        %v5184 = vld [vmem:[%s194 + $0x78] sm:$0xe]
        %v5185 = vld [vmem:[%s194 + $0x80] sm:$0x1]
        %v5186 = vld [vmem:[%s194 + $0x84] sm:$0xe]
        %v5187 = vld [vmem:[%s194 + $0x8c] sm:$0x1]
        %v5188 = vld [vmem:[%s194 + $0x90] sm:$0xe]
        %v5189 = vld [vmem:[%s194 + $0x98] sm:$0x1]
        %v5190 = vld [vmem:[%s194 + $0x9c] sm:$0xe]
        %v5191 = vld [vmem:[%s194 + $0xa4] sm:$0x1]
        %v5192 = vld [vmem:[%s194 + $0xa8] sm:$0xe]
        %v5193 = vld [vmem:[%s194 + $0xb0] sm:$0x1]
        %v5194 = vld [vmem:[%s194 + $0xb4] sm:$0xe]
        %v5195 = vld [vmem:[%s194 + $0xbc] sm:$0x1]
        %v5196 = vld [vmem:[%s194] sm:$0xc]
        %v5197 = vld [vmem:[%s194 + $0x8] sm:$0x3]
        %v5198 = vld [vmem:[%s194 + $0xc] sm:$0xc]
        %v5199 = vld [vmem:[%s194 + $0x14] sm:$0x3]
        %v5200 = vld [vmem:[%s194 + $0x18] sm:$0xc]
        %v5201 = vld [vmem:[%s194 + $0x20] sm:$0x3]
        %v5202 = vld [vmem:[%s194 + $0x24] sm:$0xc]
        %v5203 = vld [vmem:[%s194 + $0x2c] sm:$0x3]
        %v5204 = vld [vmem:[%s194 + $0x30] sm:$0xc]
        %v5205 = vld [vmem:[%s194 + $0x38] sm:$0x3]
        %v5206 = vld [vmem:[%s194 + $0x3c] sm:$0xc]
        %v5207 = vld [vmem:[%s194 + $0x44] sm:$0x3]
        %v5208 = vld [vmem:[%s194 + $0x48] sm:$0xc]
        %v5209 = vld [vmem:[%s194 + $0x50] sm:$0x3]
        %v5210 = vld [vmem:[%s194 + $0x54] sm:$0xc]
        %v5211 = vld [vmem:[%s194 + $0x5c] sm:$0x3]
        %v5212 = vld [vmem:[%s194 + $0x60] sm:$0xc]
        %v5213 = vld [vmem:[%s194 + $0x68] sm:$0x3]
        %v5214 = vld [vmem:[%s194 + $0x6c] sm:$0xc]
        %v5215 = vld [vmem:[%s194 + $0x74] sm:$0x3]
        %v5216 = vld [vmem:[%s194 + $0x78] sm:$0xc]
        %v5217 = vld [vmem:[%s194 + $0x80] sm:$0x3]
        %v5218 = vld [vmem:[%s194 + $0x84] sm:$0xc]
        %v5219 = vld [vmem:[%s194 + $0x8c] sm:$0x3]
        %v5220 = vld [vmem:[%s194 + $0x90] sm:$0xc]
        %v5221 = vld [vmem:[%s194 + $0x98] sm:$0x3]
        %v5222 = vld [vmem:[%s194 + $0x9c] sm:$0xc]
        %v5223 = vld [vmem:[%s194 + $0xa4] sm:$0x3]
        %v5224 = vld [vmem:[%s194 + $0xa8] sm:$0xc]
        %v5225 = vld [vmem:[%s194 + $0xb0] sm:$0x3]
        %v5226 = vld [vmem:[%s194 + $0xb4] sm:$0xc]
        %v5227 = vld [vmem:[%s194 + $0xbc] sm:$0x3]
        %v5228 = vld [vmem:[%s279] sm:$0xf]
        %v5229 = vld [vmem:[%s279 + $0x4] sm:$0xf]
        %v5230 = vld [vmem:[%s279 + $0xc] sm:$0xf]
        %v5231 = vld [vmem:[%s279 + $0x10] sm:$0xf]
        %v5232 = vld [vmem:[%s279 + $0x18] sm:$0xf]
        %v5233 = vld [vmem:[%s279 + $0x1c] sm:$0xf]
        %v5234 = vld [vmem:[%s279 + $0x24] sm:$0xf]
        %v5235 = vld [vmem:[%s279 + $0x28] sm:$0xf]
        %v5236 = vld [vmem:[%s279 + $0x30] sm:$0xf]
        %v5237 = vld [vmem:[%s279 + $0x34] sm:$0xf]
        %v5238 = vld [vmem:[%s279 + $0x3c] sm:$0xf]
        %v5239 = vld [vmem:[%s279 + $0x40] sm:$0xf]
        %v5240 = vld [vmem:[%s279 + $0x48] sm:$0xf]
        %v5241 = vld [vmem:[%s279 + $0x4c] sm:$0xf]
        %v5242 = vld [vmem:[%s279 + $0x54] sm:$0xf]
        %v5243 = vld [vmem:[%s279 + $0x58] sm:$0xf]
        %v5244 = vld [vmem:[%s279 + $0x60] sm:$0xf]
        %v5245 = vld [vmem:[%s279 + $0x64] sm:$0xf]
        %v5246 = vld [vmem:[%s279 + $0x6c] sm:$0xf]
        %v5247 = vld [vmem:[%s279 + $0x70] sm:$0xf]
        %v5248 = vld [vmem:[%s279 + $0x78] sm:$0xf]
        %v5249 = vld [vmem:[%s279 + $0x7c] sm:$0xf]
        %v5250 = vld [vmem:[%s279 + $0x84] sm:$0xf]
        %v5251 = vld [vmem:[%s279 + $0x88] sm:$0xf]
        %v5252 = vld [vmem:[%s279 + $0x90] sm:$0xf]
        %v5253 = vld [vmem:[%s279 + $0x94] sm:$0xf]
        %v5254 = vld [vmem:[%s279 + $0x9c] sm:$0xf]
        %v5255 = vld [vmem:[%s279 + $0xa0] sm:$0xf]
        %v5256 = vld [vmem:[%s279 + $0xa8] sm:$0xf]
        %v5257 = vld [vmem:[%s279 + $0xac] sm:$0xf]
        %v5258 = vld [vmem:[%s279 + $0xb4] sm:$0xf]
        %v5259 = vld [vmem:[%s279 + $0xb8] sm:$0xf]
        %v5260 = vld [vmem:[%s279] sm:$0xe]
        %v5261 = vld [vmem:[%s279 + $0x8] sm:$0x1]
        %v5262 = vld [vmem:[%s279 + $0xc] sm:$0xe]
        %v5263 = vld [vmem:[%s279 + $0x14] sm:$0x1]
        %v5264 = vld [vmem:[%s279 + $0x18] sm:$0xe]
        %v5265 = vld [vmem:[%s279 + $0x20] sm:$0x1]
        %v5266 = vld [vmem:[%s279 + $0x24] sm:$0xe]
        %v5267 = vld [vmem:[%s279 + $0x2c] sm:$0x1]
        %v5268 = vld [vmem:[%s279 + $0x30] sm:$0xe]
        %v5269 = vld [vmem:[%s279 + $0x38] sm:$0x1]
        %v5270 = vld [vmem:[%s279 + $0x3c] sm:$0xe]
        %v5271 = vld [vmem:[%s279 + $0x44] sm:$0x1]
        %v5272 = vld [vmem:[%s279 + $0x48] sm:$0xe]
        %v5273 = vld [vmem:[%s279 + $0x50] sm:$0x1]
        %v5274 = vld [vmem:[%s279 + $0x54] sm:$0xe]
        %v5275 = vld [vmem:[%s279 + $0x5c] sm:$0x1]
        %v5276 = vld [vmem:[%s279 + $0x60] sm:$0xe]
        %v5277 = vld [vmem:[%s279 + $0x68] sm:$0x1]
        %v5278 = vld [vmem:[%s279 + $0x6c] sm:$0xe]
        %v5279 = vld [vmem:[%s279 + $0x74] sm:$0x1]
        %v5280 = vld [vmem:[%s279 + $0x78] sm:$0xe]
        %v5281 = vld [vmem:[%s279 + $0x80] sm:$0x1]
        %v5282 = vld [vmem:[%s279 + $0x84] sm:$0xe]
        %v5283 = vld [vmem:[%s279 + $0x8c] sm:$0x1]
        %v5284 = vld [vmem:[%s279 + $0x90] sm:$0xe]
        %v5285 = vld [vmem:[%s279 + $0x98] sm:$0x1]
        %v5286 = vld [vmem:[%s279 + $0x9c] sm:$0xe]
        %v5287 = vld [vmem:[%s279 + $0xa4] sm:$0x1]
        %v5288 = vld [vmem:[%s279 + $0xa8] sm:$0xe]
        %v5289 = vld [vmem:[%s279 + $0xb0] sm:$0x1]
        %v5290 = vld [vmem:[%s279 + $0xb4] sm:$0xe]
        %v5291 = vld [vmem:[%s279 + $0xbc] sm:$0x1]
        %v5292 = vld [vmem:[%s279] sm:$0xc]
        %v5293 = vld [vmem:[%s279 + $0x8] sm:$0x3]
        %v5294 = vld [vmem:[%s279 + $0xc] sm:$0xc]
        %v5295 = vld [vmem:[%s279 + $0x14] sm:$0x3]
        %v5296 = vld [vmem:[%s279 + $0x18] sm:$0xc]
        %v5297 = vld [vmem:[%s279 + $0x20] sm:$0x3]
        %v5298 = vld [vmem:[%s279 + $0x24] sm:$0xc]
        %v5299 = vld [vmem:[%s279 + $0x2c] sm:$0x3]
        %v5300 = vld [vmem:[%s279 + $0x30] sm:$0xc]
        %v5301 = vld [vmem:[%s279 + $0x38] sm:$0x3]
        %v5302 = vld [vmem:[%s279 + $0x3c] sm:$0xc]
        %v5303 = vld [vmem:[%s279 + $0x44] sm:$0x3]
        %v5304 = vld [vmem:[%s279 + $0x48] sm:$0xc]
        %v5305 = vld [vmem:[%s279 + $0x50] sm:$0x3]
        %v5306 = vld [vmem:[%s279 + $0x54] sm:$0xc]
        %v5307 = vld [vmem:[%s279 + $0x5c] sm:$0x3]
        %v5308 = vld [vmem:[%s279 + $0x60] sm:$0xc]
        %v5309 = vld [vmem:[%s279 + $0x68] sm:$0x3]
        %v5310 = vld [vmem:[%s279 + $0x6c] sm:$0xc]
        %v5311 = vld [vmem:[%s279 + $0x74] sm:$0x3]
        %v5312 = vld [vmem:[%s279 + $0x78] sm:$0xc]
        %v5313 = vld [vmem:[%s279 + $0x80] sm:$0x3]
        %v5314 = vld [vmem:[%s279 + $0x84] sm:$0xc]
        %v5315 = vld [vmem:[%s279 + $0x8c] sm:$0x3]
        %v5316 = vld [vmem:[%s279 + $0x90] sm:$0xc]
        %v5317 = vld [vmem:[%s279 + $0x98] sm:$0x3]
        %v5318 = vld [vmem:[%s279 + $0x9c] sm:$0xc]
        %v5319 = vld [vmem:[%s279 + $0xa4] sm:$0x3]
        %v5320 = vld [vmem:[%s279 + $0xa8] sm:$0xc]
        %v5321 = vld [vmem:[%s279 + $0xb0] sm:$0x3]
        %v5322 = vld [vmem:[%s279 + $0xb4] sm:$0xc]
        %v5323 = vld [vmem:[%s279 + $0xbc] sm:$0x3]
        %s5324 = scalar_lea.vmem %s194, 48
        %v5325 = vld [vmem:[%s5324] sm:$0xf]
        %v5326 = vld [vmem:[%s5324 + $0x4] sm:$0xf]
        %v5327 = vld [vmem:[%s5324 + $0xc] sm:$0xf]
        %v5328 = vld [vmem:[%s5324 + $0x10] sm:$0xf]
        %v5329 = vld [vmem:[%s5324 + $0x18] sm:$0xf]
        %v5330 = vld [vmem:[%s5324 + $0x1c] sm:$0xf]
        %v5331 = vld [vmem:[%s5324 + $0x24] sm:$0xf]
        %v5332 = vld [vmem:[%s5324 + $0x28] sm:$0xf]
        %v5333 = vld [vmem:[%s5324 + $0x30] sm:$0xf]
        %v5334 = vld [vmem:[%s5324 + $0x34] sm:$0xf]
        %v5335 = vld [vmem:[%s5324 + $0x3c] sm:$0xf]
        %v5336 = vld [vmem:[%s5324 + $0x40] sm:$0xf]
        %v5337 = vld [vmem:[%s5324 + $0x48] sm:$0xf]
        %v5338 = vld [vmem:[%s5324 + $0x4c] sm:$0xf]
        %v5339 = vld [vmem:[%s5324 + $0x54] sm:$0xf]
        %v5340 = vld [vmem:[%s5324 + $0x58] sm:$0xf]
        %v5341 = vld [vmem:[%s5324 + $0x60] sm:$0xf]
        %v5342 = vld [vmem:[%s5324 + $0x64] sm:$0xf]
        %v5343 = vld [vmem:[%s5324 + $0x6c] sm:$0xf]
        %v5344 = vld [vmem:[%s5324 + $0x70] sm:$0xf]
        %v5345 = vld [vmem:[%s5324 + $0x78] sm:$0xf]
        %v5346 = vld [vmem:[%s5324 + $0x7c] sm:$0xf]
        %v5347 = vld [vmem:[%s5324 + $0x84] sm:$0xf]
        %v5348 = vld [vmem:[%s5324 + $0x88] sm:$0xf]
        %v5349 = vld [vmem:[%s5324 + $0x90] sm:$0xf]
        %v5350 = vld [vmem:[%s5324 + $0x94] sm:$0xf]
        %v5351 = vld [vmem:[%s5324 + $0x9c] sm:$0xf]
        %v5352 = vld [vmem:[%s5324 + $0xa0] sm:$0xf]
        %v5353 = vld [vmem:[%s5324 + $0xa8] sm:$0xf]
        %v5354 = vld [vmem:[%s5324 + $0xac] sm:$0xf]
        %v5355 = vld [vmem:[%s5324 + $0xb4] sm:$0xf]
        %v5356 = vld [vmem:[%s5324 + $0xb8] sm:$0xf]
        %v5357 = vld [vmem:[%s5324] sm:$0xe]
        %v5358 = vld [vmem:[%s5324 + $0x8] sm:$0x1]
        %v5359 = vld [vmem:[%s5324 + $0xc] sm:$0xe]
        %v5360 = vld [vmem:[%s5324 + $0x14] sm:$0x1]
        %v5361 = vld [vmem:[%s5324 + $0x18] sm:$0xe]
        %v5362 = vld [vmem:[%s5324 + $0x20] sm:$0x1]
        %v5363 = vld [vmem:[%s5324 + $0x24] sm:$0xe]
        %v5364 = vld [vmem:[%s5324 + $0x2c] sm:$0x1]
        %v5365 = vld [vmem:[%s5324 + $0x30] sm:$0xe]
        %v5366 = vld [vmem:[%s5324 + $0x38] sm:$0x1]
        %v5367 = vld [vmem:[%s5324 + $0x3c] sm:$0xe]
        %v5368 = vld [vmem:[%s5324 + $0x44] sm:$0x1]
        %v5369 = vld [vmem:[%s5324 + $0x48] sm:$0xe]
        %v5370 = vld [vmem:[%s5324 + $0x50] sm:$0x1]
        %v5371 = vld [vmem:[%s5324 + $0x54] sm:$0xe]
        %v5372 = vld [vmem:[%s5324 + $0x5c] sm:$0x1]
        %v5373 = vld [vmem:[%s5324 + $0x60] sm:$0xe]
        %v5374 = vld [vmem:[%s5324 + $0x68] sm:$0x1]
        %v5375 = vld [vmem:[%s5324 + $0x6c] sm:$0xe]
        %v5376 = vld [vmem:[%s5324 + $0x74] sm:$0x1]
        %v5377 = vld [vmem:[%s5324 + $0x78] sm:$0xe]
        %v5378 = vld [vmem:[%s5324 + $0x80] sm:$0x1]
        %v5379 = vld [vmem:[%s5324 + $0x84] sm:$0xe]
        %v5380 = vld [vmem:[%s5324 + $0x8c] sm:$0x1]
        %v5381 = vld [vmem:[%s5324 + $0x90] sm:$0xe]
        %v5382 = vld [vmem:[%s5324 + $0x98] sm:$0x1]
        %v5383 = vld [vmem:[%s5324 + $0x9c] sm:$0xe]
        %v5384 = vld [vmem:[%s5324 + $0xa4] sm:$0x1]
        %v5385 = vld [vmem:[%s5324 + $0xa8] sm:$0xe]
        %v5386 = vld [vmem:[%s5324 + $0xb0] sm:$0x1]
        %v5387 = vld [vmem:[%s5324 + $0xb4] sm:$0xe]
        %v5388 = vld [vmem:[%s5324 + $0xbc] sm:$0x1]
        %v5389 = vld [vmem:[%s5324] sm:$0xc]
        %v5390 = vld [vmem:[%s5324 + $0x8] sm:$0x3]
        %v5391 = vld [vmem:[%s5324 + $0xc] sm:$0xc]
        %v5392 = vld [vmem:[%s5324 + $0x14] sm:$0x3]
        %v5393 = vld [vmem:[%s5324 + $0x18] sm:$0xc]
        %v5394 = vld [vmem:[%s5324 + $0x20] sm:$0x3]
        %v5395 = vld [vmem:[%s5324 + $0x24] sm:$0xc]
        %v5396 = vld [vmem:[%s5324 + $0x2c] sm:$0x3]
        %v5397 = vld [vmem:[%s5324 + $0x30] sm:$0xc]
        %v5398 = vld [vmem:[%s5324 + $0x38] sm:$0x3]
        %v5399 = vld [vmem:[%s5324 + $0x3c] sm:$0xc]
        %v5400 = vld [vmem:[%s5324 + $0x44] sm:$0x3]
        %v5401 = vld [vmem:[%s5324 + $0x48] sm:$0xc]
        %v5402 = vld [vmem:[%s5324 + $0x50] sm:$0x3]
        %v5403 = vld [vmem:[%s5324 + $0x54] sm:$0xc]
        %v5404 = vld [vmem:[%s5324 + $0x5c] sm:$0x3]
        %v5405 = vld [vmem:[%s5324 + $0x60] sm:$0xc]
        %v5406 = vld [vmem:[%s5324 + $0x68] sm:$0x3]
        %v5407 = vld [vmem:[%s5324 + $0x6c] sm:$0xc]
        %v5408 = vld [vmem:[%s5324 + $0x74] sm:$0x3]
        %v5409 = vld [vmem:[%s5324 + $0x78] sm:$0xc]
        %v5410 = vld [vmem:[%s5324 + $0x80] sm:$0x3]
        %v5411 = vld [vmem:[%s5324 + $0x84] sm:$0xc]
        %v5412 = vld [vmem:[%s5324 + $0x8c] sm:$0x3]
        %v5413 = vld [vmem:[%s5324 + $0x90] sm:$0xc]
        %v5414 = vld [vmem:[%s5324 + $0x98] sm:$0x3]
        %v5415 = vld [vmem:[%s5324 + $0x9c] sm:$0xc]
        %v5416 = vld [vmem:[%s5324 + $0xa4] sm:$0x3]
        %v5417 = vld [vmem:[%s5324 + $0xa8] sm:$0xc]
        %v5418 = vld [vmem:[%s5324 + $0xb0] sm:$0x3]
        %v5419 = vld [vmem:[%s5324 + $0xb4] sm:$0xc]
        %v5420 = vld [vmem:[%s5324 + $0xbc] sm:$0x3]
        %v5453 = vunpack.c.l.b16 %v5132
        %v5454 = vunpack.c.l.b16 %v5133
        %v5455 = vunpack.c.l.b16 %v5134
        %v5456 = vunpack.c.l.b16 %v5135
        %v5457 = vunpack.c.l.b16 %v5136
        %v5458 = vunpack.c.l.b16 %v5137
        %v5459 = vunpack.c.l.b16 %v5138
        %v5460 = vunpack.c.l.b16 %v5139
        %v5461 = vunpack.c.l.b16 %v5140
        %v5462 = vunpack.c.l.b16 %v5141
        %v5463 = vunpack.c.l.b16 %v5142
        %v5464 = vunpack.c.l.b16 %v5143
        %v5465 = vunpack.c.l.b16 %v5144
        %v5466 = vunpack.c.l.b16 %v5145
        %v5467 = vunpack.c.l.b16 %v5146
        %v5468 = vunpack.c.l.b16 %v5147
        %v5469 = vunpack.c.l.b16 %v5148
        %v5470 = vunpack.c.l.b16 %v5149
        %v5471 = vunpack.c.l.b16 %v5150
        %v5472 = vunpack.c.l.b16 %v5151
        %v5473 = vunpack.c.l.b16 %v5152
        %v5474 = vunpack.c.l.b16 %v5153
        %v5475 = vunpack.c.l.b16 %v5154
        %v5476 = vunpack.c.l.b16 %v5155
        %v5477 = vunpack.c.l.b16 %v5156
        %v5478 = vunpack.c.l.b16 %v5157
        %v5479 = vunpack.c.l.b16 %v5158
        %v5480 = vunpack.c.l.b16 %v5159
        %v5481 = vunpack.c.l.b16 %v5160
        %v5482 = vunpack.c.l.b16 %v5161
        %v5483 = vunpack.c.l.b16 %v5162
        %v5484 = vunpack.c.l.b16 %v5163
        %v5485 = vpack.c.b16 %v5454, %v5453
        %v5486 = vpack.c.b16 %v5456, %v5455
        %v5487 = vpack.c.b16 %v5458, %v5457
        %v5488 = vpack.c.b16 %v5460, %v5459
        %v5489 = vpack.c.b16 %v5462, %v5461
        %v5490 = vpack.c.b16 %v5464, %v5463
        %v5491 = vpack.c.b16 %v5466, %v5465
        %v5492 = vpack.c.b16 %v5468, %v5467
        %v5493 = vpack.c.b16 %v5470, %v5469
        %v5494 = vpack.c.b16 %v5472, %v5471
        %v5495 = vpack.c.b16 %v5474, %v5473
        %v5496 = vpack.c.b16 %v5476, %v5475
        %v5497 = vpack.c.b16 %v5478, %v5477
        %v5498 = vpack.c.b16 %v5480, %v5479
        %v5499 = vpack.c.b16 %v5482, %v5481
        %v5500 = vpack.c.b16 %v5484, %v5483
        %v5549 = vunpack.c.l.b16 %v5164
        %v5550 = vunpack.c.l.b16 %v5165
        %v5551 = vunpack.c.l.b16 %v5166
        %v5552 = vunpack.c.l.b16 %v5167
        %v5553 = vunpack.c.l.b16 %v5168
        %v5554 = vunpack.c.l.b16 %v5169
        %v5555 = vunpack.c.l.b16 %v5170
        %v5556 = vunpack.c.l.b16 %v5171
        %v5557 = vunpack.c.l.b16 %v5172
        %v5558 = vunpack.c.l.b16 %v5173
        %v5559 = vunpack.c.l.b16 %v5174
        %v5560 = vunpack.c.l.b16 %v5175
        %v5561 = vunpack.c.l.b16 %v5176
        %v5562 = vunpack.c.l.b16 %v5177
        %v5563 = vunpack.c.l.b16 %v5178
        %v5564 = vunpack.c.l.b16 %v5179
        %v5565 = vunpack.c.l.b16 %v5180
        %v5566 = vunpack.c.l.b16 %v5181
        %v5567 = vunpack.c.l.b16 %v5182
        %v5568 = vunpack.c.l.b16 %v5183
        %v5569 = vunpack.c.l.b16 %v5184
        %v5570 = vunpack.c.l.b16 %v5185
        %v5571 = vunpack.c.l.b16 %v5186
        %v5572 = vunpack.c.l.b16 %v5187
        %v5573 = vunpack.c.l.b16 %v5188
        %v5574 = vunpack.c.l.b16 %v5189
        %v5575 = vunpack.c.l.b16 %v5190
        %v5576 = vunpack.c.l.b16 %v5191
        %v5577 = vunpack.c.l.b16 %v5192
        %v5578 = vunpack.c.l.b16 %v5193
        %v5579 = vunpack.c.l.b16 %v5194
        %v5580 = vunpack.c.l.b16 %v5195
        %v5581 = vpack.c.b16 %v5454, %v5549
        %v5582 = vpack.c.b16 %v5550, %v5550
        %v5583 = vpack.c.b16 %v5456, %v5551
        %v5584 = vpack.c.b16 %v5552, %v5552
        %v5585 = vpack.c.b16 %v5458, %v5553
        %v5586 = vpack.c.b16 %v5554, %v5554
        %v5587 = vpack.c.b16 %v5460, %v5555
        %v5588 = vpack.c.b16 %v5556, %v5556
        %v5589 = vpack.c.b16 %v5462, %v5557
        %v5590 = vpack.c.b16 %v5558, %v5558
        %v5591 = vpack.c.b16 %v5464, %v5559
        %v5592 = vpack.c.b16 %v5560, %v5560
        %v5593 = vpack.c.b16 %v5466, %v5561
        %v5594 = vpack.c.b16 %v5562, %v5562
        %v5595 = vpack.c.b16 %v5468, %v5563
        %v5596 = vpack.c.b16 %v5564, %v5564
        %v5597 = vpack.c.b16 %v5470, %v5565
        %v5598 = vpack.c.b16 %v5566, %v5566
        %v5599 = vpack.c.b16 %v5472, %v5567
        %v5600 = vpack.c.b16 %v5568, %v5568
        %v5601 = vpack.c.b16 %v5474, %v5569
        %v5602 = vpack.c.b16 %v5570, %v5570
        %v5603 = vpack.c.b16 %v5476, %v5571
        %v5604 = vpack.c.b16 %v5572, %v5572
        %v5605 = vpack.c.b16 %v5478, %v5573
        %v5606 = vpack.c.b16 %v5574, %v5574
        %v5607 = vpack.c.b16 %v5480, %v5575
        %v5608 = vpack.c.b16 %v5576, %v5576
        %v5609 = vpack.c.b16 %v5482, %v5577
        %v5610 = vpack.c.b16 %v5578, %v5578
        %v5611 = vpack.c.b16 %v5484, %v5579
        %v5612 = vpack.c.b16 %v5580, %v5580
        %v5613 = vrot.slane %v5581, 1
        %v5614 = vrot.slane %v5582, 1
        %v5615 = vsel %vm890, %v5613, %v5614
        %v5616 = vrot.slane %v5583, 1
        %v5617 = vrot.slane %v5584, 1
        %v5618 = vsel %vm890, %v5616, %v5617
        %v5619 = vrot.slane %v5585, 1
        %v5620 = vrot.slane %v5586, 1
        %v5621 = vsel %vm890, %v5619, %v5620
        %v5622 = vrot.slane %v5587, 1
        %v5623 = vrot.slane %v5588, 1
        %v5624 = vsel %vm890, %v5622, %v5623
        %v5625 = vrot.slane %v5589, 1
        %v5626 = vrot.slane %v5590, 1
        %v5627 = vsel %vm890, %v5625, %v5626
        %v5628 = vrot.slane %v5591, 1
        %v5629 = vrot.slane %v5592, 1
        %v5630 = vsel %vm890, %v5628, %v5629
        %v5631 = vrot.slane %v5593, 1
        %v5632 = vrot.slane %v5594, 1
        %v5633 = vsel %vm890, %v5631, %v5632
        %v5634 = vrot.slane %v5595, 1
        %v5635 = vrot.slane %v5596, 1
        %v5636 = vsel %vm890, %v5634, %v5635
        %v5637 = vrot.slane %v5597, 1
        %v5638 = vrot.slane %v5598, 1
        %v5639 = vsel %vm890, %v5637, %v5638
        %v5640 = vrot.slane %v5599, 1
        %v5641 = vrot.slane %v5600, 1
        %v5642 = vsel %vm890, %v5640, %v5641
        %v5643 = vrot.slane %v5601, 1
        %v5644 = vrot.slane %v5602, 1
        %v5645 = vsel %vm890, %v5643, %v5644
        %v5646 = vrot.slane %v5603, 1
        %v5647 = vrot.slane %v5604, 1
        %v5648 = vsel %vm890, %v5646, %v5647
        %v5649 = vrot.slane %v5605, 1
        %v5650 = vrot.slane %v5606, 1
        %v5651 = vsel %vm890, %v5649, %v5650
        %v5652 = vrot.slane %v5607, 1
        %v5653 = vrot.slane %v5608, 1
        %v5654 = vsel %vm890, %v5652, %v5653
        %v5655 = vrot.slane %v5609, 1
        %v5656 = vrot.slane %v5610, 1
        %v5657 = vsel %vm890, %v5655, %v5656
        %v5658 = vrot.slane %v5611, 1
        %v5659 = vrot.slane %v5612, 1
        %v5660 = vsel %vm890, %v5658, %v5659
        %v5709 = vunpack.c.l.b16 %v5196
        %v5710 = vunpack.c.l.b16 %v5197
        %v5711 = vunpack.c.l.b16 %v5198
        %v5712 = vunpack.c.l.b16 %v5199
        %v5713 = vunpack.c.l.b16 %v5200
        %v5714 = vunpack.c.l.b16 %v5201
        %v5715 = vunpack.c.l.b16 %v5202
        %v5716 = vunpack.c.l.b16 %v5203
        %v5717 = vunpack.c.l.b16 %v5204
        %v5718 = vunpack.c.l.b16 %v5205
        %v5719 = vunpack.c.l.b16 %v5206
        %v5720 = vunpack.c.l.b16 %v5207
        %v5721 = vunpack.c.l.b16 %v5208
        %v5722 = vunpack.c.l.b16 %v5209
        %v5723 = vunpack.c.l.b16 %v5210
        %v5724 = vunpack.c.l.b16 %v5211
        %v5725 = vunpack.c.l.b16 %v5212
        %v5726 = vunpack.c.l.b16 %v5213
        %v5727 = vunpack.c.l.b16 %v5214
        %v5728 = vunpack.c.l.b16 %v5215
        %v5729 = vunpack.c.l.b16 %v5216
        %v5730 = vunpack.c.l.b16 %v5217
        %v5731 = vunpack.c.l.b16 %v5218
        %v5732 = vunpack.c.l.b16 %v5219
        %v5733 = vunpack.c.l.b16 %v5220
        %v5734 = vunpack.c.l.b16 %v5221
        %v5735 = vunpack.c.l.b16 %v5222
        %v5736 = vunpack.c.l.b16 %v5223
        %v5737 = vunpack.c.l.b16 %v5224
        %v5738 = vunpack.c.l.b16 %v5225
        %v5739 = vunpack.c.l.b16 %v5226
        %v5740 = vunpack.c.l.b16 %v5227
        %v5741 = vpack.c.b16 %v5454, %v5709
        %v5742 = vpack.c.b16 %v5710, %v5710
        %v5743 = vpack.c.b16 %v5456, %v5711
        %v5744 = vpack.c.b16 %v5712, %v5712
        %v5745 = vpack.c.b16 %v5458, %v5713
        %v5746 = vpack.c.b16 %v5714, %v5714
        %v5747 = vpack.c.b16 %v5460, %v5715
        %v5748 = vpack.c.b16 %v5716, %v5716
        %v5749 = vpack.c.b16 %v5462, %v5717
        %v5750 = vpack.c.b16 %v5718, %v5718
        %v5751 = vpack.c.b16 %v5464, %v5719
        %v5752 = vpack.c.b16 %v5720, %v5720
        %v5753 = vpack.c.b16 %v5466, %v5721
        %v5754 = vpack.c.b16 %v5722, %v5722
        %v5755 = vpack.c.b16 %v5468, %v5723
        %v5756 = vpack.c.b16 %v5724, %v5724
        %v5757 = vpack.c.b16 %v5470, %v5725
        %v5758 = vpack.c.b16 %v5726, %v5726
        %v5759 = vpack.c.b16 %v5472, %v5727
        %v5760 = vpack.c.b16 %v5728, %v5728
        %v5761 = vpack.c.b16 %v5474, %v5729
        %v5762 = vpack.c.b16 %v5730, %v5730
        %v5763 = vpack.c.b16 %v5476, %v5731
        %v5764 = vpack.c.b16 %v5732, %v5732
        %v5765 = vpack.c.b16 %v5478, %v5733
        %v5766 = vpack.c.b16 %v5734, %v5734
        %v5767 = vpack.c.b16 %v5480, %v5735
        %v5768 = vpack.c.b16 %v5736, %v5736
        %v5769 = vpack.c.b16 %v5482, %v5737
        %v5770 = vpack.c.b16 %v5738, %v5738
        %v5771 = vpack.c.b16 %v5484, %v5739
        %v5772 = vpack.c.b16 %v5740, %v5740
        %vm5773 = vcmask 1045504
        %v5774 = vrot.slane %v5741, 2
        %v5775 = vrot.slane %v5742, 2
        %v5776 = vsel %vm5773, %v5774, %v5775
        %v5777 = vrot.slane %v5743, 2
        %v5778 = vrot.slane %v5744, 2
        %v5779 = vsel %vm5773, %v5777, %v5778
        %v5780 = vrot.slane %v5745, 2
        %v5781 = vrot.slane %v5746, 2
        %v5782 = vsel %vm5773, %v5780, %v5781
        %v5783 = vrot.slane %v5747, 2
        %v5784 = vrot.slane %v5748, 2
        %v5785 = vsel %vm5773, %v5783, %v5784
        %v5786 = vrot.slane %v5749, 2
        %v5787 = vrot.slane %v5750, 2
        %v5788 = vsel %vm5773, %v5786, %v5787
        %v5789 = vrot.slane %v5751, 2
        %v5790 = vrot.slane %v5752, 2
        %v5791 = vsel %vm5773, %v5789, %v5790
        %v5792 = vrot.slane %v5753, 2
        %v5793 = vrot.slane %v5754, 2
        %v5794 = vsel %vm5773, %v5792, %v5793
        %v5795 = vrot.slane %v5755, 2
        %v5796 = vrot.slane %v5756, 2
        %v5797 = vsel %vm5773, %v5795, %v5796
        %v5798 = vrot.slane %v5757, 2
        %v5799 = vrot.slane %v5758, 2
        %v5800 = vsel %vm5773, %v5798, %v5799
        %v5801 = vrot.slane %v5759, 2
        %v5802 = vrot.slane %v5760, 2
        %v5803 = vsel %vm5773, %v5801, %v5802
        %v5804 = vrot.slane %v5761, 2
        %v5805 = vrot.slane %v5762, 2
        %v5806 = vsel %vm5773, %v5804, %v5805
        %v5807 = vrot.slane %v5763, 2
        %v5808 = vrot.slane %v5764, 2
        %v5809 = vsel %vm5773, %v5807, %v5808
        %v5810 = vrot.slane %v5765, 2
        %v5811 = vrot.slane %v5766, 2
        %v5812 = vsel %vm5773, %v5810, %v5811
        %v5813 = vrot.slane %v5767, 2
        %v5814 = vrot.slane %v5768, 2
        %v5815 = vsel %vm5773, %v5813, %v5814
        %v5816 = vrot.slane %v5769, 2
        %v5817 = vrot.slane %v5770, 2
        %v5818 = vsel %vm5773, %v5816, %v5817
        %v5819 = vrot.slane %v5771, 2
        %v5820 = vrot.slane %v5772, 2
        %v5821 = vsel %vm5773, %v5819, %v5820
        %v5870 = vunpack.c.l.b16 %v5228
        %v5871 = vunpack.c.l.b16 %v5229
        %v5872 = vunpack.c.l.b16 %v5230
        %v5873 = vunpack.c.l.b16 %v5231
        %v5874 = vunpack.c.l.b16 %v5232
        %v5875 = vunpack.c.l.b16 %v5233
        %v5876 = vunpack.c.l.b16 %v5234
        %v5877 = vunpack.c.l.b16 %v5235
        %v5878 = vunpack.c.l.b16 %v5236
        %v5879 = vunpack.c.l.b16 %v5237
        %v5880 = vunpack.c.l.b16 %v5238
        %v5881 = vunpack.c.l.b16 %v5239
        %v5882 = vunpack.c.l.b16 %v5240
        %v5883 = vunpack.c.l.b16 %v5241
        %v5884 = vunpack.c.l.b16 %v5242
        %v5885 = vunpack.c.l.b16 %v5243
        %v5886 = vunpack.c.l.b16 %v5244
        %v5887 = vunpack.c.l.b16 %v5245
        %v5888 = vunpack.c.l.b16 %v5246
        %v5889 = vunpack.c.l.b16 %v5247
        %v5890 = vunpack.c.l.b16 %v5248
        %v5891 = vunpack.c.l.b16 %v5249
        %v5892 = vunpack.c.l.b16 %v5250
        %v5893 = vunpack.c.l.b16 %v5251
        %v5894 = vunpack.c.l.b16 %v5252
        %v5895 = vunpack.c.l.b16 %v5253
        %v5896 = vunpack.c.l.b16 %v5254
        %v5897 = vunpack.c.l.b16 %v5255
        %v5898 = vunpack.c.l.b16 %v5256
        %v5899 = vunpack.c.l.b16 %v5257
        %v5900 = vunpack.c.l.b16 %v5258
        %v5901 = vunpack.c.l.b16 %v5259
        %v5902 = vpack.c.b16 %v5871, %v5870
        %v5903 = vpack.c.b16 %v5873, %v5872
        %v5904 = vpack.c.b16 %v5875, %v5874
        %v5905 = vpack.c.b16 %v5877, %v5876
        %v5906 = vpack.c.b16 %v5879, %v5878
        %v5907 = vpack.c.b16 %v5881, %v5880
        %v5908 = vpack.c.b16 %v5883, %v5882
        %v5909 = vpack.c.b16 %v5885, %v5884
        %v5910 = vpack.c.b16 %v5887, %v5886
        %v5911 = vpack.c.b16 %v5889, %v5888
        %v5912 = vpack.c.b16 %v5891, %v5890
        %v5913 = vpack.c.b16 %v5893, %v5892
        %v5914 = vpack.c.b16 %v5895, %v5894
        %v5915 = vpack.c.b16 %v5897, %v5896
        %v5916 = vpack.c.b16 %v5899, %v5898
        %v5917 = vpack.c.b16 %v5901, %v5900
        %v5966 = vunpack.c.l.b16 %v5260
        %v5967 = vunpack.c.l.b16 %v5261
        %v5968 = vunpack.c.l.b16 %v5262
        %v5969 = vunpack.c.l.b16 %v5263
        %v5970 = vunpack.c.l.b16 %v5264
        %v5971 = vunpack.c.l.b16 %v5265
        %v5972 = vunpack.c.l.b16 %v5266
        %v5973 = vunpack.c.l.b16 %v5267
        %v5974 = vunpack.c.l.b16 %v5268
        %v5975 = vunpack.c.l.b16 %v5269
        %v5976 = vunpack.c.l.b16 %v5270
        %v5977 = vunpack.c.l.b16 %v5271
        %v5978 = vunpack.c.l.b16 %v5272
        %v5979 = vunpack.c.l.b16 %v5273
        %v5980 = vunpack.c.l.b16 %v5274
        %v5981 = vunpack.c.l.b16 %v5275
        %v5982 = vunpack.c.l.b16 %v5276
        %v5983 = vunpack.c.l.b16 %v5277
        %v5984 = vunpack.c.l.b16 %v5278
        %v5985 = vunpack.c.l.b16 %v5279
        %v5986 = vunpack.c.l.b16 %v5280
        %v5987 = vunpack.c.l.b16 %v5281
        %v5988 = vunpack.c.l.b16 %v5282
        %v5989 = vunpack.c.l.b16 %v5283
        %v5990 = vunpack.c.l.b16 %v5284
        %v5991 = vunpack.c.l.b16 %v5285
        %v5992 = vunpack.c.l.b16 %v5286
        %v5993 = vunpack.c.l.b16 %v5287
        %v5994 = vunpack.c.l.b16 %v5288
        %v5995 = vunpack.c.l.b16 %v5289
        %v5996 = vunpack.c.l.b16 %v5290
        %v5997 = vunpack.c.l.b16 %v5291
        %v5998 = vpack.c.b16 %v5871, %v5966
        %v5999 = vpack.c.b16 %v5967, %v5967
        %v6000 = vpack.c.b16 %v5873, %v5968
        %v6001 = vpack.c.b16 %v5969, %v5969
        %v6002 = vpack.c.b16 %v5875, %v5970
        %v6003 = vpack.c.b16 %v5971, %v5971
        %v6004 = vpack.c.b16 %v5877, %v5972
        %v6005 = vpack.c.b16 %v5973, %v5973
        %v6006 = vpack.c.b16 %v5879, %v5974
        %v6007 = vpack.c.b16 %v5975, %v5975
        %v6008 = vpack.c.b16 %v5881, %v5976
        %v6009 = vpack.c.b16 %v5977, %v5977
        %v6010 = vpack.c.b16 %v5883, %v5978
        %v6011 = vpack.c.b16 %v5979, %v5979
        %v6012 = vpack.c.b16 %v5885, %v5980
        %v6013 = vpack.c.b16 %v5981, %v5981
        %v6014 = vpack.c.b16 %v5887, %v5982
        %v6015 = vpack.c.b16 %v5983, %v5983
        %v6016 = vpack.c.b16 %v5889, %v5984
        %v6017 = vpack.c.b16 %v5985, %v5985
        %v6018 = vpack.c.b16 %v5891, %v5986
        %v6019 = vpack.c.b16 %v5987, %v5987
        %v6020 = vpack.c.b16 %v5893, %v5988
        %v6021 = vpack.c.b16 %v5989, %v5989
        %v6022 = vpack.c.b16 %v5895, %v5990
        %v6023 = vpack.c.b16 %v5991, %v5991
        %v6024 = vpack.c.b16 %v5897, %v5992
        %v6025 = vpack.c.b16 %v5993, %v5993
        %v6026 = vpack.c.b16 %v5899, %v5994
        %v6027 = vpack.c.b16 %v5995, %v5995
        %v6028 = vpack.c.b16 %v5901, %v5996
        %v6029 = vpack.c.b16 %v5997, %v5997
        %v6030 = vrot.slane %v5998, 1
        %v6031 = vrot.slane %v5999, 1
        %v6032 = vsel %vm890, %v6030, %v6031
        %v6033 = vrot.slane %v6000, 1
        %v6034 = vrot.slane %v6001, 1
        %v6035 = vsel %vm890, %v6033, %v6034
        %v6036 = vrot.slane %v6002, 1
        %v6037 = vrot.slane %v6003, 1
        %v6038 = vsel %vm890, %v6036, %v6037
        %v6039 = vrot.slane %v6004, 1
        %v6040 = vrot.slane %v6005, 1
        %v6041 = vsel %vm890, %v6039, %v6040
        %v6042 = vrot.slane %v6006, 1
        %v6043 = vrot.slane %v6007, 1
        %v6044 = vsel %vm890, %v6042, %v6043
        %v6045 = vrot.slane %v6008, 1
        %v6046 = vrot.slane %v6009, 1
        %v6047 = vsel %vm890, %v6045, %v6046
        %v6048 = vrot.slane %v6010, 1
        %v6049 = vrot.slane %v6011, 1
        %v6050 = vsel %vm890, %v6048, %v6049
        %v6051 = vrot.slane %v6012, 1
        %v6052 = vrot.slane %v6013, 1
        %v6053 = vsel %vm890, %v6051, %v6052
        %v6054 = vrot.slane %v6014, 1
        %v6055 = vrot.slane %v6015, 1
        %v6056 = vsel %vm890, %v6054, %v6055
        %v6057 = vrot.slane %v6016, 1
        %v6058 = vrot.slane %v6017, 1
        %v6059 = vsel %vm890, %v6057, %v6058
        %v6060 = vrot.slane %v6018, 1
        %v6061 = vrot.slane %v6019, 1
        %v6062 = vsel %vm890, %v6060, %v6061
        %v6063 = vrot.slane %v6020, 1
        %v6064 = vrot.slane %v6021, 1
        %v6065 = vsel %vm890, %v6063, %v6064
        %v6066 = vrot.slane %v6022, 1
        %v6067 = vrot.slane %v6023, 1
        %v6068 = vsel %vm890, %v6066, %v6067
        %v6069 = vrot.slane %v6024, 1
        %v6070 = vrot.slane %v6025, 1
        %v6071 = vsel %vm890, %v6069, %v6070
        %v6072 = vrot.slane %v6026, 1
        %v6073 = vrot.slane %v6027, 1
        %v6074 = vsel %vm890, %v6072, %v6073
        %v6075 = vrot.slane %v6028, 1
        %v6076 = vrot.slane %v6029, 1
        %v6077 = vsel %vm890, %v6075, %v6076
        %v6126 = vunpack.c.l.b16 %v5292
        %v6127 = vunpack.c.l.b16 %v5293
        %v6128 = vunpack.c.l.b16 %v5294
        %v6129 = vunpack.c.l.b16 %v5295
        %v6130 = vunpack.c.l.b16 %v5296
        %v6131 = vunpack.c.l.b16 %v5297
        %v6132 = vunpack.c.l.b16 %v5298
        %v6133 = vunpack.c.l.b16 %v5299
        %v6134 = vunpack.c.l.b16 %v5300
        %v6135 = vunpack.c.l.b16 %v5301
        %v6136 = vunpack.c.l.b16 %v5302
        %v6137 = vunpack.c.l.b16 %v5303
        %v6138 = vunpack.c.l.b16 %v5304
        %v6139 = vunpack.c.l.b16 %v5305
        %v6140 = vunpack.c.l.b16 %v5306
        %v6141 = vunpack.c.l.b16 %v5307
        %v6142 = vunpack.c.l.b16 %v5308
        %v6143 = vunpack.c.l.b16 %v5309
        %v6144 = vunpack.c.l.b16 %v5310
        %v6145 = vunpack.c.l.b16 %v5311
        %v6146 = vunpack.c.l.b16 %v5312
        %v6147 = vunpack.c.l.b16 %v5313
        %v6148 = vunpack.c.l.b16 %v5314
        %v6149 = vunpack.c.l.b16 %v5315
        %v6150 = vunpack.c.l.b16 %v5316
        %v6151 = vunpack.c.l.b16 %v5317
        %v6152 = vunpack.c.l.b16 %v5318
        %v6153 = vunpack.c.l.b16 %v5319
        %v6154 = vunpack.c.l.b16 %v5320
        %v6155 = vunpack.c.l.b16 %v5321
        %v6156 = vunpack.c.l.b16 %v5322
        %v6157 = vunpack.c.l.b16 %v5323
        %v6158 = vpack.c.b16 %v5871, %v6126
        %v6159 = vpack.c.b16 %v6127, %v6127
        %v6160 = vpack.c.b16 %v5873, %v6128
        %v6161 = vpack.c.b16 %v6129, %v6129
        %v6162 = vpack.c.b16 %v5875, %v6130
        %v6163 = vpack.c.b16 %v6131, %v6131
        %v6164 = vpack.c.b16 %v5877, %v6132
        %v6165 = vpack.c.b16 %v6133, %v6133
        %v6166 = vpack.c.b16 %v5879, %v6134
        %v6167 = vpack.c.b16 %v6135, %v6135
        %v6168 = vpack.c.b16 %v5881, %v6136
        %v6169 = vpack.c.b16 %v6137, %v6137
        %v6170 = vpack.c.b16 %v5883, %v6138
        %v6171 = vpack.c.b16 %v6139, %v6139
        %v6172 = vpack.c.b16 %v5885, %v6140
        %v6173 = vpack.c.b16 %v6141, %v6141
        %v6174 = vpack.c.b16 %v5887, %v6142
        %v6175 = vpack.c.b16 %v6143, %v6143
        %v6176 = vpack.c.b16 %v5889, %v6144
        %v6177 = vpack.c.b16 %v6145, %v6145
        %v6178 = vpack.c.b16 %v5891, %v6146
        %v6179 = vpack.c.b16 %v6147, %v6147
        %v6180 = vpack.c.b16 %v5893, %v6148
        %v6181 = vpack.c.b16 %v6149, %v6149
        %v6182 = vpack.c.b16 %v5895, %v6150
        %v6183 = vpack.c.b16 %v6151, %v6151
        %v6184 = vpack.c.b16 %v5897, %v6152
        %v6185 = vpack.c.b16 %v6153, %v6153
        %v6186 = vpack.c.b16 %v5899, %v6154
        %v6187 = vpack.c.b16 %v6155, %v6155
        %v6188 = vpack.c.b16 %v5901, %v6156
        %v6189 = vpack.c.b16 %v6157, %v6157
        %v6190 = vrot.slane %v6158, 2
        %v6191 = vrot.slane %v6159, 2
        %v6192 = vsel %vm5773, %v6190, %v6191
        %v6193 = vrot.slane %v6160, 2
        %v6194 = vrot.slane %v6161, 2
        %v6195 = vsel %vm5773, %v6193, %v6194
        %v6196 = vrot.slane %v6162, 2
        %v6197 = vrot.slane %v6163, 2
        %v6198 = vsel %vm5773, %v6196, %v6197
        %v6199 = vrot.slane %v6164, 2
        %v6200 = vrot.slane %v6165, 2
        %v6201 = vsel %vm5773, %v6199, %v6200
        %v6202 = vrot.slane %v6166, 2
        %v6203 = vrot.slane %v6167, 2
        %v6204 = vsel %vm5773, %v6202, %v6203
        %v6205 = vrot.slane %v6168, 2
        %v6206 = vrot.slane %v6169, 2
        %v6207 = vsel %vm5773, %v6205, %v6206
        %v6208 = vrot.slane %v6170, 2
        %v6209 = vrot.slane %v6171, 2
        %v6210 = vsel %vm5773, %v6208, %v6209
        %v6211 = vrot.slane %v6172, 2
        %v6212 = vrot.slane %v6173, 2
        %v6213 = vsel %vm5773, %v6211, %v6212
        %v6214 = vrot.slane %v6174, 2
        %v6215 = vrot.slane %v6175, 2
        %v6216 = vsel %vm5773, %v6214, %v6215
        %v6217 = vrot.slane %v6176, 2
        %v6218 = vrot.slane %v6177, 2
        %v6219 = vsel %vm5773, %v6217, %v6218
        %v6220 = vrot.slane %v6178, 2
        %v6221 = vrot.slane %v6179, 2
        %v6222 = vsel %vm5773, %v6220, %v6221
        %v6223 = vrot.slane %v6180, 2
        %v6224 = vrot.slane %v6181, 2
        %v6225 = vsel %vm5773, %v6223, %v6224
        %v6226 = vrot.slane %v6182, 2
        %v6227 = vrot.slane %v6183, 2
        %v6228 = vsel %vm5773, %v6226, %v6227
        %v6229 = vrot.slane %v6184, 2
        %v6230 = vrot.slane %v6185, 2
        %v6231 = vsel %vm5773, %v6229, %v6230
        %v6232 = vrot.slane %v6186, 2
        %v6233 = vrot.slane %v6187, 2
        %v6234 = vsel %vm5773, %v6232, %v6233
        %v6235 = vrot.slane %v6188, 2
        %v6236 = vrot.slane %v6189, 2
        %v6237 = vsel %vm5773, %v6235, %v6236
        %v6286 = vunpack.c.l.b16 %v5325
        %v6287 = vunpack.c.l.b16 %v5326
        %v6288 = vunpack.c.l.b16 %v5327
        %v6289 = vunpack.c.l.b16 %v5328
        %v6290 = vunpack.c.l.b16 %v5329
        %v6291 = vunpack.c.l.b16 %v5330
        %v6292 = vunpack.c.l.b16 %v5331
        %v6293 = vunpack.c.l.b16 %v5332
        %v6294 = vunpack.c.l.b16 %v5333
        %v6295 = vunpack.c.l.b16 %v5334
        %v6296 = vunpack.c.l.b16 %v5335
        %v6297 = vunpack.c.l.b16 %v5336
        %v6298 = vunpack.c.l.b16 %v5337
        %v6299 = vunpack.c.l.b16 %v5338
        %v6300 = vunpack.c.l.b16 %v5339
        %v6301 = vunpack.c.l.b16 %v5340
        %v6302 = vunpack.c.l.b16 %v5341
        %v6303 = vunpack.c.l.b16 %v5342
        %v6304 = vunpack.c.l.b16 %v5343
        %v6305 = vunpack.c.l.b16 %v5344
        %v6306 = vunpack.c.l.b16 %v5345
        %v6307 = vunpack.c.l.b16 %v5346
        %v6308 = vunpack.c.l.b16 %v5347
        %v6309 = vunpack.c.l.b16 %v5348
        %v6310 = vunpack.c.l.b16 %v5349
        %v6311 = vunpack.c.l.b16 %v5350
        %v6312 = vunpack.c.l.b16 %v5351
        %v6313 = vunpack.c.l.b16 %v5352
        %v6314 = vunpack.c.l.b16 %v5353
        %v6315 = vunpack.c.l.b16 %v5354
        %v6316 = vunpack.c.l.b16 %v5355
        %v6317 = vunpack.c.l.b16 %v5356
        %v6318 = vpack.c.b16 %v6287, %v6286
        %v6319 = vpack.c.b16 %v6289, %v6288
        %v6320 = vpack.c.b16 %v6291, %v6290
        %v6321 = vpack.c.b16 %v6293, %v6292
        %v6322 = vpack.c.b16 %v6295, %v6294
        %v6323 = vpack.c.b16 %v6297, %v6296
        %v6324 = vpack.c.b16 %v6299, %v6298
        %v6325 = vpack.c.b16 %v6301, %v6300
        %v6326 = vpack.c.b16 %v6303, %v6302
        %v6327 = vpack.c.b16 %v6305, %v6304
        %v6328 = vpack.c.b16 %v6307, %v6306
        %v6329 = vpack.c.b16 %v6309, %v6308
        %v6330 = vpack.c.b16 %v6311, %v6310
        %v6331 = vpack.c.b16 %v6313, %v6312
        %v6332 = vpack.c.b16 %v6315, %v6314
        %v6333 = vpack.c.b16 %v6317, %v6316
        %v6382 = vunpack.c.l.b16 %v5357
        %v6383 = vunpack.c.l.b16 %v5358
        %v6384 = vunpack.c.l.b16 %v5359
        %v6385 = vunpack.c.l.b16 %v5360
        %v6386 = vunpack.c.l.b16 %v5361
        %v6387 = vunpack.c.l.b16 %v5362
        %v6388 = vunpack.c.l.b16 %v5363
        %v6389 = vunpack.c.l.b16 %v5364
        %v6390 = vunpack.c.l.b16 %v5365
        %v6391 = vunpack.c.l.b16 %v5366
        %v6392 = vunpack.c.l.b16 %v5367
        %v6393 = vunpack.c.l.b16 %v5368
        %v6394 = vunpack.c.l.b16 %v5369
        %v6395 = vunpack.c.l.b16 %v5370
        %v6396 = vunpack.c.l.b16 %v5371
        %v6397 = vunpack.c.l.b16 %v5372
        %v6398 = vunpack.c.l.b16 %v5373
        %v6399 = vunpack.c.l.b16 %v5374
        %v6400 = vunpack.c.l.b16 %v5375
        %v6401 = vunpack.c.l.b16 %v5376
        %v6402 = vunpack.c.l.b16 %v5377
        %v6403 = vunpack.c.l.b16 %v5378
        %v6404 = vunpack.c.l.b16 %v5379
        %v6405 = vunpack.c.l.b16 %v5380
        %v6406 = vunpack.c.l.b16 %v5381
        %v6407 = vunpack.c.l.b16 %v5382
        %v6408 = vunpack.c.l.b16 %v5383
        %v6409 = vunpack.c.l.b16 %v5384
        %v6410 = vunpack.c.l.b16 %v5385
        %v6411 = vunpack.c.l.b16 %v5386
        %v6412 = vunpack.c.l.b16 %v5387
        %v6413 = vunpack.c.l.b16 %v5388
        %v6414 = vpack.c.b16 %v6287, %v6382
        %v6415 = vpack.c.b16 %v6383, %v6383
        %v6416 = vpack.c.b16 %v6289, %v6384
        %v6417 = vpack.c.b16 %v6385, %v6385
        %v6418 = vpack.c.b16 %v6291, %v6386
        %v6419 = vpack.c.b16 %v6387, %v6387
        %v6420 = vpack.c.b16 %v6293, %v6388
        %v6421 = vpack.c.b16 %v6389, %v6389
        %v6422 = vpack.c.b16 %v6295, %v6390
        %v6423 = vpack.c.b16 %v6391, %v6391
        %v6424 = vpack.c.b16 %v6297, %v6392
        %v6425 = vpack.c.b16 %v6393, %v6393
        %v6426 = vpack.c.b16 %v6299, %v6394
        %v6427 = vpack.c.b16 %v6395, %v6395
        %v6428 = vpack.c.b16 %v6301, %v6396
        %v6429 = vpack.c.b16 %v6397, %v6397
        %v6430 = vpack.c.b16 %v6303, %v6398
        %v6431 = vpack.c.b16 %v6399, %v6399
        %v6432 = vpack.c.b16 %v6305, %v6400
        %v6433 = vpack.c.b16 %v6401, %v6401
        %v6434 = vpack.c.b16 %v6307, %v6402
        %v6435 = vpack.c.b16 %v6403, %v6403
        %v6436 = vpack.c.b16 %v6309, %v6404
        %v6437 = vpack.c.b16 %v6405, %v6405
        %v6438 = vpack.c.b16 %v6311, %v6406
        %v6439 = vpack.c.b16 %v6407, %v6407
        %v6440 = vpack.c.b16 %v6313, %v6408
        %v6441 = vpack.c.b16 %v6409, %v6409
        %v6442 = vpack.c.b16 %v6315, %v6410
        %v6443 = vpack.c.b16 %v6411, %v6411
        %v6444 = vpack.c.b16 %v6317, %v6412
        %v6445 = vpack.c.b16 %v6413, %v6413
        %v6446 = vrot.slane %v6414, 1
        %v6447 = vrot.slane %v6415, 1
        %v6448 = vsel %vm890, %v6446, %v6447
        %v6449 = vrot.slane %v6416, 1
        %v6450 = vrot.slane %v6417, 1
        %v6451 = vsel %vm890, %v6449, %v6450
        %v6452 = vrot.slane %v6418, 1
        %v6453 = vrot.slane %v6419, 1
        %v6454 = vsel %vm890, %v6452, %v6453
        %v6455 = vrot.slane %v6420, 1
        %v6456 = vrot.slane %v6421, 1
        %v6457 = vsel %vm890, %v6455, %v6456
        %v6458 = vrot.slane %v6422, 1
        %v6459 = vrot.slane %v6423, 1
        %v6460 = vsel %vm890, %v6458, %v6459
        %v6461 = vrot.slane %v6424, 1
        %v6462 = vrot.slane %v6425, 1
        %v6463 = vsel %vm890, %v6461, %v6462
        %v6464 = vrot.slane %v6426, 1
        %v6465 = vrot.slane %v6427, 1
        %v6466 = vsel %vm890, %v6464, %v6465
        %v6467 = vrot.slane %v6428, 1
        %v6468 = vrot.slane %v6429, 1
        %v6469 = vsel %vm890, %v6467, %v6468
        %v6470 = vrot.slane %v6430, 1
        %v6471 = vrot.slane %v6431, 1
        %v6472 = vsel %vm890, %v6470, %v6471
        %v6473 = vrot.slane %v6432, 1
        %v6474 = vrot.slane %v6433, 1
        %v6475 = vsel %vm890, %v6473, %v6474
        %v6476 = vrot.slane %v6434, 1
        %v6477 = vrot.slane %v6435, 1
        %v6478 = vsel %vm890, %v6476, %v6477
        %v6479 = vrot.slane %v6436, 1
        %v6480 = vrot.slane %v6437, 1
        %v6481 = vsel %vm890, %v6479, %v6480
        %v6482 = vrot.slane %v6438, 1
        %v6483 = vrot.slane %v6439, 1
        %v6484 = vsel %vm890, %v6482, %v6483
        %v6485 = vrot.slane %v6440, 1
        %v6486 = vrot.slane %v6441, 1
        %v6487 = vsel %vm890, %v6485, %v6486
        %v6488 = vrot.slane %v6442, 1
        %v6489 = vrot.slane %v6443, 1
        %v6490 = vsel %vm890, %v6488, %v6489
        %v6491 = vrot.slane %v6444, 1
        %v6492 = vrot.slane %v6445, 1
        %v6493 = vsel %vm890, %v6491, %v6492
        %v6542 = vunpack.c.l.b16 %v5389
        %v6543 = vunpack.c.l.b16 %v5390
        %v6544 = vunpack.c.l.b16 %v5391
        %v6545 = vunpack.c.l.b16 %v5392
        %v6546 = vunpack.c.l.b16 %v5393
        %v6547 = vunpack.c.l.b16 %v5394
        %v6548 = vunpack.c.l.b16 %v5395
        %v6549 = vunpack.c.l.b16 %v5396
        %v6550 = vunpack.c.l.b16 %v5397
        %v6551 = vunpack.c.l.b16 %v5398
        %v6552 = vunpack.c.l.b16 %v5399
        %v6553 = vunpack.c.l.b16 %v5400
        %v6554 = vunpack.c.l.b16 %v5401
        %v6555 = vunpack.c.l.b16 %v5402
        %v6556 = vunpack.c.l.b16 %v5403
        %v6557 = vunpack.c.l.b16 %v5404
        %v6558 = vunpack.c.l.b16 %v5405
        %v6559 = vunpack.c.l.b16 %v5406
        %v6560 = vunpack.c.l.b16 %v5407
        %v6561 = vunpack.c.l.b16 %v5408
        %v6562 = vunpack.c.l.b16 %v5409
        %v6563 = vunpack.c.l.b16 %v5410
        %v6564 = vunpack.c.l.b16 %v5411
        %v6565 = vunpack.c.l.b16 %v5412
        %v6566 = vunpack.c.l.b16 %v5413
        %v6567 = vunpack.c.l.b16 %v5414
        %v6568 = vunpack.c.l.b16 %v5415
        %v6569 = vunpack.c.l.b16 %v5416
        %v6570 = vunpack.c.l.b16 %v5417
        %v6571 = vunpack.c.l.b16 %v5418
        %v6572 = vunpack.c.l.b16 %v5419
        %v6573 = vunpack.c.l.b16 %v5420
        %v6574 = vpack.c.b16 %v6287, %v6542
        %v6575 = vpack.c.b16 %v6543, %v6543
        %v6576 = vpack.c.b16 %v6289, %v6544
        %v6577 = vpack.c.b16 %v6545, %v6545
        %v6578 = vpack.c.b16 %v6291, %v6546
        %v6579 = vpack.c.b16 %v6547, %v6547
        %v6580 = vpack.c.b16 %v6293, %v6548
        %v6581 = vpack.c.b16 %v6549, %v6549
        %v6582 = vpack.c.b16 %v6295, %v6550
        %v6583 = vpack.c.b16 %v6551, %v6551
        %v6584 = vpack.c.b16 %v6297, %v6552
        %v6585 = vpack.c.b16 %v6553, %v6553
        %v6586 = vpack.c.b16 %v6299, %v6554
        %v6587 = vpack.c.b16 %v6555, %v6555
        %v6588 = vpack.c.b16 %v6301, %v6556
        %v6589 = vpack.c.b16 %v6557, %v6557
        %v6590 = vpack.c.b16 %v6303, %v6558
        %v6591 = vpack.c.b16 %v6559, %v6559
        %v6592 = vpack.c.b16 %v6305, %v6560
        %v6593 = vpack.c.b16 %v6561, %v6561
        %v6594 = vpack.c.b16 %v6307, %v6562
        %v6595 = vpack.c.b16 %v6563, %v6563
        %v6596 = vpack.c.b16 %v6309, %v6564
        %v6597 = vpack.c.b16 %v6565, %v6565
        %v6598 = vpack.c.b16 %v6311, %v6566
        %v6599 = vpack.c.b16 %v6567, %v6567
        %v6600 = vpack.c.b16 %v6313, %v6568
        %v6601 = vpack.c.b16 %v6569, %v6569
        %v6602 = vpack.c.b16 %v6315, %v6570
        %v6603 = vpack.c.b16 %v6571, %v6571
        %v6604 = vpack.c.b16 %v6317, %v6572
        %v6605 = vpack.c.b16 %v6573, %v6573
        %v6606 = vrot.slane %v6574, 2
        %v6607 = vrot.slane %v6575, 2
        %v6608 = vsel %vm5773, %v6606, %v6607
        %v6609 = vrot.slane %v6576, 2
        %v6610 = vrot.slane %v6577, 2
        %v6611 = vsel %vm5773, %v6609, %v6610
        %v6612 = vrot.slane %v6578, 2
        %v6613 = vrot.slane %v6579, 2
        %v6614 = vsel %vm5773, %v6612, %v6613
        %v6615 = vrot.slane %v6580, 2
        %v6616 = vrot.slane %v6581, 2
        %v6617 = vsel %vm5773, %v6615, %v6616
        %v6618 = vrot.slane %v6582, 2
        %v6619 = vrot.slane %v6583, 2
        %v6620 = vsel %vm5773, %v6618, %v6619
        %v6621 = vrot.slane %v6584, 2
        %v6622 = vrot.slane %v6585, 2
        %v6623 = vsel %vm5773, %v6621, %v6622
        %v6624 = vrot.slane %v6586, 2
        %v6625 = vrot.slane %v6587, 2
        %v6626 = vsel %vm5773, %v6624, %v6625
        %v6627 = vrot.slane %v6588, 2
        %v6628 = vrot.slane %v6589, 2
        %v6629 = vsel %vm5773, %v6627, %v6628
        %v6630 = vrot.slane %v6590, 2
        %v6631 = vrot.slane %v6591, 2
        %v6632 = vsel %vm5773, %v6630, %v6631
        %v6633 = vrot.slane %v6592, 2
        %v6634 = vrot.slane %v6593, 2
        %v6635 = vsel %vm5773, %v6633, %v6634
        %v6636 = vrot.slane %v6594, 2
        %v6637 = vrot.slane %v6595, 2
        %v6638 = vsel %vm5773, %v6636, %v6637
        %v6639 = vrot.slane %v6596, 2
        %v6640 = vrot.slane %v6597, 2
        %v6641 = vsel %vm5773, %v6639, %v6640
        %v6642 = vrot.slane %v6598, 2
        %v6643 = vrot.slane %v6599, 2
        %v6644 = vsel %vm5773, %v6642, %v6643
        %v6645 = vrot.slane %v6600, 2
        %v6646 = vrot.slane %v6601, 2
        %v6647 = vsel %vm5773, %v6645, %v6646
        %v6648 = vrot.slane %v6602, 2
        %v6649 = vrot.slane %v6603, 2
        %v6650 = vsel %vm5773, %v6648, %v6649
        %v6651 = vrot.slane %v6604, 2
        %v6652 = vrot.slane %v6605, 2
        %v6653 = vsel %vm5773, %v6651, %v6652
        %s6670 = scalar_lea.vmem [#allocation2], 576
        %v6671 = vld [vmem:[%s6670] sm:$0xf]
        %v6672 = vld [vmem:[%s6670 + $0x4] sm:$0xf]
        %v6673 = vld [vmem:[%s6670 + $0x8] sm:$0xf]
        %v6674 = vld [vmem:[%s6670 + $0xc] sm:$0xf]
        %v6675 = vld [vmem:[%s6670 + $0x10] sm:$0xf]
        %v6676 = vld [vmem:[%s6670 + $0x14] sm:$0xf]
        %v6677 = vld [vmem:[%s6670 + $0x18] sm:$0xf]
        %v6678 = vld [vmem:[%s6670 + $0x1c] sm:$0xf]
        %v6679 = vld [vmem:[%s6670 + $0x20] sm:$0xf]
        %v6680 = vld [vmem:[%s6670 + $0x24] sm:$0xf]
        %v6681 = vld [vmem:[%s6670 + $0x28] sm:$0xf]
        %v6682 = vld [vmem:[%s6670 + $0x2c] sm:$0xf]
        %v6683 = vld [vmem:[%s6670 + $0x30] sm:$0xf]
        %v6684 = vld [vmem:[%s6670 + $0x34] sm:$0xf]
        %v6685 = vld [vmem:[%s6670 + $0x38] sm:$0xf]
        %v6686 = vld [vmem:[%s6670 + $0x3c] sm:$0xf]
        %v6687 = vld [vmem:[%s6670 + $0x40] sm:$0xf]
        %v6688 = vld [vmem:[%s6670 + $0x44] sm:$0xf]
        %v6689 = vld [vmem:[%s6670 + $0x48] sm:$0xf]
        %v6690 = vld [vmem:[%s6670 + $0x4c] sm:$0xf]
        %v6691 = vld [vmem:[%s6670 + $0x50] sm:$0xf]
        %v6692 = vld [vmem:[%s6670 + $0x54] sm:$0xf]
        %v6693 = vld [vmem:[%s6670 + $0x58] sm:$0xf]
        %v6694 = vld [vmem:[%s6670 + $0x5c] sm:$0xf]
        %v6695 = vld [vmem:[%s6670 + $0x60] sm:$0xf]
        %v6696 = vld [vmem:[%s6670 + $0x64] sm:$0xf]
        %v6697 = vld [vmem:[%s6670 + $0x68] sm:$0xf]
        %v6698 = vld [vmem:[%s6670 + $0x6c] sm:$0xf]
        %v6699 = vld [vmem:[%s6670 + $0x70] sm:$0xf]
        %v6700 = vld [vmem:[%s6670 + $0x74] sm:$0xf]
        %v6701 = vld [vmem:[%s6670 + $0x78] sm:$0xf]
        %v6702 = vld [vmem:[%s6670 + $0x7c] sm:$0xf]
        %v6703 = vld [vmem:[%s6670 + $0x80] sm:$0xf]
        %v6704 = vld [vmem:[%s6670 + $0x84] sm:$0xf]
        %v6705 = vld [vmem:[%s6670 + $0x88] sm:$0xf]
        %v6706 = vld [vmem:[%s6670 + $0x8c] sm:$0xf]
        %v6707 = vld [vmem:[%s6670 + $0x90] sm:$0xf]
        %v6708 = vld [vmem:[%s6670 + $0x94] sm:$0xf]
        %v6709 = vld [vmem:[%s6670 + $0x98] sm:$0xf]
        %v6710 = vld [vmem:[%s6670 + $0x9c] sm:$0xf]
        %v6711 = vld [vmem:[%s6670 + $0xa0] sm:$0xf]
        %v6712 = vld [vmem:[%s6670 + $0xa4] sm:$0xf]
        %v6713 = vld [vmem:[%s6670 + $0xa8] sm:$0xf]
        %v6714 = vld [vmem:[%s6670 + $0xac] sm:$0xf]
        %v6715 = vld [vmem:[%s6670 + $0xb0] sm:$0xf]
        %v6716 = vld [vmem:[%s6670 + $0xb4] sm:$0xf]
        %v6717 = vld [vmem:[%s6670 + $0xb8] sm:$0xf]
        %v6718 = vld [vmem:[%s6670 + $0xbc] sm:$0xf]
        %v6719 = vld [vmem:[%s6670 + $0xc0] sm:$0xf]
        %v6720 = vld [vmem:[%s6670 + $0xc4] sm:$0xf]
        %v6721 = vld [vmem:[%s6670 + $0xc8] sm:$0xf]
        %v6722 = vld [vmem:[%s6670 + $0xcc] sm:$0xf]
        %v6723 = vld [vmem:[%s6670 + $0xd0] sm:$0xf]
        %v6724 = vld [vmem:[%s6670 + $0xd4] sm:$0xf]
        %v6725 = vld [vmem:[%s6670 + $0xd8] sm:$0xf]
        %v6726 = vld [vmem:[%s6670 + $0xdc] sm:$0xf]
        %v6727 = vld [vmem:[%s6670 + $0xe0] sm:$0xf]
        %v6728 = vld [vmem:[%s6670 + $0xe4] sm:$0xf]
        %v6729 = vld [vmem:[%s6670 + $0xe8] sm:$0xf]
        %v6730 = vld [vmem:[%s6670 + $0xec] sm:$0xf]
        %v6731 = vld [vmem:[%s6670 + $0xf0] sm:$0xf]
        %v6732 = vld [vmem:[%s6670 + $0xf4] sm:$0xf]
        %v6733 = vld [vmem:[%s6670 + $0xf8] sm:$0xf]
        %v6734 = vld [vmem:[%s6670 + $0xfc] sm:$0xf]
        %v6735 = vld [vmem:[%s6670 + $0x100] sm:$0xf]
        %v6736 = vld [vmem:[%s6670 + $0x104] sm:$0xf]
        %v6737 = vld [vmem:[%s6670 + $0x108] sm:$0xf]
        %v6738 = vld [vmem:[%s6670 + $0x10c] sm:$0xf]
        %v6739 = vld [vmem:[%s6670 + $0x110] sm:$0xf]
        %v6740 = vld [vmem:[%s6670 + $0x114] sm:$0xf]
        %v6741 = vld [vmem:[%s6670 + $0x118] sm:$0xf]
        %v6742 = vld [vmem:[%s6670 + $0x11c] sm:$0xf]
        %v6743 = vld [vmem:[%s6670 + $0x120] sm:$0xf]
        %v6744 = vld [vmem:[%s6670 + $0x124] sm:$0xf]
        %v6745 = vld [vmem:[%s6670 + $0x128] sm:$0xf]
        %v6746 = vld [vmem:[%s6670 + $0x12c] sm:$0xf]
        %v6747 = vld [vmem:[%s6670 + $0x130] sm:$0xf]
        %v6748 = vld [vmem:[%s6670 + $0x134] sm:$0xf]
        %v6749 = vld [vmem:[%s6670 + $0x138] sm:$0xf]
        %v6750 = vld [vmem:[%s6670 + $0x13c] sm:$0xf]
        %v6751 = vld [vmem:[%s6670 + $0x140] sm:$0xf]
        %v6752 = vld [vmem:[%s6670 + $0x144] sm:$0xf]
        %v6753 = vld [vmem:[%s6670 + $0x148] sm:$0xf]
        %v6754 = vld [vmem:[%s6670 + $0x14c] sm:$0xf]
        %v6755 = vld [vmem:[%s6670 + $0x150] sm:$0xf]
        %v6756 = vld [vmem:[%s6670 + $0x154] sm:$0xf]
        %v6757 = vld [vmem:[%s6670 + $0x158] sm:$0xf]
        %v6758 = vld [vmem:[%s6670 + $0x15c] sm:$0xf]
        %v6759 = vld [vmem:[%s6670 + $0x160] sm:$0xf]
        %v6760 = vld [vmem:[%s6670 + $0x164] sm:$0xf]
        %v6761 = vld [vmem:[%s6670 + $0x168] sm:$0xf]
        %v6762 = vld [vmem:[%s6670 + $0x16c] sm:$0xf]
        %v6763 = vld [vmem:[%s6670 + $0x170] sm:$0xf]
        %v6764 = vld [vmem:[%s6670 + $0x174] sm:$0xf]
        %v6765 = vld [vmem:[%s6670 + $0x178] sm:$0xf]
        %v6766 = vld [vmem:[%s6670 + $0x17c] sm:$0xf]
        %v6767 = vld [vmem:[%s6670 + $0x180] sm:$0xf]
        %v6768 = vld [vmem:[%s6670 + $0x184] sm:$0xf]
        %v6769 = vld [vmem:[%s6670 + $0x188] sm:$0xf]
        %v6770 = vld [vmem:[%s6670 + $0x18c] sm:$0xf]
        %v6771 = vld [vmem:[%s6670 + $0x190] sm:$0xf]
        %v6772 = vld [vmem:[%s6670 + $0x194] sm:$0xf]
        %v6773 = vld [vmem:[%s6670 + $0x198] sm:$0xf]
        %v6774 = vld [vmem:[%s6670 + $0x19c] sm:$0xf]
        %v6775 = vld [vmem:[%s6670 + $0x1a0] sm:$0xf]
        %v6776 = vld [vmem:[%s6670 + $0x1a4] sm:$0xf]
        %v6777 = vld [vmem:[%s6670 + $0x1a8] sm:$0xf]
        %v6778 = vld [vmem:[%s6670 + $0x1ac] sm:$0xf]
        %v6779 = vld [vmem:[%s6670 + $0x1b0] sm:$0xf]
        %v6780 = vld [vmem:[%s6670 + $0x1b4] sm:$0xf]
        %v6781 = vld [vmem:[%s6670 + $0x1b8] sm:$0xf]
        %v6782 = vld [vmem:[%s6670 + $0x1bc] sm:$0xf]
        %v6783 = vld [vmem:[%s6670 + $0x1c0] sm:$0xf]
        %v6784 = vld [vmem:[%s6670 + $0x1c4] sm:$0xf]
        %v6785 = vld [vmem:[%s6670 + $0x1c8] sm:$0xf]
        %v6786 = vld [vmem:[%s6670 + $0x1cc] sm:$0xf]
        %v6787 = vld [vmem:[%s6670 + $0x1d0] sm:$0xf]
        %v6788 = vld [vmem:[%s6670 + $0x1d4] sm:$0xf]
        %v6789 = vld [vmem:[%s6670 + $0x1d8] sm:$0xf]
        %v6790 = vld [vmem:[%s6670 + $0x1dc] sm:$0xf]
        %v6791 = vld [vmem:[%s6670 + $0x1e0] sm:$0xf]
        %v6792 = vld [vmem:[%s6670 + $0x1e4] sm:$0xf]
        %v6793 = vld [vmem:[%s6670 + $0x1e8] sm:$0xf]
        %v6794 = vld [vmem:[%s6670 + $0x1ec] sm:$0xf]
        %v6795 = vld [vmem:[%s6670 + $0x1f0] sm:$0xf]
        %v6796 = vld [vmem:[%s6670 + $0x1f4] sm:$0xf]
        %v6797 = vld [vmem:[%s6670 + $0x1f8] sm:$0xf]
        %v6798 = vld [vmem:[%s6670 + $0x1fc] sm:$0xf]
        %v6799 = vld [vmem:[%s6670 + $0x200] sm:$0xf]
        %v6800 = vld [vmem:[%s6670 + $0x204] sm:$0xf]
        %v6801 = vld [vmem:[%s6670 + $0x208] sm:$0xf]
        %v6802 = vld [vmem:[%s6670 + $0x20c] sm:$0xf]
        %v6803 = vld [vmem:[%s6670 + $0x210] sm:$0xf]
        %v6804 = vld [vmem:[%s6670 + $0x214] sm:$0xf]
        %v6805 = vld [vmem:[%s6670 + $0x218] sm:$0xf]
        %v6806 = vld [vmem:[%s6670 + $0x21c] sm:$0xf]
        %v6807 = vld [vmem:[%s6670 + $0x220] sm:$0xf]
        %v6808 = vld [vmem:[%s6670 + $0x224] sm:$0xf]
        %v6809 = vld [vmem:[%s6670 + $0x228] sm:$0xf]
        %v6810 = vld [vmem:[%s6670 + $0x22c] sm:$0xf]
        %v6811 = vld [vmem:[%s6670 + $0x230] sm:$0xf]
        %v6812 = vld [vmem:[%s6670 + $0x234] sm:$0xf]
        %v6813 = vld [vmem:[%s6670 + $0x238] sm:$0xf]
        %v6814 = vld [vmem:[%s6670 + $0x23c] sm:$0xf]
        %v6959 = vunpack.c.l.b16 %v6671
        %v6960 = vunpack.c.l.b16 %v6672
        %v6961 = vunpack.c.l.b16 %v6673
        %v6962 = vunpack.c.l.b16 %v6674
        %v6963 = vunpack.c.l.b16 %v6675
        %v6964 = vunpack.c.l.b16 %v6676
        %v6965 = vunpack.c.l.b16 %v6677
        %v6966 = vunpack.c.l.b16 %v6678
        %v6967 = vunpack.c.l.b16 %v6679
        %v6968 = vunpack.c.l.b16 %v6680
        %v6969 = vunpack.c.l.b16 %v6681
        %v6970 = vunpack.c.l.b16 %v6682
        %v6971 = vunpack.c.l.b16 %v6683
        %v6972 = vunpack.c.l.b16 %v6684
        %v6973 = vunpack.c.l.b16 %v6685
        %v6974 = vunpack.c.l.b16 %v6686
        %v6975 = vunpack.c.l.b16 %v6687
        %v6976 = vunpack.c.l.b16 %v6688
        %v6977 = vunpack.c.l.b16 %v6689
        %v6978 = vunpack.c.l.b16 %v6690
        %v6979 = vunpack.c.l.b16 %v6691
        %v6980 = vunpack.c.l.b16 %v6692
        %v6981 = vunpack.c.l.b16 %v6693
        %v6982 = vunpack.c.l.b16 %v6694
        %v6983 = vunpack.c.l.b16 %v6695
        %v6984 = vunpack.c.l.b16 %v6696
        %v6985 = vunpack.c.l.b16 %v6697
        %v6986 = vunpack.c.l.b16 %v6698
        %v6987 = vunpack.c.l.b16 %v6699
        %v6988 = vunpack.c.l.b16 %v6700
        %v6989 = vunpack.c.l.b16 %v6701
        %v6990 = vunpack.c.l.b16 %v6702
        %v6991 = vunpack.c.l.b16 %v6703
        %v6992 = vunpack.c.l.b16 %v6704
        %v6993 = vunpack.c.l.b16 %v6705
        %v6994 = vunpack.c.l.b16 %v6706
        %v6995 = vunpack.c.l.b16 %v6707
        %v6996 = vunpack.c.l.b16 %v6708
        %v6997 = vunpack.c.l.b16 %v6709
        %v6998 = vunpack.c.l.b16 %v6710
        %v6999 = vunpack.c.l.b16 %v6711
        %v7000 = vunpack.c.l.b16 %v6712
        %v7001 = vunpack.c.l.b16 %v6713
        %v7002 = vunpack.c.l.b16 %v6714
        %v7003 = vunpack.c.l.b16 %v6715
        %v7004 = vunpack.c.l.b16 %v6716
        %v7005 = vunpack.c.l.b16 %v6717
        %v7006 = vunpack.c.l.b16 %v6718
        %v7007 = vunpack.c.l.b16 %v6719
        %v7008 = vunpack.c.l.b16 %v6720
        %v7009 = vunpack.c.l.b16 %v6721
        %v7010 = vunpack.c.l.b16 %v6722
        %v7011 = vunpack.c.l.b16 %v6723
        %v7012 = vunpack.c.l.b16 %v6724
        %v7013 = vunpack.c.l.b16 %v6725
        %v7014 = vunpack.c.l.b16 %v6726
        %v7015 = vunpack.c.l.b16 %v6727
        %v7016 = vunpack.c.l.b16 %v6728
        %v7017 = vunpack.c.l.b16 %v6729
        %v7018 = vunpack.c.l.b16 %v6730
        %v7019 = vunpack.c.l.b16 %v6731
        %v7020 = vunpack.c.l.b16 %v6732
        %v7021 = vunpack.c.l.b16 %v6733
        %v7022 = vunpack.c.l.b16 %v6734
        %v7023 = vunpack.c.l.b16 %v6735
        %v7024 = vunpack.c.l.b16 %v6736
        %v7025 = vunpack.c.l.b16 %v6737
        %v7026 = vunpack.c.l.b16 %v6738
        %v7027 = vunpack.c.l.b16 %v6739
        %v7028 = vunpack.c.l.b16 %v6740
        %v7029 = vunpack.c.l.b16 %v6741
        %v7030 = vunpack.c.l.b16 %v6742
        %v7031 = vunpack.c.l.b16 %v6743
        %v7032 = vunpack.c.l.b16 %v6744
        %v7033 = vunpack.c.l.b16 %v6745
        %v7034 = vunpack.c.l.b16 %v6746
        %v7035 = vunpack.c.l.b16 %v6747
        %v7036 = vunpack.c.l.b16 %v6748
        %v7037 = vunpack.c.l.b16 %v6749
        %v7038 = vunpack.c.l.b16 %v6750
        %v7039 = vunpack.c.l.b16 %v6751
        %v7040 = vunpack.c.l.b16 %v6752
        %v7041 = vunpack.c.l.b16 %v6753
        %v7042 = vunpack.c.l.b16 %v6754
        %v7043 = vunpack.c.l.b16 %v6755
        %v7044 = vunpack.c.l.b16 %v6756
        %v7045 = vunpack.c.l.b16 %v6757
        %v7046 = vunpack.c.l.b16 %v6758
        %v7047 = vunpack.c.l.b16 %v6759
        %v7048 = vunpack.c.l.b16 %v6760
        %v7049 = vunpack.c.l.b16 %v6761
        %v7050 = vunpack.c.l.b16 %v6762
        %v7051 = vunpack.c.l.b16 %v6763
        %v7052 = vunpack.c.l.b16 %v6764
        %v7053 = vunpack.c.l.b16 %v6765
        %v7054 = vunpack.c.l.b16 %v6766
        %v7055 = vunpack.c.l.b16 %v6767
        %v7056 = vunpack.c.l.b16 %v6768
        %v7057 = vunpack.c.l.b16 %v6769
        %v7058 = vunpack.c.l.b16 %v6770
        %v7059 = vunpack.c.l.b16 %v6771
        %v7060 = vunpack.c.l.b16 %v6772
        %v7061 = vunpack.c.l.b16 %v6773
        %v7062 = vunpack.c.l.b16 %v6774
        %v7063 = vunpack.c.l.b16 %v6775
        %v7064 = vunpack.c.l.b16 %v6776
        %v7065 = vunpack.c.l.b16 %v6777
        %v7066 = vunpack.c.l.b16 %v6778
        %v7067 = vunpack.c.l.b16 %v6779
        %v7068 = vunpack.c.l.b16 %v6780
        %v7069 = vunpack.c.l.b16 %v6781
        %v7070 = vunpack.c.l.b16 %v6782
        %v7071 = vunpack.c.l.b16 %v6783
        %v7072 = vunpack.c.l.b16 %v6784
        %v7073 = vunpack.c.l.b16 %v6785
        %v7074 = vunpack.c.l.b16 %v6786
        %v7075 = vunpack.c.l.b16 %v6787
        %v7076 = vunpack.c.l.b16 %v6788
        %v7077 = vunpack.c.l.b16 %v6789
        %v7078 = vunpack.c.l.b16 %v6790
        %v7079 = vunpack.c.l.b16 %v6791
        %v7080 = vunpack.c.l.b16 %v6792
        %v7081 = vunpack.c.l.b16 %v6793
        %v7082 = vunpack.c.l.b16 %v6794
        %v7083 = vunpack.c.l.b16 %v6795
        %v7084 = vunpack.c.l.b16 %v6796
        %v7085 = vunpack.c.l.b16 %v6797
        %v7086 = vunpack.c.l.b16 %v6798
        %v7087 = vunpack.c.l.b16 %v6799
        %v7088 = vunpack.c.l.b16 %v6800
        %v7089 = vunpack.c.l.b16 %v6801
        %v7090 = vunpack.c.l.b16 %v6802
        %v7091 = vunpack.c.l.b16 %v6803
        %v7092 = vunpack.c.l.b16 %v6804
        %v7093 = vunpack.c.l.b16 %v6805
        %v7094 = vunpack.c.l.b16 %v6806
        %v7095 = vunpack.c.l.b16 %v6807
        %v7096 = vunpack.c.l.b16 %v6808
        %v7097 = vunpack.c.l.b16 %v6809
        %v7098 = vunpack.c.l.b16 %v6810
        %v7099 = vunpack.c.l.b16 %v6811
        %v7100 = vunpack.c.l.b16 %v6812
        %v7101 = vunpack.c.l.b16 %v6813
        %v7102 = vunpack.c.l.b16 %v6814
        %v7103 = vpack.c.b16 %v6960, %v6959
        %v7104 = vpack.c.b16 %v6962, %v6961
        %v7105 = vpack.c.b16 %v6964, %v6963
        %v7106 = vpack.c.b16 %v6966, %v6965
        %v7107 = vpack.c.b16 %v6968, %v6967
        %v7108 = vpack.c.b16 %v6970, %v6969
        %v7109 = vpack.c.b16 %v6972, %v6971
        %v7110 = vpack.c.b16 %v6974, %v6973
        %v7111 = vpack.c.b16 %v6976, %v6975
        %v7112 = vpack.c.b16 %v6978, %v6977
        %v7113 = vpack.c.b16 %v6980, %v6979
        %v7114 = vpack.c.b16 %v6982, %v6981
        %v7115 = vpack.c.b16 %v6984, %v6983
        %v7116 = vpack.c.b16 %v6986, %v6985
        %v7117 = vpack.c.b16 %v6988, %v6987
        %v7118 = vpack.c.b16 %v6990, %v6989
        %v7119 = vpack.c.b16 %v6992, %v6991
        %v7120 = vpack.c.b16 %v6994, %v6993
        %v7121 = vpack.c.b16 %v6996, %v6995
        %v7122 = vpack.c.b16 %v6998, %v6997
        %v7123 = vpack.c.b16 %v7000, %v6999
        %v7124 = vpack.c.b16 %v7002, %v7001
        %v7125 = vpack.c.b16 %v7004, %v7003
        %v7126 = vpack.c.b16 %v7006, %v7005
        %v7127 = vpack.c.b16 %v7008, %v7007
        %v7128 = vpack.c.b16 %v7010, %v7009
        %v7129 = vpack.c.b16 %v7012, %v7011
        %v7130 = vpack.c.b16 %v7014, %v7013
        %v7131 = vpack.c.b16 %v7016, %v7015
        %v7132 = vpack.c.b16 %v7018, %v7017
        %v7133 = vpack.c.b16 %v7020, %v7019
        %v7134 = vpack.c.b16 %v7022, %v7021
        %v7135 = vpack.c.b16 %v7024, %v7023
        %v7136 = vpack.c.b16 %v7026, %v7025
        %v7137 = vpack.c.b16 %v7028, %v7027
        %v7138 = vpack.c.b16 %v7030, %v7029
        %v7139 = vpack.c.b16 %v7032, %v7031
        %v7140 = vpack.c.b16 %v7034, %v7033
        %v7141 = vpack.c.b16 %v7036, %v7035
        %v7142 = vpack.c.b16 %v7038, %v7037
        %v7143 = vpack.c.b16 %v7040, %v7039
        %v7144 = vpack.c.b16 %v7042, %v7041
        %v7145 = vpack.c.b16 %v7044, %v7043
        %v7146 = vpack.c.b16 %v7046, %v7045
        %v7147 = vpack.c.b16 %v7048, %v7047
        %v7148 = vpack.c.b16 %v7050, %v7049
        %v7149 = vpack.c.b16 %v7052, %v7051
        %v7150 = vpack.c.b16 %v7054, %v7053
        %v7151 = vpack.c.b16 %v7056, %v7055
        %v7152 = vpack.c.b16 %v7058, %v7057
        %v7153 = vpack.c.b16 %v7060, %v7059
        %v7154 = vpack.c.b16 %v7062, %v7061
        %v7155 = vpack.c.b16 %v7064, %v7063
        %v7156 = vpack.c.b16 %v7066, %v7065
        %v7157 = vpack.c.b16 %v7068, %v7067
        %v7158 = vpack.c.b16 %v7070, %v7069
        %v7159 = vpack.c.b16 %v7072, %v7071
        %v7160 = vpack.c.b16 %v7074, %v7073
        %v7161 = vpack.c.b16 %v7076, %v7075
        %v7162 = vpack.c.b16 %v7078, %v7077
        %v7163 = vpack.c.b16 %v7080, %v7079
        %v7164 = vpack.c.b16 %v7082, %v7081
        %v7165 = vpack.c.b16 %v7084, %v7083
        %v7166 = vpack.c.b16 %v7086, %v7085
        %v7167 = vpack.c.b16 %v7088, %v7087
        %v7168 = vpack.c.b16 %v7090, %v7089
        %v7169 = vpack.c.b16 %v7092, %v7091
        %v7170 = vpack.c.b16 %v7094, %v7093
        %v7171 = vpack.c.b16 %v7096, %v7095
        %v7172 = vpack.c.b16 %v7098, %v7097
        %v7173 = vpack.c.b16 %v7100, %v7099
        %v7174 = vpack.c.b16 %v7102, %v7101
        %7247 = vmatprep.subr.bf16.mxu0 0
        %7248 = vmatpush1.bf16.msra.mxu0 %v7103
        %7249 = vmatprep.subr.bf16.mxu0 0
        %7250 = vmatpush1.bf16.msra.mxu0 %v7104
        %7251 = vmatprep.subr.bf16.mxu0 0
        %7252 = vmatpush1.bf16.msra.mxu0 %v7105
        %7253 = vmatprep.subr.bf16.mxu0 0
        %7254 = vmatpush1.bf16.msra.mxu0 %v7106
        %7255 = vmatprep.subr.bf16.mxu0 0
        %7256 = vmatpush1.bf16.msra.mxu0 %v7107
        %7257 = vmatprep.subr.bf16.mxu0 0
        %7258 = vmatpush1.bf16.msra.mxu0 %v7108
        %7259 = vmatprep.subr.bf16.mxu0 0
        %7260 = vmatpush1.bf16.msra.mxu0 %v7109
        %7261 = vmatprep.subr.bf16.mxu0 0
        %7262 = vmatpush1.bf16.msra.mxu0 %v7110
        %7263 = vmatprep.subr.bf16.mxu0 0
        %7264 = vmatpush1.bf16.msra.mxu0 %v7111
        %7265 = vmatprep.subr.bf16.mxu0 0
        %7266 = vmatpush1.bf16.msra.mxu0 %v7112
        %7267 = vmatprep.subr.bf16.mxu0 0
        %7268 = vmatpush1.bf16.msra.mxu0 %v7113
        %7269 = vmatprep.subr.bf16.mxu0 0
        %7270 = vmatpush1.bf16.msra.mxu0 %v7114
        %7271 = vmatprep.subr.bf16.mxu0 0
        %7272 = vmatpush1.bf16.msra.mxu0 %v7115
        %7273 = vmatprep.subr.bf16.mxu0 0
        %7274 = vmatpush1.bf16.msra.mxu0 %v7116
        %7275 = vmatprep.subr.bf16.mxu0 0
        %7276 = vmatpush1.bf16.msra.mxu0 %v7117
        %7277 = vmatprep.subr.bf16.mxu0 0
        %7278 = vmatpush1.bf16.msra.mxu0 %v7118
        %7279 = vmatprep.mubr.bf16.mxu0 %v5615
        %7280 = vmatmul.mubr.bf16.gmra.mrb[0].mxu0 %v5485
        %v7281 = vpop.f32.mrb[0].mxu0
        %v7282 = vadd.f32 0.0, %v7281
        %v7283 = vpop.f32.mrb[0].mxu0
        %v7284 = vpop.f32.mrb[0].mxu0
        %v7285 = vadd.f32 0.0, %v7284
        %v7286 = vpop.f32.mrb[0].mxu0
        %7287 = vmatprep.mubr.bf16.mxu0 %v5618
        %7288 = vmatmul.mubr.bf16.gmra.mrb[0].mxu0 %v5486
        %v7289 = vpop.f32.mrb[0].mxu0
        %v7290 = vadd.f32 0.0, %v7289
        %v7291 = vpop.f32.mrb[0].mxu0
        %v7292 = vpop.f32.mrb[0].mxu0
        %v7293 = vadd.f32 0.0, %v7292
        %v7294 = vpop.f32.mrb[0].mxu0
        %7295 = vmatprep.mubr.bf16.mxu0 %v5621
        %7296 = vmatmul.mubr.bf16.gmra.mrb[0].mxu0 %v5487
        %v7297 = vpop.f32.mrb[0].mxu0
        %v7298 = vadd.f32 0.0, %v7297
        %v7299 = vpop.f32.mrb[0].mxu0
        %v7300 = vpop.f32.mrb[0].mxu0
        %v7301 = vadd.f32 0.0, %v7300
        %v7302 = vpop.f32.mrb[0].mxu0
        %7303 = vmatprep.mubr.bf16.mxu0 %v5624
        %7304 = vmatmul.mubr.bf16.gmra.mrb[0].mxu0 %v5488
        %v7305 = vpop.f32.mrb[0].mxu0
        %v7306 = vadd.f32 0.0, %v7305
        %v7307 = vpop.f32.mrb[0].mxu0
        %v7308 = vpop.f32.mrb[0].mxu0
        %v7309 = vadd.f32 0.0, %v7308
        %v7310 = vpop.f32.mrb[0].mxu0
        %7311 = vmatprep.mubr.bf16.mxu0 %v5627
        %7312 = vmatmul.mubr.bf16.gmra.mrb[0].mxu0 %v5489
        %v7313 = vpop.f32.mrb[0].mxu0
        %v7314 = vadd.f32 0.0, %v7313
        %v7315 = vpop.f32.mrb[0].mxu0
        %v7316 = vpop.f32.mrb[0].mxu0
        %v7317 = vadd.f32 0.0, %v7316
        %v7318 = vpop.f32.mrb[0].mxu0
        %7319 = vmatprep.mubr.bf16.mxu0 %v5630
        %7320 = vmatmul.mubr.bf16.gmra.mrb[0].mxu0 %v5490
        %v7321 = vpop.f32.mrb[0].mxu0
        %v7322 = vadd.f32 0.0, %v7321
        %v7323 = vpop.f32.mrb[0].mxu0
        %v7324 = vpop.f32.mrb[0].mxu0
        %v7325 = vadd.f32 0.0, %v7324
        %v7326 = vpop.f32.mrb[0].mxu0
        %7327 = vmatprep.mubr.bf16.mxu0 %v5633
        %7328 = vmatmul.mubr.bf16.gmra.mrb[0].mxu0 %v5491
        %v7329 = vpop.f32.mrb[0].mxu0
        %v7330 = vadd.f32 0.0, %v7329
        %v7331 = vpop.f32.mrb[0].mxu0
        %v7332 = vpop.f32.mrb[0].mxu0
        %v7333 = vadd.f32 0.0, %v7332
        %v7334 = vpop.f32.mrb[0].mxu0
        %7335 = vmatprep.mubr.bf16.mxu0 %v5636
        %7336 = vmatmul.mubr.bf16.gmra.mrb[0].mxu0 %v5492
        %v7337 = vpop.f32.mrb[0].mxu0
        %v7338 = vadd.f32 0.0, %v7337
        %v7339 = vpop.f32.mrb[0].mxu0
        %v7340 = vpop.f32.mrb[0].mxu0
        %v7341 = vadd.f32 0.0, %v7340
        %v7342 = vpop.f32.mrb[0].mxu0
        %7343 = vmatprep.mubr.bf16.mxu0 %v5639
        %7344 = vmatmul.mubr.bf16.gmra.mrb[0].mxu0 %v5493
        %v7345 = vpop.f32.mrb[0].mxu0
        %v7346 = vadd.f32 0.0, %v7345
        %v7347 = vpop.f32.mrb[0].mxu0
        %v7348 = vpop.f32.mrb[0].mxu0
        %v7349 = vadd.f32 0.0, %v7348
        %v7350 = vpop.f32.mrb[0].mxu0
        %7351 = vmatprep.mubr.bf16.mxu0 %v5642
        %7352 = vmatmul.mubr.bf16.gmra.mrb[0].mxu0 %v5494
        %v7353 = vpop.f32.mrb[0].mxu0
        %v7354 = vadd.f32 0.0, %v7353
        %v7355 = vpop.f32.mrb[0].mxu0
        %v7356 = vpop.f32.mrb[0].mxu0
        %v7357 = vadd.f32 0.0, %v7356
        %v7358 = vpop.f32.mrb[0].mxu0
        %7359 = vmatprep.mubr.bf16.mxu0 %v5645
        %7360 = vmatmul.mubr.bf16.gmra.mrb[0].mxu0 %v5495
        %v7361 = vpop.f32.mrb[0].mxu0
        %v7362 = vadd.f32 0.0, %v7361
        %v7363 = vpop.f32.mrb[0].mxu0
        %v7364 = vpop.f32.mrb[0].mxu0
        %v7365 = vadd.f32 0.0, %v7364
        %v7366 = vpop.f32.mrb[0].mxu0
        %7367 = vmatprep.mubr.bf16.mxu0 %v5648
        %7368 = vmatmul.mubr.bf16.gmra.mrb[0].mxu0 %v5496
        %v7369 = vpop.f32.mrb[0].mxu0
        %v7370 = vadd.f32 0.0, %v7369
        %v7371 = vpop.f32.mrb[0].mxu0
        %v7372 = vpop.f32.mrb[0].mxu0
        %v7373 = vadd.f32 0.0, %v7372
        %v7374 = vpop.f32.mrb[0].mxu0
        %7375 = vmatprep.mubr.bf16.mxu0 %v5651
        %7376 = vmatmul.mubr.bf16.gmra.mrb[0].mxu0 %v5497
        %v7377 = vpop.f32.mrb[0].mxu0
        %v7378 = vadd.f32 0.0, %v7377
        %v7379 = vpop.f32.mrb[0].mxu0
        %v7380 = vpop.f32.mrb[0].mxu0
        %v7381 = vadd.f32 0.0, %v7380
        %v7382 = vpop.f32.mrb[0].mxu0
        %7383 = vmatprep.mubr.bf16.mxu0 %v5654
        %7384 = vmatmul.mubr.bf16.gmra.mrb[0].mxu0 %v5498
        %v7385 = vpop.f32.mrb[0].mxu0
        %v7386 = vadd.f32 0.0, %v7385
        %v7387 = vpop.f32.mrb[0].mxu0
        %v7388 = vpop.f32.mrb[0].mxu0
        %v7389 = vadd.f32 0.0, %v7388
        %v7390 = vpop.f32.mrb[0].mxu0
        %7391 = vmatprep.mubr.bf16.mxu0 %v5657
        %7392 = vmatmul.mubr.bf16.gmra.mrb[0].mxu0 %v5499
        %v7393 = vpop.f32.mrb[0].mxu0
        %v7394 = vadd.f32 0.0, %v7393
        %v7395 = vpop.f32.mrb[0].mxu0
        %v7396 = vpop.f32.mrb[0].mxu0
        %v7397 = vadd.f32 0.0, %v7396
        %v7398 = vpop.f32.mrb[0].mxu0
        %7399 = vmatprep.mubr.bf16.mxu0 %v5660
        %7400 = vmatmul.mubr.bf16.gmra.mrb[0].mxu0 %v5500
        %v7401 = vpop.f32.mrb[0].mxu0
        %v7402 = vadd.f32 0.0, %v7401
        %v7403 = vpop.f32.mrb[0].mxu0
        %v7404 = vpop.f32.mrb[0].mxu0
        %v7405 = vadd.f32 0.0, %v7404
        %v7406 = vpop.f32.mrb[0].mxu0
        %7407 = vdwg.mxu0
        %7408 = vmatprep.subr.bf16.mxu0 0
        %7409 = vmatpush1.bf16.msra.mxu0 %v7119
        %7410 = vmatprep.subr.bf16.mxu0 0
        %7411 = vmatpush1.bf16.msra.mxu0 %v7120
        %7412 = vmatprep.subr.bf16.mxu0 0
        %7413 = vmatpush1.bf16.msra.mxu0 %v7121
        %7414 = vmatprep.subr.bf16.mxu0 0
        %7415 = vmatpush1.bf16.msra.mxu0 %v7122
        %7416 = vmatprep.subr.bf16.mxu0 0
        %7417 = vmatpush1.bf16.msra.mxu0 %v7123
        %7418 = vmatprep.subr.bf16.mxu0 0
        %7419 = vmatpush1.bf16.msra.mxu0 %v7124
        %7420 = vmatprep.subr.bf16.mxu0 0
        %7421 = vmatpush1.bf16.msra.mxu0 %v7125
        %7422 = vmatprep.subr.bf16.mxu0 0
        %7423 = vmatpush1.bf16.msra.mxu0 %v7126
        %7424 = vmatprep.subr.bf16.mxu0 0
        %7425 = vmatpush1.bf16.msra.mxu0 %v7127
        %7426 = vmatprep.subr.bf16.mxu0 0
        %7427 = vmatpush1.bf16.msra.mxu0 %v7128
        %7428 = vmatprep.subr.bf16.mxu0 0
        %7429 = vmatpush1.bf16.msra.mxu0 %v7129
        %7430 = vmatprep.subr.bf16.mxu0 0
        %7431 = vmatpush1.bf16.msra.mxu0 %v7130
        %7432 = vmatprep.subr.bf16.mxu0 0
        %7433 = vmatpush1.bf16.msra.mxu0 %v7131
        %7434 = vmatprep.subr.bf16.mxu0 0
        %7435 = vmatpush1.bf16.msra.mxu0 %v7132
        %7436 = vmatprep.subr.bf16.mxu0 0
        %7437 = vmatpush1.bf16.msra.mxu0 %v7133
        %7438 = vmatprep.subr.bf16.mxu0 0
        %7439 = vmatpush1.bf16.msra.mxu0 %v7134
        %7440 = vmatprep.mubr.bf16.mxu0 %v5902
        %7441 = vmatmul.mubr.bf16.gmra.mrb[0].mxu0 %v5776
        %v7442 = vpop.f32.mrb[0].mxu0
        %v7443 = vadd.f32 %v7282, %v7442
        %v7444 = vpop.f32.mrb[0].mxu0
        %v7445 = vpop.f32.mrb[0].mxu0
        %v7446 = vadd.f32 %v7285, %v7445
        %v7447 = vpop.f32.mrb[0].mxu0
        %7448 = vmatprep.mubr.bf16.mxu0 %v5903
        %7449 = vmatmul.mubr.bf16.gmra.mrb[0].mxu0 %v5779
        %v7450 = vpop.f32.mrb[0].mxu0
        %v7451 = vadd.f32 %v7290, %v7450
        %v7452 = vpop.f32.mrb[0].mxu0
        %v7453 = vpop.f32.mrb[0].mxu0
        %v7454 = vadd.f32 %v7293, %v7453
        %v7455 = vpop.f32.mrb[0].mxu0
        %7456 = vmatprep.mubr.bf16.mxu0 %v5904
        %7457 = vmatmul.mubr.bf16.gmra.mrb[0].mxu0 %v5782
        %v7458 = vpop.f32.mrb[0].mxu0
        %v7459 = vadd.f32 %v7298, %v7458
        %v7460 = vpop.f32.mrb[0].mxu0
        %v7461 = vpop.f32.mrb[0].mxu0
        %v7462 = vadd.f32 %v7301, %v7461
        %v7463 = vpop.f32.mrb[0].mxu0
        %7464 = vmatprep.mubr.bf16.mxu0 %v5905
        %7465 = vmatmul.mubr.bf16.gmra.mrb[0].mxu0 %v5785
        %v7466 = vpop.f32.mrb[0].mxu0
        %v7467 = vadd.f32 %v7306, %v7466
        %v7468 = vpop.f32.mrb[0].mxu0
        %v7469 = vpop.f32.mrb[0].mxu0
        %v7470 = vadd.f32 %v7309, %v7469
        %v7471 = vpop.f32.mrb[0].mxu0
        %7472 = vmatprep.mubr.bf16.mxu0 %v5906
        %7473 = vmatmul.mubr.bf16.gmra.mrb[0].mxu0 %v5788
        %v7474 = vpop.f32.mrb[0].mxu0
        %v7475 = vadd.f32 %v7314, %v7474
        %v7476 = vpop.f32.mrb[0].mxu0
        %v7477 = vpop.f32.mrb[0].mxu0
        %v7478 = vadd.f32 %v7317, %v7477
        %v7479 = vpop.f32.mrb[0].mxu0
        %7480 = vmatprep.mubr.bf16.mxu0 %v5907
        %7481 = vmatmul.mubr.bf16.gmra.mrb[0].mxu0 %v5791
        %v7482 = vpop.f32.mrb[0].mxu0
        %v7483 = vadd.f32 %v7322, %v7482
        %v7484 = vpop.f32.mrb[0].mxu0
        %v7485 = vpop.f32.mrb[0].mxu0
        %v7486 = vadd.f32 %v7325, %v7485
        %v7487 = vpop.f32.mrb[0].mxu0
        %7488 = vmatprep.mubr.bf16.mxu0 %v5908
        %7489 = vmatmul.mubr.bf16.gmra.mrb[0].mxu0 %v5794
        %v7490 = vpop.f32.mrb[0].mxu0
        %v7491 = vadd.f32 %v7330, %v7490
        %v7492 = vpop.f32.mrb[0].mxu0
        %v7493 = vpop.f32.mrb[0].mxu0
        %v7494 = vadd.f32 %v7333, %v7493
        %v7495 = vpop.f32.mrb[0].mxu0
        %7496 = vmatprep.mubr.bf16.mxu0 %v5909
        %7497 = vmatmul.mubr.bf16.gmra.mrb[0].mxu0 %v5797
        %v7498 = vpop.f32.mrb[0].mxu0
        %v7499 = vadd.f32 %v7338, %v7498
        %v7500 = vpop.f32.mrb[0].mxu0
        %v7501 = vpop.f32.mrb[0].mxu0
        %v7502 = vadd.f32 %v7341, %v7501
        %v7503 = vpop.f32.mrb[0].mxu0
        %7504 = vmatprep.mubr.bf16.mxu0 %v5910
        %7505 = vmatmul.mubr.bf16.gmra.mrb[0].mxu0 %v5800
        %v7506 = vpop.f32.mrb[0].mxu0
        %v7507 = vadd.f32 %v7346, %v7506
        %v7508 = vpop.f32.mrb[0].mxu0
        %v7509 = vpop.f32.mrb[0].mxu0
        %v7510 = vadd.f32 %v7349, %v7509
        %v7511 = vpop.f32.mrb[0].mxu0
        %7512 = vmatprep.mubr.bf16.mxu0 %v5911
        %7513 = vmatmul.mubr.bf16.gmra.mrb[0].mxu0 %v5803
        %v7514 = vpop.f32.mrb[0].mxu0
        %v7515 = vadd.f32 %v7354, %v7514
        %v7516 = vpop.f32.mrb[0].mxu0
        %v7517 = vpop.f32.mrb[0].mxu0
        %v7518 = vadd.f32 %v7357, %v7517
        %v7519 = vpop.f32.mrb[0].mxu0
        %7520 = vmatprep.mubr.bf16.mxu0 %v5912
        %7521 = vmatmul.mubr.bf16.gmra.mrb[0].mxu0 %v5806
        %v7522 = vpop.f32.mrb[0].mxu0
        %v7523 = vadd.f32 %v7362, %v7522
        %v7524 = vpop.f32.mrb[0].mxu0
        %v7525 = vpop.f32.mrb[0].mxu0
        %v7526 = vadd.f32 %v7365, %v7525
        %v7527 = vpop.f32.mrb[0].mxu0
        %7528 = vmatprep.mubr.bf16.mxu0 %v5913
        %7529 = vmatmul.mubr.bf16.gmra.mrb[0].mxu0 %v5809
        %v7530 = vpop.f32.mrb[0].mxu0
        %v7531 = vadd.f32 %v7370, %v7530
        %v7532 = vpop.f32.mrb[0].mxu0
        %v7533 = vpop.f32.mrb[0].mxu0
        %v7534 = vadd.f32 %v7373, %v7533
        %v7535 = vpop.f32.mrb[0].mxu0
        %7536 = vmatprep.mubr.bf16.mxu0 %v5914
        %7537 = vmatmul.mubr.bf16.gmra.mrb[0].mxu0 %v5812
        %v7538 = vpop.f32.mrb[0].mxu0
        %v7539 = vadd.f32 %v7378, %v7538
        %v7540 = vpop.f32.mrb[0].mxu0
        %v7541 = vpop.f32.mrb[0].mxu0
        %v7542 = vadd.f32 %v7381, %v7541
        %v7543 = vpop.f32.mrb[0].mxu0
        %7544 = vmatprep.mubr.bf16.mxu0 %v5915
        %7545 = vmatmul.mubr.bf16.gmra.mrb[0].mxu0 %v5815
        %v7546 = vpop.f32.mrb[0].mxu0
        %v7547 = vadd.f32 %v7386, %v7546
        %v7548 = vpop.f32.mrb[0].mxu0
        %v7549 = vpop.f32.mrb[0].mxu0
        %v7550 = vadd.f32 %v7389, %v7549
        %v7551 = vpop.f32.mrb[0].mxu0
        %7552 = vmatprep.mubr.bf16.mxu0 %v5916
        %7553 = vmatmul.mubr.bf16.gmra.mrb[0].mxu0 %v5818
        %v7554 = vpop.f32.mrb[0].mxu0
        %v7555 = vadd.f32 %v7394, %v7554
        %v7556 = vpop.f32.mrb[0].mxu0
        %v7557 = vpop.f32.mrb[0].mxu0
        %v7558 = vadd.f32 %v7397, %v7557
        %v7559 = vpop.f32.mrb[0].mxu0
        %7560 = vmatprep.mubr.bf16.mxu0 %v5917
        %7561 = vmatmul.mubr.bf16.gmra.mrb[0].mxu0 %v5821
        %v7562 = vpop.f32.mrb[0].mxu0
        %v7563 = vadd.f32 %v7402, %v7562
        %v7564 = vpop.f32.mrb[0].mxu0
        %v7565 = vpop.f32.mrb[0].mxu0
        %v7566 = vadd.f32 %v7405, %v7565
        %v7567 = vpop.f32.mrb[0].mxu0
        %7568 = vdwg.mxu0
        %7569 = vmatprep.subr.bf16.mxu0 0
        %7570 = vmatpush1.bf16.msra.mxu0 %v7135
        %7571 = vmatprep.subr.bf16.mxu0 0
        %7572 = vmatpush1.bf16.msra.mxu0 %v7136
        %7573 = vmatprep.subr.bf16.mxu0 0
        %7574 = vmatpush1.bf16.msra.mxu0 %v7137
        %7575 = vmatprep.subr.bf16.mxu0 0
        %7576 = vmatpush1.bf16.msra.mxu0 %v7138
        %7577 = vmatprep.subr.bf16.mxu0 0
        %7578 = vmatpush1.bf16.msra.mxu0 %v7139
        %7579 = vmatprep.subr.bf16.mxu0 0
        %7580 = vmatpush1.bf16.msra.mxu0 %v7140
        %7581 = vmatprep.subr.bf16.mxu0 0
        %7582 = vmatpush1.bf16.msra.mxu0 %v7141
        %7583 = vmatprep.subr.bf16.mxu0 0
        %7584 = vmatpush1.bf16.msra.mxu0 %v7142
        %7585 = vmatprep.subr.bf16.mxu0 0
        %7586 = vmatpush1.bf16.msra.mxu0 %v7143
        %7587 = vmatprep.subr.bf16.mxu0 0
        %7588 = vmatpush1.bf16.msra.mxu0 %v7144
        %7589 = vmatprep.subr.bf16.mxu0 0
        %7590 = vmatpush1.bf16.msra.mxu0 %v7145
        %7591 = vmatprep.subr.bf16.mxu0 0
        %7592 = vmatpush1.bf16.msra.mxu0 %v7146
        %7593 = vmatprep.subr.bf16.mxu0 0
        %7594 = vmatpush1.bf16.msra.mxu0 %v7147
        %7595 = vmatprep.subr.bf16.mxu0 0
        %7596 = vmatpush1.bf16.msra.mxu0 %v7148
        %7597 = vmatprep.subr.bf16.mxu0 0
        %7598 = vmatpush1.bf16.msra.mxu0 %v7149
        %7599 = vmatprep.subr.bf16.mxu0 0
        %7600 = vmatpush1.bf16.msra.mxu0 %v7150
        %7601 = vmatprep.mubr.bf16.mxu0 %v6192
        %7602 = vmatmul.mubr.bf16.gmra.mrb[0].mxu0 %v6032
        %v7603 = vpop.f32.mrb[0].mxu0
        %v7604 = vadd.f32 %v7443, %v7603
        %v7605 = vpop.f32.mrb[0].mxu0
        %v7606 = vpop.f32.mrb[0].mxu0
        %v7607 = vadd.f32 %v7446, %v7606
        %v7608 = vpop.f32.mrb[0].mxu0
        %7609 = vmatprep.mubr.bf16.mxu0 %v6195
        %7610 = vmatmul.mubr.bf16.gmra.mrb[0].mxu0 %v6035
        %v7611 = vpop.f32.mrb[0].mxu0
        %v7612 = vadd.f32 %v7451, %v7611
        %v7613 = vpop.f32.mrb[0].mxu0
        %v7614 = vpop.f32.mrb[0].mxu0
        %v7615 = vadd.f32 %v7454, %v7614
        %v7616 = vpop.f32.mrb[0].mxu0
        %7617 = vmatprep.mubr.bf16.mxu0 %v6198
        %7618 = vmatmul.mubr.bf16.gmra.mrb[0].mxu0 %v6038
        %v7619 = vpop.f32.mrb[0].mxu0
        %v7620 = vadd.f32 %v7459, %v7619
        %v7621 = vpop.f32.mrb[0].mxu0
        %v7622 = vpop.f32.mrb[0].mxu0
        %v7623 = vadd.f32 %v7462, %v7622
        %v7624 = vpop.f32.mrb[0].mxu0
        %7625 = vmatprep.mubr.bf16.mxu0 %v6201
        %7626 = vmatmul.mubr.bf16.gmra.mrb[0].mxu0 %v6041
        %v7627 = vpop.f32.mrb[0].mxu0
        %v7628 = vadd.f32 %v7467, %v7627
        %v7629 = vpop.f32.mrb[0].mxu0
        %v7630 = vpop.f32.mrb[0].mxu0
        %v7631 = vadd.f32 %v7470, %v7630
        %v7632 = vpop.f32.mrb[0].mxu0
        %7633 = vmatprep.mubr.bf16.mxu0 %v6204
        %7634 = vmatmul.mubr.bf16.gmra.mrb[0].mxu0 %v6044
        %v7635 = vpop.f32.mrb[0].mxu0
        %v7636 = vadd.f32 %v7475, %v7635
        %v7637 = vpop.f32.mrb[0].mxu0
        %v7638 = vpop.f32.mrb[0].mxu0
        %v7639 = vadd.f32 %v7478, %v7638
        %v7640 = vpop.f32.mrb[0].mxu0
        %7641 = vmatprep.mubr.bf16.mxu0 %v6207
        %7642 = vmatmul.mubr.bf16.gmra.mrb[0].mxu0 %v6047
        %v7643 = vpop.f32.mrb[0].mxu0
        %v7644 = vadd.f32 %v7483, %v7643
        %v7645 = vpop.f32.mrb[0].mxu0
        %v7646 = vpop.f32.mrb[0].mxu0
        %v7647 = vadd.f32 %v7486, %v7646
        %v7648 = vpop.f32.mrb[0].mxu0
        %7649 = vmatprep.mubr.bf16.mxu0 %v6210
        %7650 = vmatmul.mubr.bf16.gmra.mrb[0].mxu0 %v6050
        %v7651 = vpop.f32.mrb[0].mxu0
        %v7652 = vadd.f32 %v7491, %v7651
        %v7653 = vpop.f32.mrb[0].mxu0
        %v7654 = vpop.f32.mrb[0].mxu0
        %v7655 = vadd.f32 %v7494, %v7654
        %v7656 = vpop.f32.mrb[0].mxu0
        %7657 = vmatprep.mubr.bf16.mxu0 %v6213
        %7658 = vmatmul.mubr.bf16.gmra.mrb[0].mxu0 %v6053
        %v7659 = vpop.f32.mrb[0].mxu0
        %v7660 = vadd.f32 %v7499, %v7659
        %v7661 = vpop.f32.mrb[0].mxu0
        %v7662 = vpop.f32.mrb[0].mxu0
        %v7663 = vadd.f32 %v7502, %v7662
        %v7664 = vpop.f32.mrb[0].mxu0
        %7665 = vmatprep.mubr.bf16.mxu0 %v6216
        %7666 = vmatmul.mubr.bf16.gmra.mrb[0].mxu0 %v6056
        %v7667 = vpop.f32.mrb[0].mxu0
        %v7668 = vadd.f32 %v7507, %v7667
        %v7669 = vpop.f32.mrb[0].mxu0
        %v7670 = vpop.f32.mrb[0].mxu0
        %v7671 = vadd.f32 %v7510, %v7670
        %v7672 = vpop.f32.mrb[0].mxu0
        %7673 = vmatprep.mubr.bf16.mxu0 %v6219
        %7674 = vmatmul.mubr.bf16.gmra.mrb[0].mxu0 %v6059
        %v7675 = vpop.f32.mrb[0].mxu0
        %v7676 = vadd.f32 %v7515, %v7675
        %v7677 = vpop.f32.mrb[0].mxu0
        %v7678 = vpop.f32.mrb[0].mxu0
        %v7679 = vadd.f32 %v7518, %v7678
        %v7680 = vpop.f32.mrb[0].mxu0
        %7681 = vmatprep.mubr.bf16.mxu0 %v6222
        %7682 = vmatmul.mubr.bf16.gmra.mrb[0].mxu0 %v6062
        %v7683 = vpop.f32.mrb[0].mxu0
        %v7684 = vadd.f32 %v7523, %v7683
        %v7685 = vpop.f32.mrb[0].mxu0
        %v7686 = vpop.f32.mrb[0].mxu0
        %v7687 = vadd.f32 %v7526, %v7686
        %v7688 = vpop.f32.mrb[0].mxu0
        %7689 = vmatprep.mubr.bf16.mxu0 %v6225
        %7690 = vmatmul.mubr.bf16.gmra.mrb[0].mxu0 %v6065
        %v7691 = vpop.f32.mrb[0].mxu0
        %v7692 = vadd.f32 %v7531, %v7691
        %v7693 = vpop.f32.mrb[0].mxu0
        %v7694 = vpop.f32.mrb[0].mxu0
        %v7695 = vadd.f32 %v7534, %v7694
        %v7696 = vpop.f32.mrb[0].mxu0
        %7697 = vmatprep.mubr.bf16.mxu0 %v6228
        %7698 = vmatmul.mubr.bf16.gmra.mrb[0].mxu0 %v6068
        %v7699 = vpop.f32.mrb[0].mxu0
        %v7700 = vadd.f32 %v7539, %v7699
        %v7701 = vpop.f32.mrb[0].mxu0
        %v7702 = vpop.f32.mrb[0].mxu0
        %v7703 = vadd.f32 %v7542, %v7702
        %v7704 = vpop.f32.mrb[0].mxu0
        %7705 = vmatprep.mubr.bf16.mxu0 %v6231
        %7706 = vmatmul.mubr.bf16.gmra.mrb[0].mxu0 %v6071
        %v7707 = vpop.f32.mrb[0].mxu0
        %v7708 = vadd.f32 %v7547, %v7707
        %v7709 = vpop.f32.mrb[0].mxu0
        %v7710 = vpop.f32.mrb[0].mxu0
        %v7711 = vadd.f32 %v7550, %v7710
        %v7712 = vpop.f32.mrb[0].mxu0
        %7713 = vmatprep.mubr.bf16.mxu0 %v6234
        %7714 = vmatmul.mubr.bf16.gmra.mrb[0].mxu0 %v6074
        %v7715 = vpop.f32.mrb[0].mxu0
        %v7716 = vadd.f32 %v7555, %v7715
        %v7717 = vpop.f32.mrb[0].mxu0
        %v7718 = vpop.f32.mrb[0].mxu0
        %v7719 = vadd.f32 %v7558, %v7718
        %v7720 = vpop.f32.mrb[0].mxu0
        %7721 = vmatprep.mubr.bf16.mxu0 %v6237
        %7722 = vmatmul.mubr.bf16.gmra.mrb[0].mxu0 %v6077
        %v7723 = vpop.f32.mrb[0].mxu0
        %v7724 = vadd.f32 %v7563, %v7723
        %v7725 = vpop.f32.mrb[0].mxu0
        %v7726 = vpop.f32.mrb[0].mxu0
        %v7727 = vadd.f32 %v7566, %v7726
        %v7728 = vpop.f32.mrb[0].mxu0
        %7729 = vdwg.mxu0
        %7730 = vmatprep.subr.bf16.mxu0 0
        %7731 = vmatpush1.bf16.msra.mxu0 %v7151
        %7732 = vmatprep.subr.bf16.mxu0 0
        %7733 = vmatpush1.bf16.msra.mxu0 %v7152
        %7734 = vmatprep.subr.bf16.mxu0 0
        %7735 = vmatpush1.bf16.msra.mxu0 %v7153
        %7736 = vmatprep.subr.bf16.mxu0 0
        %7737 = vmatpush1.bf16.msra.mxu0 %v7154
        %7738 = vmatprep.subr.bf16.mxu0 0
        %7739 = vmatpush1.bf16.msra.mxu0 %v7155
        %7740 = vmatprep.subr.bf16.mxu0 0
        %7741 = vmatpush1.bf16.msra.mxu0 %v7156
        %7742 = vmatprep.subr.bf16.mxu0 0
        %7743 = vmatpush1.bf16.msra.mxu0 %v7157
        %7744 = vmatprep.subr.bf16.mxu0 0
        %7745 = vmatpush1.bf16.msra.mxu0 %v7158
        %7746 = vmatprep.subr.bf16.mxu0 0
        %7747 = vmatpush1.bf16.msra.mxu0 %v7159
        %7748 = vmatprep.subr.bf16.mxu0 0
        %7749 = vmatpush1.bf16.msra.mxu0 %v7160
        %7750 = vmatprep.subr.bf16.mxu0 0
        %7751 = vmatpush1.bf16.msra.mxu0 %v7161
        %7752 = vmatprep.subr.bf16.mxu0 0
        %7753 = vmatpush1.bf16.msra.mxu0 %v7162
        %7754 = vmatprep.subr.bf16.mxu0 0
        %7755 = vmatpush1.bf16.msra.mxu0 %v7163
        %7756 = vmatprep.subr.bf16.mxu0 0
        %7757 = vmatpush1.bf16.msra.mxu0 %v7164
        %7758 = vmatprep.subr.bf16.mxu0 0
        %7759 = vmatpush1.bf16.msra.mxu0 %v7165
        %7760 = vmatprep.subr.bf16.mxu0 0
        %7761 = vmatpush1.bf16.msra.mxu0 %v7166
        %7762 = vmatprep.mubr.bf16.mxu0 %v6448
        %7763 = vmatmul.mubr.bf16.gmra.mrb[0].mxu0 %v6318
        %v7764 = vpop.f32.mrb[0].mxu0
        %v7765 = vadd.f32 %v7604, %v7764
        %v7766 = vpop.f32.mrb[0].mxu0
        %v7767 = vpop.f32.mrb[0].mxu0
        %v7768 = vadd.f32 %v7607, %v7767
        %v7769 = vpop.f32.mrb[0].mxu0
        %7770 = vmatprep.mubr.bf16.mxu0 %v6451
        %7771 = vmatmul.mubr.bf16.gmra.mrb[0].mxu0 %v6319
        %v7772 = vpop.f32.mrb[0].mxu0
        %v7773 = vadd.f32 %v7612, %v7772
        %v7774 = vpop.f32.mrb[0].mxu0
        %v7775 = vpop.f32.mrb[0].mxu0
        %v7776 = vadd.f32 %v7615, %v7775
        %v7777 = vpop.f32.mrb[0].mxu0
        %7778 = vmatprep.mubr.bf16.mxu0 %v6454
        %7779 = vmatmul.mubr.bf16.gmra.mrb[0].mxu0 %v6320
        %v7780 = vpop.f32.mrb[0].mxu0
        %v7781 = vadd.f32 %v7620, %v7780
        %v7782 = vpop.f32.mrb[0].mxu0
        %v7783 = vpop.f32.mrb[0].mxu0
        %v7784 = vadd.f32 %v7623, %v7783
        %v7785 = vpop.f32.mrb[0].mxu0
        %7786 = vmatprep.mubr.bf16.mxu0 %v6457
        %7787 = vmatmul.mubr.bf16.gmra.mrb[0].mxu0 %v6321
        %v7788 = vpop.f32.mrb[0].mxu0
        %v7789 = vadd.f32 %v7628, %v7788
        %v7790 = vpop.f32.mrb[0].mxu0
        %v7791 = vpop.f32.mrb[0].mxu0
        %v7792 = vadd.f32 %v7631, %v7791
        %v7793 = vpop.f32.mrb[0].mxu0
        %7794 = vmatprep.mubr.bf16.mxu0 %v6460
        %7795 = vmatmul.mubr.bf16.gmra.mrb[0].mxu0 %v6322
        %v7796 = vpop.f32.mrb[0].mxu0
        %v7797 = vadd.f32 %v7636, %v7796
        %v7798 = vpop.f32.mrb[0].mxu0
        %v7799 = vpop.f32.mrb[0].mxu0
        %v7800 = vadd.f32 %v7639, %v7799
        %v7801 = vpop.f32.mrb[0].mxu0
        %7802 = vmatprep.mubr.bf16.mxu0 %v6463
        %7803 = vmatmul.mubr.bf16.gmra.mrb[0].mxu0 %v6323
        %v7804 = vpop.f32.mrb[0].mxu0
        %v7805 = vadd.f32 %v7644, %v7804
        %v7806 = vpop.f32.mrb[0].mxu0
        %v7807 = vpop.f32.mrb[0].mxu0
        %v7808 = vadd.f32 %v7647, %v7807
        %v7809 = vpop.f32.mrb[0].mxu0
        %7810 = vmatprep.mubr.bf16.mxu0 %v6466
        %7811 = vmatmul.mubr.bf16.gmra.mrb[0].mxu0 %v6324
        %v7812 = vpop.f32.mrb[0].mxu0
        %v7813 = vadd.f32 %v7652, %v7812
        %v7814 = vpop.f32.mrb[0].mxu0
        %v7815 = vpop.f32.mrb[0].mxu0
        %v7816 = vadd.f32 %v7655, %v7815
        %v7817 = vpop.f32.mrb[0].mxu0
        %7818 = vmatprep.mubr.bf16.mxu0 %v6469
        %7819 = vmatmul.mubr.bf16.gmra.mrb[0].mxu0 %v6325
        %v7820 = vpop.f32.mrb[0].mxu0
        %v7821 = vadd.f32 %v7660, %v7820
        %v7822 = vpop.f32.mrb[0].mxu0
        %v7823 = vpop.f32.mrb[0].mxu0
        %v7824 = vadd.f32 %v7663, %v7823
        %v7825 = vpop.f32.mrb[0].mxu0
        %7826 = vmatprep.mubr.bf16.mxu0 %v6472
        %7827 = vmatmul.mubr.bf16.gmra.mrb[0].mxu0 %v6326
        %v7828 = vpop.f32.mrb[0].mxu0
        %v7829 = vadd.f32 %v7668, %v7828
        %v7830 = vpop.f32.mrb[0].mxu0
        %v7831 = vpop.f32.mrb[0].mxu0
        %v7832 = vadd.f32 %v7671, %v7831
        %v7833 = vpop.f32.mrb[0].mxu0
        %7834 = vmatprep.mubr.bf16.mxu0 %v6475
        %7835 = vmatmul.mubr.bf16.gmra.mrb[0].mxu0 %v6327
        %v7836 = vpop.f32.mrb[0].mxu0
        %v7837 = vadd.f32 %v7676, %v7836
        %v7838 = vpop.f32.mrb[0].mxu0
        %v7839 = vpop.f32.mrb[0].mxu0
        %v7840 = vadd.f32 %v7679, %v7839
        %v7841 = vpop.f32.mrb[0].mxu0
        %7842 = vmatprep.mubr.bf16.mxu0 %v6478
        %7843 = vmatmul.mubr.bf16.gmra.mrb[0].mxu0 %v6328
        %v7844 = vpop.f32.mrb[0].mxu0
        %v7845 = vadd.f32 %v7684, %v7844
        %v7846 = vpop.f32.mrb[0].mxu0
        %v7847 = vpop.f32.mrb[0].mxu0
        %v7848 = vadd.f32 %v7687, %v7847
        %v7849 = vpop.f32.mrb[0].mxu0
        %7850 = vmatprep.mubr.bf16.mxu0 %v6481
        %7851 = vmatmul.mubr.bf16.gmra.mrb[0].mxu0 %v6329
        %v7852 = vpop.f32.mrb[0].mxu0
        %v7853 = vadd.f32 %v7692, %v7852
        %v7854 = vpop.f32.mrb[0].mxu0
        %v7855 = vpop.f32.mrb[0].mxu0
        %v7856 = vadd.f32 %v7695, %v7855
        %v7857 = vpop.f32.mrb[0].mxu0
        %7858 = vmatprep.mubr.bf16.mxu0 %v6484
        %7859 = vmatmul.mubr.bf16.gmra.mrb[0].mxu0 %v6330
        %v7860 = vpop.f32.mrb[0].mxu0
        %v7861 = vadd.f32 %v7700, %v7860
        %v7862 = vpop.f32.mrb[0].mxu0
        %v7863 = vpop.f32.mrb[0].mxu0
        %v7864 = vadd.f32 %v7703, %v7863
        %v7865 = vpop.f32.mrb[0].mxu0
        %7866 = vmatprep.mubr.bf16.mxu0 %v6487
        %7867 = vmatmul.mubr.bf16.gmra.mrb[0].mxu0 %v6331
        %v7868 = vpop.f32.mrb[0].mxu0
        %v7869 = vadd.f32 %v7708, %v7868
        %v7870 = vpop.f32.mrb[0].mxu0
        %v7871 = vpop.f32.mrb[0].mxu0
        %v7872 = vadd.f32 %v7711, %v7871
        %v7873 = vpop.f32.mrb[0].mxu0
        %7874 = vmatprep.mubr.bf16.mxu0 %v6490
        %7875 = vmatmul.mubr.bf16.gmra.mrb[0].mxu0 %v6332
        %v7876 = vpop.f32.mrb[0].mxu0
        %v7877 = vadd.f32 %v7716, %v7876
        %v7878 = vpop.f32.mrb[0].mxu0
        %v7879 = vpop.f32.mrb[0].mxu0
        %v7880 = vadd.f32 %v7719, %v7879
        %v7881 = vpop.f32.mrb[0].mxu0
        %7882 = vmatprep.mubr.bf16.mxu0 %v6493
        %7883 = vmatmul.mubr.bf16.gmra.mrb[0].mxu0 %v6333
        %v7884 = vpop.f32.mrb[0].mxu0
        %v7885 = vadd.f32 %v7724, %v7884
        %v7886 = vpop.f32.mrb[0].mxu0
        %v7887 = vpop.f32.mrb[0].mxu0
        %v7888 = vadd.f32 %v7727, %v7887
        %v7889 = vpop.f32.mrb[0].mxu0
        %7890 = vdwg.mxu0
        %7891 = vmatprep.subr.bf16.mxu0 0
        %7892 = vmatpush1.bf16.msra.mxu0 %v7167
        %7893 = vmatprep.subr.bf16.mxu0 0
        %7894 = vmatpush1.bf16.msra.mxu0 %v7168
        %7895 = vmatprep.subr.bf16.mxu0 0
        %7896 = vmatpush1.bf16.msra.mxu0 %v7169
        %7897 = vmatprep.subr.bf16.mxu0 0
        %7898 = vmatpush1.bf16.msra.mxu0 %v7170
        %7899 = vmatprep.subr.bf16.mxu0 0
        %7900 = vmatpush1.bf16.msra.mxu0 %v7171
        %7901 = vmatprep.subr.bf16.mxu0 0
        %7902 = vmatpush1.bf16.msra.mxu0 %v7172
        %7903 = vmatprep.subr.bf16.mxu0 0
        %7904 = vmatpush1.bf16.msra.mxu0 %v7173
        %7905 = vmatprep.subr.bf16.mxu0 0
        %7906 = vmatpush1.bf16.msra.mxu0 %v7174
        %7907 = vmatprep.subr.bf16.mxu0 0
        %7908 = vmatpush1.bf16.msra.mxu0 0
        %7909 = vmatprep.subr.bf16.mxu0 0
        %7910 = vmatpush1.bf16.msra.mxu0 0
        %7911 = vmatprep.subr.bf16.mxu0 0
        %7912 = vmatpush1.bf16.msra.mxu0 0
        %7913 = vmatprep.subr.bf16.mxu0 0
        %7914 = vmatpush1.bf16.msra.mxu0 0
        %7915 = vmatprep.subr.bf16.mxu0 0
        %7916 = vmatpush1.bf16.msra.mxu0 0
        %7917 = vmatprep.subr.bf16.mxu0 0
        %7918 = vmatpush1.bf16.msra.mxu0 0
        %7919 = vmatprep.subr.bf16.mxu0 0
        %7920 = vmatpush1.bf16.msra.mxu0 0
        %7921 = vmatprep.subr.bf16.mxu0 0
        %7922 = vmatpush1.bf16.msra.mxu0 0
        %7923 = vmatprep.mubr.bf16.mxu0 0
        %7924 = vmatmul.mubr.bf16.gmra.mrb[0].mxu0 %v6608
        %v7925 = vpop.f32.mrb[0].mxu0
        %v7926 = vadd.f32 %v7765, %v7925
        %v7927 = vpop.f32.mrb[0].mxu0
        %v7928 = vpop.f32.mrb[0].mxu0
        %v7929 = vadd.f32 %v7768, %v7928
        %v7930 = vpop.f32.mrb[0].mxu0
        %7931 = vmatprep.mubr.bf16.mxu0 0
        %7932 = vmatmul.mubr.bf16.gmra.mrb[0].mxu0 %v6611
        %v7933 = vpop.f32.mrb[0].mxu0
        %v7934 = vadd.f32 %v7773, %v7933
        %v7935 = vpop.f32.mrb[0].mxu0
        %v7936 = vpop.f32.mrb[0].mxu0
        %v7937 = vadd.f32 %v7776, %v7936
        %v7938 = vpop.f32.mrb[0].mxu0
        %7939 = vmatprep.mubr.bf16.mxu0 0
        %7940 = vmatmul.mubr.bf16.gmra.mrb[0].mxu0 %v6614
        %v7941 = vpop.f32.mrb[0].mxu0
        %v7942 = vadd.f32 %v7781, %v7941
        %v7943 = vpop.f32.mrb[0].mxu0
        %v7944 = vpop.f32.mrb[0].mxu0
        %v7945 = vadd.f32 %v7784, %v7944
        %v7946 = vpop.f32.mrb[0].mxu0
        %7947 = vmatprep.mubr.bf16.mxu0 0
        %7948 = vmatmul.mubr.bf16.gmra.mrb[0].mxu0 %v6617
        %v7949 = vpop.f32.mrb[0].mxu0
        %v7950 = vadd.f32 %v7789, %v7949
        %v7951 = vpop.f32.mrb[0].mxu0
        %v7952 = vpop.f32.mrb[0].mxu0
        %v7953 = vadd.f32 %v7792, %v7952
        %v7954 = vpop.f32.mrb[0].mxu0
        %7955 = vmatprep.mubr.bf16.mxu0 0
        %7956 = vmatmul.mubr.bf16.gmra.mrb[0].mxu0 %v6620
        %v7957 = vpop.f32.mrb[0].mxu0
        %v7958 = vadd.f32 %v7797, %v7957
        %v7959 = vpop.f32.mrb[0].mxu0
        %v7960 = vpop.f32.mrb[0].mxu0
        %v7961 = vadd.f32 %v7800, %v7960
        %v7962 = vpop.f32.mrb[0].mxu0
        %7963 = vmatprep.mubr.bf16.mxu0 0
        %7964 = vmatmul.mubr.bf16.gmra.mrb[0].mxu0 %v6623
        %v7965 = vpop.f32.mrb[0].mxu0
        %v7966 = vadd.f32 %v7805, %v7965
        %v7967 = vpop.f32.mrb[0].mxu0
        %v7968 = vpop.f32.mrb[0].mxu0
        %v7969 = vadd.f32 %v7808, %v7968
        %v7970 = vpop.f32.mrb[0].mxu0
        %7971 = vmatprep.mubr.bf16.mxu0 0
        %7972 = vmatmul.mubr.bf16.gmra.mrb[0].mxu0 %v6626
        %v7973 = vpop.f32.mrb[0].mxu0
        %v7974 = vadd.f32 %v7813, %v7973
        %v7975 = vpop.f32.mrb[0].mxu0
        %v7976 = vpop.f32.mrb[0].mxu0
        %v7977 = vadd.f32 %v7816, %v7976
        %v7978 = vpop.f32.mrb[0].mxu0
        %7979 = vmatprep.mubr.bf16.mxu0 0
        %7980 = vmatmul.mubr.bf16.gmra.mrb[0].mxu0 %v6629
        %v7981 = vpop.f32.mrb[0].mxu0
        %v7982 = vadd.f32 %v7821, %v7981
        %v7983 = vpop.f32.mrb[0].mxu0
        %v7984 = vpop.f32.mrb[0].mxu0
        %v7985 = vadd.f32 %v7824, %v7984
        %v7986 = vpop.f32.mrb[0].mxu0
        %7987 = vmatprep.mubr.bf16.mxu0 0
        %7988 = vmatmul.mubr.bf16.gmra.mrb[0].mxu0 %v6632
        %v7989 = vpop.f32.mrb[0].mxu0
        %v7990 = vadd.f32 %v7829, %v7989
        %v7991 = vpop.f32.mrb[0].mxu0
        %v7992 = vpop.f32.mrb[0].mxu0
        %v7993 = vadd.f32 %v7832, %v7992
        %v7994 = vpop.f32.mrb[0].mxu0
        %7995 = vmatprep.mubr.bf16.mxu0 0
        %7996 = vmatmul.mubr.bf16.gmra.mrb[0].mxu0 %v6635
        %v7997 = vpop.f32.mrb[0].mxu0
        %v7998 = vadd.f32 %v7837, %v7997
        %v7999 = vpop.f32.mrb[0].mxu0
        %v8000 = vpop.f32.mrb[0].mxu0
        %v8001 = vadd.f32 %v7840, %v8000
        %v8002 = vpop.f32.mrb[0].mxu0
        %8003 = vmatprep.mubr.bf16.mxu0 0
        %8004 = vmatmul.mubr.bf16.gmra.mrb[0].mxu0 %v6638
        %v8005 = vpop.f32.mrb[0].mxu0
        %v8006 = vadd.f32 %v7845, %v8005
        %v8007 = vpop.f32.mrb[0].mxu0
        %v8008 = vpop.f32.mrb[0].mxu0
        %v8009 = vadd.f32 %v7848, %v8008
        %v8010 = vpop.f32.mrb[0].mxu0
        %8011 = vmatprep.mubr.bf16.mxu0 0
        %8012 = vmatmul.mubr.bf16.gmra.mrb[0].mxu0 %v6641
        %v8013 = vpop.f32.mrb[0].mxu0
        %v8014 = vadd.f32 %v7853, %v8013
        %v8015 = vpop.f32.mrb[0].mxu0
        %v8016 = vpop.f32.mrb[0].mxu0
        %v8017 = vadd.f32 %v7856, %v8016
        %v8018 = vpop.f32.mrb[0].mxu0
        %8019 = vmatprep.mubr.bf16.mxu0 0
        %8020 = vmatmul.mubr.bf16.gmra.mrb[0].mxu0 %v6644
        %v8021 = vpop.f32.mrb[0].mxu0
        %v8022 = vadd.f32 %v7861, %v8021
        %v8023 = vpop.f32.mrb[0].mxu0
        %v8024 = vpop.f32.mrb[0].mxu0
        %v8025 = vadd.f32 %v7864, %v8024
        %v8026 = vpop.f32.mrb[0].mxu0
        %8027 = vmatprep.mubr.bf16.mxu0 0
        %8028 = vmatmul.mubr.bf16.gmra.mrb[0].mxu0 %v6647
        %v8029 = vpop.f32.mrb[0].mxu0
        %v8030 = vadd.f32 %v7869, %v8029
        %v8031 = vpop.f32.mrb[0].mxu0
        %v8032 = vpop.f32.mrb[0].mxu0
        %v8033 = vadd.f32 %v7872, %v8032
        %v8034 = vpop.f32.mrb[0].mxu0
        %8035 = vmatprep.mubr.bf16.mxu0 0
        %8036 = vmatmul.mubr.bf16.gmra.mrb[0].mxu0 %v6650
        %v8037 = vpop.f32.mrb[0].mxu0
        %v8038 = vadd.f32 %v7877, %v8037
        %v8039 = vpop.f32.mrb[0].mxu0
        %v8040 = vpop.f32.mrb[0].mxu0
        %v8041 = vadd.f32 %v7880, %v8040
        %v8042 = vpop.f32.mrb[0].mxu0
        %8043 = vmatprep.mubr.bf16.mxu0 0
        %8044 = vmatmul.mubr.bf16.gmra.mrb[0].mxu0 %v6653
        %v8045 = vpop.f32.mrb[0].mxu0
        %v8046 = vadd.f32 %v7885, %v8045
        %v8047 = vpop.f32.mrb[0].mxu0
        %v8048 = vpop.f32.mrb[0].mxu0
        %v8049 = vadd.f32 %v7888, %v8048
        %v8050 = vpop.f32.mrb[0].mxu0
        %8051 = vdwg.mxu0
        %s8052 = scalar_lea.vmem %s182, 256 [#allocation5]
        %8053 = vst [vmem:[%s8052] sm:$0xff] %v7926
        %8054 = vst [vmem:[%s8052 + $0x8] sm:$0xff] %v7929
        %8055 = vst [vmem:[%s8052 + $0x10] sm:$0xff] %v7934
        %8056 = vst [vmem:[%s8052 + $0x18] sm:$0xff] %v7937
        %8057 = vst [vmem:[%s8052 + $0x20] sm:$0xff] %v7942
        %8058 = vst [vmem:[%s8052 + $0x28] sm:$0xff] %v7945
        %8059 = vst [vmem:[%s8052 + $0x30] sm:$0xff] %v7950
        %8060 = vst [vmem:[%s8052 + $0x38] sm:$0xff] %v7953
        %8061 = vst [vmem:[%s8052 + $0x40] sm:$0xff] %v7958
        %8062 = vst [vmem:[%s8052 + $0x48] sm:$0xff] %v7961
        %8063 = vst [vmem:[%s8052 + $0x50] sm:$0xff] %v7966
        %8064 = vst [vmem:[%s8052 + $0x58] sm:$0xff] %v7969
        %8065 = vst [vmem:[%s8052 + $0x60] sm:$0xff] %v7974
        %8066 = vst [vmem:[%s8052 + $0x68] sm:$0xff] %v7977
        %8067 = vst [vmem:[%s8052 + $0x70] sm:$0xff] %v7982
        %8068 = vst [vmem:[%s8052 + $0x78] sm:$0xff] %v7985
        %8069 = vst [vmem:[%s8052 + $0x80] sm:$0xff] %v7990
        %8070 = vst [vmem:[%s8052 + $0x88] sm:$0xff] %v7993
        %8071 = vst [vmem:[%s8052 + $0x90] sm:$0xff] %v7998
        %8072 = vst [vmem:[%s8052 + $0x98] sm:$0xff] %v8001
        %8073 = vst [vmem:[%s8052 + $0xa0] sm:$0xff] %v8006
        %8074 = vst [vmem:[%s8052 + $0xa8] sm:$0xff] %v8009
        %8075 = vst [vmem:[%s8052 + $0xb0] sm:$0xff] %v8014
        %8076 = vst [vmem:[%s8052 + $0xb8] sm:$0xff] %v8017
        %8077 = vst [vmem:[%s8052 + $0xc0] sm:$0xff] %v8022
        %8078 = vst [vmem:[%s8052 + $0xc8] sm:$0xff] %v8025
        %8079 = vst [vmem:[%s8052 + $0xd0] sm:$0xff] %v8030
        %8080 = vst [vmem:[%s8052 + $0xd8] sm:$0xff] %v8033
        %8081 = vst [vmem:[%s8052 + $0xe0] sm:$0xff] %v8038
        %8082 = vst [vmem:[%s8052 + $0xe8] sm:$0xff] %v8041
        %8083 = vst [vmem:[%s8052 + $0xf0] sm:$0xff] %v8046
        %8084 = vst [vmem:[%s8052 + $0xf8] sm:$0xff] %v8049
        %v8085 = vadd.f32 %v7926, %v7934
        %v8086 = vadd.f32 %v8085, %v7942
        %v8087 = vadd.f32 %v8086, %v7950
        %v8088 = vadd.f32 %v8087, %v7958
        %v8089 = vadd.f32 %v8088, %v7966
        %v8090 = vadd.f32 %v8089, %v7974
        %v8091 = vadd.f32 %v8090, %v7982
        %v8092 = vadd.f32 %v8091, %v7990
        %v8093 = vadd.f32 %v8092, %v7998
        %v8094 = vadd.f32 %v8093, %v8006
        %v8095 = vadd.f32 %v8094, %v8014
        %v8096 = vadd.f32 %v8095, %v8022
        %v8097 = vadd.f32 %v8096, %v8030
        %v8098 = vadd.f32 %v8097, %v8038
        %v8099 = vadd.f32 %v8098, %v8046
        %v8100 = vadd.f32 %v7929, %v7937
        %v8101 = vadd.f32 %v8100, %v7945
        %v8102 = vadd.f32 %v8101, %v7953
        %v8103 = vadd.f32 %v8102, %v7961
        %v8104 = vadd.f32 %v8103, %v7969
        %v8105 = vadd.f32 %v8104, %v7977
        %v8106 = vadd.f32 %v8105, %v7985
        %v8107 = vadd.f32 %v8106, %v7993
        %v8108 = vadd.f32 %v8107, %v8001
        %v8109 = vadd.f32 %v8108, %v8009
        %v8110 = vadd.f32 %v8109, %v8017
        %v8111 = vadd.f32 %v8110, %v8025
        %v8112 = vadd.f32 %v8111, %v8033
        %v8113 = vadd.f32 %v8112, %v8041
        %v8114 = vadd.f32 %v8113, %v8049
        %v8115 = vadd.f32 %v8099, %v8114
        %v8116 = vrot.slane %v8115, 4
        %v8117 = vadd.f32 %v8115, %v8116
        %v8118 = vrot.slane %v8117, 2
        %v8119 = vadd.f32 %v8117, %v8118
        %v8120 = vrot.slane %v8119, 1
        %v8121 = vadd.f32 %v8119, %v8120
        %v8122 = vmul.f32 %v7926, %v7926
        %v8123 = vmul.f32 %v7929, %v7929
        %v8124 = vmul.f32 %v7934, %v7934
        %v8125 = vmul.f32 %v7937, %v7937
        %v8126 = vmul.f32 %v7942, %v7942
        %v8127 = vmul.f32 %v7945, %v7945
        %v8128 = vmul.f32 %v7950, %v7950
        %v8129 = vmul.f32 %v7953, %v7953
        %v8130 = vmul.f32 %v7958, %v7958
        %v8131 = vmul.f32 %v7961, %v7961
        %v8132 = vmul.f32 %v7966, %v7966
        %v8133 = vmul.f32 %v7969, %v7969
        %v8134 = vmul.f32 %v7974, %v7974
        %v8135 = vmul.f32 %v7977, %v7977
        %v8136 = vmul.f32 %v7982, %v7982
        %v8137 = vmul.f32 %v7985, %v7985
        %v8138 = vmul.f32 %v7990, %v7990
        %v8139 = vmul.f32 %v7993, %v7993
        %v8140 = vmul.f32 %v7998, %v7998
        %v8141 = vmul.f32 %v8001, %v8001
        %v8142 = vmul.f32 %v8006, %v8006
        %v8143 = vmul.f32 %v8009, %v8009
        %v8144 = vmul.f32 %v8014, %v8014
        %v8145 = vmul.f32 %v8017, %v8017
        %v8146 = vmul.f32 %v8022, %v8022
        %v8147 = vmul.f32 %v8025, %v8025
        %v8148 = vmul.f32 %v8030, %v8030
        %v8149 = vmul.f32 %v8033, %v8033
        %v8150 = vmul.f32 %v8038, %v8038
        %v8151 = vmul.f32 %v8041, %v8041
        %v8152 = vmul.f32 %v8046, %v8046
        %v8153 = vmul.f32 %v8049, %v8049
        %v8154 = vadd.f32 %v8122, %v8124
        %v8155 = vadd.f32 %v8154, %v8126
        %v8156 = vadd.f32 %v8155, %v8128
        %v8157 = vadd.f32 %v8156, %v8130
        %v8158 = vadd.f32 %v8157, %v8132
        %v8159 = vadd.f32 %v8158, %v8134
        %v8160 = vadd.f32 %v8159, %v8136
        %v8161 = vadd.f32 %v8160, %v8138
        %v8162 = vadd.f32 %v8161, %v8140
        %v8163 = vadd.f32 %v8162, %v8142
        %v8164 = vadd.f32 %v8163, %v8144
        %v8165 = vadd.f32 %v8164, %v8146
        %v8166 = vadd.f32 %v8165, %v8148
        %v8167 = vadd.f32 %v8166, %v8150
        %v8168 = vadd.f32 %v8167, %v8152
        %v8169 = vadd.f32 %v8123, %v8125
        %v8170 = vadd.f32 %v8169, %v8127
        %v8171 = vadd.f32 %v8170, %v8129
        %v8172 = vadd.f32 %v8171, %v8131
        %v8173 = vadd.f32 %v8172, %v8133
        %v8174 = vadd.f32 %v8173, %v8135
        %v8175 = vadd.f32 %v8174, %v8137
        %v8176 = vadd.f32 %v8175, %v8139
        %v8177 = vadd.f32 %v8176, %v8141
        %v8178 = vadd.f32 %v8177, %v8143
        %v8179 = vadd.f32 %v8178, %v8145
        %v8180 = vadd.f32 %v8179, %v8147
        %v8181 = vadd.f32 %v8180, %v8149
        %v8182 = vadd.f32 %v8181, %v8151
        %v8183 = vadd.f32 %v8182, %v8153
        %v8184 = vadd.f32 %v8168, %v8183
        %v8185 = vrot.slane %v8184, 4
        %v8186 = vadd.f32 %v8184, %v8185
        %v8187 = vrot.slane %v8186, 2
        %v8188 = vadd.f32 %v8186, %v8187
        %v8189 = vrot.slane %v8188, 1
        %v8190 = vadd.f32 %v8188, %v8189
        %s8191 = scalar_lea.vmem %s189, 2 [#allocation6]
        %8192 = vst [vmem:[%s8191] sm:$0x1] %v8121
        %8193 = vst [vmem:[%s8191 + $0x1] sm:$0x1] %v8190
        %s8194 = sand.u32 %s77, 1
        %s8195 = scalar_lea.sflag [#allocation4], %s8194
        %s8196 = sand.u32 %s77, 1
        %s8197 = smul.addr %s8196, 512
        %s8198 = scalar_lea.vmem [#allocation5], %s8197
        %s8199 = sand.u32 %s103, 1
        %s8200 = scalar_lea.sflag [#allocation7], %s8199
        %s8201 = sand.u32 %s103, 1
        %s8202 = smul.addr %s8201, 4
        %s8203 = scalar_lea.vmem [#allocation6], %s8202
        // Predicated region
        $region33: #{tpu_custom_call.1} parent=27 // pred_check
          %p8204 = pneg %p87
        $region34: #{tpu_custom_call.1} parent=27 // pred_check_branch
          %8206 = sbr.rel (%p8204) target = $region36
        $region35: #{tpu_custom_call.1} parent=27 // pred_region
          %s8207 = smul.u32 2, %s22
          %s8209 = ssub.s32 8192, 8192
          %8210 = vsyncadd %s8195, %s8209
          %s8211 = smul.addr %s8207, 32
          %s8212 = smul.addr %s8211, 128
          %s8213 = scalar_lea.hbm %s2, %s8212
          %s8214 = sshll.u32 %s8198, 4
          %s8215 = int_to_ptr.vmem [resolvable:$true] %s8214
          %8220 = dma.vmem_to_hbm [thread:$0]  %s8215, 8192, %s8213, %s8195, 128, 128, 8
        $region36: #{tpu_custom_call.1} parent=27 // pred_fallthru
          _
        // Predicated region
        $region37: #{tpu_custom_call.1} parent=27 // pred_check
          %p8221 = pneg %p113
        $region38: #{tpu_custom_call.1} parent=27 // pred_check_branch
          %8223 = sbr.rel (%p8221) target = $region40
        $region39: #{tpu_custom_call.1} parent=27 // pred_region
          %s8224 = smul.u32 2, %s22
          %s8226 = ssub.s32 64, 64
          %8227 = vsyncadd %s8200, %s8226
          %s8228 = smul.addr %s8224, 32
          %s8229 = scalar_lea.hbm %s3, %s8228
          %s8230 = sshll.u32 %s8203, 4
          %s8231 = int_to_ptr.vmem [resolvable:$true] %s8230
          %8236 = dma.vmem_to_hbm [thread:$0]  %s8231, 64, %s8229, %s8200, 32, 32, 2
        $region40: #{tpu_custom_call.1} parent=27 // pred_fallthru
          _
      $region28: #{tpu_custom_call.1} parent=5 // pred_fallthru
        _
      %p8237 = scmp.le.s32.totalorder 2, %s17
      // Predicated region
      $region41: #{tpu_custom_call.1} parent=5 // pred_check
        %p8238 = pneg %p8237
      $region42: #{tpu_custom_call.1} parent=5 // pred_check_branch
        %8240 = sbr.rel (%p8238) target = $region44
      $region43: #{tpu_custom_call.1} parent=5 // pred_region
        %s8241 = ssub.s32 %s17, 2
        // Predicated region
        $region45: #{tpu_custom_call.1} parent=43 // pred_check
          %p8242 = pneg %p93
        $region46: #{tpu_custom_call.1} parent=43 // pred_check_branch
          %8244 = sbr.rel (%p8242) target = $region48
        $region47: #{tpu_custom_call.1} parent=43 // pred_region
          %s8245 = sand.u32 %s78, 1
          %s8246 = scalar_lea.sflag [#allocation4], %s8245
          %s8247 = sand.u32 %s78, 1
          %s8248 = smul.addr %s8247, 512
          %s8249 = scalar_lea.vmem [#allocation5], %s8248
          %8250 = dma.done %s8246, 8192
        $region48: #{tpu_custom_call.1} parent=43 // pred_fallthru
          _
        // Predicated region
        $region49: #{tpu_custom_call.1} parent=43 // pred_check
          %p8251 = pneg %p119
        $region50: #{tpu_custom_call.1} parent=43 // pred_check_branch
          %8253 = sbr.rel (%p8251) target = $region52
        $region51: #{tpu_custom_call.1} parent=43 // pred_region
          %s8254 = sand.u32 %s104, 1
          %s8255 = scalar_lea.sflag [#allocation7], %s8254
          %s8256 = sand.u32 %s104, 1
          %s8257 = smul.addr %s8256, 4
          %s8258 = scalar_lea.vmem [#allocation6], %s8257
          %8259 = dma.done %s8255, 64
        $region52: #{tpu_custom_call.1} parent=43 // pred_fallthru
          _
      $region44: #{tpu_custom_call.1} parent=5 // pred_fallthru
        _
    $region6: #{tpu_custom_call.1} parent=1 // loop_footer
      %s21 = sadd.s32 1, %s17
    $region7: #{tpu_custom_call.1} parent=1 // loop_footer_branch
      %16 = sbr.rel target = $region3
    $region8: #{tpu_custom_call.1} parent=1 // loop_exit
      _
    %8260 = vsyncpa [#allocation3], 1
    %s8261 = scalar_lea.sflag [#allocation3], 1
    %8262 = vsyncpa %s8261, 1
    %8263 = vsyncpa [#allocation4], 1
    %s8264 = scalar_lea.sflag [#allocation4], 1
    %8265 = vsyncpa %s8264, 1
    %8266 = vsyncpa [#allocation7], 1
    %s8267 = scalar_lea.sflag [#allocation7], 1
    %8268 = vsyncpa %s8267, 1

</llo_original>
